<compile_context>
chip_gen: v7x
topology: tpu7x:2x2x1
jax: 0.10.0
libtpu: 0.0.40
codegen_flags: <defaults>
</compile_context>

<pallas_src>
import jax
import jax.numpy as jnp
from jax.experimental import pallas as pl
from jax.experimental.pallas import tpu as pltpu


NUM_CLASSES = 10

# Fixed geometry implied by fc1 = Linear(128*4*4, .)  ->  32x32 input.
_S1 = 30 * 30                    # conv1 output positions (exact im2col rows)
_KC1 = 32                        # conv1 contraction 3*3*3=27, padded to 32
_L2 = 15 * 15 - 2 * 15 - 2       # = 193 conv2 rows (flattened-map formulation)
_L3 = 6 * 6 - 2 * 6 - 2          # = 22  conv3 rows
_KC = 9 * 128                    # = 1152 packed 3x3x128 contraction


# ----------------------------------------------------------------------------
# Pallas kernels
# ----------------------------------------------------------------------------
def _cnn_fused_kernel(xc_ref, w1_ref, b1_ref, w2_ref, b2_ref, w3_ref, b3_ref,
                      feat_ref,
                      m1_ref, a1_ref, col2_ref, m2_ref, a2_ref, col3_ref):
    """Whole conv stack for one sample.

    xc_ref:   (900, 32)   bf16  im2col patches of the 32x32x3 image (rows = output
                                pixel h*30+w, cols = (di,dj,cin), zero-padded to 32)
    w1_ref:   (32, 128)   bf16  conv1 weights, rows ordered (di,dj,cin)
    w2_ref:   (1152, 128) bf16  conv2 weights, rows ordered (tap, cin)
    w3_ref:   (1152, 128) bf16  conv3 weights
    b*_ref:   (1, 128)    f32
    feat_ref: (16, 128)   f32   ReLU(conv3) in (h*4+w, c) order
    """
    # ---------------- conv1 (3x3, 3->128): one K=32 MXU matmul ----------------
    r = jnp.dot(xc_ref[...], w1_ref[...], preferred_element_type=jnp.float32)
    r = jnp.maximum(r + b1_ref[...], 0.0)                  # (900,128) == 30x30 grid
    # 2x2 stride-2 max-pool: pairwise maxima, then strided compaction of anchors.
    h = jnp.maximum(r[:-1, :], r[1:, :])                   # (899,128) horizontal pair
    m1_ref[...] = jnp.maximum(h[:-30, :], h[30:, :])       # (869,128) full 2x2 window
    for q in range(15):                                    # pooled row q: anchors 60q+2p
        a1_ref[15 * q:15 * (q + 1), :] = m1_ref[pl.ds(60 * q, 15, stride=2), :]

    # ------------- conv2 (3x3, 128->128): K=1152 packed matmul ---------------
    for t in range(9):                                     # tap (di,dj) = (t//3, t%3)
        off = (t // 3) * 15 + (t % 3)
        col2_ref[:, 128 * t:128 * (t + 1)] = (
            a1_ref[off:off + _L2, :].astype(jnp.bfloat16))
    r = jnp.dot(col2_ref[...], w2_ref[...], preferred_element_type=jnp.float32)
    r = jnp.maximum(r + b2_ref[...], 0.0)                  # (193,128); cols 13,14 of each
                                                           # 15-wide row are wrap garbage
                                                           # and never selected below
    h = jnp.maximum(r[:-1, :], r[1:, :])                   # (192,128)
    m2_ref[...] = jnp.maximum(h[:-15, :], h[15:, :])       # (177,128)
    for q in range(6):
        a2_ref[6 * q:6 * (q + 1), :] = m2_ref[pl.ds(30 * q, 6, stride=2), :]

    # ---------------- conv3 (3x3, 128->128) + ReLU ----------------
    for t in range(9):
        off = (t // 3) * 6 + (t % 3)
        col3_ref[:, 128 * t:128 * (t + 1)] = (
            a2_ref[off:off + _L3, :].astype(jnp.bfloat16))
    r = jnp.dot(col3_ref[...], w3_ref[...], preferred_element_type=jnp.float32)
    r = jnp.maximum(r + b3_ref[...], 0.0)                  # (22,128)
    for q in range(4):                                     # keep the 4 valid cols per row
        feat_ref[4 * q:4 * (q + 1), :] = r[6 * q:6 * q + 4, :]


def _fc_kernel(x_ref, w_ref, b_ref, o_ref):
    """out = bf16(x) @ w_bf16 + b, f32 accumulation (no activation)."""
    x = x_ref[...].astype(jnp.bfloat16)
    o_ref[...] = (jnp.dot(x, w_ref[...], preferred_element_type=jnp.float32)
                  + b_ref[...]).astype(o_ref.dtype)


# ----------------------------------------------------------------------------
# pallas_call wrappers
# ----------------------------------------------------------------------------
def _fused_convnet(xc, params):
    """xc: (B, 900, 32) bf16 im2col of the input -> (B, 16, 128) f32 conv3 output."""
    B = xc.shape[0]
    flops = B * 2 * (_S1 * _KC1 * 128 + _L2 * _KC * 128 + _L3 * _KC * 128)
    bytes_accessed = (xc.size * 2 + B * 16 * 128 * 4
                      + params["w1"].size * 2 + params["w2"].size * 2
                      + params["w3"].size * 2 + 3 * 128 * 4)
    return pl.pallas_call(
        _cnn_fused_kernel,
        out_shape=jax.ShapeDtypeStruct((B, 16, 128), jnp.float32),
        grid=(B,),
        in_specs=[
            pl.BlockSpec((None, _S1, _KC1), lambda b: (b, 0, 0)),   # im2col input
            pl.BlockSpec((_KC1, 128), lambda b: (0, 0)),            # w1 (resident)
            pl.BlockSpec((1, 128), lambda b: (0, 0)),               # b1
            pl.BlockSpec((_KC, 128), lambda b: (0, 0)),             # w2
            pl.BlockSpec((1, 128), lambda b: (0, 0)),               # b2
            pl.BlockSpec((_KC, 128), lambda b: (0, 0)),             # w3
            pl.BlockSpec((1, 128), lambda b: (0, 0)),               # b3
        ],
        out_specs=pl.BlockSpec((None, 16, 128), lambda b: (b, 0, 0)),
        scratch_shapes=[
            pltpu.VMEM((869, 128), jnp.float32),     # layer-1 pooling window maxima
            pltpu.VMEM((225, 128), jnp.float32),     # pooled 15x15 activation
            pltpu.VMEM((_L2, _KC), jnp.bfloat16),    # conv2 K=1152 im2col slab
            pltpu.VMEM((177, 128), jnp.float32),     # layer-2 pooling window maxima
            pltpu.VMEM((36, 128), jnp.float32),      # pooled 6x6 activation
            pltpu.VMEM((_L3, _KC), jnp.bfloat16),    # conv3 K=1152 im2col slab
        ],
        compiler_params=pltpu.CompilerParams(
            dimension_semantics=("parallel",),
            vmem_limit_bytes=24 * 1024 * 1024,
        ),
        cost_estimate=pl.CostEstimate(
            flops=flops, transcendentals=0, bytes_accessed=bytes_accessed),
    )(xc, params["w1"], params["b1"], params["w2"], params["b2"],
      params["w3"], params["b3"])


def _fc(x, w, b):
    """Tiny dense layer, fully VMEM-resident (output lanes padded to 128)."""
    B, K = x.shape
    N = w.shape[1]
    vmem = pl.BlockSpec(memory_space=pltpu.MemorySpace.VMEM)
    return pl.pallas_call(
        _fc_kernel,
        out_shape=jax.ShapeDtypeStruct((B, N), jnp.float32),
        in_specs=[vmem, vmem, vmem],
        out_specs=vmem,
        cost_estimate=pl.CostEstimate(
            flops=2 * B * K * N, transcendentals=0,
            bytes_accessed=B * K * 4 + K * N * 2 + N * 4 + B * N * 4),
    )(x, w, b)


# ----------------------------------------------------------------------------
# Parameter init (PyTorch-default-like uniform bounds, deterministic)
# ----------------------------------------------------------------------------
def _uniform(key, shape, fan_in):
    bound = 1.0 / (fan_in ** 0.5)
    return jax.random.uniform(key, shape, jnp.float32, -bound, bound)


def init_params(key, num_classes=10):
    ks = jax.random.split(key, 8)
    p = {}
    # conv1: rows ordered (di,dj,cin) to match the im2col patch order; pad 27->32.
    w1 = _uniform(ks[0], (9, 3, 128), 27).reshape(27, 128)
    p["w1"] = jnp.pad(w1, ((0, 5), (0, 0))).astype(jnp.bfloat16)
    p["b1"] = _uniform(ks[1], (1, 128), 27)
    # conv2 / conv3: rows ordered (tap, cin) -> (1152, 128).
    p["w2"] = _uniform(ks[2], (9, 128, 128), 1152).reshape(_KC, 128).astype(jnp.bfloat16)
    p["b2"] = _uniform(ks[3], (1, 128), 1152)
    p["w3"] = _uniform(ks[4], (9, 128, 128), 1152).reshape(_KC, 128).astype(jnp.bfloat16)
    p["b3"] = _uniform(ks[5], (1, 128), 1152)
    # fc1: (2048, num_classes), output lanes padded to 128, bf16 weights.
    wfc = _uniform(ks[6], (128 * 4 * 4, num_classes), 128 * 4 * 4)
    p["wfc"] = jnp.pad(wfc, ((0, 0), (0, 128 - num_classes))).astype(jnp.bfloat16)
    bfc = _uniform(ks[7], (1, num_classes), 128 * 4 * 4)
    p["bfc"] = jnp.pad(bfc, ((0, 0), (0, 128 - num_classes)))
    return p


# ----------------------------------------------------------------------------
# Forward pass (matches CNNCifar.forward with return_features=True)
# ----------------------------------------------------------------------------
def _im2col_3x3(x_nhwc):
    """(B,H,W,C) -> (B, (H-2)*(W-2), 9*C) valid 3x3 patches, ordered (di,dj,c)."""
    B, H, W, C = x_nhwc.shape
    cols = [x_nhwc[:, di:di + H - 2, dj:dj + W - 2, :]
            for di in range(3) for dj in range(3)]
    patches = jnp.concatenate(cols, axis=-1)
    return patches.reshape(B, (H - 2) * (W - 2), 9 * C)


def cnn_cifar_forward(x_nchw, params):
    B = x_nchw.shape[0]
    x = jnp.transpose(x_nchw, (0, 2, 3, 1)).astype(jnp.bfloat16)    # NHWC (B,32,32,3)
    xc = _im2col_3x3(x)                                             # (B,900,27)
    xc = jnp.pad(xc, ((0, 0), (0, 0), (0, _KC1 - 27)))              # (B,900,32)

    conv3_out = _fused_convnet(xc, params)                          # (B,16,128) f32
    # torch flattens in (C,H,W) order: one tiny transpose on the output path.
    feature = jnp.transpose(conv3_out, (0, 2, 1)).reshape(B, 128 * 4 * 4)
    logits = _fc(feature, params["wfc"], params["bfc"])[:, :NUM_CLASSES]
    return logits, feature


# ----------------------------------------------------------------------------
# Pure-XLA reference (same bf16 weights / casts) for a numerical sanity check
# ----------------------------------------------------------------------------
def _reference_forward(x_nchw, params):
    x = jnp.transpose(x_nchw, (0, 2, 3, 1)).astype(jnp.bfloat16)

    def conv_block(y, w_rows, b, cin, pool):
        w = w_rows[:9 * cin].reshape(3, 3, cin, 128).astype(jnp.float32)   # HWIO
        y = jax.lax.conv_general_dilated(
            y.astype(jnp.float32), w, (1, 1), "VALID",
            dimension_numbers=("NHWC", "HWIO", "NHWC"))
        y = jnp.maximum(y + b.reshape(1, 1, 1, -1), 0.0)
        if pool:
            y = jax.lax.reduce_window(y, -jnp.inf, jax.lax.max,
                                      (1, 2, 2, 1), (1, 2, 2, 1), "VALID")
        return y

    y = conv_block(x, params["w1"], params["b1"], 3, True).astype(jnp.bfloat16)
    y = conv_block(y, params["w2"], params["b2"], 128, True).astype(jnp.bfloat16)
    y = conv_block(y, params["w3"], params["b3"], 128, False)              # (B,4,4,128)
    B = y.shape[0]
    feature = jnp.transpose(y, (0, 3, 1, 2)).reshape(B, 128 * 4 * 4)
    logits = (feature.astype(jnp.bfloat16).astype(jnp.float32)
              @ params["wfc"].astype(jnp.float32)[:, :NUM_CLASSES]
              + params["bfc"][0, :NUM_CLASSES])
    return logits, feature


# ----------------------------------------------------------------------------
if __name__ == "__main__":
    key = jax.random.PRNGKey(0)
    k_param, k_input = jax.random.split(key)

    params = init_params(k_param, NUM_CLASSES)
    # 32x32 spatial so that 128*4*4 matches fc1 (as the forward implies).
    x = jax.random.normal(k_input, (2, 3, 32, 32), dtype=jnp.float32)

    fwd = jax.jit(cnn_cifar_forward)
    logits, feature = fwd(x, params)
    jax.block_until_ready((logits, feature))

    assert logits.shape == (2, NUM_CLASSES), logits.shape
    assert feature.shape == (2, 128 * 4 * 4), feature.shape
    assert bool(jnp.all(jnp.isfinite(logits)))

    # Sanity check vs. plain-XLA reference built from the same bf16 params.
    ref_logits, ref_feature = jax.jit(_reference_forward)(x, params)
    assert bool(jnp.max(jnp.abs(feature - ref_feature)) < 5e-2), "feature mismatch"
    assert bool(jnp.max(jnp.abs(logits - ref_logits)) < 5e-2), "logits mismatch"

    print("KERNEL_OK")
</pallas_src>

<mosaic_0001>
module attributes {stable_mosaic.version = 11 : i64} {
  func.func @_cnn_fused_kernel(%arg0: i32, %arg1: memref<1x900x32xbf16, #tpu.memory_space<vmem>>, %arg2: memref<32x128xbf16, #tpu.memory_space<vmem>>, %arg3: memref<1x128xf32, #tpu.memory_space<vmem>>, %arg4: memref<1152x128xbf16, #tpu.memory_space<vmem>>, %arg5: memref<1x128xf32, #tpu.memory_space<vmem>>, %arg6: memref<1152x128xbf16, #tpu.memory_space<vmem>>, %arg7: memref<1x128xf32, #tpu.memory_space<vmem>>, %arg8: memref<1x16x128xf32, #tpu.memory_space<vmem>>, %arg9: memref<869x128xf32, #tpu.memory_space<vmem>>, %arg10: memref<225x128xf32, #tpu.memory_space<vmem>>, %arg11: memref<193x1152xbf16, #tpu.memory_space<vmem>>, %arg12: memref<177x128xf32, #tpu.memory_space<vmem>>, %arg13: memref<36x128xf32, #tpu.memory_space<vmem>>, %arg14: memref<22x1152xbf16, #tpu.memory_space<vmem>>) attributes {dimension_semantics = [#tpu.dimension_semantics<parallel>], iteration_bounds = array<i64: 2>, scalar_prefetch = 0 : i64, scratch_operands = 6 : i64, tpu.core_type = #tpu.core_type<tc>, window_params = [{transform_indices = @transform_0, window_bounds = array<i64: 1, 900, 32>}, {pipeline_mode = #tpu.pipeline_mode<synchronous>, transform_indices = @transform_1, window_bounds = array<i64: 32, 128>}, {pipeline_mode = #tpu.pipeline_mode<synchronous>, transform_indices = @transform_2, window_bounds = array<i64: 1, 128>}, {pipeline_mode = #tpu.pipeline_mode<synchronous>, transform_indices = @transform_3, window_bounds = array<i64: 1152, 128>}, {pipeline_mode = #tpu.pipeline_mode<synchronous>, transform_indices = @transform_4, window_bounds = array<i64: 1, 128>}, {pipeline_mode = #tpu.pipeline_mode<synchronous>, transform_indices = @transform_5, window_bounds = array<i64: 1152, 128>}, {pipeline_mode = #tpu.pipeline_mode<synchronous>, transform_indices = @transform_6, window_bounds = array<i64: 1, 128>}, {transform_indices = @transform_7, window_bounds = array<i64: 1, 16, 128>}]} {
    %c0 = arith.constant 0 : index
    %c0_0 = arith.constant 0 : index
    %c0_1 = arith.constant 0 : index
    %0 = vector.load %arg1[%c0, %c0_0, %c0_1] : memref<1x900x32xbf16, #tpu.memory_space<vmem>>, vector<1x900x32xbf16>
    %1 = vector.shape_cast %0 : vector<1x900x32xbf16> to vector<900x32xbf16>
    %c0_2 = arith.constant 0 : index
    %c0_3 = arith.constant 0 : index
    %2 = vector.load %arg2[%c0_2, %c0_3] : memref<32x128xbf16, #tpu.memory_space<vmem>>, vector<32x128xbf16>
    %cst = arith.constant dense<0.000000e+00> : vector<900x128xf32>
    %3 = tpu.matmul %1, %2, %cst {dimension_numbers = #tpu.dot_dimension_numbers<[1], [0], [0], [1], [0, 0, 1, 1], [], []>} : vector<900x32xbf16>, vector<32x128xbf16>, vector<900x128xf32> -> vector<900x128xf32>
    %c0_4 = arith.constant 0 : index
    %c0_5 = arith.constant 0 : index
    %4 = vector.load %arg3[%c0_4, %c0_5] : memref<1x128xf32, #tpu.memory_space<vmem>>, vector<1x128xf32>
    %5 = vector.broadcast %4 : vector<1x128xf32> to vector<900x128xf32>
    %6 = arith.addf %3, %5 : vector<900x128xf32>
    %cst_6 = arith.constant 0.000000e+00 : f32
    %7 = vector.broadcast %cst_6 : f32 to vector<900x128xf32>
    %8 = arith.maximumf %6, %7 : vector<900x128xf32>
    %9 = vector.extract_strided_slice %8 {offsets = [0, 0], sizes = [899, 128], strides = [1, 1]} : vector<900x128xf32> to vector<899x128xf32>
    %10 = vector.extract_strided_slice %8 {offsets = [1, 0], sizes = [899, 128], strides = [1, 1]} : vector<900x128xf32> to vector<899x128xf32>
    %11 = arith.maximumf %9, %10 : vector<899x128xf32>
    %12 = vector.extract_strided_slice %11 {offsets = [0, 0], sizes = [869, 128], strides = [1, 1]} : vector<899x128xf32> to vector<869x128xf32>
    %13 = vector.extract_strided_slice %11 {offsets = [30, 0], sizes = [869, 128], strides = [1, 1]} : vector<899x128xf32> to vector<869x128xf32>
    %14 = arith.maximumf %12, %13 : vector<869x128xf32>
    %c0_7 = arith.constant 0 : index
    %c0_8 = arith.constant 0 : index
    %15 = vector.load %arg9[%c0_7, %c0_8] : memref<869x128xf32, #tpu.memory_space<vmem>>, vector<869x128xf32>
    tpu.vector_store %arg9[%c0_7, %c0_8], %14 {strides = array<i32>} : memref<869x128xf32, #tpu.memory_space<vmem>>, vector<869x128xf32>,
    %c0_9 = arith.constant 0 : index
    %c0_10 = arith.constant 0 : index
    %16 = tpu.strided_load %arg9[%c0_9, %c0_10] {strides = array<i32: 2, 1>} : memref<869x128xf32, #tpu.memory_space<vmem>>, vector<15x128xf32>
    %c0_11 = arith.constant 0 : index
    %c0_12 = arith.constant 0 : index
    %17 = vector.load %arg10[%c0_11, %c0_12] : memref<225x128xf32, #tpu.memory_space<vmem>>, vector<15x128xf32>
    tpu.vector_store %arg10[%c0_11, %c0_12], %16 {strides = array<i32>} : memref<225x128xf32, #tpu.memory_space<vmem>>, vector<15x128xf32>,
    %c60 = arith.constant 60 : index
    %c0_13 = arith.constant 0 : index
    %18 = tpu.strided_load %arg9[%c60, %c0_13] {strides = array<i32: 2, 1>} : memref<869x128xf32, #tpu.memory_space<vmem>>, vector<15x128xf32>
    %c15 = arith.constant 15 : index
    %c0_14 = arith.constant 0 : index
    %19 = vector.load %arg10[%c15, %c0_14] : memref<225x128xf32, #tpu.memory_space<vmem>>, vector<15x128xf32>
    tpu.vector_store %arg10[%c15, %c0_14], %18 {strides = array<i32>} : memref<225x128xf32, #tpu.memory_space<vmem>>, vector<15x128xf32>,
    %c120 = arith.constant 120 : index
    %c0_15 = arith.constant 0 : index
    %20 = tpu.strided_load %arg9[%c120, %c0_15] {strides = array<i32: 2, 1>} : memref<869x128xf32, #tpu.memory_space<vmem>>, vector<15x128xf32>
    %c30 = arith.constant 30 : index
    %c0_16 = arith.constant 0 : index
    %21 = vector.load %arg10[%c30, %c0_16] : memref<225x128xf32, #tpu.memory_space<vmem>>, vector<15x128xf32>
    tpu.vector_store %arg10[%c30, %c0_16], %20 {strides = array<i32>} : memref<225x128xf32, #tpu.memory_space<vmem>>, vector<15x128xf32>,
    %c180 = arith.constant 180 : index
    %c0_17 = arith.constant 0 : index
    %22 = tpu.strided_load %arg9[%c180, %c0_17] {strides = array<i32: 2, 1>} : memref<869x128xf32, #tpu.memory_space<vmem>>, vector<15x128xf32>
    %c45 = arith.constant 45 : index
    %c0_18 = arith.constant 0 : index
    %23 = vector.load %arg10[%c45, %c0_18] : memref<225x128xf32, #tpu.memory_space<vmem>>, vector<15x128xf32>
    tpu.vector_store %arg10[%c45, %c0_18], %22 {strides = array<i32>} : memref<225x128xf32, #tpu.memory_space<vmem>>, vector<15x128xf32>,
    %c240 = arith.constant 240 : index
    %c0_19 = arith.constant 0 : index
    %24 = tpu.strided_load %arg9[%c240, %c0_19] {strides = array<i32: 2, 1>} : memref<869x128xf32, #tpu.memory_space<vmem>>, vector<15x128xf32>
    %c60_20 = arith.constant 60 : index
    %c0_21 = arith.constant 0 : index
    %25 = vector.load %arg10[%c60_20, %c0_21] : memref<225x128xf32, #tpu.memory_space<vmem>>, vector<15x128xf32>
    tpu.vector_store %arg10[%c60_20, %c0_21], %24 {strides = array<i32>} : memref<225x128xf32, #tpu.memory_space<vmem>>, vector<15x128xf32>,
    %c300 = arith.constant 300 : index
    %c0_22 = arith.constant 0 : index
    %26 = tpu.strided_load %arg9[%c300, %c0_22] {strides = array<i32: 2, 1>} : memref<869x128xf32, #tpu.memory_space<vmem>>, vector<15x128xf32>
    %c75 = arith.constant 75 : index
    %c0_23 = arith.constant 0 : index
    %27 = vector.load %arg10[%c75, %c0_23] : memref<225x128xf32, #tpu.memory_space<vmem>>, vector<15x128xf32>
    tpu.vector_store %arg10[%c75, %c0_23], %26 {strides = array<i32>} : memref<225x128xf32, #tpu.memory_space<vmem>>, vector<15x128xf32>,
    %c360 = arith.constant 360 : index
    %c0_24 = arith.constant 0 : index
    %28 = tpu.strided_load %arg9[%c360, %c0_24] {strides = array<i32: 2, 1>} : memref<869x128xf32, #tpu.memory_space<vmem>>, vector<15x128xf32>
    %c90 = arith.constant 90 : index
    %c0_25 = arith.constant 0 : index
    %29 = vector.load %arg10[%c90, %c0_25] : memref<225x128xf32, #tpu.memory_space<vmem>>, vector<15x128xf32>
    tpu.vector_store %arg10[%c90, %c0_25], %28 {strides = array<i32>} : memref<225x128xf32, #tpu.memory_space<vmem>>, vector<15x128xf32>,
    %c420 = arith.constant 420 : index
    %c0_26 = arith.constant 0 : index
    %30 = tpu.strided_load %arg9[%c420, %c0_26] {strides = array<i32: 2, 1>} : memref<869x128xf32, #tpu.memory_space<vmem>>, vector<15x128xf32>
    %c105 = arith.constant 105 : index
    %c0_27 = arith.constant 0 : index
    %31 = vector.load %arg10[%c105, %c0_27] : memref<225x128xf32, #tpu.memory_space<vmem>>, vector<15x128xf32>
    tpu.vector_store %arg10[%c105, %c0_27], %30 {strides = array<i32>} : memref<225x128xf32, #tpu.memory_space<vmem>>, vector<15x128xf32>,
    %c480 = arith.constant 480 : index
    %c0_28 = arith.constant 0 : index
    %32 = tpu.strided_load %arg9[%c480, %c0_28] {strides = array<i32: 2, 1>} : memref<869x128xf32, #tpu.memory_space<vmem>>, vector<15x128xf32>
    %c120_29 = arith.constant 120 : index
    %c0_30 = arith.constant 0 : index
    %33 = vector.load %arg10[%c120_29, %c0_30] : memref<225x128xf32, #tpu.memory_space<vmem>>, vector<15x128xf32>
    tpu.vector_store %arg10[%c120_29, %c0_30], %32 {strides = array<i32>} : memref<225x128xf32, #tpu.memory_space<vmem>>, vector<15x128xf32>,
    %c540 = arith.constant 540 : index
    %c0_31 = arith.constant 0 : index
    %34 = tpu.strided_load %arg9[%c540, %c0_31] {strides = array<i32: 2, 1>} : memref<869x128xf32, #tpu.memory_space<vmem>>, vector<15x128xf32>
    %c135 = arith.constant 135 : index
    %c0_32 = arith.constant 0 : index
    %35 = vector.load %arg10[%c135, %c0_32] : memref<225x128xf32, #tpu.memory_space<vmem>>, vector<15x128xf32>
    tpu.vector_store %arg10[%c135, %c0_32], %34 {strides = array<i32>} : memref<225x128xf32, #tpu.memory_space<vmem>>, vector<15x128xf32>,
    %c600 = arith.constant 600 : index
    %c0_33 = arith.constant 0 : index
    %36 = tpu.strided_load %arg9[%c600, %c0_33] {strides = array<i32: 2, 1>} : memref<869x128xf32, #tpu.memory_space<vmem>>, vector<15x128xf32>
    %c150 = arith.constant 150 : index
    %c0_34 = arith.constant 0 : index
    %37 = vector.load %arg10[%c150, %c0_34] : memref<225x128xf32, #tpu.memory_space<vmem>>, vector<15x128xf32>
    tpu.vector_store %arg10[%c150, %c0_34], %36 {strides = array<i32>} : memref<225x128xf32, #tpu.memory_space<vmem>>, vector<15x128xf32>,
    %c660 = arith.constant 660 : index
    %c0_35 = arith.constant 0 : index
    %38 = tpu.strided_load %arg9[%c660, %c0_35] {strides = array<i32: 2, 1>} : memref<869x128xf32, #tpu.memory_space<vmem>>, vector<15x128xf32>
    %c165 = arith.constant 165 : index
    %c0_36 = arith.constant 0 : index
    %39 = vector.load %arg10[%c165, %c0_36] : memref<225x128xf32, #tpu.memory_space<vmem>>, vector<15x128xf32>
    tpu.vector_store %arg10[%c165, %c0_36], %38 {strides = array<i32>} : memref<225x128xf32, #tpu.memory_space<vmem>>, vector<15x128xf32>,
    %c720 = arith.constant 720 : index
    %c0_37 = arith.constant 0 : index
    %40 = tpu.strided_load %arg9[%c720, %c0_37] {strides = array<i32: 2, 1>} : memref<869x128xf32, #tpu.memory_space<vmem>>, vector<15x128xf32>
    %c180_38 = arith.constant 180 : index
    %c0_39 = arith.constant 0 : index
    %41 = vector.load %arg10[%c180_38, %c0_39] : memref<225x128xf32, #tpu.memory_space<vmem>>, vector<15x128xf32>
    tpu.vector_store %arg10[%c180_38, %c0_39], %40 {strides = array<i32>} : memref<225x128xf32, #tpu.memory_space<vmem>>, vector<15x128xf32>,
    %c780 = arith.constant 780 : index
    %c0_40 = arith.constant 0 : index
    %42 = tpu.strided_load %arg9[%c780, %c0_40] {strides = array<i32: 2, 1>} : memref<869x128xf32, #tpu.memory_space<vmem>>, vector<15x128xf32>
    %c195 = arith.constant 195 : index
    %c0_41 = arith.constant 0 : index
    %43 = vector.load %arg10[%c195, %c0_41] : memref<225x128xf32, #tpu.memory_space<vmem>>, vector<15x128xf32>
    tpu.vector_store %arg10[%c195, %c0_41], %42 {strides = array<i32>} : memref<225x128xf32, #tpu.memory_space<vmem>>, vector<15x128xf32>,
    %c840 = arith.constant 840 : index
    %c0_42 = arith.constant 0 : index
    %44 = tpu.strided_load %arg9[%c840, %c0_42] {strides = array<i32: 2, 1>} : memref<869x128xf32, #tpu.memory_space<vmem>>, vector<15x128xf32>
    %c210 = arith.constant 210 : index
    %c0_43 = arith.constant 0 : index
    %45 = vector.load %arg10[%c210, %c0_43] : memref<225x128xf32, #tpu.memory_space<vmem>>, vector<15x128xf32>
    tpu.vector_store %arg10[%c210, %c0_43], %44 {strides = array<i32>} : memref<225x128xf32, #tpu.memory_space<vmem>>, vector<15x128xf32>,
    %c0_44 = arith.constant 0 : index
    %c0_45 = arith.constant 0 : index
    %46 = vector.load %arg10[%c0_44, %c0_45] : memref<225x128xf32, #tpu.memory_space<vmem>>, vector<193x128xf32>
    %47 = arith.truncf %46 : vector<193x128xf32> to vector<193x128xbf16>
    %c0_46 = arith.constant 0 : index
    %c0_47 = arith.constant 0 : index
    %48 = vector.load %arg11[%c0_46, %c0_47] : memref<193x1152xbf16, #tpu.memory_space<vmem>>, vector<193x128xbf16>
    tpu.vector_store %arg11[%c0_46, %c0_47], %47 {strides = array<i32>} : memref<193x1152xbf16, #tpu.memory_space<vmem>>, vector<193x128xbf16>,
    %c1 = arith.constant 1 : index
    %c0_48 = arith.constant 0 : index
    %49 = vector.load %arg10[%c1, %c0_48] : memref<225x128xf32, #tpu.memory_space<vmem>>, vector<193x128xf32>
    %50 = arith.truncf %49 : vector<193x128xf32> to vector<193x128xbf16>
    %c0_49 = arith.constant 0 : index
    %c128 = arith.constant 128 : index
    %51 = vector.load %arg11[%c0_49, %c128] : memref<193x1152xbf16, #tpu.memory_space<vmem>>, vector<193x128xbf16>
    tpu.vector_store %arg11[%c0_49, %c128], %50 {strides = array<i32>} : memref<193x1152xbf16, #tpu.memory_space<vmem>>, vector<193x128xbf16>,
    %c2 = arith.constant 2 : index
    %c0_50 = arith.constant 0 : index
    %52 = vector.load %arg10[%c2, %c0_50] : memref<225x128xf32, #tpu.memory_space<vmem>>, vector<193x128xf32>
    %53 = arith.truncf %52 : vector<193x128xf32> to vector<193x128xbf16>
    %c0_51 = arith.constant 0 : index
    %c256 = arith.constant 256 : index
    %54 = vector.load %arg11[%c0_51, %c256] : memref<193x1152xbf16, #tpu.memory_space<vmem>>, vector<193x128xbf16>
    tpu.vector_store %arg11[%c0_51, %c256], %53 {strides = array<i32>} : memref<193x1152xbf16, #tpu.memory_space<vmem>>, vector<193x128xbf16>,
    %c15_52 = arith.constant 15 : index
    %c0_53 = arith.constant 0 : index
    %55 = vector.load %arg10[%c15_52, %c0_53] : memref<225x128xf32, #tpu.memory_space<vmem>>, vector<193x128xf32>
    %56 = arith.truncf %55 : vector<193x128xf32> to vector<193x128xbf16>
    %c0_54 = arith.constant 0 : index
    %c384 = arith.constant 384 : index
    %57 = vector.load %arg11[%c0_54, %c384] : memref<193x1152xbf16, #tpu.memory_space<vmem>>, vector<193x128xbf16>
    tpu.vector_store %arg11[%c0_54, %c384], %56 {strides = array<i32>} : memref<193x1152xbf16, #tpu.memory_space<vmem>>, vector<193x128xbf16>,
    %c16 = arith.constant 16 : index
    %c0_55 = arith.constant 0 : index
    %58 = vector.load %arg10[%c16, %c0_55] : memref<225x128xf32, #tpu.memory_space<vmem>>, vector<193x128xf32>
    %59 = arith.truncf %58 : vector<193x128xf32> to vector<193x128xbf16>
    %c0_56 = arith.constant 0 : index
    %c512 = arith.constant 512 : index
    %60 = vector.load %arg11[%c0_56, %c512] : memref<193x1152xbf16, #tpu.memory_space<vmem>>, vector<193x128xbf16>
    tpu.vector_store %arg11[%c0_56, %c512], %59 {strides = array<i32>} : memref<193x1152xbf16, #tpu.memory_space<vmem>>, vector<193x128xbf16>,
    %c17 = arith.constant 17 : index
    %c0_57 = arith.constant 0 : index
    %61 = vector.load %arg10[%c17, %c0_57] : memref<225x128xf32, #tpu.memory_space<vmem>>, vector<193x128xf32>
    %62 = arith.truncf %61 : vector<193x128xf32> to vector<193x128xbf16>
    %c0_58 = arith.constant 0 : index
    %c640 = arith.constant 640 : index
    %63 = vector.load %arg11[%c0_58, %c640] : memref<193x1152xbf16, #tpu.memory_space<vmem>>, vector<193x128xbf16>
    tpu.vector_store %arg11[%c0_58, %c640], %62 {strides = array<i32>} : memref<193x1152xbf16, #tpu.memory_space<vmem>>, vector<193x128xbf16>,
    %c30_59 = arith.constant 30 : index
    %c0_60 = arith.constant 0 : index
    %64 = vector.load %arg10[%c30_59, %c0_60] : memref<225x128xf32, #tpu.memory_space<vmem>>, vector<193x128xf32>
    %65 = arith.truncf %64 : vector<193x128xf32> to vector<193x128xbf16>
    %c0_61 = arith.constant 0 : index
    %c768 = arith.constant 768 : index
    %66 = vector.load %arg11[%c0_61, %c768] : memref<193x1152xbf16, #tpu.memory_space<vmem>>, vector<193x128xbf16>
    tpu.vector_store %arg11[%c0_61, %c768], %65 {strides = array<i32>} : memref<193x1152xbf16, #tpu.memory_space<vmem>>, vector<193x128xbf16>,
    %c31 = arith.constant 31 : index
    %c0_62 = arith.constant 0 : index
    %67 = vector.load %arg10[%c31, %c0_62] : memref<225x128xf32, #tpu.memory_space<vmem>>, vector<193x128xf32>
    %68 = arith.truncf %67 : vector<193x128xf32> to vector<193x128xbf16>
    %c0_63 = arith.constant 0 : index
    %c896 = arith.constant 896 : index
    %69 = vector.load %arg11[%c0_63, %c896] : memref<193x1152xbf16, #tpu.memory_space<vmem>>, vector<193x128xbf16>
    tpu.vector_store %arg11[%c0_63, %c896], %68 {strides = array<i32>} : memref<193x1152xbf16, #tpu.memory_space<vmem>>, vector<193x128xbf16>,
    %c32 = arith.constant 32 : index
    %c0_64 = arith.constant 0 : index
    %70 = vector.load %arg10[%c32, %c0_64] : memref<225x128xf32, #tpu.memory_space<vmem>>, vector<193x128xf32>
    %71 = arith.truncf %70 : vector<193x128xf32> to vector<193x128xbf16>
    %c0_65 = arith.constant 0 : index
    %c1024 = arith.constant 1024 : index
    %72 = vector.load %arg11[%c0_65, %c1024] : memref<193x1152xbf16, #tpu.memory_space<vmem>>, vector<193x128xbf16>
    tpu.vector_store %arg11[%c0_65, %c1024], %71 {strides = array<i32>} : memref<193x1152xbf16, #tpu.memory_space<vmem>>, vector<193x128xbf16>,
    %c0_66 = arith.constant 0 : index
    %c0_67 = arith.constant 0 : index
    %73 = vector.load %arg11[%c0_66, %c0_67] : memref<193x1152xbf16, #tpu.memory_space<vmem>>, vector<193x1152xbf16>
    %c0_68 = arith.constant 0 : index
    %c0_69 = arith.constant 0 : index
    %74 = vector.load %arg4[%c0_68, %c0_69] : memref<1152x128xbf16, #tpu.memory_space<vmem>>, vector<1152x128xbf16>
    %cst_70 = arith.constant dense<0.000000e+00> : vector<193x128xf32>
    %75 = tpu.matmul %73, %74, %cst_70 {dimension_numbers = #tpu.dot_dimension_numbers<[1], [0], [0], [1], [0, 0, 1, 1], [], []>} : vector<193x1152xbf16>, vector<1152x128xbf16>, vector<193x128xf32> -> vector<193x128xf32>
    %c0_71 = arith.constant 0 : index
    %c0_72 = arith.constant 0 : index
    %76 = vector.load %arg5[%c0_71, %c0_72] : memref<1x128xf32, #tpu.memory_space<vmem>>, vector<1x128xf32>
    %77 = vector.broadcast %76 : vector<1x128xf32> to vector<193x128xf32>
    %78 = arith.addf %75, %77 : vector<193x128xf32>
    %cst_73 = arith.constant 0.000000e+00 : f32
    %79 = vector.broadcast %cst_73 : f32 to vector<193x128xf32>
    %80 = arith.maximumf %78, %79 : vector<193x128xf32>
    %81 = vector.extract_strided_slice %80 {offsets = [0, 0], sizes = [192, 128], strides = [1, 1]} : vector<193x128xf32> to vector<192x128xf32>
    %82 = vector.extract_strided_slice %80 {offsets = [1, 0], sizes = [192, 128], strides = [1, 1]} : vector<193x128xf32> to vector<192x128xf32>
    %83 = arith.maximumf %81, %82 : vector<192x128xf32>
    %84 = vector.extract_strided_slice %83 {offsets = [0, 0], sizes = [177, 128], strides = [1, 1]} : vector<192x128xf32> to vector<177x128xf32>
    %85 = vector.extract_strided_slice %83 {offsets = [15, 0], sizes = [177, 128], strides = [1, 1]} : vector<192x128xf32> to vector<177x128xf32>
    %86 = arith.maximumf %84, %85 : vector<177x128xf32>
    %c0_74 = arith.constant 0 : index
    %c0_75 = arith.constant 0 : index
    %87 = vector.load %arg12[%c0_74, %c0_75] : memref<177x128xf32, #tpu.memory_space<vmem>>, vector<177x128xf32>
    tpu.vector_store %arg12[%c0_74, %c0_75], %86 {strides = array<i32>} : memref<177x128xf32, #tpu.memory_space<vmem>>, vector<177x128xf32>,
    %c0_76 = arith.constant 0 : index
    %c0_77 = arith.constant 0 : index
    %88 = tpu.strided_load %arg12[%c0_76, %c0_77] {strides = array<i32: 2, 1>} : memref<177x128xf32, #tpu.memory_space<vmem>>, vector<6x128xf32>
    %c0_78 = arith.constant 0 : index
    %c0_79 = arith.constant 0 : index
    %89 = vector.load %arg13[%c0_78, %c0_79] : memref<36x128xf32, #tpu.memory_space<vmem>>, vector<6x128xf32>
    tpu.vector_store %arg13[%c0_78, %c0_79], %88 {strides = array<i32>} : memref<36x128xf32, #tpu.memory_space<vmem>>, vector<6x128xf32>,
    %c30_80 = arith.constant 30 : index
    %c0_81 = arith.constant 0 : index
    %90 = tpu.strided_load %arg12[%c30_80, %c0_81] {strides = array<i32: 2, 1>} : memref<177x128xf32, #tpu.memory_space<vmem>>, vector<6x128xf32>
    %c6 = arith.constant 6 : index
    %c0_82 = arith.constant 0 : index
    %91 = vector.load %arg13[%c6, %c0_82] : memref<36x128xf32, #tpu.memory_space<vmem>>, vector<6x128xf32>
    tpu.vector_store %arg13[%c6, %c0_82], %90 {strides = array<i32>} : memref<36x128xf32, #tpu.memory_space<vmem>>, vector<6x128xf32>,
    %c60_83 = arith.constant 60 : index
    %c0_84 = arith.constant 0 : index
    %92 = tpu.strided_load %arg12[%c60_83, %c0_84] {strides = array<i32: 2, 1>} : memref<177x128xf32, #tpu.memory_space<vmem>>, vector<6x128xf32>
    %c12 = arith.constant 12 : index
    %c0_85 = arith.constant 0 : index
    %93 = vector.load %arg13[%c12, %c0_85] : memref<36x128xf32, #tpu.memory_space<vmem>>, vector<6x128xf32>
    tpu.vector_store %arg13[%c12, %c0_85], %92 {strides = array<i32>} : memref<36x128xf32, #tpu.memory_space<vmem>>, vector<6x128xf32>,
    %c90_86 = arith.constant 90 : index
    %c0_87 = arith.constant 0 : index
    %94 = tpu.strided_load %arg12[%c90_86, %c0_87] {strides = array<i32: 2, 1>} : memref<177x128xf32, #tpu.memory_space<vmem>>, vector<6x128xf32>
    %c18 = arith.constant 18 : index
    %c0_88 = arith.constant 0 : index
    %95 = vector.load %arg13[%c18, %c0_88] : memref<36x128xf32, #tpu.memory_space<vmem>>, vector<6x128xf32>
    tpu.vector_store %arg13[%c18, %c0_88], %94 {strides = array<i32>} : memref<36x128xf32, #tpu.memory_space<vmem>>, vector<6x128xf32>,
    %c120_89 = arith.constant 120 : index
    %c0_90 = arith.constant 0 : index
    %96 = tpu.strided_load %arg12[%c120_89, %c0_90] {strides = array<i32: 2, 1>} : memref<177x128xf32, #tpu.memory_space<vmem>>, vector<6x128xf32>
    %c24 = arith.constant 24 : index
    %c0_91 = arith.constant 0 : index
    %97 = vector.load %arg13[%c24, %c0_91] : memref<36x128xf32, #tpu.memory_space<vmem>>, vector<6x128xf32>
    tpu.vector_store %arg13[%c24, %c0_91], %96 {strides = array<i32>} : memref<36x128xf32, #tpu.memory_space<vmem>>, vector<6x128xf32>,
    %c150_92 = arith.constant 150 : index
    %c0_93 = arith.constant 0 : index
    %98 = tpu.strided_load %arg12[%c150_92, %c0_93] {strides = array<i32: 2, 1>} : memref<177x128xf32, #tpu.memory_space<vmem>>, vector<6x128xf32>
    %c30_94 = arith.constant 30 : index
    %c0_95 = arith.constant 0 : index
    %99 = vector.load %arg13[%c30_94, %c0_95] : memref<36x128xf32, #tpu.memory_space<vmem>>, vector<6x128xf32>
    tpu.vector_store %arg13[%c30_94, %c0_95], %98 {strides = array<i32>} : memref<36x128xf32, #tpu.memory_space<vmem>>, vector<6x128xf32>,
    %c0_96 = arith.constant 0 : index
    %c0_97 = arith.constant 0 : index
    %100 = vector.load %arg13[%c0_96, %c0_97] : memref<36x128xf32, #tpu.memory_space<vmem>>, vector<22x128xf32>
    %101 = arith.truncf %100 : vector<22x128xf32> to vector<22x128xbf16>
    %c0_98 = arith.constant 0 : index
    %c0_99 = arith.constant 0 : index
    %102 = vector.load %arg14[%c0_98, %c0_99] : memref<22x1152xbf16, #tpu.memory_space<vmem>>, vector<22x128xbf16>
    tpu.vector_store %arg14[%c0_98, %c0_99], %101 {strides = array<i32>} : memref<22x1152xbf16, #tpu.memory_space<vmem>>, vector<22x128xbf16>,
    %c1_100 = arith.constant 1 : index
    %c0_101 = arith.constant 0 : index
    %103 = vector.load %arg13[%c1_100, %c0_101] : memref<36x128xf32, #tpu.memory_space<vmem>>, vector<22x128xf32>
    %104 = arith.truncf %103 : vector<22x128xf32> to vector<22x128xbf16>
    %c0_102 = arith.constant 0 : index
    %c128_103 = arith.constant 128 : index
    %105 = vector.load %arg14[%c0_102, %c128_103] : memref<22x1152xbf16, #tpu.memory_space<vmem>>, vector<22x128xbf16>
    tpu.vector_store %arg14[%c0_102, %c128_103], %104 {strides = array<i32>} : memref<22x1152xbf16, #tpu.memory_space<vmem>>, vector<22x128xbf16>,
    %c2_104 = arith.constant 2 : index
    %c0_105 = arith.constant 0 : index
    %106 = vector.load %arg13[%c2_104, %c0_105] : memref<36x128xf32, #tpu.memory_space<vmem>>, vector<22x128xf32>
    %107 = arith.truncf %106 : vector<22x128xf32> to vector<22x128xbf16>
    %c0_106 = arith.constant 0 : index
    %c256_107 = arith.constant 256 : index
    %108 = vector.load %arg14[%c0_106, %c256_107] : memref<22x1152xbf16, #tpu.memory_space<vmem>>, vector<22x128xbf16>
    tpu.vector_store %arg14[%c0_106, %c256_107], %107 {strides = array<i32>} : memref<22x1152xbf16, #tpu.memory_space<vmem>>, vector<22x128xbf16>,
    %c6_108 = arith.constant 6 : index
    %c0_109 = arith.constant 0 : index
    %109 = vector.load %arg13[%c6_108, %c0_109] : memref<36x128xf32, #tpu.memory_space<vmem>>, vector<22x128xf32>
    %110 = arith.truncf %109 : vector<22x128xf32> to vector<22x128xbf16>
    %c0_110 = arith.constant 0 : index
    %c384_111 = arith.constant 384 : index
    %111 = vector.load %arg14[%c0_110, %c384_111] : memref<22x1152xbf16, #tpu.memory_space<vmem>>, vector<22x128xbf16>
    tpu.vector_store %arg14[%c0_110, %c384_111], %110 {strides = array<i32>} : memref<22x1152xbf16, #tpu.memory_space<vmem>>, vector<22x128xbf16>,
    %c7 = arith.constant 7 : index
    %c0_112 = arith.constant 0 : index
    %112 = vector.load %arg13[%c7, %c0_112] : memref<36x128xf32, #tpu.memory_space<vmem>>, vector<22x128xf32>
    %113 = arith.truncf %112 : vector<22x128xf32> to vector<22x128xbf16>
    %c0_113 = arith.constant 0 : index
    %c512_114 = arith.constant 512 : index
    %114 = vector.load %arg14[%c0_113, %c512_114] : memref<22x1152xbf16, #tpu.memory_space<vmem>>, vector<22x128xbf16>
    tpu.vector_store %arg14[%c0_113, %c512_114], %113 {strides = array<i32>} : memref<22x1152xbf16, #tpu.memory_space<vmem>>, vector<22x128xbf16>,
    %c8 = arith.constant 8 : index
    %c0_115 = arith.constant 0 : index
    %115 = vector.load %arg13[%c8, %c0_115] : memref<36x128xf32, #tpu.memory_space<vmem>>, vector<22x128xf32>
    %116 = arith.truncf %115 : vector<22x128xf32> to vector<22x128xbf16>
    %c0_116 = arith.constant 0 : index
    %c640_117 = arith.constant 640 : index
    %117 = vector.load %arg14[%c0_116, %c640_117] : memref<22x1152xbf16, #tpu.memory_space<vmem>>, vector<22x128xbf16>
    tpu.vector_store %arg14[%c0_116, %c640_117], %116 {strides = array<i32>} : memref<22x1152xbf16, #tpu.memory_space<vmem>>, vector<22x128xbf16>,
    %c12_118 = arith.constant 12 : index
    %c0_119 = arith.constant 0 : index
    %118 = vector.load %arg13[%c12_118, %c0_119] : memref<36x128xf32, #tpu.memory_space<vmem>>, vector<22x128xf32>
    %119 = arith.truncf %118 : vector<22x128xf32> to vector<22x128xbf16>
    %c0_120 = arith.constant 0 : index
    %c768_121 = arith.constant 768 : index
    %120 = vector.load %arg14[%c0_120, %c768_121] : memref<22x1152xbf16, #tpu.memory_space<vmem>>, vector<22x128xbf16>
    tpu.vector_store %arg14[%c0_120, %c768_121], %119 {strides = array<i32>} : memref<22x1152xbf16, #tpu.memory_space<vmem>>, vector<22x128xbf16>,
    %c13 = arith.constant 13 : index
    %c0_122 = arith.constant 0 : index
    %121 = vector.load %arg13[%c13, %c0_122] : memref<36x128xf32, #tpu.memory_space<vmem>>, vector<22x128xf32>
    %122 = arith.truncf %121 : vector<22x128xf32> to vector<22x128xbf16>
    %c0_123 = arith.constant 0 : index
    %c896_124 = arith.constant 896 : index
    %123 = vector.load %arg14[%c0_123, %c896_124] : memref<22x1152xbf16, #tpu.memory_space<vmem>>, vector<22x128xbf16>
    tpu.vector_store %arg14[%c0_123, %c896_124], %122 {strides = array<i32>} : memref<22x1152xbf16, #tpu.memory_space<vmem>>, vector<22x128xbf16>,
    %c14 = arith.constant 14 : index
    %c0_125 = arith.constant 0 : index
    %124 = vector.load %arg13[%c14, %c0_125] : memref<36x128xf32, #tpu.memory_space<vmem>>, vector<22x128xf32>
    %125 = arith.truncf %124 : vector<22x128xf32> to vector<22x128xbf16>
    %c0_126 = arith.constant 0 : index
    %c1024_127 = arith.constant 1024 : index
    %126 = vector.load %arg14[%c0_126, %c1024_127] : memref<22x1152xbf16, #tpu.memory_space<vmem>>, vector<22x128xbf16>
    tpu.vector_store %arg14[%c0_126, %c1024_127], %125 {strides = array<i32>} : memref<22x1152xbf16, #tpu.memory_space<vmem>>, vector<22x128xbf16>,
    %c0_128 = arith.constant 0 : index
    %c0_129 = arith.constant 0 : index
    %127 = vector.load %arg14[%c0_128, %c0_129] : memref<22x1152xbf16, #tpu.memory_space<vmem>>, vector<22x1152xbf16>
    %c0_130 = arith.constant 0 : index
    %c0_131 = arith.constant 0 : index
    %128 = vector.load %arg6[%c0_130, %c0_131] : memref<1152x128xbf16, #tpu.memory_space<vmem>>, vector<1152x128xbf16>
    %cst_132 = arith.constant dense<0.000000e+00> : vector<22x128xf32>
    %129 = tpu.matmul %127, %128, %cst_132 {dimension_numbers = #tpu.dot_dimension_numbers<[1], [0], [0], [1], [0, 0, 1, 1], [], []>} : vector<22x1152xbf16>, vector<1152x128xbf16>, vector<22x128xf32> -> vector<22x128xf32>
    %c0_133 = arith.constant 0 : index
    %c0_134 = arith.constant 0 : index
    %130 = vector.load %arg7[%c0_133, %c0_134] : memref<1x128xf32, #tpu.memory_space<vmem>>, vector<1x128xf32>
    %131 = vector.broadcast %130 : vector<1x128xf32> to vector<22x128xf32>
    %132 = arith.addf %129, %131 : vector<22x128xf32>
    %cst_135 = arith.constant 0.000000e+00 : f32
    %133 = vector.broadcast %cst_135 : f32 to vector<22x128xf32>
    %134 = arith.maximumf %132, %133 : vector<22x128xf32>
    %135 = vector.extract_strided_slice %134 {offsets = [0, 0], sizes = [4, 128], strides = [1, 1]} : vector<22x128xf32> to vector<4x128xf32>
    %c0_136 = arith.constant 0 : index
    %c0_137 = arith.constant 0 : index
    %c0_138 = arith.constant 0 : index
    %136 = vector.load %arg8[%c0_136, %c0_137, %c0_138] : memref<1x16x128xf32, #tpu.memory_space<vmem>>, vector<1x4x128xf32>
    %137 = vector.shape_cast %136 : vector<1x4x128xf32> to vector<4x128xf32>
    %138 = vector.shape_cast %135 : vector<4x128xf32> to vector<1x4x128xf32>
    tpu.vector_store %arg8[%c0_136, %c0_137, %c0_138], %138 {strides = array<i32>} : memref<1x16x128xf32, #tpu.memory_space<vmem>>, vector<1x4x128xf32>,
    %139 = vector.extract_strided_slice %134 {offsets = [6, 0], sizes = [4, 128], strides = [1, 1]} : vector<22x128xf32> to vector<4x128xf32>
    %c0_139 = arith.constant 0 : index
    %c4 = arith.constant 4 : index
    %c0_140 = arith.constant 0 : index
    %140 = vector.load %arg8[%c0_139, %c4, %c0_140] : memref<1x16x128xf32, #tpu.memory_space<vmem>>, vector<1x4x128xf32>
    %141 = vector.shape_cast %140 : vector<1x4x128xf32> to vector<4x128xf32>
    %142 = vector.shape_cast %139 : vector<4x128xf32> to vector<1x4x128xf32>
    tpu.vector_store %arg8[%c0_139, %c4, %c0_140], %142 {strides = array<i32>} : memref<1x16x128xf32, #tpu.memory_space<vmem>>, vector<1x4x128xf32>,
    %143 = vector.extract_strided_slice %134 {offsets = [12, 0], sizes = [4, 128], strides = [1, 1]} : vector<22x128xf32> to vector<4x128xf32>
    %c0_141 = arith.constant 0 : index
    %c8_142 = arith.constant 8 : index
    %c0_143 = arith.constant 0 : index
    %144 = vector.load %arg8[%c0_141, %c8_142, %c0_143] : memref<1x16x128xf32, #tpu.memory_space<vmem>>, vector<1x4x128xf32>
    %145 = vector.shape_cast %144 : vector<1x4x128xf32> to vector<4x128xf32>
    %146 = vector.shape_cast %143 : vector<4x128xf32> to vector<1x4x128xf32>
    tpu.vector_store %arg8[%c0_141, %c8_142, %c0_143], %146 {strides = array<i32>} : memref<1x16x128xf32, #tpu.memory_space<vmem>>, vector<1x4x128xf32>,
    %147 = vector.extract_strided_slice %134 {offsets = [18, 0], sizes = [4, 128], strides = [1, 1]} : vector<22x128xf32> to vector<4x128xf32>
    %c0_144 = arith.constant 0 : index
    %c12_145 = arith.constant 12 : index
    %c0_146 = arith.constant 0 : index
    %148 = vector.load %arg8[%c0_144, %c12_145, %c0_146] : memref<1x16x128xf32, #tpu.memory_space<vmem>>, vector<1x4x128xf32>
    %149 = vector.shape_cast %148 : vector<1x4x128xf32> to vector<4x128xf32>
    %150 = vector.shape_cast %147 : vector<4x128xf32> to vector<1x4x128xf32>
    tpu.vector_store %arg8[%c0_144, %c12_145, %c0_146], %150 {strides = array<i32>} : memref<1x16x128xf32, #tpu.memory_space<vmem>>, vector<1x4x128xf32>,
    return
  }
  func.func @transform_0(%arg0: i32) -> (i32, i32, i32) {
    %c0_i32 = arith.constant 0 : i32
    %c0_i32_0 = arith.constant 0 : i32
    %c0_i32_1 = arith.constant 0 : i32
    return %arg0, %c0_i32, %c0_i32_0 : i32, i32, i32
  }
  func.func @transform_1(%arg0: i32) -> (i32, i32) {
    %c0_i32 = arith.constant 0 : i32
    %c0_i32_0 = arith.constant 0 : i32
    %c0_i32_1 = arith.constant 0 : i32
    return %c0_i32, %c0_i32_0 : i32, i32
  }
  func.func @transform_2(%arg0: i32) -> (i32, i32) {
    %c0_i32 = arith.constant 0 : i32
    %c0_i32_0 = arith.constant 0 : i32
    %c0_i32_1 = arith.constant 0 : i32
    return %c0_i32, %c0_i32_0 : i32, i32
  }
  func.func @transform_3(%arg0: i32) -> (i32, i32) {
    %c0_i32 = arith.constant 0 : i32
    %c0_i32_0 = arith.constant 0 : i32
    %c0_i32_1 = arith.constant 0 : i32
    return %c0_i32, %c0_i32_0 : i32, i32
  }
  func.func @transform_4(%arg0: i32) -> (i32, i32) {
    %c0_i32 = arith.constant 0 : i32
    %c0_i32_0 = arith.constant 0 : i32
    %c0_i32_1 = arith.constant 0 : i32
    return %c0_i32, %c0_i32_0 : i32, i32
  }
  func.func @transform_5(%arg0: i32) -> (i32, i32) {
    %c0_i32 = arith.constant 0 : i32
    %c0_i32_0 = arith.constant 0 : i32
    %c0_i32_1 = arith.constant 0 : i32
    return %c0_i32, %c0_i32_0 : i32, i32
  }
  func.func @transform_6(%arg0: i32) -> (i32, i32) {
    %c0_i32 = arith.constant 0 : i32
    %c0_i32_0 = arith.constant 0 : i32
    %c0_i32_1 = arith.constant 0 : i32
    return %c0_i32, %c0_i32_0 : i32, i32
  }
  func.func @transform_7(%arg0: i32) -> (i32, i32, i32) {
    %c0_i32 = arith.constant 0 : i32
    %c0_i32_0 = arith.constant 0 : i32
    %c0_i32_1 = arith.constant 0 : i32
    return %arg0, %c0_i32, %c0_i32_0 : i32, i32, i32
  }
}

module attributes {stable_mosaic.version = 11 : i64} {
  func.func @_fc_kernel(%arg0: memref<2x2048xf32, #tpu.memory_space<vmem>>, %arg1: memref<2048x128xbf16, #tpu.memory_space<vmem>>, %arg2: memref<1x128xf32, #tpu.memory_space<vmem>>, %arg3: memref<2x128xf32, #tpu.memory_space<vmem>>) attributes {dimension_semantics = [], scalar_prefetch = 0 : i64, scratch_operands = 0 : i64, tpu.core_type = #tpu.core_type<tc>} {
    %c0 = arith.constant 0 : index
    %c0_0 = arith.constant 0 : index
    %0 = vector.load %arg0[%c0, %c0_0] : memref<2x2048xf32, #tpu.memory_space<vmem>>, vector<2x2048xf32>
    %1 = arith.truncf %0 : vector<2x2048xf32> to vector<2x2048xbf16>
    %c0_1 = arith.constant 0 : index
    %c0_2 = arith.constant 0 : index
    %2 = vector.load %arg1[%c0_1, %c0_2] : memref<2048x128xbf16, #tpu.memory_space<vmem>>, vector<2048x128xbf16>
    %cst = arith.constant dense<0.000000e+00> : vector<2x128xf32>
    %3 = tpu.matmul %1, %2, %cst {dimension_numbers = #tpu.dot_dimension_numbers<[1], [0], [0], [1], [0, 0, 1, 1], [], []>} : vector<2x2048xbf16>, vector<2048x128xbf16>, vector<2x128xf32> -> vector<2x128xf32>
    %c0_3 = arith.constant 0 : index
    %c0_4 = arith.constant 0 : index
    %4 = vector.load %arg2[%c0_3, %c0_4] : memref<1x128xf32, #tpu.memory_space<vmem>>, vector<1x128xf32>
    %5 = vector.broadcast %4 : vector<1x128xf32> to vector<2x128xf32>
    %6 = arith.addf %3, %5 : vector<2x128xf32>
    %c0_5 = arith.constant 0 : index
    %c0_6 = arith.constant 0 : index
    %7 = vector.load %arg3[%c0_5, %c0_6] : memref<2x128xf32, #tpu.memory_space<vmem>>, vector<2x128xf32>
    tpu.vector_store %arg3[%c0_5, %c0_6], %6 {strides = array<i32>} : memref<2x128xf32, #tpu.memory_space<vmem>>, vector<2x128xf32>,
    return
  }
}

</mosaic_0001>

<llo_original>
// kernel: cnn_cifar_forward.3
$region0: #{cnn_cifar_forward.3}
  #allocation0 [shape = 'u32[]', space=smem, size = 0x4, offset = 0x4, fixed_abs, tag = 'smem constant byte address 0x4 - core index']
  #allocation1 [shape = 'u32[144,128]{1,0:T(1,128)}', space=vmem, size = 0x12000, scoped, tag = 'internal scratch']
  %s0 = inlined_call_operand.vmem [shape: f32[2,2048], index: 0, kind: input, shape index: {}]
  %s1 = inlined_call_operand.vmem [shape: bf16[2048,128], index: 1, kind: input, shape index: {}]
  %s2 = inlined_call_operand.vmem [shape: f32[1,128], index: 2, kind: input, shape index: {}]
  %s3 = inlined_call_operand.hbm [shape: f32[2,128], index: 3, kind: output, shape index: {}]
  %s4 = sld [smem:[#allocation0]]
  $region22: #{cnn_cifar_forward.3} parent=0
    _
  %s6 = ssub.s32 1, %s4
  %s7 = scalar_select 0, %s6, %s4
  $region1: #{cnn_cifar_forward.3} parent=0
    #allocation2 [shape = 'u8[1024]{0}', space=vmem, size = 0x400, scoped, tag = 'output window, operand 0, single buffered']
    #allocation3 [shape = 's32[1]{0}', space=sflag, size = 0x4, scoped, tag = 'scoped memory for cnn_cifar_forward.3']
    %8 = vsyncpa [#allocation3], 0
    // Predicated region
    $region2: #{cnn_cifar_forward.3} parent=1 // pred_check
      _
    $region3: #{cnn_cifar_forward.3} parent=1 // pred_check_branch
      %10 = sbr.rel (0) target = $region5
    $region4: #{cnn_cifar_forward.3} parent=1 // pred_region
      _
    $region5: #{cnn_cifar_forward.3} parent=1 // pred_fallthru
      _
    // Predicated region
    $region6: #{cnn_cifar_forward.3} parent=1 // pred_check
      _
    $region7: #{cnn_cifar_forward.3} parent=1 // pred_check_branch
      %12 = sbr.rel (0) target = $region9
    $region8: #{cnn_cifar_forward.3} parent=1 // pred_region
      _
    $region9: #{cnn_cifar_forward.3} parent=1 // pred_fallthru
      _
    // Predicated region
    $region10: #{cnn_cifar_forward.3} parent=1 // pred_check
      _
    $region11: #{cnn_cifar_forward.3} parent=1 // pred_check_branch
      %14 = sbr.rel (0) target = $region13
    $region12: #{cnn_cifar_forward.3} parent=1 // pred_region
      _
    $region13: #{cnn_cifar_forward.3} parent=1 // pred_fallthru
      _
    %v16 = vld [vmem:[%s0] sm:$0xff]
    %v17 = vld [vmem:[%s0 + $0x8] sm:$0xff]
    %v18 = vld [vmem:[%s0 + $0x10] sm:$0xff]
    %v19 = vld [vmem:[%s0 + $0x18] sm:$0xff]
    %v24 = vcombine.high %v16, %v16
    %v26 = vunpack.c.l.s4 1983009808
    %v27 = vunpack.c.0.s8 %v26
    %v28 = vlaneseq
    %v29 = vshrl.u32 %v28, 7
    %v30 = vsub.s32 %v27, %v29
    %v31 = vrot.slane %v16, %v30
    %v33 = vunpack.c.l.s4 1983009808
    %v34 = vunpack.c.0.s8 %v33
    %v35 = vlaneseq
    %v36 = vshrl.u32 %v35, 7
    %v37 = vsub.s32 %v34, %v36
    %v38 = vrot.slane %v24, %v37
    %v39 = vcombine.high %v31, %v31
    %v40 = vcombine.high %v38, %v38
    %v41 = vcombine.high %v17, %v17
    %v43 = vunpack.c.l.s4 1983009808
    %v44 = vunpack.c.0.s8 %v43
    %v45 = vlaneseq
    %v46 = vshrl.u32 %v45, 7
    %v47 = vsub.s32 %v44, %v46
    %v48 = vrot.slane %v17, %v47
    %v50 = vunpack.c.l.s4 1983009808
    %v51 = vunpack.c.0.s8 %v50
    %v52 = vlaneseq
    %v53 = vshrl.u32 %v52, 7
    %v54 = vsub.s32 %v51, %v53
    %v55 = vrot.slane %v41, %v54
    %v56 = vcombine.high %v48, %v48
    %v57 = vcombine.high %v55, %v55
    %v58 = vcombine.high %v18, %v18
    %v60 = vunpack.c.l.s4 1983009808
    %v61 = vunpack.c.0.s8 %v60
    %v62 = vlaneseq
    %v63 = vshrl.u32 %v62, 7
    %v64 = vsub.s32 %v61, %v63
    %v65 = vrot.slane %v18, %v64
    %v67 = vunpack.c.l.s4 1983009808
    %v68 = vunpack.c.0.s8 %v67
    %v69 = vlaneseq
    %v70 = vshrl.u32 %v69, 7
    %v71 = vsub.s32 %v68, %v70
    %v72 = vrot.slane %v58, %v71
    %v73 = vcombine.high %v65, %v65
    %v74 = vcombine.high %v72, %v72
    %v75 = vcombine.high %v19, %v19
    %v77 = vunpack.c.l.s4 1983009808
    %v78 = vunpack.c.0.s8 %v77
    %v79 = vlaneseq
    %v80 = vshrl.u32 %v79, 7
    %v81 = vsub.s32 %v78, %v80
    %v82 = vrot.slane %v19, %v81
    %v84 = vunpack.c.l.s4 1983009808
    %v85 = vunpack.c.0.s8 %v84
    %v86 = vlaneseq
    %v87 = vshrl.u32 %v86, 7
    %v88 = vsub.s32 %v85, %v87
    %v89 = vrot.slane %v75, %v88
    %v90 = vcombine.high %v82, %v82
    %v91 = vcombine.high %v89, %v89
    %v108 = vpack.c.bf16 %v31, %v31
    %v109 = vpack.c.bf16 %v39, %v39
    %v110 = vpack.c.bf16 %v38, %v38
    %v111 = vpack.c.bf16 %v40, %v40
    %v112 = vpack.c.bf16 %v48, %v48
    %v113 = vpack.c.bf16 %v56, %v56
    %v114 = vpack.c.bf16 %v55, %v55
    %v115 = vpack.c.bf16 %v57, %v57
    %v116 = vpack.c.bf16 %v65, %v65
    %v117 = vpack.c.bf16 %v73, %v73
    %v118 = vpack.c.bf16 %v72, %v72
    %v119 = vpack.c.bf16 %v74, %v74
    %v120 = vpack.c.bf16 %v82, %v82
    %v121 = vpack.c.bf16 %v90, %v90
    %v122 = vpack.c.bf16 %v89, %v89
    %v123 = vpack.c.bf16 %v91, %v91
    %v124 = vld [vmem:[%s1] sm:$0xf]
    %v125 = vld [vmem:[%s1 + $0x4] sm:$0xf]
    %v126 = vld [vmem:[%s1 + $0x8] sm:$0xf]
    %v127 = vld [vmem:[%s1 + $0xc] sm:$0xf]
    %v128 = vld [vmem:[%s1 + $0x10] sm:$0xf]
    %v129 = vld [vmem:[%s1 + $0x14] sm:$0xf]
    %v130 = vld [vmem:[%s1 + $0x18] sm:$0xf]
    %v131 = vld [vmem:[%s1 + $0x1c] sm:$0xf]
    %v132 = vld [vmem:[%s1 + $0x20] sm:$0xf]
    %v133 = vld [vmem:[%s1 + $0x24] sm:$0xf]
    %v134 = vld [vmem:[%s1 + $0x28] sm:$0xf]
    %v135 = vld [vmem:[%s1 + $0x2c] sm:$0xf]
    %v136 = vld [vmem:[%s1 + $0x30] sm:$0xf]
    %v137 = vld [vmem:[%s1 + $0x34] sm:$0xf]
    %v138 = vld [vmem:[%s1 + $0x38] sm:$0xf]
    %v139 = vld [vmem:[%s1 + $0x3c] sm:$0xf]
    %v140 = vld [vmem:[%s1 + $0x40] sm:$0xf]
    %v141 = vld [vmem:[%s1 + $0x44] sm:$0xf]
    %v142 = vld [vmem:[%s1 + $0x48] sm:$0xf]
    %v143 = vld [vmem:[%s1 + $0x4c] sm:$0xf]
    %v144 = vld [vmem:[%s1 + $0x50] sm:$0xf]
    %v145 = vld [vmem:[%s1 + $0x54] sm:$0xf]
    %v146 = vld [vmem:[%s1 + $0x58] sm:$0xf]
    %v147 = vld [vmem:[%s1 + $0x5c] sm:$0xf]
    %v148 = vld [vmem:[%s1 + $0x60] sm:$0xf]
    %v149 = vld [vmem:[%s1 + $0x64] sm:$0xf]
    %v150 = vld [vmem:[%s1 + $0x68] sm:$0xf]
    %v151 = vld [vmem:[%s1 + $0x6c] sm:$0xf]
    %v152 = vld [vmem:[%s1 + $0x70] sm:$0xf]
    %v153 = vld [vmem:[%s1 + $0x74] sm:$0xf]
    %v154 = vld [vmem:[%s1 + $0x78] sm:$0xf]
    %v155 = vld [vmem:[%s1 + $0x7c] sm:$0xf]
    %v156 = vld [vmem:[%s1 + $0x80] sm:$0xf]
    %v157 = vld [vmem:[%s1 + $0x84] sm:$0xf]
    %v158 = vld [vmem:[%s1 + $0x88] sm:$0xf]
    %v159 = vld [vmem:[%s1 + $0x8c] sm:$0xf]
    %v160 = vld [vmem:[%s1 + $0x90] sm:$0xf]
    %v161 = vld [vmem:[%s1 + $0x94] sm:$0xf]
    %v162 = vld [vmem:[%s1 + $0x98] sm:$0xf]
    %v163 = vld [vmem:[%s1 + $0x9c] sm:$0xf]
    %v164 = vld [vmem:[%s1 + $0xa0] sm:$0xf]
    %v165 = vld [vmem:[%s1 + $0xa4] sm:$0xf]
    %v166 = vld [vmem:[%s1 + $0xa8] sm:$0xf]
    %v167 = vld [vmem:[%s1 + $0xac] sm:$0xf]
    %v168 = vld [vmem:[%s1 + $0xb0] sm:$0xf]
    %v169 = vld [vmem:[%s1 + $0xb4] sm:$0xf]
    %v170 = vld [vmem:[%s1 + $0xb8] sm:$0xf]
    %v171 = vld [vmem:[%s1 + $0xbc] sm:$0xf]
    %v172 = vld [vmem:[%s1 + $0xc0] sm:$0xf]
    %v173 = vld [vmem:[%s1 + $0xc4] sm:$0xf]
    %v174 = vld [vmem:[%s1 + $0xc8] sm:$0xf]
    %v175 = vld [vmem:[%s1 + $0xcc] sm:$0xf]
    %v176 = vld [vmem:[%s1 + $0xd0] sm:$0xf]
    %v177 = vld [vmem:[%s1 + $0xd4] sm:$0xf]
    %v178 = vld [vmem:[%s1 + $0xd8] sm:$0xf]
    %v179 = vld [vmem:[%s1 + $0xdc] sm:$0xf]
    %v180 = vld [vmem:[%s1 + $0xe0] sm:$0xf]
    %v181 = vld [vmem:[%s1 + $0xe4] sm:$0xf]
    %v182 = vld [vmem:[%s1 + $0xe8] sm:$0xf]
    %v183 = vld [vmem:[%s1 + $0xec] sm:$0xf]
    %v184 = vld [vmem:[%s1 + $0xf0] sm:$0xf]
    %v185 = vld [vmem:[%s1 + $0xf4] sm:$0xf]
    %v186 = vld [vmem:[%s1 + $0xf8] sm:$0xf]
    %v187 = vld [vmem:[%s1 + $0xfc] sm:$0xf]
    %v188 = vld [vmem:[%s1 + $0x100] sm:$0xf]
    %v189 = vld [vmem:[%s1 + $0x104] sm:$0xf]
    %v190 = vld [vmem:[%s1 + $0x108] sm:$0xf]
    %v191 = vld [vmem:[%s1 + $0x10c] sm:$0xf]
    %v192 = vld [vmem:[%s1 + $0x110] sm:$0xf]
    %v193 = vld [vmem:[%s1 + $0x114] sm:$0xf]
    %v194 = vld [vmem:[%s1 + $0x118] sm:$0xf]
    %v195 = vld [vmem:[%s1 + $0x11c] sm:$0xf]
    %v196 = vld [vmem:[%s1 + $0x120] sm:$0xf]
    %v197 = vld [vmem:[%s1 + $0x124] sm:$0xf]
    %v198 = vld [vmem:[%s1 + $0x128] sm:$0xf]
    %v199 = vld [vmem:[%s1 + $0x12c] sm:$0xf]
    %v200 = vld [vmem:[%s1 + $0x130] sm:$0xf]
    %v201 = vld [vmem:[%s1 + $0x134] sm:$0xf]
    %v202 = vld [vmem:[%s1 + $0x138] sm:$0xf]
    %v203 = vld [vmem:[%s1 + $0x13c] sm:$0xf]
    %v204 = vld [vmem:[%s1 + $0x140] sm:$0xf]
    %v205 = vld [vmem:[%s1 + $0x144] sm:$0xf]
    %v206 = vld [vmem:[%s1 + $0x148] sm:$0xf]
    %v207 = vld [vmem:[%s1 + $0x14c] sm:$0xf]
    %v208 = vld [vmem:[%s1 + $0x150] sm:$0xf]
    %v209 = vld [vmem:[%s1 + $0x154] sm:$0xf]
    %v210 = vld [vmem:[%s1 + $0x158] sm:$0xf]
    %v211 = vld [vmem:[%s1 + $0x15c] sm:$0xf]
    %v212 = vld [vmem:[%s1 + $0x160] sm:$0xf]
    %v213 = vld [vmem:[%s1 + $0x164] sm:$0xf]
    %v214 = vld [vmem:[%s1 + $0x168] sm:$0xf]
    %v215 = vld [vmem:[%s1 + $0x16c] sm:$0xf]
    %v216 = vld [vmem:[%s1 + $0x170] sm:$0xf]
    %v217 = vld [vmem:[%s1 + $0x174] sm:$0xf]
    %v218 = vld [vmem:[%s1 + $0x178] sm:$0xf]
    %v219 = vld [vmem:[%s1 + $0x17c] sm:$0xf]
    %v220 = vld [vmem:[%s1 + $0x180] sm:$0xf]
    %v221 = vld [vmem:[%s1 + $0x184] sm:$0xf]
    %v222 = vld [vmem:[%s1 + $0x188] sm:$0xf]
    %v223 = vld [vmem:[%s1 + $0x18c] sm:$0xf]
    %v224 = vld [vmem:[%s1 + $0x190] sm:$0xf]
    %v225 = vld [vmem:[%s1 + $0x194] sm:$0xf]
    %v226 = vld [vmem:[%s1 + $0x198] sm:$0xf]
    %v227 = vld [vmem:[%s1 + $0x19c] sm:$0xf]
    %v228 = vld [vmem:[%s1 + $0x1a0] sm:$0xf]
    %v229 = vld [vmem:[%s1 + $0x1a4] sm:$0xf]
    %v230 = vld [vmem:[%s1 + $0x1a8] sm:$0xf]
    %v231 = vld [vmem:[%s1 + $0x1ac] sm:$0xf]
    %v232 = vld [vmem:[%s1 + $0x1b0] sm:$0xf]
    %v233 = vld [vmem:[%s1 + $0x1b4] sm:$0xf]
    %v234 = vld [vmem:[%s1 + $0x1b8] sm:$0xf]
    %v235 = vld [vmem:[%s1 + $0x1bc] sm:$0xf]
    %v236 = vld [vmem:[%s1 + $0x1c0] sm:$0xf]
    %v237 = vld [vmem:[%s1 + $0x1c4] sm:$0xf]
    %v238 = vld [vmem:[%s1 + $0x1c8] sm:$0xf]
    %v239 = vld [vmem:[%s1 + $0x1cc] sm:$0xf]
    %v240 = vld [vmem:[%s1 + $0x1d0] sm:$0xf]
    %v241 = vld [vmem:[%s1 + $0x1d4] sm:$0xf]
    %v242 = vld [vmem:[%s1 + $0x1d8] sm:$0xf]
    %v243 = vld [vmem:[%s1 + $0x1dc] sm:$0xf]
    %v244 = vld [vmem:[%s1 + $0x1e0] sm:$0xf]
    %v245 = vld [vmem:[%s1 + $0x1e4] sm:$0xf]
    %v246 = vld [vmem:[%s1 + $0x1e8] sm:$0xf]
    %v247 = vld [vmem:[%s1 + $0x1ec] sm:$0xf]
    %v248 = vld [vmem:[%s1 + $0x1f0] sm:$0xf]
    %v249 = vld [vmem:[%s1 + $0x1f4] sm:$0xf]
    %v250 = vld [vmem:[%s1 + $0x1f8] sm:$0xf]
    %v251 = vld [vmem:[%s1 + $0x1fc] sm:$0xf]
    %v252 = vld [vmem:[%s1 + $0x200] sm:$0xf]
    %v253 = vld [vmem:[%s1 + $0x204] sm:$0xf]
    %v254 = vld [vmem:[%s1 + $0x208] sm:$0xf]
    %v255 = vld [vmem:[%s1 + $0x20c] sm:$0xf]
    %v256 = vld [vmem:[%s1 + $0x210] sm:$0xf]
    %v257 = vld [vmem:[%s1 + $0x214] sm:$0xf]
    %v258 = vld [vmem:[%s1 + $0x218] sm:$0xf]
    %v259 = vld [vmem:[%s1 + $0x21c] sm:$0xf]
    %v260 = vld [vmem:[%s1 + $0x220] sm:$0xf]
    %v261 = vld [vmem:[%s1 + $0x224] sm:$0xf]
    %v262 = vld [vmem:[%s1 + $0x228] sm:$0xf]
    %v263 = vld [vmem:[%s1 + $0x22c] sm:$0xf]
    %v264 = vld [vmem:[%s1 + $0x230] sm:$0xf]
    %v265 = vld [vmem:[%s1 + $0x234] sm:$0xf]
    %v266 = vld [vmem:[%s1 + $0x238] sm:$0xf]
    %v267 = vld [vmem:[%s1 + $0x23c] sm:$0xf]
    %v268 = vld [vmem:[%s1 + $0x240] sm:$0xf]
    %v269 = vld [vmem:[%s1 + $0x244] sm:$0xf]
    %v270 = vld [vmem:[%s1 + $0x248] sm:$0xf]
    %v271 = vld [vmem:[%s1 + $0x24c] sm:$0xf]
    %v272 = vld [vmem:[%s1 + $0x250] sm:$0xf]
    %v273 = vld [vmem:[%s1 + $0x254] sm:$0xf]
    %v274 = vld [vmem:[%s1 + $0x258] sm:$0xf]
    %v275 = vld [vmem:[%s1 + $0x25c] sm:$0xf]
    %v276 = vld [vmem:[%s1 + $0x260] sm:$0xf]
    %v277 = vld [vmem:[%s1 + $0x264] sm:$0xf]
    %v278 = vld [vmem:[%s1 + $0x268] sm:$0xf]
    %v279 = vld [vmem:[%s1 + $0x26c] sm:$0xf]
    %v280 = vld [vmem:[%s1 + $0x270] sm:$0xf]
    %v281 = vld [vmem:[%s1 + $0x274] sm:$0xf]
    %v282 = vld [vmem:[%s1 + $0x278] sm:$0xf]
    %v283 = vld [vmem:[%s1 + $0x27c] sm:$0xf]
    %v284 = vld [vmem:[%s1 + $0x280] sm:$0xf]
    %v285 = vld [vmem:[%s1 + $0x284] sm:$0xf]
    %v286 = vld [vmem:[%s1 + $0x288] sm:$0xf]
    %v287 = vld [vmem:[%s1 + $0x28c] sm:$0xf]
    %v288 = vld [vmem:[%s1 + $0x290] sm:$0xf]
    %v289 = vld [vmem:[%s1 + $0x294] sm:$0xf]
    %v290 = vld [vmem:[%s1 + $0x298] sm:$0xf]
    %v291 = vld [vmem:[%s1 + $0x29c] sm:$0xf]
    %v292 = vld [vmem:[%s1 + $0x2a0] sm:$0xf]
    %v293 = vld [vmem:[%s1 + $0x2a4] sm:$0xf]
    %v294 = vld [vmem:[%s1 + $0x2a8] sm:$0xf]
    %v295 = vld [vmem:[%s1 + $0x2ac] sm:$0xf]
    %v296 = vld [vmem:[%s1 + $0x2b0] sm:$0xf]
    %v297 = vld [vmem:[%s1 + $0x2b4] sm:$0xf]
    %v298 = vld [vmem:[%s1 + $0x2b8] sm:$0xf]
    %v299 = vld [vmem:[%s1 + $0x2bc] sm:$0xf]
    %v300 = vld [vmem:[%s1 + $0x2c0] sm:$0xf]
    %v301 = vld [vmem:[%s1 + $0x2c4] sm:$0xf]
    %v302 = vld [vmem:[%s1 + $0x2c8] sm:$0xf]
    %v303 = vld [vmem:[%s1 + $0x2cc] sm:$0xf]
    %v304 = vld [vmem:[%s1 + $0x2d0] sm:$0xf]
    %v305 = vld [vmem:[%s1 + $0x2d4] sm:$0xf]
    %v306 = vld [vmem:[%s1 + $0x2d8] sm:$0xf]
    %v307 = vld [vmem:[%s1 + $0x2dc] sm:$0xf]
    %v308 = vld [vmem:[%s1 + $0x2e0] sm:$0xf]
    %v309 = vld [vmem:[%s1 + $0x2e4] sm:$0xf]
    %v310 = vld [vmem:[%s1 + $0x2e8] sm:$0xf]
    %v311 = vld [vmem:[%s1 + $0x2ec] sm:$0xf]
    %v312 = vld [vmem:[%s1 + $0x2f0] sm:$0xf]
    %v313 = vld [vmem:[%s1 + $0x2f4] sm:$0xf]
    %v314 = vld [vmem:[%s1 + $0x2f8] sm:$0xf]
    %v315 = vld [vmem:[%s1 + $0x2fc] sm:$0xf]
    %v316 = vld [vmem:[%s1 + $0x300] sm:$0xf]
    %v317 = vld [vmem:[%s1 + $0x304] sm:$0xf]
    %v318 = vld [vmem:[%s1 + $0x308] sm:$0xf]
    %v319 = vld [vmem:[%s1 + $0x30c] sm:$0xf]
    %v320 = vld [vmem:[%s1 + $0x310] sm:$0xf]
    %v321 = vld [vmem:[%s1 + $0x314] sm:$0xf]
    %v322 = vld [vmem:[%s1 + $0x318] sm:$0xf]
    %v323 = vld [vmem:[%s1 + $0x31c] sm:$0xf]
    %v324 = vld [vmem:[%s1 + $0x320] sm:$0xf]
    %v325 = vld [vmem:[%s1 + $0x324] sm:$0xf]
    %v326 = vld [vmem:[%s1 + $0x328] sm:$0xf]
    %v327 = vld [vmem:[%s1 + $0x32c] sm:$0xf]
    %v328 = vld [vmem:[%s1 + $0x330] sm:$0xf]
    %v329 = vld [vmem:[%s1 + $0x334] sm:$0xf]
    %v330 = vld [vmem:[%s1 + $0x338] sm:$0xf]
    %v331 = vld [vmem:[%s1 + $0x33c] sm:$0xf]
    %v332 = vld [vmem:[%s1 + $0x340] sm:$0xf]
    %v333 = vld [vmem:[%s1 + $0x344] sm:$0xf]
    %v334 = vld [vmem:[%s1 + $0x348] sm:$0xf]
    %v335 = vld [vmem:[%s1 + $0x34c] sm:$0xf]
    %v336 = vld [vmem:[%s1 + $0x350] sm:$0xf]
    %v337 = vld [vmem:[%s1 + $0x354] sm:$0xf]
    %v338 = vld [vmem:[%s1 + $0x358] sm:$0xf]
    %v339 = vld [vmem:[%s1 + $0x35c] sm:$0xf]
    %v340 = vld [vmem:[%s1 + $0x360] sm:$0xf]
    %v341 = vld [vmem:[%s1 + $0x364] sm:$0xf]
    %v342 = vld [vmem:[%s1 + $0x368] sm:$0xf]
    %v343 = vld [vmem:[%s1 + $0x36c] sm:$0xf]
    %v344 = vld [vmem:[%s1 + $0x370] sm:$0xf]
    %v345 = vld [vmem:[%s1 + $0x374] sm:$0xf]
    %v346 = vld [vmem:[%s1 + $0x378] sm:$0xf]
    %v347 = vld [vmem:[%s1 + $0x37c] sm:$0xf]
    %v348 = vld [vmem:[%s1 + $0x380] sm:$0xf]
    %v349 = vld [vmem:[%s1 + $0x384] sm:$0xf]
    %v350 = vld [vmem:[%s1 + $0x388] sm:$0xf]
    %v351 = vld [vmem:[%s1 + $0x38c] sm:$0xf]
    %v352 = vld [vmem:[%s1 + $0x390] sm:$0xf]
    %v353 = vld [vmem:[%s1 + $0x394] sm:$0xf]
    %v354 = vld [vmem:[%s1 + $0x398] sm:$0xf]
    %v355 = vld [vmem:[%s1 + $0x39c] sm:$0xf]
    %v356 = vld [vmem:[%s1 + $0x3a0] sm:$0xf]
    %v357 = vld [vmem:[%s1 + $0x3a4] sm:$0xf]
    %v358 = vld [vmem:[%s1 + $0x3a8] sm:$0xf]
    %v359 = vld [vmem:[%s1 + $0x3ac] sm:$0xf]
    %v360 = vld [vmem:[%s1 + $0x3b0] sm:$0xf]
    %v361 = vld [vmem:[%s1 + $0x3b4] sm:$0xf]
    %v362 = vld [vmem:[%s1 + $0x3b8] sm:$0xf]
    %v363 = vld [vmem:[%s1 + $0x3bc] sm:$0xf]
    %v364 = vld [vmem:[%s1 + $0x3c0] sm:$0xf]
    %v365 = vld [vmem:[%s1 + $0x3c4] sm:$0xf]
    %v366 = vld [vmem:[%s1 + $0x3c8] sm:$0xf]
    %v367 = vld [vmem:[%s1 + $0x3cc] sm:$0xf]
    %v368 = vld [vmem:[%s1 + $0x3d0] sm:$0xf]
    %v369 = vld [vmem:[%s1 + $0x3d4] sm:$0xf]
    %v370 = vld [vmem:[%s1 + $0x3d8] sm:$0xf]
    %v371 = vld [vmem:[%s1 + $0x3dc] sm:$0xf]
    %v372 = vld [vmem:[%s1 + $0x3e0] sm:$0xf]
    %v373 = vld [vmem:[%s1 + $0x3e4] sm:$0xf]
    %v374 = vld [vmem:[%s1 + $0x3e8] sm:$0xf]
    %v375 = vld [vmem:[%s1 + $0x3ec] sm:$0xf]
    %v376 = vld [vmem:[%s1 + $0x3f0] sm:$0xf]
    %v377 = vld [vmem:[%s1 + $0x3f4] sm:$0xf]
    %v378 = vld [vmem:[%s1 + $0x3f8] sm:$0xf]
    %v379 = vld [vmem:[%s1 + $0x3fc] sm:$0xf]
    %v380 = vld [vmem:[%s2] sm:$0x1]
    %v382 = vlaneseq
    %v383 = vshrl.u32 %v382, 7
    %v384 = vsub.s32 0, %v383
    %v385 = vrot.slane %v380, %v384
    %v643 = vunpack.c.l.b16 %v124
    %v644 = vunpack.c.l.b16 %v125
    %v645 = vunpack.c.l.b16 %v126
    %v646 = vunpack.c.l.b16 %v127
    %v647 = vunpack.c.l.b16 %v128
    %v648 = vunpack.c.l.b16 %v129
    %v649 = vunpack.c.l.b16 %v130
    %v650 = vunpack.c.l.b16 %v131
    %v651 = vunpack.c.l.b16 %v132
    %v652 = vunpack.c.l.b16 %v133
    %v653 = vunpack.c.l.b16 %v134
    %v654 = vunpack.c.l.b16 %v135
    %v655 = vunpack.c.l.b16 %v136
    %v656 = vunpack.c.l.b16 %v137
    %v657 = vunpack.c.l.b16 %v138
    %v658 = vunpack.c.l.b16 %v139
    %v659 = vunpack.c.l.b16 %v140
    %v660 = vunpack.c.l.b16 %v141
    %v661 = vunpack.c.l.b16 %v142
    %v662 = vunpack.c.l.b16 %v143
    %v663 = vunpack.c.l.b16 %v144
    %v664 = vunpack.c.l.b16 %v145
    %v665 = vunpack.c.l.b16 %v146
    %v666 = vunpack.c.l.b16 %v147
    %v667 = vunpack.c.l.b16 %v148
    %v668 = vunpack.c.l.b16 %v149
    %v669 = vunpack.c.l.b16 %v150
    %v670 = vunpack.c.l.b16 %v151
    %v671 = vunpack.c.l.b16 %v152
    %v672 = vunpack.c.l.b16 %v153
    %v673 = vunpack.c.l.b16 %v154
    %v674 = vunpack.c.l.b16 %v155
    %v675 = vunpack.c.l.b16 %v156
    %v676 = vunpack.c.l.b16 %v157
    %v677 = vunpack.c.l.b16 %v158
    %v678 = vunpack.c.l.b16 %v159
    %v679 = vunpack.c.l.b16 %v160
    %v680 = vunpack.c.l.b16 %v161
    %v681 = vunpack.c.l.b16 %v162
    %v682 = vunpack.c.l.b16 %v163
    %v683 = vunpack.c.l.b16 %v164
    %v684 = vunpack.c.l.b16 %v165
    %v685 = vunpack.c.l.b16 %v166
    %v686 = vunpack.c.l.b16 %v167
    %v687 = vunpack.c.l.b16 %v168
    %v688 = vunpack.c.l.b16 %v169
    %v689 = vunpack.c.l.b16 %v170
    %v690 = vunpack.c.l.b16 %v171
    %v691 = vunpack.c.l.b16 %v172
    %v692 = vunpack.c.l.b16 %v173
    %v693 = vunpack.c.l.b16 %v174
    %v694 = vunpack.c.l.b16 %v175
    %v695 = vunpack.c.l.b16 %v176
    %v696 = vunpack.c.l.b16 %v177
    %v697 = vunpack.c.l.b16 %v178
    %v698 = vunpack.c.l.b16 %v179
    %v699 = vunpack.c.l.b16 %v180
    %v700 = vunpack.c.l.b16 %v181
    %v701 = vunpack.c.l.b16 %v182
    %v702 = vunpack.c.l.b16 %v183
    %v703 = vunpack.c.l.b16 %v184
    %v704 = vunpack.c.l.b16 %v185
    %v705 = vunpack.c.l.b16 %v186
    %v706 = vunpack.c.l.b16 %v187
    %v707 = vunpack.c.l.b16 %v188
    %v708 = vunpack.c.l.b16 %v189
    %v709 = vunpack.c.l.b16 %v190
    %v710 = vunpack.c.l.b16 %v191
    %v711 = vunpack.c.l.b16 %v192
    %v712 = vunpack.c.l.b16 %v193
    %v713 = vunpack.c.l.b16 %v194
    %v714 = vunpack.c.l.b16 %v195
    %v715 = vunpack.c.l.b16 %v196
    %v716 = vunpack.c.l.b16 %v197
    %v717 = vunpack.c.l.b16 %v198
    %v718 = vunpack.c.l.b16 %v199
    %v719 = vunpack.c.l.b16 %v200
    %v720 = vunpack.c.l.b16 %v201
    %v721 = vunpack.c.l.b16 %v202
    %v722 = vunpack.c.l.b16 %v203
    %v723 = vunpack.c.l.b16 %v204
    %v724 = vunpack.c.l.b16 %v205
    %v725 = vunpack.c.l.b16 %v206
    %v726 = vunpack.c.l.b16 %v207
    %v727 = vunpack.c.l.b16 %v208
    %v728 = vunpack.c.l.b16 %v209
    %v729 = vunpack.c.l.b16 %v210
    %v730 = vunpack.c.l.b16 %v211
    %v731 = vunpack.c.l.b16 %v212
    %v732 = vunpack.c.l.b16 %v213
    %v733 = vunpack.c.l.b16 %v214
    %v734 = vunpack.c.l.b16 %v215
    %v735 = vunpack.c.l.b16 %v216
    %v736 = vunpack.c.l.b16 %v217
    %v737 = vunpack.c.l.b16 %v218
    %v738 = vunpack.c.l.b16 %v219
    %v739 = vunpack.c.l.b16 %v220
    %v740 = vunpack.c.l.b16 %v221
    %v741 = vunpack.c.l.b16 %v222
    %v742 = vunpack.c.l.b16 %v223
    %v743 = vunpack.c.l.b16 %v224
    %v744 = vunpack.c.l.b16 %v225
    %v745 = vunpack.c.l.b16 %v226
    %v746 = vunpack.c.l.b16 %v227
    %v747 = vunpack.c.l.b16 %v228
    %v748 = vunpack.c.l.b16 %v229
    %v749 = vunpack.c.l.b16 %v230
    %v750 = vunpack.c.l.b16 %v231
    %v751 = vunpack.c.l.b16 %v232
    %v752 = vunpack.c.l.b16 %v233
    %v753 = vunpack.c.l.b16 %v234
    %v754 = vunpack.c.l.b16 %v235
    %v755 = vunpack.c.l.b16 %v236
    %v756 = vunpack.c.l.b16 %v237
    %v757 = vunpack.c.l.b16 %v238
    %v758 = vunpack.c.l.b16 %v239
    %v759 = vunpack.c.l.b16 %v240
    %v760 = vunpack.c.l.b16 %v241
    %v761 = vunpack.c.l.b16 %v242
    %v762 = vunpack.c.l.b16 %v243
    %v763 = vunpack.c.l.b16 %v244
    %v764 = vunpack.c.l.b16 %v245
    %v765 = vunpack.c.l.b16 %v246
    %v766 = vunpack.c.l.b16 %v247
    %v767 = vunpack.c.l.b16 %v248
    %v768 = vunpack.c.l.b16 %v249
    %v769 = vunpack.c.l.b16 %v250
    %v770 = vunpack.c.l.b16 %v251
    %v771 = vunpack.c.l.b16 %v252
    %v772 = vunpack.c.l.b16 %v253
    %v773 = vunpack.c.l.b16 %v254
    %v774 = vunpack.c.l.b16 %v255
    %v775 = vunpack.c.l.b16 %v256
    %v776 = vunpack.c.l.b16 %v257
    %v777 = vunpack.c.l.b16 %v258
    %v778 = vunpack.c.l.b16 %v259
    %v779 = vunpack.c.l.b16 %v260
    %v780 = vunpack.c.l.b16 %v261
    %v781 = vunpack.c.l.b16 %v262
    %v782 = vunpack.c.l.b16 %v263
    %v783 = vunpack.c.l.b16 %v264
    %v784 = vunpack.c.l.b16 %v265
    %v785 = vunpack.c.l.b16 %v266
    %v786 = vunpack.c.l.b16 %v267
    %v787 = vunpack.c.l.b16 %v268
    %v788 = vunpack.c.l.b16 %v269
    %v789 = vunpack.c.l.b16 %v270
    %v790 = vunpack.c.l.b16 %v271
    %v791 = vunpack.c.l.b16 %v272
    %v792 = vunpack.c.l.b16 %v273
    %v793 = vunpack.c.l.b16 %v274
    %v794 = vunpack.c.l.b16 %v275
    %v795 = vunpack.c.l.b16 %v276
    %v796 = vunpack.c.l.b16 %v277
    %v797 = vunpack.c.l.b16 %v278
    %v798 = vunpack.c.l.b16 %v279
    %v799 = vunpack.c.l.b16 %v280
    %v800 = vunpack.c.l.b16 %v281
    %v801 = vunpack.c.l.b16 %v282
    %v802 = vunpack.c.l.b16 %v283
    %v803 = vunpack.c.l.b16 %v284
    %v804 = vunpack.c.l.b16 %v285
    %v805 = vunpack.c.l.b16 %v286
    %v806 = vunpack.c.l.b16 %v287
    %v807 = vunpack.c.l.b16 %v288
    %v808 = vunpack.c.l.b16 %v289
    %v809 = vunpack.c.l.b16 %v290
    %v810 = vunpack.c.l.b16 %v291
    %v811 = vunpack.c.l.b16 %v292
    %v812 = vunpack.c.l.b16 %v293
    %v813 = vunpack.c.l.b16 %v294
    %v814 = vunpack.c.l.b16 %v295
    %v815 = vunpack.c.l.b16 %v296
    %v816 = vunpack.c.l.b16 %v297
    %v817 = vunpack.c.l.b16 %v298
    %v818 = vunpack.c.l.b16 %v299
    %v819 = vunpack.c.l.b16 %v300
    %v820 = vunpack.c.l.b16 %v301
    %v821 = vunpack.c.l.b16 %v302
    %v822 = vunpack.c.l.b16 %v303
    %v823 = vunpack.c.l.b16 %v304
    %v824 = vunpack.c.l.b16 %v305
    %v825 = vunpack.c.l.b16 %v306
    %v826 = vunpack.c.l.b16 %v307
    %v827 = vunpack.c.l.b16 %v308
    %v828 = vunpack.c.l.b16 %v309
    %v829 = vunpack.c.l.b16 %v310
    %v830 = vunpack.c.l.b16 %v311
    %v831 = vunpack.c.l.b16 %v312
    %v832 = vunpack.c.l.b16 %v313
    %v833 = vunpack.c.l.b16 %v314
    %v834 = vunpack.c.l.b16 %v315
    %v835 = vunpack.c.l.b16 %v316
    %v836 = vunpack.c.l.b16 %v317
    %v837 = vunpack.c.l.b16 %v318
    %v838 = vunpack.c.l.b16 %v319
    %v839 = vunpack.c.l.b16 %v320
    %v840 = vunpack.c.l.b16 %v321
    %v841 = vunpack.c.l.b16 %v322
    %v842 = vunpack.c.l.b16 %v323
    %v843 = vunpack.c.l.b16 %v324
    %v844 = vunpack.c.l.b16 %v325
    %v845 = vunpack.c.l.b16 %v326
    %v846 = vunpack.c.l.b16 %v327
    %v847 = vunpack.c.l.b16 %v328
    %v848 = vunpack.c.l.b16 %v329
    %v849 = vunpack.c.l.b16 %v330
    %v850 = vunpack.c.l.b16 %v331
    %v851 = vunpack.c.l.b16 %v332
    %v852 = vunpack.c.l.b16 %v333
    %v853 = vunpack.c.l.b16 %v334
    %v854 = vunpack.c.l.b16 %v335
    %v855 = vunpack.c.l.b16 %v336
    %v856 = vunpack.c.l.b16 %v337
    %v857 = vunpack.c.l.b16 %v338
    %v858 = vunpack.c.l.b16 %v339
    %v859 = vunpack.c.l.b16 %v340
    %v860 = vunpack.c.l.b16 %v341
    %v861 = vunpack.c.l.b16 %v342
    %v862 = vunpack.c.l.b16 %v343
    %v863 = vunpack.c.l.b16 %v344
    %v864 = vunpack.c.l.b16 %v345
    %v865 = vunpack.c.l.b16 %v346
    %v866 = vunpack.c.l.b16 %v347
    %v867 = vunpack.c.l.b16 %v348
    %v868 = vunpack.c.l.b16 %v349
    %v869 = vunpack.c.l.b16 %v350
    %v870 = vunpack.c.l.b16 %v351
    %v871 = vunpack.c.l.b16 %v352
    %v872 = vunpack.c.l.b16 %v353
    %v873 = vunpack.c.l.b16 %v354
    %v874 = vunpack.c.l.b16 %v355
    %v875 = vunpack.c.l.b16 %v356
    %v876 = vunpack.c.l.b16 %v357
    %v877 = vunpack.c.l.b16 %v358
    %v878 = vunpack.c.l.b16 %v359
    %v879 = vunpack.c.l.b16 %v360
    %v880 = vunpack.c.l.b16 %v361
    %v881 = vunpack.c.l.b16 %v362
    %v882 = vunpack.c.l.b16 %v363
    %v883 = vunpack.c.l.b16 %v364
    %v884 = vunpack.c.l.b16 %v365
    %v885 = vunpack.c.l.b16 %v366
    %v886 = vunpack.c.l.b16 %v367
    %v887 = vunpack.c.l.b16 %v368
    %v888 = vunpack.c.l.b16 %v369
    %v889 = vunpack.c.l.b16 %v370
    %v890 = vunpack.c.l.b16 %v371
    %v891 = vunpack.c.l.b16 %v372
    %v892 = vunpack.c.l.b16 %v373
    %v893 = vunpack.c.l.b16 %v374
    %v894 = vunpack.c.l.b16 %v375
    %v895 = vunpack.c.l.b16 %v376
    %v896 = vunpack.c.l.b16 %v377
    %v897 = vunpack.c.l.b16 %v378
    %v898 = vunpack.c.l.b16 %v379
    %v899 = vpack.c.b16 %v644, %v643
    %v900 = vpack.c.b16 %v646, %v645
    %v901 = vpack.c.b16 %v648, %v647
    %v902 = vpack.c.b16 %v650, %v649
    %v903 = vpack.c.b16 %v652, %v651
    %v904 = vpack.c.b16 %v654, %v653
    %v905 = vpack.c.b16 %v656, %v655
    %v906 = vpack.c.b16 %v658, %v657
    %v907 = vpack.c.b16 %v660, %v659
    %v908 = vpack.c.b16 %v662, %v661
    %v909 = vpack.c.b16 %v664, %v663
    %v910 = vpack.c.b16 %v666, %v665
    %v911 = vpack.c.b16 %v668, %v667
    %v912 = vpack.c.b16 %v670, %v669
    %v913 = vpack.c.b16 %v672, %v671
    %v914 = vpack.c.b16 %v674, %v673
    %v915 = vpack.c.b16 %v676, %v675
    %v916 = vpack.c.b16 %v678, %v677
    %v917 = vpack.c.b16 %v680, %v679
    %v918 = vpack.c.b16 %v682, %v681
    %v919 = vpack.c.b16 %v684, %v683
    %v920 = vpack.c.b16 %v686, %v685
    %v921 = vpack.c.b16 %v688, %v687
    %v922 = vpack.c.b16 %v690, %v689
    %v923 = vpack.c.b16 %v692, %v691
    %v924 = vpack.c.b16 %v694, %v693
    %v925 = vpack.c.b16 %v696, %v695
    %v926 = vpack.c.b16 %v698, %v697
    %v927 = vpack.c.b16 %v700, %v699
    %v928 = vpack.c.b16 %v702, %v701
    %v929 = vpack.c.b16 %v704, %v703
    %v930 = vpack.c.b16 %v706, %v705
    %v931 = vpack.c.b16 %v708, %v707
    %v932 = vpack.c.b16 %v710, %v709
    %v933 = vpack.c.b16 %v712, %v711
    %v934 = vpack.c.b16 %v714, %v713
    %v935 = vpack.c.b16 %v716, %v715
    %v936 = vpack.c.b16 %v718, %v717
    %v937 = vpack.c.b16 %v720, %v719
    %v938 = vpack.c.b16 %v722, %v721
    %v939 = vpack.c.b16 %v724, %v723
    %v940 = vpack.c.b16 %v726, %v725
    %v941 = vpack.c.b16 %v728, %v727
    %v942 = vpack.c.b16 %v730, %v729
    %v943 = vpack.c.b16 %v732, %v731
    %v944 = vpack.c.b16 %v734, %v733
    %v945 = vpack.c.b16 %v736, %v735
    %v946 = vpack.c.b16 %v738, %v737
    %v947 = vpack.c.b16 %v740, %v739
    %v948 = vpack.c.b16 %v742, %v741
    %v949 = vpack.c.b16 %v744, %v743
    %v950 = vpack.c.b16 %v746, %v745
    %v951 = vpack.c.b16 %v748, %v747
    %v952 = vpack.c.b16 %v750, %v749
    %v953 = vpack.c.b16 %v752, %v751
    %v954 = vpack.c.b16 %v754, %v753
    %v955 = vpack.c.b16 %v756, %v755
    %v956 = vpack.c.b16 %v758, %v757
    %v957 = vpack.c.b16 %v760, %v759
    %v958 = vpack.c.b16 %v762, %v761
    %v959 = vpack.c.b16 %v764, %v763
    %v960 = vpack.c.b16 %v766, %v765
    %v961 = vpack.c.b16 %v768, %v767
    %v962 = vpack.c.b16 %v770, %v769
    %v963 = vpack.c.b16 %v772, %v771
    %v964 = vpack.c.b16 %v774, %v773
    %v965 = vpack.c.b16 %v776, %v775
    %v966 = vpack.c.b16 %v778, %v777
    %v967 = vpack.c.b16 %v780, %v779
    %v968 = vpack.c.b16 %v782, %v781
    %v969 = vpack.c.b16 %v784, %v783
    %v970 = vpack.c.b16 %v786, %v785
    %v971 = vpack.c.b16 %v788, %v787
    %v972 = vpack.c.b16 %v790, %v789
    %v973 = vpack.c.b16 %v792, %v791
    %v974 = vpack.c.b16 %v794, %v793
    %v975 = vpack.c.b16 %v796, %v795
    %v976 = vpack.c.b16 %v798, %v797
    %v977 = vpack.c.b16 %v800, %v799
    %v978 = vpack.c.b16 %v802, %v801
    %v979 = vpack.c.b16 %v804, %v803
    %v980 = vpack.c.b16 %v806, %v805
    %v981 = vpack.c.b16 %v808, %v807
    %v982 = vpack.c.b16 %v810, %v809
    %v983 = vpack.c.b16 %v812, %v811
    %v984 = vpack.c.b16 %v814, %v813
    %v985 = vpack.c.b16 %v816, %v815
    %v986 = vpack.c.b16 %v818, %v817
    %v987 = vpack.c.b16 %v820, %v819
    %v988 = vpack.c.b16 %v822, %v821
    %v989 = vpack.c.b16 %v824, %v823
    %v990 = vpack.c.b16 %v826, %v825
    %v991 = vpack.c.b16 %v828, %v827
    %v992 = vpack.c.b16 %v830, %v829
    %v993 = vpack.c.b16 %v832, %v831
    %v994 = vpack.c.b16 %v834, %v833
    %v995 = vpack.c.b16 %v836, %v835
    %v996 = vpack.c.b16 %v838, %v837
    %v997 = vpack.c.b16 %v840, %v839
    %v998 = vpack.c.b16 %v842, %v841
    %v999 = vpack.c.b16 %v844, %v843
    %v1000 = vpack.c.b16 %v846, %v845
    %v1001 = vpack.c.b16 %v848, %v847
    %v1002 = vpack.c.b16 %v850, %v849
    %v1003 = vpack.c.b16 %v852, %v851
    %v1004 = vpack.c.b16 %v854, %v853
    %v1005 = vpack.c.b16 %v856, %v855
    %v1006 = vpack.c.b16 %v858, %v857
    %v1007 = vpack.c.b16 %v860, %v859
    %v1008 = vpack.c.b16 %v862, %v861
    %v1009 = vpack.c.b16 %v864, %v863
    %v1010 = vpack.c.b16 %v866, %v865
    %v1011 = vpack.c.b16 %v868, %v867
    %v1012 = vpack.c.b16 %v870, %v869
    %v1013 = vpack.c.b16 %v872, %v871
    %v1014 = vpack.c.b16 %v874, %v873
    %v1015 = vpack.c.b16 %v876, %v875
    %v1016 = vpack.c.b16 %v878, %v877
    %v1017 = vpack.c.b16 %v880, %v879
    %v1018 = vpack.c.b16 %v882, %v881
    %v1019 = vpack.c.b16 %v884, %v883
    %v1020 = vpack.c.b16 %v886, %v885
    %v1021 = vpack.c.b16 %v888, %v887
    %v1022 = vpack.c.b16 %v890, %v889
    %v1023 = vpack.c.b16 %v892, %v891
    %v1024 = vpack.c.b16 %v894, %v893
    %v1025 = vpack.c.b16 %v896, %v895
    %v1026 = vpack.c.b16 %v898, %v897
    %1155 = vmatprep.subr.bf16.mxu0 0
    %1156 = vmatpush1.bf16.msra.mxu0 %v899
    %1157 = vmatprep.subr.bf16.mxu0 0
    %1158 = vmatpush1.bf16.msra.mxu0 %v900
    %1159 = vmatprep.subr.bf16.mxu0 0
    %1160 = vmatpush1.bf16.msra.mxu0 %v901
    %1161 = vmatprep.subr.bf16.mxu0 0
    %1162 = vmatpush1.bf16.msra.mxu0 %v902
    %1163 = vmatprep.subr.bf16.mxu0 0
    %1164 = vmatpush1.bf16.msra.mxu0 %v903
    %1165 = vmatprep.subr.bf16.mxu0 0
    %1166 = vmatpush1.bf16.msra.mxu0 %v904
    %1167 = vmatprep.subr.bf16.mxu0 0
    %1168 = vmatpush1.bf16.msra.mxu0 %v905
    %1169 = vmatprep.subr.bf16.mxu0 0
    %1170 = vmatpush1.bf16.msra.mxu0 %v906
    %1171 = vmatprep.subr.bf16.mxu0 0
    %1172 = vmatpush1.bf16.msra.mxu0 %v907
    %1173 = vmatprep.subr.bf16.mxu0 0
    %1174 = vmatpush1.bf16.msra.mxu0 %v908
    %1175 = vmatprep.subr.bf16.mxu0 0
    %1176 = vmatpush1.bf16.msra.mxu0 %v909
    %1177 = vmatprep.subr.bf16.mxu0 0
    %1178 = vmatpush1.bf16.msra.mxu0 %v910
    %1179 = vmatprep.subr.bf16.mxu0 0
    %1180 = vmatpush1.bf16.msra.mxu0 %v911
    %1181 = vmatprep.subr.bf16.mxu0 0
    %1182 = vmatpush1.bf16.msra.mxu0 %v912
    %1183 = vmatprep.subr.bf16.mxu0 0
    %1184 = vmatpush1.bf16.msra.mxu0 %v913
    %1185 = vmatprep.subr.bf16.mxu0 0
    %1186 = vmatpush1.bf16.msra.mxu0 %v914
    %1187 = vmatprep.mubr.bf16.mxu0 %v109
    %1188 = vmatmul.mubr.bf16.gmra.mrb[0].mxu0 %v108
    %v1189 = vpop.f32.mrb[0].mxu0
    %v1190 = vadd.f32 %v385, %v1189
    %v1191 = vpop.f32.mrb[0].mxu0
    %v1192 = vpop.f32.mrb[0].mxu0
    %v1193 = vpop.f32.mrb[0].mxu0
    %1194 = vdwg.mxu0
    %1195 = vmatprep.subr.bf16.mxu0 0
    %1196 = vmatpush1.bf16.msra.mxu0 %v915
    %1197 = vmatprep.subr.bf16.mxu0 0
    %1198 = vmatpush1.bf16.msra.mxu0 %v916
    %1199 = vmatprep.subr.bf16.mxu0 0
    %1200 = vmatpush1.bf16.msra.mxu0 %v917
    %1201 = vmatprep.subr.bf16.mxu0 0
    %1202 = vmatpush1.bf16.msra.mxu0 %v918
    %1203 = vmatprep.subr.bf16.mxu0 0
    %1204 = vmatpush1.bf16.msra.mxu0 %v919
    %1205 = vmatprep.subr.bf16.mxu0 0
    %1206 = vmatpush1.bf16.msra.mxu0 %v920
    %1207 = vmatprep.subr.bf16.mxu0 0
    %1208 = vmatpush1.bf16.msra.mxu0 %v921
    %1209 = vmatprep.subr.bf16.mxu0 0
    %1210 = vmatpush1.bf16.msra.mxu0 %v922
    %1211 = vmatprep.subr.bf16.mxu0 0
    %1212 = vmatpush1.bf16.msra.mxu0 %v923
    %1213 = vmatprep.subr.bf16.mxu0 0
    %1214 = vmatpush1.bf16.msra.mxu0 %v924
    %1215 = vmatprep.subr.bf16.mxu0 0
    %1216 = vmatpush1.bf16.msra.mxu0 %v925
    %1217 = vmatprep.subr.bf16.mxu0 0
    %1218 = vmatpush1.bf16.msra.mxu0 %v926
    %1219 = vmatprep.subr.bf16.mxu0 0
    %1220 = vmatpush1.bf16.msra.mxu0 %v927
    %1221 = vmatprep.subr.bf16.mxu0 0
    %1222 = vmatpush1.bf16.msra.mxu0 %v928
    %1223 = vmatprep.subr.bf16.mxu0 0
    %1224 = vmatpush1.bf16.msra.mxu0 %v929
    %1225 = vmatprep.subr.bf16.mxu0 0
    %1226 = vmatpush1.bf16.msra.mxu0 %v930
    %1227 = vmatprep.mubr.bf16.mxu0 %v111
    %1228 = vmatmul.mubr.bf16.gmra.mrb[0].mxu0 %v110
    %v1229 = vpop.f32.mrb[0].mxu0
    %v1230 = vadd.f32 %v1190, %v1229
    %v1231 = vpop.f32.mrb[0].mxu0
    %v1232 = vpop.f32.mrb[0].mxu0
    %v1233 = vpop.f32.mrb[0].mxu0
    %1234 = vdwg.mxu0
    %1235 = vmatprep.subr.bf16.mxu0 0
    %1236 = vmatpush1.bf16.msra.mxu0 %v931
    %1237 = vmatprep.subr.bf16.mxu0 0
    %1238 = vmatpush1.bf16.msra.mxu0 %v932
    %1239 = vmatprep.subr.bf16.mxu0 0
    %1240 = vmatpush1.bf16.msra.mxu0 %v933
    %1241 = vmatprep.subr.bf16.mxu0 0
    %1242 = vmatpush1.bf16.msra.mxu0 %v934
    %1243 = vmatprep.subr.bf16.mxu0 0
    %1244 = vmatpush1.bf16.msra.mxu0 %v935
    %1245 = vmatprep.subr.bf16.mxu0 0
    %1246 = vmatpush1.bf16.msra.mxu0 %v936
    %1247 = vmatprep.subr.bf16.mxu0 0
    %1248 = vmatpush1.bf16.msra.mxu0 %v937
    %1249 = vmatprep.subr.bf16.mxu0 0
    %1250 = vmatpush1.bf16.msra.mxu0 %v938
    %1251 = vmatprep.subr.bf16.mxu0 0
    %1252 = vmatpush1.bf16.msra.mxu0 %v939
    %1253 = vmatprep.subr.bf16.mxu0 0
    %1254 = vmatpush1.bf16.msra.mxu0 %v940
    %1255 = vmatprep.subr.bf16.mxu0 0
    %1256 = vmatpush1.bf16.msra.mxu0 %v941
    %1257 = vmatprep.subr.bf16.mxu0 0
    %1258 = vmatpush1.bf16.msra.mxu0 %v942
    %1259 = vmatprep.subr.bf16.mxu0 0
    %1260 = vmatpush1.bf16.msra.mxu0 %v943
    %1261 = vmatprep.subr.bf16.mxu0 0
    %1262 = vmatpush1.bf16.msra.mxu0 %v944
    %1263 = vmatprep.subr.bf16.mxu0 0
    %1264 = vmatpush1.bf16.msra.mxu0 %v945
    %1265 = vmatprep.subr.bf16.mxu0 0
    %1266 = vmatpush1.bf16.msra.mxu0 %v946
    %1267 = vmatprep.mubr.bf16.mxu0 %v113
    %1268 = vmatmul.mubr.bf16.gmra.mrb[0].mxu0 %v112
    %v1269 = vpop.f32.mrb[0].mxu0
    %v1270 = vadd.f32 %v1230, %v1269
    %v1271 = vpop.f32.mrb[0].mxu0
    %v1272 = vpop.f32.mrb[0].mxu0
    %v1273 = vpop.f32.mrb[0].mxu0
    %1274 = vdwg.mxu0
    %1275 = vmatprep.subr.bf16.mxu0 0
    %1276 = vmatpush1.bf16.msra.mxu0 %v947
    %1277 = vmatprep.subr.bf16.mxu0 0
    %1278 = vmatpush1.bf16.msra.mxu0 %v948
    %1279 = vmatprep.subr.bf16.mxu0 0
    %1280 = vmatpush1.bf16.msra.mxu0 %v949
    %1281 = vmatprep.subr.bf16.mxu0 0
    %1282 = vmatpush1.bf16.msra.mxu0 %v950
    %1283 = vmatprep.subr.bf16.mxu0 0
    %1284 = vmatpush1.bf16.msra.mxu0 %v951
    %1285 = vmatprep.subr.bf16.mxu0 0
    %1286 = vmatpush1.bf16.msra.mxu0 %v952
    %1287 = vmatprep.subr.bf16.mxu0 0
    %1288 = vmatpush1.bf16.msra.mxu0 %v953
    %1289 = vmatprep.subr.bf16.mxu0 0
    %1290 = vmatpush1.bf16.msra.mxu0 %v954
    %1291 = vmatprep.subr.bf16.mxu0 0
    %1292 = vmatpush1.bf16.msra.mxu0 %v955
    %1293 = vmatprep.subr.bf16.mxu0 0
    %1294 = vmatpush1.bf16.msra.mxu0 %v956
    %1295 = vmatprep.subr.bf16.mxu0 0
    %1296 = vmatpush1.bf16.msra.mxu0 %v957
    %1297 = vmatprep.subr.bf16.mxu0 0
    %1298 = vmatpush1.bf16.msra.mxu0 %v958
    %1299 = vmatprep.subr.bf16.mxu0 0
    %1300 = vmatpush1.bf16.msra.mxu0 %v959
    %1301 = vmatprep.subr.bf16.mxu0 0
    %1302 = vmatpush1.bf16.msra.mxu0 %v960
    %1303 = vmatprep.subr.bf16.mxu0 0
    %1304 = vmatpush1.bf16.msra.mxu0 %v961
    %1305 = vmatprep.subr.bf16.mxu0 0
    %1306 = vmatpush1.bf16.msra.mxu0 %v962
    %1307 = vmatprep.mubr.bf16.mxu0 %v115
    %1308 = vmatmul.mubr.bf16.gmra.mrb[0].mxu0 %v114
    %v1309 = vpop.f32.mrb[0].mxu0
    %v1310 = vadd.f32 %v1270, %v1309
    %v1311 = vpop.f32.mrb[0].mxu0
    %v1312 = vpop.f32.mrb[0].mxu0
    %v1313 = vpop.f32.mrb[0].mxu0
    %1314 = vdwg.mxu0
    %1315 = vmatprep.subr.bf16.mxu0 0
    %1316 = vmatpush1.bf16.msra.mxu0 %v963
    %1317 = vmatprep.subr.bf16.mxu0 0
    %1318 = vmatpush1.bf16.msra.mxu0 %v964
    %1319 = vmatprep.subr.bf16.mxu0 0
    %1320 = vmatpush1.bf16.msra.mxu0 %v965
    %1321 = vmatprep.subr.bf16.mxu0 0
    %1322 = vmatpush1.bf16.msra.mxu0 %v966
    %1323 = vmatprep.subr.bf16.mxu0 0
    %1324 = vmatpush1.bf16.msra.mxu0 %v967
    %1325 = vmatprep.subr.bf16.mxu0 0
    %1326 = vmatpush1.bf16.msra.mxu0 %v968
    %1327 = vmatprep.subr.bf16.mxu0 0
    %1328 = vmatpush1.bf16.msra.mxu0 %v969
    %1329 = vmatprep.subr.bf16.mxu0 0
    %1330 = vmatpush1.bf16.msra.mxu0 %v970
    %1331 = vmatprep.subr.bf16.mxu0 0
    %1332 = vmatpush1.bf16.msra.mxu0 %v971
    %1333 = vmatprep.subr.bf16.mxu0 0
    %1334 = vmatpush1.bf16.msra.mxu0 %v972
    %1335 = vmatprep.subr.bf16.mxu0 0
    %1336 = vmatpush1.bf16.msra.mxu0 %v973
    %1337 = vmatprep.subr.bf16.mxu0 0
    %1338 = vmatpush1.bf16.msra.mxu0 %v974
    %1339 = vmatprep.subr.bf16.mxu0 0
    %1340 = vmatpush1.bf16.msra.mxu0 %v975
    %1341 = vmatprep.subr.bf16.mxu0 0
    %1342 = vmatpush1.bf16.msra.mxu0 %v976
    %1343 = vmatprep.subr.bf16.mxu0 0
    %1344 = vmatpush1.bf16.msra.mxu0 %v977
    %1345 = vmatprep.subr.bf16.mxu0 0
    %1346 = vmatpush1.bf16.msra.mxu0 %v978
    %1347 = vmatprep.mubr.bf16.mxu0 %v117
    %1348 = vmatmul.mubr.bf16.gmra.mrb[0].mxu0 %v116
    %v1349 = vpop.f32.mrb[0].mxu0
    %v1350 = vadd.f32 %v1310, %v1349
    %v1351 = vpop.f32.mrb[0].mxu0
    %v1352 = vpop.f32.mrb[0].mxu0
    %v1353 = vpop.f32.mrb[0].mxu0
    %1354 = vdwg.mxu0
    %1355 = vmatprep.subr.bf16.mxu0 0
    %1356 = vmatpush1.bf16.msra.mxu0 %v979
    %1357 = vmatprep.subr.bf16.mxu0 0
    %1358 = vmatpush1.bf16.msra.mxu0 %v980
    %1359 = vmatprep.subr.bf16.mxu0 0
    %1360 = vmatpush1.bf16.msra.mxu0 %v981
    %1361 = vmatprep.subr.bf16.mxu0 0
    %1362 = vmatpush1.bf16.msra.mxu0 %v982
    %1363 = vmatprep.subr.bf16.mxu0 0
    %1364 = vmatpush1.bf16.msra.mxu0 %v983
    %1365 = vmatprep.subr.bf16.mxu0 0
    %1366 = vmatpush1.bf16.msra.mxu0 %v984
    %1367 = vmatprep.subr.bf16.mxu0 0
    %1368 = vmatpush1.bf16.msra.mxu0 %v985
    %1369 = vmatprep.subr.bf16.mxu0 0
    %1370 = vmatpush1.bf16.msra.mxu0 %v986
    %1371 = vmatprep.subr.bf16.mxu0 0
    %1372 = vmatpush1.bf16.msra.mxu0 %v987
    %1373 = vmatprep.subr.bf16.mxu0 0
    %1374 = vmatpush1.bf16.msra.mxu0 %v988
    %1375 = vmatprep.subr.bf16.mxu0 0
    %1376 = vmatpush1.bf16.msra.mxu0 %v989
    %1377 = vmatprep.subr.bf16.mxu0 0
    %1378 = vmatpush1.bf16.msra.mxu0 %v990
    %1379 = vmatprep.subr.bf16.mxu0 0
    %1380 = vmatpush1.bf16.msra.mxu0 %v991
    %1381 = vmatprep.subr.bf16.mxu0 0
    %1382 = vmatpush1.bf16.msra.mxu0 %v992
    %1383 = vmatprep.subr.bf16.mxu0 0
    %1384 = vmatpush1.bf16.msra.mxu0 %v993
    %1385 = vmatprep.subr.bf16.mxu0 0
    %1386 = vmatpush1.bf16.msra.mxu0 %v994
    %1387 = vmatprep.mubr.bf16.mxu0 %v119
    %1388 = vmatmul.mubr.bf16.gmra.mrb[0].mxu0 %v118
    %v1389 = vpop.f32.mrb[0].mxu0
    %v1390 = vadd.f32 %v1350, %v1389
    %v1391 = vpop.f32.mrb[0].mxu0
    %v1392 = vpop.f32.mrb[0].mxu0
    %v1393 = vpop.f32.mrb[0].mxu0
    %1394 = vdwg.mxu0
    %1395 = vmatprep.subr.bf16.mxu0 0
    %1396 = vmatpush1.bf16.msra.mxu0 %v995
    %1397 = vmatprep.subr.bf16.mxu0 0
    %1398 = vmatpush1.bf16.msra.mxu0 %v996
    %1399 = vmatprep.subr.bf16.mxu0 0
    %1400 = vmatpush1.bf16.msra.mxu0 %v997
    %1401 = vmatprep.subr.bf16.mxu0 0
    %1402 = vmatpush1.bf16.msra.mxu0 %v998
    %1403 = vmatprep.subr.bf16.mxu0 0
    %1404 = vmatpush1.bf16.msra.mxu0 %v999
    %1405 = vmatprep.subr.bf16.mxu0 0
    %1406 = vmatpush1.bf16.msra.mxu0 %v1000
    %1407 = vmatprep.subr.bf16.mxu0 0
    %1408 = vmatpush1.bf16.msra.mxu0 %v1001
    %1409 = vmatprep.subr.bf16.mxu0 0
    %1410 = vmatpush1.bf16.msra.mxu0 %v1002
    %1411 = vmatprep.subr.bf16.mxu0 0
    %1412 = vmatpush1.bf16.msra.mxu0 %v1003
    %1413 = vmatprep.subr.bf16.mxu0 0
    %1414 = vmatpush1.bf16.msra.mxu0 %v1004
    %1415 = vmatprep.subr.bf16.mxu0 0
    %1416 = vmatpush1.bf16.msra.mxu0 %v1005
    %1417 = vmatprep.subr.bf16.mxu0 0
    %1418 = vmatpush1.bf16.msra.mxu0 %v1006
    %1419 = vmatprep.subr.bf16.mxu0 0
    %1420 = vmatpush1.bf16.msra.mxu0 %v1007
    %1421 = vmatprep.subr.bf16.mxu0 0
    %1422 = vmatpush1.bf16.msra.mxu0 %v1008
    %1423 = vmatprep.subr.bf16.mxu0 0
    %1424 = vmatpush1.bf16.msra.mxu0 %v1009
    %1425 = vmatprep.subr.bf16.mxu0 0
    %1426 = vmatpush1.bf16.msra.mxu0 %v1010
    %1427 = vmatprep.mubr.bf16.mxu0 %v121
    %1428 = vmatmul.mubr.bf16.gmra.mrb[0].mxu0 %v120
    %v1429 = vpop.f32.mrb[0].mxu0
    %v1430 = vadd.f32 %v1390, %v1429
    %v1431 = vpop.f32.mrb[0].mxu0
    %v1432 = vpop.f32.mrb[0].mxu0
    %v1433 = vpop.f32.mrb[0].mxu0
    %1434 = vdwg.mxu0
    %1435 = vmatprep.subr.bf16.mxu0 0
    %1436 = vmatpush1.bf16.msra.mxu0 %v1011
    %1437 = vmatprep.subr.bf16.mxu0 0
    %1438 = vmatpush1.bf16.msra.mxu0 %v1012
    %1439 = vmatprep.subr.bf16.mxu0 0
    %1440 = vmatpush1.bf16.msra.mxu0 %v1013
    %1441 = vmatprep.subr.bf16.mxu0 0
    %1442 = vmatpush1.bf16.msra.mxu0 %v1014
    %1443 = vmatprep.subr.bf16.mxu0 0
    %1444 = vmatpush1.bf16.msra.mxu0 %v1015
    %1445 = vmatprep.subr.bf16.mxu0 0
    %1446 = vmatpush1.bf16.msra.mxu0 %v1016
    %1447 = vmatprep.subr.bf16.mxu0 0
    %1448 = vmatpush1.bf16.msra.mxu0 %v1017
    %1449 = vmatprep.subr.bf16.mxu0 0
    %1450 = vmatpush1.bf16.msra.mxu0 %v1018
    %1451 = vmatprep.subr.bf16.mxu0 0
    %1452 = vmatpush1.bf16.msra.mxu0 %v1019
    %1453 = vmatprep.subr.bf16.mxu0 0
    %1454 = vmatpush1.bf16.msra.mxu0 %v1020
    %1455 = vmatprep.subr.bf16.mxu0 0
    %1456 = vmatpush1.bf16.msra.mxu0 %v1021
    %1457 = vmatprep.subr.bf16.mxu0 0
    %1458 = vmatpush1.bf16.msra.mxu0 %v1022
    %1459 = vmatprep.subr.bf16.mxu0 0
    %1460 = vmatpush1.bf16.msra.mxu0 %v1023
    %1461 = vmatprep.subr.bf16.mxu0 0
    %1462 = vmatpush1.bf16.msra.mxu0 %v1024
    %1463 = vmatprep.subr.bf16.mxu0 0
    %1464 = vmatpush1.bf16.msra.mxu0 %v1025
    %1465 = vmatprep.subr.bf16.mxu0 0
    %1466 = vmatpush1.bf16.msra.mxu0 %v1026
    %1467 = vmatprep.mubr.bf16.mxu0 %v123
    %1468 = vmatmul.mubr.bf16.gmra.mrb[0].mxu0 %v122
    %v1469 = vpop.f32.mrb[0].mxu0
    %v1470 = vadd.f32 %v1430, %v1469
    %v1471 = vpop.f32.mrb[0].mxu0
    %v1472 = vpop.f32.mrb[0].mxu0
    %v1473 = vpop.f32.mrb[0].mxu0
    %1474 = vdwg.mxu0
    %1475 = vst [vmem:[#allocation2] sm:$0x3] %v1470
    // Predicated region
    $region14: #{cnn_cifar_forward.3} parent=1 // pred_check
      _
    $region15: #{cnn_cifar_forward.3} parent=1 // pred_check_branch
      %1477 = sbr.rel (0) target = $region17
    $region16: #{cnn_cifar_forward.3} parent=1 // pred_region
      %s1479 = ssub.s32 32, 32
      %1480 = vsyncadd [#allocation3], %s1479
      %s1482 = sshll.u32 [#allocation2], 4
      %s1483 = int_to_ptr.vmem [resolvable:$true] %s1482
      %1485 = dma.vmem_to_hbm [thread:$0]  %s1483, 32, %s3, [#allocation3]
    $region17: #{cnn_cifar_forward.3} parent=1 // pred_fallthru
      _
    // Predicated region
    $region18: #{cnn_cifar_forward.3} parent=1 // pred_check
      _
    $region19: #{cnn_cifar_forward.3} parent=1 // pred_check_branch
      %1487 = sbr.rel (0) target = $region21
    $region20: #{cnn_cifar_forward.3} parent=1 // pred_region
      %1488 = dma.done [#allocation3], 32
    $region21: #{cnn_cifar_forward.3} parent=1 // pred_fallthru
      _
    %1489 = vsyncpa [#allocation3], 1

// kernel: cnn_cifar_forward.2
$region0: #{cnn_cifar_forward.2}
  #allocation0 [shape = 'u32[]', space=smem, size = 0x4, offset = 0x4, fixed_abs, tag = 'smem constant byte address 0x4 - core index']
  #allocation1 [shape = 'u32[144,128]{1,0:T(1,128)}', space=vmem, size = 0x12000, scoped, tag = 'internal scratch']
  #allocation2 [shape = 'f32[869,128]{1,0:T(8,128)}', space=vmem, size = 0x6d000, scoped, tag = 'scratch operand']
  #allocation3 [shape = 'f32[225,128]{1,0:T(8,128)}', space=vmem, size = 0x1d000, scoped, tag = 'scratch operand']
  #allocation4 [shape = 'bf16[193,1152]{1,0:T(8,128)(2,1)}', space=vmem, size = 0x70800, scoped, tag = 'scratch operand']
  #allocation5 [shape = 'f32[177,128]{1,0:T(8,128)}', space=vmem, size = 0x17000, scoped, tag = 'scratch operand']
  #allocation6 [shape = 'f32[36,128]{1,0:T(8,128)}', space=vmem, size = 0x5000, scoped, tag = 'scratch operand']
  #allocation7 [shape = 'bf16[22,1152]{1,0:T(8,128)(2,1)}', space=vmem, size = 0xd800, scoped, tag = 'scratch operand']
  %s0 = inlined_call_operand.vmem [shape: bf16[2,900,32], index: 0, kind: input, shape index: {}]
  %s1 = inlined_call_operand.vmem [shape: bf16[32,128], index: 1, kind: input, shape index: {}]
  %s2 = inlined_call_operand.vmem [shape: f32[1,128], index: 2, kind: input, shape index: {}]
  %s3 = inlined_call_operand.vmem [shape: bf16[1152,128], index: 3, kind: input, shape index: {}]
  %s4 = inlined_call_operand.vmem [shape: f32[1,128], index: 4, kind: input, shape index: {}]
  %s5 = inlined_call_operand.vmem [shape: bf16[1152,128], index: 5, kind: input, shape index: {}]
  %s6 = inlined_call_operand.vmem [shape: f32[1,128], index: 6, kind: input, shape index: {}]
  %s7 = inlined_call_operand.vmem [shape: f32[2,16,128], index: 7, kind: output, shape index: {}]
  %s8 = sld [smem:[#allocation0]]
  $region61: #{cnn_cifar_forward.2} parent=0
    _
  %s10 = ssub.s32 1, %s8
  %s11 = scalar_select 0, %s10, %s8
  loop: start=0, step=1, limit=4
  $region2: #{cnn_cifar_forward.2} parent=0 // loop_pre_header
    _
  $region3: #{cnn_cifar_forward.2} parent=0 // loop_header
    %s13 = sphi 0, %s17
    %p14 = scmp.ge.s32.totalorder %s13, 4
    %s23 = sphi 0, %s25
    %s26 = sphi 0, %s23
    %s27 = sphi 0, %s26
    %s43 = sphi 0, %s27
    %s47 = sphi 0, %s47
    %s49 = sphi 0, %s47
    %s50 = sphi 0, %s49
    %s64 = sphi 0, %s50
    %s68 = sphi 0, %s68
    %s70 = sphi 0, %s68
    %s71 = sphi 0, %s70
    %s85 = sphi 0, %s71
    %s89 = sphi 0, %s89
    %s91 = sphi 0, %s89
    %s92 = sphi 0, %s91
    %s106 = sphi 0, %s92
    %s110 = sphi 0, %s110
    %s112 = sphi 0, %s110
    %s113 = sphi 0, %s112
    %s127 = sphi 0, %s113
    %s131 = sphi 0, %s131
    %s133 = sphi 0, %s131
    %s134 = sphi 0, %s133
    %s148 = sphi 0, %s134
    %s152 = sphi 0, %s152
    %s154 = sphi 0, %s152
    %s155 = sphi 0, %s154
    %s169 = sphi 0, %s155
    %s175 = sphi 0, %s177
    %s178 = sphi 0, %s175
    %s179 = sphi 0, %s178
    %s195 = sphi 0, %s179
  $region4: #{cnn_cifar_forward.2} parent=0 // loop_header_branch
    %16 = sbr.rel (%p14) target = $region8
  $region5: #{cnn_cifar_forward.2} parent=0 // loop_body
    %s18 = ssub.s32 %s13, 1
    %s19 = ssub.s32 %s13, 2
    %s20 = sadd.s32 %s13, 1
    %s21 = ssub.s32 %s13, %s20
    %p22 = scmp.eq.s32.totalorder %s21, 0
    %s24 = sadd.s32 %s23, 1
    %s25 = scalar_select %p22, %s23, %s24
    %p28 = pneg %p22
    %p29 = scmp.eq.s32.totalorder %s13, 1
    %p30 = por %p28, %p29
    %p31 = scmp.ne.s32.totalorder %s23, %s26
    %p32 = scmp.eq.s32.totalorder %s13, 0
    %p33 = por %p31, %p32
    %p34 = scmp.ne.s32.totalorder %s23, %s26
    %p35 = scmp.eq.s32.totalorder %s18, 1
    %p36 = por %p34, %p35
    %p37 = scmp.ne.s32.totalorder %s26, %s27
    %p38 = scmp.eq.s32.totalorder %s18, 0
    %p39 = por %p37, %p38
    %p40 = scmp.ne.s32.totalorder %s26, %s27
    %p41 = scmp.eq.s32.totalorder %s19, 1
    %p42 = por %p40, %p41
    %p44 = scmp.ne.s32.totalorder %s27, %s43
    %p45 = scmp.eq.s32.totalorder %s19, 0
    %p46 = por %p44, %p45
    %s48 = sadd.s32 %s47, 1
    %p51 = scmp.eq.s32.totalorder %s13, 1
    %p52 = scmp.ne.s32.totalorder %s47, %s49
    %p53 = scmp.eq.s32.totalorder %s13, 0
    %p54 = por %p52, %p53
    %p55 = scmp.ne.s32.totalorder %s47, %s49
    %p56 = scmp.eq.s32.totalorder %s18, 1
    %p57 = por %p55, %p56
    %p58 = scmp.ne.s32.totalorder %s49, %s50
    %p59 = scmp.eq.s32.totalorder %s18, 0
    %p60 = por %p58, %p59
    %p61 = scmp.ne.s32.totalorder %s49, %s50
    %p62 = scmp.eq.s32.totalorder %s19, 1
    %p63 = por %p61, %p62
    %p65 = scmp.ne.s32.totalorder %s50, %s64
    %p66 = scmp.eq.s32.totalorder %s19, 0
    %p67 = por %p65, %p66
    %s69 = sadd.s32 %s68, 1
    %p72 = scmp.eq.s32.totalorder %s13, 1
    %p73 = scmp.ne.s32.totalorder %s68, %s70
    %p74 = scmp.eq.s32.totalorder %s13, 0
    %p75 = por %p73, %p74
    %p76 = scmp.ne.s32.totalorder %s68, %s70
    %p77 = scmp.eq.s32.totalorder %s18, 1
    %p78 = por %p76, %p77
    %p79 = scmp.ne.s32.totalorder %s70, %s71
    %p80 = scmp.eq.s32.totalorder %s18, 0
    %p81 = por %p79, %p80
    %p82 = scmp.ne.s32.totalorder %s70, %s71
    %p83 = scmp.eq.s32.totalorder %s19, 1
    %p84 = por %p82, %p83
    %p86 = scmp.ne.s32.totalorder %s71, %s85
    %p87 = scmp.eq.s32.totalorder %s19, 0
    %p88 = por %p86, %p87
    %s90 = sadd.s32 %s89, 1
    %p93 = scmp.eq.s32.totalorder %s13, 1
    %p94 = scmp.ne.s32.totalorder %s89, %s91
    %p95 = scmp.eq.s32.totalorder %s13, 0
    %p96 = por %p94, %p95
    %p97 = scmp.ne.s32.totalorder %s89, %s91
    %p98 = scmp.eq.s32.totalorder %s18, 1
    %p99 = por %p97, %p98
    %p100 = scmp.ne.s32.totalorder %s91, %s92
    %p101 = scmp.eq.s32.totalorder %s18, 0
    %p102 = por %p100, %p101
    %p103 = scmp.ne.s32.totalorder %s91, %s92
    %p104 = scmp.eq.s32.totalorder %s19, 1
    %p105 = por %p103, %p104
    %p107 = scmp.ne.s32.totalorder %s92, %s106
    %p108 = scmp.eq.s32.totalorder %s19, 0
    %p109 = por %p107, %p108
    %s111 = sadd.s32 %s110, 1
    %p114 = scmp.eq.s32.totalorder %s13, 1
    %p115 = scmp.ne.s32.totalorder %s110, %s112
    %p116 = scmp.eq.s32.totalorder %s13, 0
    %p117 = por %p115, %p116
    %p118 = scmp.ne.s32.totalorder %s110, %s112
    %p119 = scmp.eq.s32.totalorder %s18, 1
    %p120 = por %p118, %p119
    %p121 = scmp.ne.s32.totalorder %s112, %s113
    %p122 = scmp.eq.s32.totalorder %s18, 0
    %p123 = por %p121, %p122
    %p124 = scmp.ne.s32.totalorder %s112, %s113
    %p125 = scmp.eq.s32.totalorder %s19, 1
    %p126 = por %p124, %p125
    %p128 = scmp.ne.s32.totalorder %s113, %s127
    %p129 = scmp.eq.s32.totalorder %s19, 0
    %p130 = por %p128, %p129
    %s132 = sadd.s32 %s131, 1
    %p135 = scmp.eq.s32.totalorder %s13, 1
    %p136 = scmp.ne.s32.totalorder %s131, %s133
    %p137 = scmp.eq.s32.totalorder %s13, 0
    %p138 = por %p136, %p137
    %p139 = scmp.ne.s32.totalorder %s131, %s133
    %p140 = scmp.eq.s32.totalorder %s18, 1
    %p141 = por %p139, %p140
    %p142 = scmp.ne.s32.totalorder %s133, %s134
    %p143 = scmp.eq.s32.totalorder %s18, 0
    %p144 = por %p142, %p143
    %p145 = scmp.ne.s32.totalorder %s133, %s134
    %p146 = scmp.eq.s32.totalorder %s19, 1
    %p147 = por %p145, %p146
    %p149 = scmp.ne.s32.totalorder %s134, %s148
    %p150 = scmp.eq.s32.totalorder %s19, 0
    %p151 = por %p149, %p150
    %s153 = sadd.s32 %s152, 1
    %p156 = scmp.eq.s32.totalorder %s13, 1
    %p157 = scmp.ne.s32.totalorder %s152, %s154
    %p158 = scmp.eq.s32.totalorder %s13, 0
    %p159 = por %p157, %p158
    %p160 = scmp.ne.s32.totalorder %s152, %s154
    %p161 = scmp.eq.s32.totalorder %s18, 1
    %p162 = por %p160, %p161
    %p163 = scmp.ne.s32.totalorder %s154, %s155
    %p164 = scmp.eq.s32.totalorder %s18, 0
    %p165 = por %p163, %p164
    %p166 = scmp.ne.s32.totalorder %s154, %s155
    %p167 = scmp.eq.s32.totalorder %s19, 1
    %p168 = por %p166, %p167
    %p170 = scmp.ne.s32.totalorder %s155, %s169
    %p171 = scmp.eq.s32.totalorder %s19, 0
    %p172 = por %p170, %p171
    %s173 = ssub.s32 %s13, %s20
    %p174 = scmp.eq.s32.totalorder %s173, 0
    %s176 = sadd.s32 %s175, 1
    %s177 = scalar_select %p174, %s175, %s176
    %p180 = pneg %p174
    %p181 = scmp.eq.s32.totalorder %s13, 1
    %p182 = por %p180, %p181
    %p183 = scmp.ne.s32.totalorder %s175, %s178
    %p184 = scmp.eq.s32.totalorder %s13, 0
    %p185 = por %p183, %p184
    %p186 = scmp.ne.s32.totalorder %s175, %s178
    %p187 = scmp.eq.s32.totalorder %s18, 1
    %p188 = por %p186, %p187
    %p189 = scmp.ne.s32.totalorder %s178, %s179
    %p190 = scmp.eq.s32.totalorder %s18, 0
    %p191 = por %p189, %p190
    %p192 = scmp.ne.s32.totalorder %s178, %s179
    %p193 = scmp.eq.s32.totalorder %s19, 1
    %p194 = por %p192, %p193
    %p196 = scmp.ne.s32.totalorder %s179, %s195
    %p197 = scmp.eq.s32.totalorder %s19, 0
    %p198 = por %p196, %p197
    %p199 = scmp.le.s32.totalorder 1, %s13
    %p200 = scmp.lt.s32.totalorder %s13, 3
    %p201 = pnand %p199, %p200
    %p202 = pneg %p201
    // Predicated region
    $region9: #{cnn_cifar_forward.2} parent=5 // pred_check
      _
    $region10: #{cnn_cifar_forward.2} parent=5 // pred_check_branch
      %204 = sbr.rel (%p201) target = $region12
    $region11: #{cnn_cifar_forward.2} parent=5 // pred_region
      %s205 = ssub.s32 %s13, 1
      // Predicated region
      $region13: #{cnn_cifar_forward.2} parent=11 // pred_check
        %p206 = pneg %p60
      $region14: #{cnn_cifar_forward.2} parent=11 // pred_check_branch
        %208 = sbr.rel (%p206) target = $region16
      $region15: #{cnn_cifar_forward.2} parent=11 // pred_region
        _
      $region16: #{cnn_cifar_forward.2} parent=11 // pred_fallthru
        _
      // Predicated region
      $region17: #{cnn_cifar_forward.2} parent=11 // pred_check
        %p209 = pneg %p81
      $region18: #{cnn_cifar_forward.2} parent=11 // pred_check_branch
        %211 = sbr.rel (%p209) target = $region20
      $region19: #{cnn_cifar_forward.2} parent=11 // pred_region
        _
      $region20: #{cnn_cifar_forward.2} parent=11 // pred_fallthru
        _
      // Predicated region
      $region21: #{cnn_cifar_forward.2} parent=11 // pred_check
        %p212 = pneg %p102
      $region22: #{cnn_cifar_forward.2} parent=11 // pred_check_branch
        %214 = sbr.rel (%p212) target = $region24
      $region23: #{cnn_cifar_forward.2} parent=11 // pred_region
        _
      $region24: #{cnn_cifar_forward.2} parent=11 // pred_fallthru
        _
      // Predicated region
      $region25: #{cnn_cifar_forward.2} parent=11 // pred_check
        %p215 = pneg %p123
      $region26: #{cnn_cifar_forward.2} parent=11 // pred_check_branch
        %217 = sbr.rel (%p215) target = $region28
      $region27: #{cnn_cifar_forward.2} parent=11 // pred_region
        _
      $region28: #{cnn_cifar_forward.2} parent=11 // pred_fallthru
        _
      // Predicated region
      $region29: #{cnn_cifar_forward.2} parent=11 // pred_check
        %p218 = pneg %p144
      $region30: #{cnn_cifar_forward.2} parent=11 // pred_check_branch
        %220 = sbr.rel (%p218) target = $region32
      $region31: #{cnn_cifar_forward.2} parent=11 // pred_region
        _
      $region32: #{cnn_cifar_forward.2} parent=11 // pred_fallthru
        _
      // Predicated region
      $region33: #{cnn_cifar_forward.2} parent=11 // pred_check
        %p221 = pneg %p165
      $region34: #{cnn_cifar_forward.2} parent=11 // pred_check_branch
        %223 = sbr.rel (%p221) target = $region36
      $region35: #{cnn_cifar_forward.2} parent=11 // pred_region
        _
      $region36: #{cnn_cifar_forward.2} parent=11 // pred_fallthru
        _
    $region12: #{cnn_cifar_forward.2} parent=5 // pred_fallthru
      _
    %p224 = scmp.lt.s32.totalorder %s13, 2
    // Predicated region
    $region37: #{cnn_cifar_forward.2} parent=5 // pred_check
      %p225 = pneg %p224
    $region38: #{cnn_cifar_forward.2} parent=5 // pred_check_branch
      %227 = sbr.rel (%p225) target = $region40
    $region39: #{cnn_cifar_forward.2} parent=5 // pred_region
      // Predicated region
      $region41: #{cnn_cifar_forward.2} parent=39 // pred_check
        %p228 = pneg %p33
      $region42: #{cnn_cifar_forward.2} parent=39 // pred_check_branch
        %230 = sbr.rel (%p228) target = $region44
      $region43: #{cnn_cifar_forward.2} parent=39 // pred_region
        %p231 = scmp.lt.s32.totalorder %s13, 1
        %s232 = scalar_select %p231, %s13, 1
        %s233 = smul.addr %s232, 113
        %s234 = smul.addr %s233, 4
        %s235 = scalar_lea.vmem %s0, %s234
      $region44: #{cnn_cifar_forward.2} parent=39 // pred_fallthru
        _
    $region40: #{cnn_cifar_forward.2} parent=5 // pred_fallthru
      _
    %p236 = scmp.le.s32.totalorder 1, %s13
    %p237 = scmp.lt.s32.totalorder %s13, 3
    %p238 = pnand %p236, %p237
    %p239 = pneg %p238
    // Predicated region
    $region45: #{cnn_cifar_forward.2} parent=5 // pred_check
      _
    $region46: #{cnn_cifar_forward.2} parent=5 // pred_check_branch
      %241 = sbr.rel (%p238) target = $region48
    $region47: #{cnn_cifar_forward.2} parent=5 // pred_region
      %s242 = ssub.s32 %s13, 1
      %p243 = scmp.lt.s32.totalorder %s18, 1
      %s244 = scalar_select %p243, %s18, 1
      %s245 = smul.addr %s244, 113
      %s246 = smul.addr %s245, 4
      %s247 = scalar_lea.vmem %s0, %s246
      %p248 = pneg %p39
      %p249 = pneg %p36
      %p250 = pneg %p60
      %p251 = pneg %p57
      %p252 = pneg %p81
      %p253 = pneg %p78
      %p254 = pneg %p102
      %p255 = pneg %p99
      %p256 = pneg %p123
      %p257 = pneg %p120
      %p258 = pneg %p144
      %p259 = pneg %p141
      %p260 = pneg %p165
      %p261 = pneg %p162
      %p262 = pneg %p191
      %p263 = pneg %p188
      %p264 = scmp.lt.s32.totalorder %s18, 1
      %s265 = scalar_select %p264, %s18, 1
      %s266 = smul.addr %s265, 2
      %s267 = smul.addr %s266, 8
      %s268 = scalar_lea.vmem %s7, %s267
      %p269 = scmp.lt.s32.totalorder %s18, 1
      %s270 = scalar_select %p269, %s18, 1
      %s271 = smul.addr %s270, 113
      %s272 = smul.addr %s271, 4
      %s273 = scalar_lea.vmem %s0, %s272
      %p274 = scmp.lt.s32.totalorder %s18, 1
      %s275 = scalar_select %p274, %s18, 1
      %s276 = smul.addr %s275, 2
      %s277 = smul.addr %s276, 8
      %s278 = scalar_lea.vmem %s7, %s277
      %v280 = vld [vmem:[%s273] sm:$0xf]
      %v281 = vld [vmem:[%s273 + $0x4] sm:$0xf]
      %v282 = vld [vmem:[%s273 + $0x8] sm:$0xf]
      %v283 = vld [vmem:[%s273 + $0xc] sm:$0xf]
      %v284 = vld [vmem:[%s273 + $0x10] sm:$0xf]
      %v285 = vld [vmem:[%s273 + $0x14] sm:$0xf]
      %v286 = vld [vmem:[%s273 + $0x18] sm:$0xf]
      %v287 = vld [vmem:[%s273 + $0x1c] sm:$0xf]
      %v288 = vld [vmem:[%s273 + $0x20] sm:$0xf]
      %v289 = vld [vmem:[%s273 + $0x24] sm:$0xf]
      %v290 = vld [vmem:[%s273 + $0x28] sm:$0xf]
      %v291 = vld [vmem:[%s273 + $0x2c] sm:$0xf]
      %v292 = vld [vmem:[%s273 + $0x30] sm:$0xf]
      %v293 = vld [vmem:[%s273 + $0x34] sm:$0xf]
      %v294 = vld [vmem:[%s273 + $0x38] sm:$0xf]
      %v295 = vld [vmem:[%s273 + $0x3c] sm:$0xf]
      %v296 = vld [vmem:[%s273 + $0x40] sm:$0xf]
      %v297 = vld [vmem:[%s273 + $0x44] sm:$0xf]
      %v298 = vld [vmem:[%s273 + $0x48] sm:$0xf]
      %v299 = vld [vmem:[%s273 + $0x4c] sm:$0xf]
      %v300 = vld [vmem:[%s273 + $0x50] sm:$0xf]
      %v301 = vld [vmem:[%s273 + $0x54] sm:$0xf]
      %v302 = vld [vmem:[%s273 + $0x58] sm:$0xf]
      %v303 = vld [vmem:[%s273 + $0x5c] sm:$0xf]
      %v304 = vld [vmem:[%s273 + $0x60] sm:$0xf]
      %v305 = vld [vmem:[%s273 + $0x64] sm:$0xf]
      %v306 = vld [vmem:[%s273 + $0x68] sm:$0xf]
      %v307 = vld [vmem:[%s273 + $0x6c] sm:$0xf]
      %v308 = vld [vmem:[%s273 + $0x70] sm:$0xf]
      %v309 = vld [vmem:[%s273 + $0x74] sm:$0xf]
      %v310 = vld [vmem:[%s273 + $0x78] sm:$0xf]
      %v311 = vld [vmem:[%s273 + $0x7c] sm:$0xf]
      %v312 = vld [vmem:[%s273 + $0x80] sm:$0xf]
      %v313 = vld [vmem:[%s273 + $0x84] sm:$0xf]
      %v314 = vld [vmem:[%s273 + $0x88] sm:$0xf]
      %v315 = vld [vmem:[%s273 + $0x8c] sm:$0xf]
      %v316 = vld [vmem:[%s273 + $0x90] sm:$0xf]
      %v317 = vld [vmem:[%s273 + $0x94] sm:$0xf]
      %v318 = vld [vmem:[%s273 + $0x98] sm:$0xf]
      %v319 = vld [vmem:[%s273 + $0x9c] sm:$0xf]
      %v320 = vld [vmem:[%s273 + $0xa0] sm:$0xf]
      %v321 = vld [vmem:[%s273 + $0xa4] sm:$0xf]
      %v322 = vld [vmem:[%s273 + $0xa8] sm:$0xf]
      %v323 = vld [vmem:[%s273 + $0xac] sm:$0xf]
      %v324 = vld [vmem:[%s273 + $0xb0] sm:$0xf]
      %v325 = vld [vmem:[%s273 + $0xb4] sm:$0xf]
      %v326 = vld [vmem:[%s273 + $0xb8] sm:$0xf]
      %v327 = vld [vmem:[%s273 + $0xbc] sm:$0xf]
      %v328 = vld [vmem:[%s273 + $0xc0] sm:$0xf]
      %v329 = vld [vmem:[%s273 + $0xc4] sm:$0xf]
      %v330 = vld [vmem:[%s273 + $0xc8] sm:$0xf]
      %v331 = vld [vmem:[%s273 + $0xcc] sm:$0xf]
      %v332 = vld [vmem:[%s273 + $0xd0] sm:$0xf]
      %v333 = vld [vmem:[%s273 + $0xd4] sm:$0xf]
      %v334 = vld [vmem:[%s273 + $0xd8] sm:$0xf]
      %v335 = vld [vmem:[%s273 + $0xdc] sm:$0xf]
      %v336 = vld [vmem:[%s273 + $0xe0] sm:$0xf]
      %v337 = vld [vmem:[%s273 + $0xe4] sm:$0xf]
      %v338 = vld [vmem:[%s273 + $0xe8] sm:$0xf]
      %v339 = vld [vmem:[%s273 + $0xec] sm:$0xf]
      %v340 = vld [vmem:[%s273 + $0xf0] sm:$0xf]
      %v341 = vld [vmem:[%s273 + $0xf4] sm:$0xf]
      %v342 = vld [vmem:[%s273 + $0xf8] sm:$0xf]
      %v343 = vld [vmem:[%s273 + $0xfc] sm:$0xf]
      %v344 = vld [vmem:[%s273 + $0x100] sm:$0xf]
      %v345 = vld [vmem:[%s273 + $0x104] sm:$0xf]
      %v346 = vld [vmem:[%s273 + $0x108] sm:$0xf]
      %v347 = vld [vmem:[%s273 + $0x10c] sm:$0xf]
      %v348 = vld [vmem:[%s273 + $0x110] sm:$0xf]
      %v349 = vld [vmem:[%s273 + $0x114] sm:$0xf]
      %v350 = vld [vmem:[%s273 + $0x118] sm:$0xf]
      %v351 = vld [vmem:[%s273 + $0x11c] sm:$0xf]
      %v352 = vld [vmem:[%s273 + $0x120] sm:$0xf]
      %v353 = vld [vmem:[%s273 + $0x124] sm:$0xf]
      %v354 = vld [vmem:[%s273 + $0x128] sm:$0xf]
      %v355 = vld [vmem:[%s273 + $0x12c] sm:$0xf]
      %v356 = vld [vmem:[%s273 + $0x130] sm:$0xf]
      %v357 = vld [vmem:[%s273 + $0x134] sm:$0xf]
      %v358 = vld [vmem:[%s273 + $0x138] sm:$0xf]
      %v359 = vld [vmem:[%s273 + $0x13c] sm:$0xf]
      %v360 = vld [vmem:[%s273 + $0x140] sm:$0xf]
      %v361 = vld [vmem:[%s273 + $0x144] sm:$0xf]
      %v362 = vld [vmem:[%s273 + $0x148] sm:$0xf]
      %v363 = vld [vmem:[%s273 + $0x14c] sm:$0xf]
      %v364 = vld [vmem:[%s273 + $0x150] sm:$0xf]
      %v365 = vld [vmem:[%s273 + $0x154] sm:$0xf]
      %v366 = vld [vmem:[%s273 + $0x158] sm:$0xf]
      %v367 = vld [vmem:[%s273 + $0x15c] sm:$0xf]
      %v368 = vld [vmem:[%s273 + $0x160] sm:$0xf]
      %v369 = vld [vmem:[%s273 + $0x164] sm:$0xf]
      %v370 = vld [vmem:[%s273 + $0x168] sm:$0xf]
      %v371 = vld [vmem:[%s273 + $0x16c] sm:$0xf]
      %v372 = vld [vmem:[%s273 + $0x170] sm:$0xf]
      %v373 = vld [vmem:[%s273 + $0x174] sm:$0xf]
      %v374 = vld [vmem:[%s273 + $0x178] sm:$0xf]
      %v375 = vld [vmem:[%s273 + $0x17c] sm:$0xf]
      %v376 = vld [vmem:[%s273 + $0x180] sm:$0xf]
      %v377 = vld [vmem:[%s273 + $0x184] sm:$0xf]
      %v378 = vld [vmem:[%s273 + $0x188] sm:$0xf]
      %v379 = vld [vmem:[%s273 + $0x18c] sm:$0xf]
      %v380 = vld [vmem:[%s273 + $0x190] sm:$0xf]
      %v381 = vld [vmem:[%s273 + $0x194] sm:$0xf]
      %v382 = vld [vmem:[%s273 + $0x198] sm:$0xf]
      %v383 = vld [vmem:[%s273 + $0x19c] sm:$0xf]
      %v384 = vld [vmem:[%s273 + $0x1a0] sm:$0xf]
      %v385 = vld [vmem:[%s273 + $0x1a4] sm:$0xf]
      %v386 = vld [vmem:[%s273 + $0x1a8] sm:$0xf]
      %v387 = vld [vmem:[%s273 + $0x1ac] sm:$0xf]
      %v388 = vld [vmem:[%s273 + $0x1b0] sm:$0xf]
      %v389 = vld [vmem:[%s273 + $0x1b4] sm:$0xf]
      %v390 = vld [vmem:[%s273 + $0x1b8] sm:$0xf]
      %v391 = vld [vmem:[%s273 + $0x1bc] sm:$0xf]
      %v392 = vld [vmem:[%s273 + $0x1c0] sm:$0x3]
      %v393 = vld [vmem:[%s1] sm:$0xf]
      %v394 = vld [vmem:[%s1 + $0x4] sm:$0xf]
      %v395 = vld [vmem:[%s1 + $0x8] sm:$0xf]
      %v396 = vld [vmem:[%s1 + $0xc] sm:$0xf]
      %v397 = vld [vmem:[%s2] sm:$0x1]
      %v399 = vlaneseq
      %v400 = vshrl.u32 %v399, 7
      %v401 = vsub.s32 0, %v400
      %v402 = vrot.slane %v397, %v401
      %v517 = vunpack.c.l.b16 %v280
      %v518 = vunpack.c.l.b16 %v281
      %v519 = vunpack.c.l.b16 %v282
      %v520 = vunpack.c.l.b16 %v283
      %v521 = vunpack.c.l.b16 %v284
      %v522 = vunpack.c.l.b16 %v285
      %v523 = vunpack.c.l.b16 %v286
      %v524 = vunpack.c.l.b16 %v287
      %v525 = vunpack.c.l.b16 %v288
      %v526 = vunpack.c.l.b16 %v289
      %v527 = vunpack.c.l.b16 %v290
      %v528 = vunpack.c.l.b16 %v291
      %v529 = vunpack.c.l.b16 %v292
      %v530 = vunpack.c.l.b16 %v293
      %v531 = vunpack.c.l.b16 %v294
      %v532 = vunpack.c.l.b16 %v295
      %v533 = vunpack.c.l.b16 %v296
      %v534 = vunpack.c.l.b16 %v297
      %v535 = vunpack.c.l.b16 %v298
      %v536 = vunpack.c.l.b16 %v299
      %v537 = vunpack.c.l.b16 %v300
      %v538 = vunpack.c.l.b16 %v301
      %v539 = vunpack.c.l.b16 %v302
      %v540 = vunpack.c.l.b16 %v303
      %v541 = vunpack.c.l.b16 %v304
      %v542 = vunpack.c.l.b16 %v305
      %v543 = vunpack.c.l.b16 %v306
      %v544 = vunpack.c.l.b16 %v307
      %v545 = vunpack.c.l.b16 %v308
      %v546 = vunpack.c.l.b16 %v309
      %v547 = vunpack.c.l.b16 %v310
      %v548 = vunpack.c.l.b16 %v311
      %v549 = vunpack.c.l.b16 %v312
      %v550 = vunpack.c.l.b16 %v313
      %v551 = vunpack.c.l.b16 %v314
      %v552 = vunpack.c.l.b16 %v315
      %v553 = vunpack.c.l.b16 %v316
      %v554 = vunpack.c.l.b16 %v317
      %v555 = vunpack.c.l.b16 %v318
      %v556 = vunpack.c.l.b16 %v319
      %v557 = vunpack.c.l.b16 %v320
      %v558 = vunpack.c.l.b16 %v321
      %v559 = vunpack.c.l.b16 %v322
      %v560 = vunpack.c.l.b16 %v323
      %v561 = vunpack.c.l.b16 %v324
      %v562 = vunpack.c.l.b16 %v325
      %v563 = vunpack.c.l.b16 %v326
      %v564 = vunpack.c.l.b16 %v327
      %v565 = vunpack.c.l.b16 %v328
      %v566 = vunpack.c.l.b16 %v329
      %v567 = vunpack.c.l.b16 %v330
      %v568 = vunpack.c.l.b16 %v331
      %v569 = vunpack.c.l.b16 %v332
      %v570 = vunpack.c.l.b16 %v333
      %v571 = vunpack.c.l.b16 %v334
      %v572 = vunpack.c.l.b16 %v335
      %v573 = vunpack.c.l.b16 %v336
      %v574 = vunpack.c.l.b16 %v337
      %v575 = vunpack.c.l.b16 %v338
      %v576 = vunpack.c.l.b16 %v339
      %v577 = vunpack.c.l.b16 %v340
      %v578 = vunpack.c.l.b16 %v341
      %v579 = vunpack.c.l.b16 %v342
      %v580 = vunpack.c.l.b16 %v343
      %v581 = vunpack.c.l.b16 %v344
      %v582 = vunpack.c.l.b16 %v345
      %v583 = vunpack.c.l.b16 %v346
      %v584 = vunpack.c.l.b16 %v347
      %v585 = vunpack.c.l.b16 %v348
      %v586 = vunpack.c.l.b16 %v349
      %v587 = vunpack.c.l.b16 %v350
      %v588 = vunpack.c.l.b16 %v351
      %v589 = vunpack.c.l.b16 %v352
      %v590 = vunpack.c.l.b16 %v353
      %v591 = vunpack.c.l.b16 %v354
      %v592 = vunpack.c.l.b16 %v355
      %v593 = vunpack.c.l.b16 %v356
      %v594 = vunpack.c.l.b16 %v357
      %v595 = vunpack.c.l.b16 %v358
      %v596 = vunpack.c.l.b16 %v359
      %v597 = vunpack.c.l.b16 %v360
      %v598 = vunpack.c.l.b16 %v361
      %v599 = vunpack.c.l.b16 %v362
      %v600 = vunpack.c.l.b16 %v363
      %v601 = vunpack.c.l.b16 %v364
      %v602 = vunpack.c.l.b16 %v365
      %v603 = vunpack.c.l.b16 %v366
      %v604 = vunpack.c.l.b16 %v367
      %v605 = vunpack.c.l.b16 %v368
      %v606 = vunpack.c.l.b16 %v369
      %v607 = vunpack.c.l.b16 %v370
      %v608 = vunpack.c.l.b16 %v371
      %v609 = vunpack.c.l.b16 %v372
      %v610 = vunpack.c.l.b16 %v373
      %v611 = vunpack.c.l.b16 %v374
      %v612 = vunpack.c.l.b16 %v375
      %v613 = vunpack.c.l.b16 %v376
      %v614 = vunpack.c.l.b16 %v377
      %v615 = vunpack.c.l.b16 %v378
      %v616 = vunpack.c.l.b16 %v379
      %v617 = vunpack.c.l.b16 %v380
      %v618 = vunpack.c.l.b16 %v381
      %v619 = vunpack.c.l.b16 %v382
      %v620 = vunpack.c.l.b16 %v383
      %v621 = vunpack.c.l.b16 %v384
      %v622 = vunpack.c.l.b16 %v385
      %v623 = vunpack.c.l.b16 %v386
      %v624 = vunpack.c.l.b16 %v387
      %v625 = vunpack.c.l.b16 %v388
      %v626 = vunpack.c.l.b16 %v389
      %v627 = vunpack.c.l.b16 %v390
      %v628 = vunpack.c.l.b16 %v391
      %v629 = vunpack.c.l.b16 %v392
      %v630 = vpack.c.b16 %v518, %v517
      %v631 = vpack.c.b16 %v520, %v519
      %v632 = vpack.c.b16 %v522, %v521
      %v633 = vpack.c.b16 %v524, %v523
      %v634 = vpack.c.b16 %v526, %v525
      %v635 = vpack.c.b16 %v528, %v527
      %v636 = vpack.c.b16 %v530, %v529
      %v637 = vpack.c.b16 %v532, %v531
      %v638 = vpack.c.b16 %v534, %v533
      %v639 = vpack.c.b16 %v536, %v535
      %v640 = vpack.c.b16 %v538, %v537
      %v641 = vpack.c.b16 %v540, %v539
      %v642 = vpack.c.b16 %v542, %v541
      %v643 = vpack.c.b16 %v544, %v543
      %v644 = vpack.c.b16 %v546, %v545
      %v645 = vpack.c.b16 %v548, %v547
      %v646 = vpack.c.b16 %v550, %v549
      %v647 = vpack.c.b16 %v552, %v551
      %v648 = vpack.c.b16 %v554, %v553
      %v649 = vpack.c.b16 %v556, %v555
      %v650 = vpack.c.b16 %v558, %v557
      %v651 = vpack.c.b16 %v560, %v559
      %v652 = vpack.c.b16 %v562, %v561
      %v653 = vpack.c.b16 %v564, %v563
      %v654 = vpack.c.b16 %v566, %v565
      %v655 = vpack.c.b16 %v568, %v567
      %v656 = vpack.c.b16 %v570, %v569
      %v657 = vpack.c.b16 %v572, %v571
      %v658 = vpack.c.b16 %v574, %v573
      %v659 = vpack.c.b16 %v576, %v575
      %v660 = vpack.c.b16 %v578, %v577
      %v661 = vpack.c.b16 %v580, %v579
      %v662 = vpack.c.b16 %v582, %v581
      %v663 = vpack.c.b16 %v584, %v583
      %v664 = vpack.c.b16 %v586, %v585
      %v665 = vpack.c.b16 %v588, %v587
      %v666 = vpack.c.b16 %v590, %v589
      %v667 = vpack.c.b16 %v592, %v591
      %v668 = vpack.c.b16 %v594, %v593
      %v669 = vpack.c.b16 %v596, %v595
      %v670 = vpack.c.b16 %v598, %v597
      %v671 = vpack.c.b16 %v600, %v599
      %v672 = vpack.c.b16 %v602, %v601
      %v673 = vpack.c.b16 %v604, %v603
      %v674 = vpack.c.b16 %v606, %v605
      %v675 = vpack.c.b16 %v608, %v607
      %v676 = vpack.c.b16 %v610, %v609
      %v677 = vpack.c.b16 %v612, %v611
      %v678 = vpack.c.b16 %v614, %v613
      %v679 = vpack.c.b16 %v616, %v615
      %v680 = vpack.c.b16 %v618, %v617
      %v681 = vpack.c.b16 %v620, %v619
      %v682 = vpack.c.b16 %v622, %v621
      %v683 = vpack.c.b16 %v624, %v623
      %v684 = vpack.c.b16 %v626, %v625
      %v685 = vpack.c.b16 %v628, %v627
      %v686 = vpack.c.b16 %v629, %v629
      %v691 = vunpack.c.l.b16 %v393
      %v692 = vunpack.c.l.b16 %v394
      %v693 = vunpack.c.l.b16 %v395
      %v694 = vunpack.c.l.b16 %v396
      %v695 = vpack.c.b16 %v692, %v691
      %v696 = vpack.c.b16 %v694, %v693
      %vm699 = vcmask 261120
      %v701 = vsel %vm699, %v630, 0
      %v704 = vsel %vm699, %v631, 0
      %v707 = vsel %vm699, %v632, 0
      %v710 = vsel %vm699, %v633, 0
      %v713 = vsel %vm699, %v634, 0
      %v716 = vsel %vm699, %v635, 0
      %v719 = vsel %vm699, %v636, 0
      %v722 = vsel %vm699, %v637, 0
      %v725 = vsel %vm699, %v638, 0
      %v728 = vsel %vm699, %v639, 0
      %v731 = vsel %vm699, %v640, 0
      %v734 = vsel %vm699, %v641, 0
      %v737 = vsel %vm699, %v642, 0
      %v740 = vsel %vm699, %v643, 0
      %v743 = vsel %vm699, %v644, 0
      %v746 = vsel %vm699, %v645, 0
      %v749 = vsel %vm699, %v646, 0
      %v752 = vsel %vm699, %v647, 0
      %v755 = vsel %vm699, %v648, 0
      %v758 = vsel %vm699, %v649, 0
      %v761 = vsel %vm699, %v650, 0
      %v764 = vsel %vm699, %v651, 0
      %v767 = vsel %vm699, %v652, 0
      %v770 = vsel %vm699, %v653, 0
      %v773 = vsel %vm699, %v654, 0
      %v776 = vsel %vm699, %v655, 0
      %v779 = vsel %vm699, %v656, 0
      %v782 = vsel %vm699, %v657, 0
      %v785 = vsel %vm699, %v658, 0
      %v788 = vsel %vm699, %v659, 0
      %v791 = vsel %vm699, %v660, 0
      %v794 = vsel %vm699, %v661, 0
      %v797 = vsel %vm699, %v662, 0
      %v800 = vsel %vm699, %v663, 0
      %v803 = vsel %vm699, %v664, 0
      %v806 = vsel %vm699, %v665, 0
      %v809 = vsel %vm699, %v666, 0
      %v812 = vsel %vm699, %v667, 0
      %v815 = vsel %vm699, %v668, 0
      %v818 = vsel %vm699, %v669, 0
      %v821 = vsel %vm699, %v670, 0
      %v824 = vsel %vm699, %v671, 0
      %v827 = vsel %vm699, %v672, 0
      %v830 = vsel %vm699, %v673, 0
      %v833 = vsel %vm699, %v674, 0
      %v836 = vsel %vm699, %v675, 0
      %v839 = vsel %vm699, %v676, 0
      %v842 = vsel %vm699, %v677, 0
      %v845 = vsel %vm699, %v678, 0
      %v848 = vsel %vm699, %v679, 0
      %v851 = vsel %vm699, %v680, 0
      %v854 = vsel %vm699, %v681, 0
      %v857 = vsel %vm699, %v682, 0
      %v860 = vsel %vm699, %v683, 0
      %v863 = vsel %vm699, %v684, 0
      %v866 = vsel %vm699, %v685, 0
      %v869 = vsel %vm699, %v686, 0
      %871 = vmatprep.subr.bf16.mxu0 0
      %872 = vmatpush1.bf16.msra.mxu0 %v695
      %873 = vmatprep.subr.bf16.mxu0 0
      %874 = vmatpush1.bf16.msra.mxu0 %v696
      %875 = vmatprep.subr.bf16.mxu0 0
      %876 = vmatpush1.bf16.msra.mxu0 0
      %877 = vmatprep.subr.bf16.mxu0 0
      %878 = vmatpush1.bf16.msra.mxu0 0
      %879 = vmatprep.subr.bf16.mxu0 0
      %880 = vmatpush1.bf16.msra.mxu0 0
      %881 = vmatprep.subr.bf16.mxu0 0
      %882 = vmatpush1.bf16.msra.mxu0 0
      %883 = vmatprep.subr.bf16.mxu0 0
      %884 = vmatpush1.bf16.msra.mxu0 0
      %885 = vmatprep.subr.bf16.mxu0 0
      %886 = vmatpush1.bf16.msra.mxu0 0
      %887 = vmatprep.subr.bf16.mxu0 0
      %888 = vmatpush1.bf16.msra.mxu0 0
      %889 = vmatprep.subr.bf16.mxu0 0
      %890 = vmatpush1.bf16.msra.mxu0 0
      %891 = vmatprep.subr.bf16.mxu0 0
      %892 = vmatpush1.bf16.msra.mxu0 0
      %893 = vmatprep.subr.bf16.mxu0 0
      %894 = vmatpush1.bf16.msra.mxu0 0
      %895 = vmatprep.subr.bf16.mxu0 0
      %896 = vmatpush1.bf16.msra.mxu0 0
      %897 = vmatprep.subr.bf16.mxu0 0
      %898 = vmatpush1.bf16.msra.mxu0 0
      %899 = vmatprep.subr.bf16.mxu0 0
      %900 = vmatpush1.bf16.msra.mxu0 0
      %901 = vmatprep.subr.bf16.mxu0 0
      %902 = vmatpush1.bf16.msra.mxu0 0
      %903 = vmatprep.mubr.bf16.mxu0 0
      %904 = vmatmul.mubr.bf16.gmra.mrb[0].mxu0 %v701
      %v905 = vpop.f32.mrb[0].mxu0
      %v906 = vadd.f32 %v402, %v905
      %v907 = vpop.f32.mrb[0].mxu0
      %v908 = vpop.f32.mrb[0].mxu0
      %v909 = vadd.f32 %v402, %v908
      %v910 = vpop.f32.mrb[0].mxu0
      %911 = vmatprep.mubr.bf16.mxu0 0
      %912 = vmatmul.mubr.bf16.gmra.mrb[0].mxu0 %v704
      %v913 = vpop.f32.mrb[0].mxu0
      %v914 = vadd.f32 %v402, %v913
      %v915 = vpop.f32.mrb[0].mxu0
      %v916 = vpop.f32.mrb[0].mxu0
      %v917 = vadd.f32 %v402, %v916
      %v918 = vpop.f32.mrb[0].mxu0
      %919 = vmatprep.mubr.bf16.mxu0 0
      %920 = vmatmul.mubr.bf16.gmra.mrb[0].mxu0 %v707
      %v921 = vpop.f32.mrb[0].mxu0
      %v922 = vadd.f32 %v402, %v921
      %v923 = vpop.f32.mrb[0].mxu0
      %v924 = vpop.f32.mrb[0].mxu0
      %v925 = vadd.f32 %v402, %v924
      %v926 = vpop.f32.mrb[0].mxu0
      %927 = vmatprep.mubr.bf16.mxu0 0
      %928 = vmatmul.mubr.bf16.gmra.mrb[0].mxu0 %v710
      %v929 = vpop.f32.mrb[0].mxu0
      %v930 = vadd.f32 %v402, %v929
      %v931 = vpop.f32.mrb[0].mxu0
      %v932 = vpop.f32.mrb[0].mxu0
      %v933 = vadd.f32 %v402, %v932
      %v934 = vpop.f32.mrb[0].mxu0
      %935 = vmatprep.mubr.bf16.mxu0 0
      %936 = vmatmul.mubr.bf16.gmra.mrb[0].mxu0 %v713
      %v937 = vpop.f32.mrb[0].mxu0
      %v938 = vadd.f32 %v402, %v937
      %v939 = vpop.f32.mrb[0].mxu0
      %v940 = vpop.f32.mrb[0].mxu0
      %v941 = vadd.f32 %v402, %v940
      %v942 = vpop.f32.mrb[0].mxu0
      %943 = vmatprep.mubr.bf16.mxu0 0
      %944 = vmatmul.mubr.bf16.gmra.mrb[0].mxu0 %v716
      %v945 = vpop.f32.mrb[0].mxu0
      %v946 = vadd.f32 %v402, %v945
      %v947 = vpop.f32.mrb[0].mxu0
      %v948 = vpop.f32.mrb[0].mxu0
      %v949 = vadd.f32 %v402, %v948
      %v950 = vpop.f32.mrb[0].mxu0
      %951 = vmatprep.mubr.bf16.mxu0 0
      %952 = vmatmul.mubr.bf16.gmra.mrb[0].mxu0 %v719
      %v953 = vpop.f32.mrb[0].mxu0
      %v954 = vadd.f32 %v402, %v953
      %v955 = vpop.f32.mrb[0].mxu0
      %v956 = vpop.f32.mrb[0].mxu0
      %v957 = vadd.f32 %v402, %v956
      %v958 = vpop.f32.mrb[0].mxu0
      %959 = vmatprep.mubr.bf16.mxu0 0
      %960 = vmatmul.mubr.bf16.gmra.mrb[0].mxu0 %v722
      %v961 = vpop.f32.mrb[0].mxu0
      %v962 = vadd.f32 %v402, %v961
      %v963 = vpop.f32.mrb[0].mxu0
      %v964 = vpop.f32.mrb[0].mxu0
      %v965 = vadd.f32 %v402, %v964
      %v966 = vpop.f32.mrb[0].mxu0
      %967 = vmatprep.mubr.bf16.mxu0 0
      %968 = vmatmul.mubr.bf16.gmra.mrb[0].mxu0 %v725
      %v969 = vpop.f32.mrb[0].mxu0
      %v970 = vadd.f32 %v402, %v969
      %v971 = vpop.f32.mrb[0].mxu0
      %v972 = vpop.f32.mrb[0].mxu0
      %v973 = vadd.f32 %v402, %v972
      %v974 = vpop.f32.mrb[0].mxu0
      %975 = vmatprep.mubr.bf16.mxu0 0
      %976 = vmatmul.mubr.bf16.gmra.mrb[0].mxu0 %v728
      %v977 = vpop.f32.mrb[0].mxu0
      %v978 = vadd.f32 %v402, %v977
      %v979 = vpop.f32.mrb[0].mxu0
      %v980 = vpop.f32.mrb[0].mxu0
      %v981 = vadd.f32 %v402, %v980
      %v982 = vpop.f32.mrb[0].mxu0
      %983 = vmatprep.mubr.bf16.mxu0 0
      %984 = vmatmul.mubr.bf16.gmra.mrb[0].mxu0 %v731
      %v985 = vpop.f32.mrb[0].mxu0
      %v986 = vadd.f32 %v402, %v985
      %v987 = vpop.f32.mrb[0].mxu0
      %v988 = vpop.f32.mrb[0].mxu0
      %v989 = vadd.f32 %v402, %v988
      %v990 = vpop.f32.mrb[0].mxu0
      %991 = vmatprep.mubr.bf16.mxu0 0
      %992 = vmatmul.mubr.bf16.gmra.mrb[0].mxu0 %v734
      %v993 = vpop.f32.mrb[0].mxu0
      %v994 = vadd.f32 %v402, %v993
      %v995 = vpop.f32.mrb[0].mxu0
      %v996 = vpop.f32.mrb[0].mxu0
      %v997 = vadd.f32 %v402, %v996
      %v998 = vpop.f32.mrb[0].mxu0
      %999 = vmatprep.mubr.bf16.mxu0 0
      %1000 = vmatmul.mubr.bf16.gmra.mrb[0].mxu0 %v737
      %v1001 = vpop.f32.mrb[0].mxu0
      %v1002 = vadd.f32 %v402, %v1001
      %v1003 = vpop.f32.mrb[0].mxu0
      %v1004 = vpop.f32.mrb[0].mxu0
      %v1005 = vadd.f32 %v402, %v1004
      %v1006 = vpop.f32.mrb[0].mxu0
      %1007 = vmatprep.mubr.bf16.mxu0 0
      %1008 = vmatmul.mubr.bf16.gmra.mrb[0].mxu0 %v740
      %v1009 = vpop.f32.mrb[0].mxu0
      %v1010 = vadd.f32 %v402, %v1009
      %v1011 = vpop.f32.mrb[0].mxu0
      %v1012 = vpop.f32.mrb[0].mxu0
      %v1013 = vadd.f32 %v402, %v1012
      %v1014 = vpop.f32.mrb[0].mxu0
      %1015 = vmatprep.mubr.bf16.mxu0 0
      %1016 = vmatmul.mubr.bf16.gmra.mrb[0].mxu0 %v743
      %v1017 = vpop.f32.mrb[0].mxu0
      %v1018 = vadd.f32 %v402, %v1017
      %v1019 = vpop.f32.mrb[0].mxu0
      %v1020 = vpop.f32.mrb[0].mxu0
      %v1021 = vadd.f32 %v402, %v1020
      %v1022 = vpop.f32.mrb[0].mxu0
      %1023 = vmatprep.mubr.bf16.mxu0 0
      %1024 = vmatmul.mubr.bf16.gmra.mrb[0].mxu0 %v746
      %v1025 = vpop.f32.mrb[0].mxu0
      %v1026 = vadd.f32 %v402, %v1025
      %v1027 = vpop.f32.mrb[0].mxu0
      %v1028 = vpop.f32.mrb[0].mxu0
      %v1029 = vadd.f32 %v402, %v1028
      %v1030 = vpop.f32.mrb[0].mxu0
      %1031 = vmatprep.mubr.bf16.mxu0 0
      %1032 = vmatmul.mubr.bf16.gmra.mrb[0].mxu0 %v749
      %v1033 = vpop.f32.mrb[0].mxu0
      %v1034 = vadd.f32 %v402, %v1033
      %v1035 = vpop.f32.mrb[0].mxu0
      %v1036 = vpop.f32.mrb[0].mxu0
      %v1037 = vadd.f32 %v402, %v1036
      %v1038 = vpop.f32.mrb[0].mxu0
      %1039 = vmatprep.mubr.bf16.mxu0 0
      %1040 = vmatmul.mubr.bf16.gmra.mrb[0].mxu0 %v752
      %v1041 = vpop.f32.mrb[0].mxu0
      %v1042 = vadd.f32 %v402, %v1041
      %v1043 = vpop.f32.mrb[0].mxu0
      %v1044 = vpop.f32.mrb[0].mxu0
      %v1045 = vadd.f32 %v402, %v1044
      %v1046 = vpop.f32.mrb[0].mxu0
      %1047 = vmatprep.mubr.bf16.mxu0 0
      %1048 = vmatmul.mubr.bf16.gmra.mrb[0].mxu0 %v755
      %v1049 = vpop.f32.mrb[0].mxu0
      %v1050 = vadd.f32 %v402, %v1049
      %v1051 = vpop.f32.mrb[0].mxu0
      %v1052 = vpop.f32.mrb[0].mxu0
      %v1053 = vadd.f32 %v402, %v1052
      %v1054 = vpop.f32.mrb[0].mxu0
      %1055 = vmatprep.mubr.bf16.mxu0 0
      %1056 = vmatmul.mubr.bf16.gmra.mrb[0].mxu0 %v758
      %v1057 = vpop.f32.mrb[0].mxu0
      %v1058 = vadd.f32 %v402, %v1057
      %v1059 = vpop.f32.mrb[0].mxu0
      %v1060 = vpop.f32.mrb[0].mxu0
      %v1061 = vadd.f32 %v402, %v1060
      %v1062 = vpop.f32.mrb[0].mxu0
      %1063 = vmatprep.mubr.bf16.mxu0 0
      %1064 = vmatmul.mubr.bf16.gmra.mrb[0].mxu0 %v761
      %v1065 = vpop.f32.mrb[0].mxu0
      %v1066 = vadd.f32 %v402, %v1065
      %v1067 = vpop.f32.mrb[0].mxu0
      %v1068 = vpop.f32.mrb[0].mxu0
      %v1069 = vadd.f32 %v402, %v1068
      %v1070 = vpop.f32.mrb[0].mxu0
      %1071 = vmatprep.mubr.bf16.mxu0 0
      %1072 = vmatmul.mubr.bf16.gmra.mrb[0].mxu0 %v764
      %v1073 = vpop.f32.mrb[0].mxu0
      %v1074 = vadd.f32 %v402, %v1073
      %v1075 = vpop.f32.mrb[0].mxu0
      %v1076 = vpop.f32.mrb[0].mxu0
      %v1077 = vadd.f32 %v402, %v1076
      %v1078 = vpop.f32.mrb[0].mxu0
      %1079 = vmatprep.mubr.bf16.mxu0 0
      %1080 = vmatmul.mubr.bf16.gmra.mrb[0].mxu0 %v767
      %v1081 = vpop.f32.mrb[0].mxu0
      %v1082 = vadd.f32 %v402, %v1081
      %v1083 = vpop.f32.mrb[0].mxu0
      %v1084 = vpop.f32.mrb[0].mxu0
      %v1085 = vadd.f32 %v402, %v1084
      %v1086 = vpop.f32.mrb[0].mxu0
      %1087 = vmatprep.mubr.bf16.mxu0 0
      %1088 = vmatmul.mubr.bf16.gmra.mrb[0].mxu0 %v770
      %v1089 = vpop.f32.mrb[0].mxu0
      %v1090 = vadd.f32 %v402, %v1089
      %v1091 = vpop.f32.mrb[0].mxu0
      %v1092 = vpop.f32.mrb[0].mxu0
      %v1093 = vadd.f32 %v402, %v1092
      %v1094 = vpop.f32.mrb[0].mxu0
      %1095 = vmatprep.mubr.bf16.mxu0 0
      %1096 = vmatmul.mubr.bf16.gmra.mrb[0].mxu0 %v773
      %v1097 = vpop.f32.mrb[0].mxu0
      %v1098 = vadd.f32 %v402, %v1097
      %v1099 = vpop.f32.mrb[0].mxu0
      %v1100 = vpop.f32.mrb[0].mxu0
      %v1101 = vadd.f32 %v402, %v1100
      %v1102 = vpop.f32.mrb[0].mxu0
      %1103 = vmatprep.mubr.bf16.mxu0 0
      %1104 = vmatmul.mubr.bf16.gmra.mrb[0].mxu0 %v776
      %v1105 = vpop.f32.mrb[0].mxu0
      %v1106 = vadd.f32 %v402, %v1105
      %v1107 = vpop.f32.mrb[0].mxu0
      %v1108 = vpop.f32.mrb[0].mxu0
      %v1109 = vadd.f32 %v402, %v1108
      %v1110 = vpop.f32.mrb[0].mxu0
      %1111 = vmatprep.mubr.bf16.mxu0 0
      %1112 = vmatmul.mubr.bf16.gmra.mrb[0].mxu0 %v779
      %v1113 = vpop.f32.mrb[0].mxu0
      %v1114 = vadd.f32 %v402, %v1113
      %v1115 = vpop.f32.mrb[0].mxu0
      %v1116 = vpop.f32.mrb[0].mxu0
      %v1117 = vadd.f32 %v402, %v1116
      %v1118 = vpop.f32.mrb[0].mxu0
      %1119 = vmatprep.mubr.bf16.mxu0 0
      %1120 = vmatmul.mubr.bf16.gmra.mrb[0].mxu0 %v782
      %v1121 = vpop.f32.mrb[0].mxu0
      %v1122 = vadd.f32 %v402, %v1121
      %v1123 = vpop.f32.mrb[0].mxu0
      %v1124 = vpop.f32.mrb[0].mxu0
      %v1125 = vadd.f32 %v402, %v1124
      %v1126 = vpop.f32.mrb[0].mxu0
      %1127 = vmatprep.mubr.bf16.mxu0 0
      %1128 = vmatmul.mubr.bf16.gmra.mrb[0].mxu0 %v785
      %v1129 = vpop.f32.mrb[0].mxu0
      %v1130 = vadd.f32 %v402, %v1129
      %v1131 = vpop.f32.mrb[0].mxu0
      %v1132 = vpop.f32.mrb[0].mxu0
      %v1133 = vadd.f32 %v402, %v1132
      %v1134 = vpop.f32.mrb[0].mxu0
      %1135 = vmatprep.mubr.bf16.mxu0 0
      %1136 = vmatmul.mubr.bf16.gmra.mrb[0].mxu0 %v788
      %v1137 = vpop.f32.mrb[0].mxu0
      %v1138 = vadd.f32 %v402, %v1137
      %v1139 = vpop.f32.mrb[0].mxu0
      %v1140 = vpop.f32.mrb[0].mxu0
      %v1141 = vadd.f32 %v402, %v1140
      %v1142 = vpop.f32.mrb[0].mxu0
      %1143 = vmatprep.mubr.bf16.mxu0 0
      %1144 = vmatmul.mubr.bf16.gmra.mrb[0].mxu0 %v791
      %v1145 = vpop.f32.mrb[0].mxu0
      %v1146 = vadd.f32 %v402, %v1145
      %v1147 = vpop.f32.mrb[0].mxu0
      %v1148 = vpop.f32.mrb[0].mxu0
      %v1149 = vadd.f32 %v402, %v1148
      %v1150 = vpop.f32.mrb[0].mxu0
      %1151 = vmatprep.mubr.bf16.mxu0 0
      %1152 = vmatmul.mubr.bf16.gmra.mrb[0].mxu0 %v794
      %v1153 = vpop.f32.mrb[0].mxu0
      %v1154 = vadd.f32 %v402, %v1153
      %v1155 = vpop.f32.mrb[0].mxu0
      %v1156 = vpop.f32.mrb[0].mxu0
      %v1157 = vadd.f32 %v402, %v1156
      %v1158 = vpop.f32.mrb[0].mxu0
      %1159 = vmatprep.mubr.bf16.mxu0 0
      %1160 = vmatmul.mubr.bf16.gmra.mrb[0].mxu0 %v797
      %v1161 = vpop.f32.mrb[0].mxu0
      %v1162 = vadd.f32 %v402, %v1161
      %v1163 = vpop.f32.mrb[0].mxu0
      %v1164 = vpop.f32.mrb[0].mxu0
      %v1165 = vadd.f32 %v402, %v1164
      %v1166 = vpop.f32.mrb[0].mxu0
      %1167 = vmatprep.mubr.bf16.mxu0 0
      %1168 = vmatmul.mubr.bf16.gmra.mrb[0].mxu0 %v800
      %v1169 = vpop.f32.mrb[0].mxu0
      %v1170 = vadd.f32 %v402, %v1169
      %v1171 = vpop.f32.mrb[0].mxu0
      %v1172 = vpop.f32.mrb[0].mxu0
      %v1173 = vadd.f32 %v402, %v1172
      %v1174 = vpop.f32.mrb[0].mxu0
      %1175 = vmatprep.mubr.bf16.mxu0 0
      %1176 = vmatmul.mubr.bf16.gmra.mrb[0].mxu0 %v803
      %v1177 = vpop.f32.mrb[0].mxu0
      %v1178 = vadd.f32 %v402, %v1177
      %v1179 = vpop.f32.mrb[0].mxu0
      %v1180 = vpop.f32.mrb[0].mxu0
      %v1181 = vadd.f32 %v402, %v1180
      %v1182 = vpop.f32.mrb[0].mxu0
      %1183 = vmatprep.mubr.bf16.mxu0 0
      %1184 = vmatmul.mubr.bf16.gmra.mrb[0].mxu0 %v806
      %v1185 = vpop.f32.mrb[0].mxu0
      %v1186 = vadd.f32 %v402, %v1185
      %v1187 = vpop.f32.mrb[0].mxu0
      %v1188 = vpop.f32.mrb[0].mxu0
      %v1189 = vadd.f32 %v402, %v1188
      %v1190 = vpop.f32.mrb[0].mxu0
      %1191 = vmatprep.mubr.bf16.mxu0 0
      %1192 = vmatmul.mubr.bf16.gmra.mrb[0].mxu0 %v809
      %v1193 = vpop.f32.mrb[0].mxu0
      %v1194 = vadd.f32 %v402, %v1193
      %v1195 = vpop.f32.mrb[0].mxu0
      %v1196 = vpop.f32.mrb[0].mxu0
      %v1197 = vadd.f32 %v402, %v1196
      %v1198 = vpop.f32.mrb[0].mxu0
      %1199 = vmatprep.mubr.bf16.mxu0 0
      %1200 = vmatmul.mubr.bf16.gmra.mrb[0].mxu0 %v812
      %v1201 = vpop.f32.mrb[0].mxu0
      %v1202 = vadd.f32 %v402, %v1201
      %v1203 = vpop.f32.mrb[0].mxu0
      %v1204 = vpop.f32.mrb[0].mxu0
      %v1205 = vadd.f32 %v402, %v1204
      %v1206 = vpop.f32.mrb[0].mxu0
      %1207 = vmatprep.mubr.bf16.mxu0 0
      %1208 = vmatmul.mubr.bf16.gmra.mrb[0].mxu0 %v815
      %v1209 = vpop.f32.mrb[0].mxu0
      %v1210 = vadd.f32 %v402, %v1209
      %v1211 = vpop.f32.mrb[0].mxu0
      %v1212 = vpop.f32.mrb[0].mxu0
      %v1213 = vadd.f32 %v402, %v1212
      %v1214 = vpop.f32.mrb[0].mxu0
      %1215 = vmatprep.mubr.bf16.mxu0 0
      %1216 = vmatmul.mubr.bf16.gmra.mrb[0].mxu0 %v818
      %v1217 = vpop.f32.mrb[0].mxu0
      %v1218 = vadd.f32 %v402, %v1217
      %v1219 = vpop.f32.mrb[0].mxu0
      %v1220 = vpop.f32.mrb[0].mxu0
      %v1221 = vadd.f32 %v402, %v1220
      %v1222 = vpop.f32.mrb[0].mxu0
      %1223 = vmatprep.mubr.bf16.mxu0 0
      %1224 = vmatmul.mubr.bf16.gmra.mrb[0].mxu0 %v821
      %v1225 = vpop.f32.mrb[0].mxu0
      %v1226 = vadd.f32 %v402, %v1225
      %v1227 = vpop.f32.mrb[0].mxu0
      %v1228 = vpop.f32.mrb[0].mxu0
      %v1229 = vadd.f32 %v402, %v1228
      %v1230 = vpop.f32.mrb[0].mxu0
      %1231 = vmatprep.mubr.bf16.mxu0 0
      %1232 = vmatmul.mubr.bf16.gmra.mrb[0].mxu0 %v824
      %v1233 = vpop.f32.mrb[0].mxu0
      %v1234 = vadd.f32 %v402, %v1233
      %v1235 = vpop.f32.mrb[0].mxu0
      %v1236 = vpop.f32.mrb[0].mxu0
      %v1237 = vadd.f32 %v402, %v1236
      %v1238 = vpop.f32.mrb[0].mxu0
      %1239 = vmatprep.mubr.bf16.mxu0 0
      %1240 = vmatmul.mubr.bf16.gmra.mrb[0].mxu0 %v827
      %v1241 = vpop.f32.mrb[0].mxu0
      %v1242 = vadd.f32 %v402, %v1241
      %v1243 = vpop.f32.mrb[0].mxu0
      %v1244 = vpop.f32.mrb[0].mxu0
      %v1245 = vadd.f32 %v402, %v1244
      %v1246 = vpop.f32.mrb[0].mxu0
      %1247 = vmatprep.mubr.bf16.mxu0 0
      %1248 = vmatmul.mubr.bf16.gmra.mrb[0].mxu0 %v830
      %v1249 = vpop.f32.mrb[0].mxu0
      %v1250 = vadd.f32 %v402, %v1249
      %v1251 = vpop.f32.mrb[0].mxu0
      %v1252 = vpop.f32.mrb[0].mxu0
      %v1253 = vadd.f32 %v402, %v1252
      %v1254 = vpop.f32.mrb[0].mxu0
      %1255 = vmatprep.mubr.bf16.mxu0 0
      %1256 = vmatmul.mubr.bf16.gmra.mrb[0].mxu0 %v833
      %v1257 = vpop.f32.mrb[0].mxu0
      %v1258 = vadd.f32 %v402, %v1257
      %v1259 = vpop.f32.mrb[0].mxu0
      %v1260 = vpop.f32.mrb[0].mxu0
      %v1261 = vadd.f32 %v402, %v1260
      %v1262 = vpop.f32.mrb[0].mxu0
      %1263 = vmatprep.mubr.bf16.mxu0 0
      %1264 = vmatmul.mubr.bf16.gmra.mrb[0].mxu0 %v836
      %v1265 = vpop.f32.mrb[0].mxu0
      %v1266 = vadd.f32 %v402, %v1265
      %v1267 = vpop.f32.mrb[0].mxu0
      %v1268 = vpop.f32.mrb[0].mxu0
      %v1269 = vadd.f32 %v402, %v1268
      %v1270 = vpop.f32.mrb[0].mxu0
      %1271 = vmatprep.mubr.bf16.mxu0 0
      %1272 = vmatmul.mubr.bf16.gmra.mrb[0].mxu0 %v839
      %v1273 = vpop.f32.mrb[0].mxu0
      %v1274 = vadd.f32 %v402, %v1273
      %v1275 = vpop.f32.mrb[0].mxu0
      %v1276 = vpop.f32.mrb[0].mxu0
      %v1277 = vadd.f32 %v402, %v1276
      %v1278 = vpop.f32.mrb[0].mxu0
      %1279 = vmatprep.mubr.bf16.mxu0 0
      %1280 = vmatmul.mubr.bf16.gmra.mrb[0].mxu0 %v842
      %v1281 = vpop.f32.mrb[0].mxu0
      %v1282 = vadd.f32 %v402, %v1281
      %v1283 = vpop.f32.mrb[0].mxu0
      %v1284 = vpop.f32.mrb[0].mxu0
      %v1285 = vadd.f32 %v402, %v1284
      %v1286 = vpop.f32.mrb[0].mxu0
      %1287 = vmatprep.mubr.bf16.mxu0 0
      %1288 = vmatmul.mubr.bf16.gmra.mrb[0].mxu0 %v845
      %v1289 = vpop.f32.mrb[0].mxu0
      %v1290 = vadd.f32 %v402, %v1289
      %v1291 = vpop.f32.mrb[0].mxu0
      %v1292 = vpop.f32.mrb[0].mxu0
      %v1293 = vadd.f32 %v402, %v1292
      %v1294 = vpop.f32.mrb[0].mxu0
      %1295 = vmatprep.mubr.bf16.mxu0 0
      %1296 = vmatmul.mubr.bf16.gmra.mrb[0].mxu0 %v848
      %v1297 = vpop.f32.mrb[0].mxu0
      %v1298 = vadd.f32 %v402, %v1297
      %v1299 = vpop.f32.mrb[0].mxu0
      %v1300 = vpop.f32.mrb[0].mxu0
      %v1301 = vadd.f32 %v402, %v1300
      %v1302 = vpop.f32.mrb[0].mxu0
      %1303 = vmatprep.mubr.bf16.mxu0 0
      %1304 = vmatmul.mubr.bf16.gmra.mrb[0].mxu0 %v851
      %v1305 = vpop.f32.mrb[0].mxu0
      %v1306 = vadd.f32 %v402, %v1305
      %v1307 = vpop.f32.mrb[0].mxu0
      %v1308 = vpop.f32.mrb[0].mxu0
      %v1309 = vadd.f32 %v402, %v1308
      %v1310 = vpop.f32.mrb[0].mxu0
      %1311 = vmatprep.mubr.bf16.mxu0 0
      %1312 = vmatmul.mubr.bf16.gmra.mrb[0].mxu0 %v854
      %v1313 = vpop.f32.mrb[0].mxu0
      %v1314 = vadd.f32 %v402, %v1313
      %v1315 = vpop.f32.mrb[0].mxu0
      %v1316 = vpop.f32.mrb[0].mxu0
      %v1317 = vadd.f32 %v402, %v1316
      %v1318 = vpop.f32.mrb[0].mxu0
      %1319 = vmatprep.mubr.bf16.mxu0 0
      %1320 = vmatmul.mubr.bf16.gmra.mrb[0].mxu0 %v857
      %v1321 = vpop.f32.mrb[0].mxu0
      %v1322 = vadd.f32 %v402, %v1321
      %v1323 = vpop.f32.mrb[0].mxu0
      %v1324 = vpop.f32.mrb[0].mxu0
      %v1325 = vadd.f32 %v402, %v1324
      %v1326 = vpop.f32.mrb[0].mxu0
      %1327 = vmatprep.mubr.bf16.mxu0 0
      %1328 = vmatmul.mubr.bf16.gmra.mrb[0].mxu0 %v860
      %v1329 = vpop.f32.mrb[0].mxu0
      %v1330 = vadd.f32 %v402, %v1329
      %v1331 = vpop.f32.mrb[0].mxu0
      %v1332 = vpop.f32.mrb[0].mxu0
      %v1333 = vadd.f32 %v402, %v1332
      %v1334 = vpop.f32.mrb[0].mxu0
      %1335 = vmatprep.mubr.bf16.mxu0 0
      %1336 = vmatmul.mubr.bf16.gmra.mrb[0].mxu0 %v863
      %v1337 = vpop.f32.mrb[0].mxu0
      %v1338 = vadd.f32 %v402, %v1337
      %v1339 = vpop.f32.mrb[0].mxu0
      %v1340 = vpop.f32.mrb[0].mxu0
      %v1341 = vadd.f32 %v402, %v1340
      %v1342 = vpop.f32.mrb[0].mxu0
      %1343 = vmatprep.mubr.bf16.mxu0 0
      %1344 = vmatmul.mubr.bf16.gmra.mrb[0].mxu0 %v866
      %v1345 = vpop.f32.mrb[0].mxu0
      %v1346 = vadd.f32 %v402, %v1345
      %v1347 = vpop.f32.mrb[0].mxu0
      %v1348 = vpop.f32.mrb[0].mxu0
      %v1349 = vadd.f32 %v402, %v1348
      %v1350 = vpop.f32.mrb[0].mxu0
      %1351 = vmatprep.mubr.bf16.mxu0 0
      %1352 = vmatmul.mubr.bf16.gmra.mrb[0].mxu0 %v869
      %v1353 = vpop.f32.mrb[0].mxu0
      %v1354 = vadd.f32 %v402, %v1353
      %v1355 = vpop.f32.mrb[0].mxu0
      %v1356 = vpop.f32.mrb[0].mxu0
      %v1357 = vpop.f32.mrb[0].mxu0
      %1358 = vdwg.mxu0
      %v1359 = vmax.f32 %v906, 0.0
      %v1360 = vmax.f32 %v909, 0.0
      %v1361 = vmax.f32 %v914, 0.0
      %v1362 = vmax.f32 %v917, 0.0
      %v1363 = vmax.f32 %v922, 0.0
      %v1364 = vmax.f32 %v925, 0.0
      %v1365 = vmax.f32 %v930, 0.0
      %v1366 = vmax.f32 %v933, 0.0
      %v1367 = vmax.f32 %v938, 0.0
      %v1368 = vmax.f32 %v941, 0.0
      %v1369 = vmax.f32 %v946, 0.0
      %v1370 = vmax.f32 %v949, 0.0
      %v1371 = vmax.f32 %v954, 0.0
      %v1372 = vmax.f32 %v957, 0.0
      %v1373 = vmax.f32 %v962, 0.0
      %v1374 = vmax.f32 %v965, 0.0
      %v1375 = vmax.f32 %v970, 0.0
      %v1376 = vmax.f32 %v973, 0.0
      %v1377 = vmax.f32 %v978, 0.0
      %v1378 = vmax.f32 %v981, 0.0
      %v1379 = vmax.f32 %v986, 0.0
      %v1380 = vmax.f32 %v989, 0.0
      %v1381 = vmax.f32 %v994, 0.0
      %v1382 = vmax.f32 %v997, 0.0
      %v1383 = vmax.f32 %v1002, 0.0
      %v1384 = vmax.f32 %v1005, 0.0
      %v1385 = vmax.f32 %v1010, 0.0
      %v1386 = vmax.f32 %v1013, 0.0
      %v1387 = vmax.f32 %v1018, 0.0
      %v1388 = vmax.f32 %v1021, 0.0
      %v1389 = vmax.f32 %v1026, 0.0
      %v1390 = vmax.f32 %v1029, 0.0
      %v1391 = vmax.f32 %v1034, 0.0
      %v1392 = vmax.f32 %v1037, 0.0
      %v1393 = vmax.f32 %v1042, 0.0
      %v1394 = vmax.f32 %v1045, 0.0
      %v1395 = vmax.f32 %v1050, 0.0
      %v1396 = vmax.f32 %v1053, 0.0
      %v1397 = vmax.f32 %v1058, 0.0
      %v1398 = vmax.f32 %v1061, 0.0
      %v1399 = vmax.f32 %v1066, 0.0
      %v1400 = vmax.f32 %v1069, 0.0
      %v1401 = vmax.f32 %v1074, 0.0
      %v1402 = vmax.f32 %v1077, 0.0
      %v1403 = vmax.f32 %v1082, 0.0
      %v1404 = vmax.f32 %v1085, 0.0
      %v1405 = vmax.f32 %v1090, 0.0
      %v1406 = vmax.f32 %v1093, 0.0
      %v1407 = vmax.f32 %v1098, 0.0
      %v1408 = vmax.f32 %v1101, 0.0
      %v1409 = vmax.f32 %v1106, 0.0
      %v1410 = vmax.f32 %v1109, 0.0
      %v1411 = vmax.f32 %v1114, 0.0
      %v1412 = vmax.f32 %v1117, 0.0
      %v1413 = vmax.f32 %v1122, 0.0
      %v1414 = vmax.f32 %v1125, 0.0
      %v1415 = vmax.f32 %v1130, 0.0
      %v1416 = vmax.f32 %v1133, 0.0
      %v1417 = vmax.f32 %v1138, 0.0
      %v1418 = vmax.f32 %v1141, 0.0
      %v1419 = vmax.f32 %v1146, 0.0
      %v1420 = vmax.f32 %v1149, 0.0
      %v1421 = vmax.f32 %v1154, 0.0
      %v1422 = vmax.f32 %v1157, 0.0
      %v1423 = vmax.f32 %v1162, 0.0
      %v1424 = vmax.f32 %v1165, 0.0
      %v1425 = vmax.f32 %v1170, 0.0
      %v1426 = vmax.f32 %v1173, 0.0
      %v1427 = vmax.f32 %v1178, 0.0
      %v1428 = vmax.f32 %v1181, 0.0
      %v1429 = vmax.f32 %v1186, 0.0
      %v1430 = vmax.f32 %v1189, 0.0
      %v1431 = vmax.f32 %v1194, 0.0
      %v1432 = vmax.f32 %v1197, 0.0
      %v1433 = vmax.f32 %v1202, 0.0
      %v1434 = vmax.f32 %v1205, 0.0
      %v1435 = vmax.f32 %v1210, 0.0
      %v1436 = vmax.f32 %v1213, 0.0
      %v1437 = vmax.f32 %v1218, 0.0
      %v1438 = vmax.f32 %v1221, 0.0
      %v1439 = vmax.f32 %v1226, 0.0
      %v1440 = vmax.f32 %v1229, 0.0
      %v1441 = vmax.f32 %v1234, 0.0
      %v1442 = vmax.f32 %v1237, 0.0
      %v1443 = vmax.f32 %v1242, 0.0
      %v1444 = vmax.f32 %v1245, 0.0
      %v1445 = vmax.f32 %v1250, 0.0
      %v1446 = vmax.f32 %v1253, 0.0
      %v1447 = vmax.f32 %v1258, 0.0
      %v1448 = vmax.f32 %v1261, 0.0
      %v1449 = vmax.f32 %v1266, 0.0
      %v1450 = vmax.f32 %v1269, 0.0
      %v1451 = vmax.f32 %v1274, 0.0
      %v1452 = vmax.f32 %v1277, 0.0
      %v1453 = vmax.f32 %v1282, 0.0
      %v1454 = vmax.f32 %v1285, 0.0
      %v1455 = vmax.f32 %v1290, 0.0
      %v1456 = vmax.f32 %v1293, 0.0
      %v1457 = vmax.f32 %v1298, 0.0
      %v1458 = vmax.f32 %v1301, 0.0
      %v1459 = vmax.f32 %v1306, 0.0
      %v1460 = vmax.f32 %v1309, 0.0
      %v1461 = vmax.f32 %v1314, 0.0
      %v1462 = vmax.f32 %v1317, 0.0
      %v1463 = vmax.f32 %v1322, 0.0
      %v1464 = vmax.f32 %v1325, 0.0
      %v1465 = vmax.f32 %v1330, 0.0
      %v1466 = vmax.f32 %v1333, 0.0
      %v1467 = vmax.f32 %v1338, 0.0
      %v1468 = vmax.f32 %v1341, 0.0
      %v1469 = vmax.f32 %v1346, 0.0
      %v1470 = vmax.f32 %v1349, 0.0
      %v1471 = vmax.f32 %v1354, 0.0
      %vm1585 = vcmask 1046528
      %v1586 = vrot.slane %v1359, 1
      %v1587 = vrot.slane %v1360, 1
      %v1588 = vsel %vm1585, %v1586, %v1587
      %v1589 = vrot.slane %v1361, 1
      %v1590 = vsel %vm1585, %v1587, %v1589
      %v1591 = vrot.slane %v1362, 1
      %v1592 = vsel %vm1585, %v1589, %v1591
      %v1593 = vrot.slane %v1363, 1
      %v1594 = vsel %vm1585, %v1591, %v1593
      %v1595 = vrot.slane %v1364, 1
      %v1596 = vsel %vm1585, %v1593, %v1595
      %v1597 = vrot.slane %v1365, 1
      %v1598 = vsel %vm1585, %v1595, %v1597
      %v1599 = vrot.slane %v1366, 1
      %v1600 = vsel %vm1585, %v1597, %v1599
      %v1601 = vrot.slane %v1367, 1
      %v1602 = vsel %vm1585, %v1599, %v1601
      %v1603 = vrot.slane %v1368, 1
      %v1604 = vsel %vm1585, %v1601, %v1603
      %v1605 = vrot.slane %v1369, 1
      %v1606 = vsel %vm1585, %v1603, %v1605
      %v1607 = vrot.slane %v1370, 1
      %v1608 = vsel %vm1585, %v1605, %v1607
      %v1609 = vrot.slane %v1371, 1
      %v1610 = vsel %vm1585, %v1607, %v1609
      %v1611 = vrot.slane %v1372, 1
      %v1612 = vsel %vm1585, %v1609, %v1611
      %v1613 = vrot.slane %v1373, 1
      %v1614 = vsel %vm1585, %v1611, %v1613
      %v1615 = vrot.slane %v1374, 1
      %v1616 = vsel %vm1585, %v1613, %v1615
      %v1617 = vrot.slane %v1375, 1
      %v1618 = vsel %vm1585, %v1615, %v1617
      %v1619 = vrot.slane %v1376, 1
      %v1620 = vsel %vm1585, %v1617, %v1619
      %v1621 = vrot.slane %v1377, 1
      %v1622 = vsel %vm1585, %v1619, %v1621
      %v1623 = vrot.slane %v1378, 1
      %v1624 = vsel %vm1585, %v1621, %v1623
      %v1625 = vrot.slane %v1379, 1
      %v1626 = vsel %vm1585, %v1623, %v1625
      %v1627 = vrot.slane %v1380, 1
      %v1628 = vsel %vm1585, %v1625, %v1627
      %v1629 = vrot.slane %v1381, 1
      %v1630 = vsel %vm1585, %v1627, %v1629
      %v1631 = vrot.slane %v1382, 1
      %v1632 = vsel %vm1585, %v1629, %v1631
      %v1633 = vrot.slane %v1383, 1
      %v1634 = vsel %vm1585, %v1631, %v1633
      %v1635 = vrot.slane %v1384, 1
      %v1636 = vsel %vm1585, %v1633, %v1635
      %v1637 = vrot.slane %v1385, 1
      %v1638 = vsel %vm1585, %v1635, %v1637
      %v1639 = vrot.slane %v1386, 1
      %v1640 = vsel %vm1585, %v1637, %v1639
      %v1641 = vrot.slane %v1387, 1
      %v1642 = vsel %vm1585, %v1639, %v1641
      %v1643 = vrot.slane %v1388, 1
      %v1644 = vsel %vm1585, %v1641, %v1643
      %v1645 = vrot.slane %v1389, 1
      %v1646 = vsel %vm1585, %v1643, %v1645
      %v1647 = vrot.slane %v1390, 1
      %v1648 = vsel %vm1585, %v1645, %v1647
      %v1649 = vrot.slane %v1391, 1
      %v1650 = vsel %vm1585, %v1647, %v1649
      %v1651 = vrot.slane %v1392, 1
      %v1652 = vsel %vm1585, %v1649, %v1651
      %v1653 = vrot.slane %v1393, 1
      %v1654 = vsel %vm1585, %v1651, %v1653
      %v1655 = vrot.slane %v1394, 1
      %v1656 = vsel %vm1585, %v1653, %v1655
      %v1657 = vrot.slane %v1395, 1
      %v1658 = vsel %vm1585, %v1655, %v1657
      %v1659 = vrot.slane %v1396, 1
      %v1660 = vsel %vm1585, %v1657, %v1659
      %v1661 = vrot.slane %v1397, 1
      %v1662 = vsel %vm1585, %v1659, %v1661
      %v1663 = vrot.slane %v1398, 1
      %v1664 = vsel %vm1585, %v1661, %v1663
      %v1665 = vrot.slane %v1399, 1
      %v1666 = vsel %vm1585, %v1663, %v1665
      %v1667 = vrot.slane %v1400, 1
      %v1668 = vsel %vm1585, %v1665, %v1667
      %v1669 = vrot.slane %v1401, 1
      %v1670 = vsel %vm1585, %v1667, %v1669
      %v1671 = vrot.slane %v1402, 1
      %v1672 = vsel %vm1585, %v1669, %v1671
      %v1673 = vrot.slane %v1403, 1
      %v1674 = vsel %vm1585, %v1671, %v1673
      %v1675 = vrot.slane %v1404, 1
      %v1676 = vsel %vm1585, %v1673, %v1675
      %v1677 = vrot.slane %v1405, 1
      %v1678 = vsel %vm1585, %v1675, %v1677
      %v1679 = vrot.slane %v1406, 1
      %v1680 = vsel %vm1585, %v1677, %v1679
      %v1681 = vrot.slane %v1407, 1
      %v1682 = vsel %vm1585, %v1679, %v1681
      %v1683 = vrot.slane %v1408, 1
      %v1684 = vsel %vm1585, %v1681, %v1683
      %v1685 = vrot.slane %v1409, 1
      %v1686 = vsel %vm1585, %v1683, %v1685
      %v1687 = vrot.slane %v1410, 1
      %v1688 = vsel %vm1585, %v1685, %v1687
      %v1689 = vrot.slane %v1411, 1
      %v1690 = vsel %vm1585, %v1687, %v1689
      %v1691 = vrot.slane %v1412, 1
      %v1692 = vsel %vm1585, %v1689, %v1691
      %v1693 = vrot.slane %v1413, 1
      %v1694 = vsel %vm1585, %v1691, %v1693
      %v1695 = vrot.slane %v1414, 1
      %v1696 = vsel %vm1585, %v1693, %v1695
      %v1697 = vrot.slane %v1415, 1
      %v1698 = vsel %vm1585, %v1695, %v1697
      %v1699 = vrot.slane %v1416, 1
      %v1700 = vsel %vm1585, %v1697, %v1699
      %v1701 = vrot.slane %v1417, 1
      %v1702 = vsel %vm1585, %v1699, %v1701
      %v1703 = vrot.slane %v1418, 1
      %v1704 = vsel %vm1585, %v1701, %v1703
      %v1705 = vrot.slane %v1419, 1
      %v1706 = vsel %vm1585, %v1703, %v1705
      %v1707 = vrot.slane %v1420, 1
      %v1708 = vsel %vm1585, %v1705, %v1707
      %v1709 = vrot.slane %v1421, 1
      %v1710 = vsel %vm1585, %v1707, %v1709
      %v1711 = vrot.slane %v1422, 1
      %v1712 = vsel %vm1585, %v1709, %v1711
      %v1713 = vrot.slane %v1423, 1
      %v1714 = vsel %vm1585, %v1711, %v1713
      %v1715 = vrot.slane %v1424, 1
      %v1716 = vsel %vm1585, %v1713, %v1715
      %v1717 = vrot.slane %v1425, 1
      %v1718 = vsel %vm1585, %v1715, %v1717
      %v1719 = vrot.slane %v1426, 1
      %v1720 = vsel %vm1585, %v1717, %v1719
      %v1721 = vrot.slane %v1427, 1
      %v1722 = vsel %vm1585, %v1719, %v1721
      %v1723 = vrot.slane %v1428, 1
      %v1724 = vsel %vm1585, %v1721, %v1723
      %v1725 = vrot.slane %v1429, 1
      %v1726 = vsel %vm1585, %v1723, %v1725
      %v1727 = vrot.slane %v1430, 1
      %v1728 = vsel %vm1585, %v1725, %v1727
      %v1729 = vrot.slane %v1431, 1
      %v1730 = vsel %vm1585, %v1727, %v1729
      %v1731 = vrot.slane %v1432, 1
      %v1732 = vsel %vm1585, %v1729, %v1731
      %v1733 = vrot.slane %v1433, 1
      %v1734 = vsel %vm1585, %v1731, %v1733
      %v1735 = vrot.slane %v1434, 1
      %v1736 = vsel %vm1585, %v1733, %v1735
      %v1737 = vrot.slane %v1435, 1
      %v1738 = vsel %vm1585, %v1735, %v1737
      %v1739 = vrot.slane %v1436, 1
      %v1740 = vsel %vm1585, %v1737, %v1739
      %v1741 = vrot.slane %v1437, 1
      %v1742 = vsel %vm1585, %v1739, %v1741
      %v1743 = vrot.slane %v1438, 1
      %v1744 = vsel %vm1585, %v1741, %v1743
      %v1745 = vrot.slane %v1439, 1
      %v1746 = vsel %vm1585, %v1743, %v1745
      %v1747 = vrot.slane %v1440, 1
      %v1748 = vsel %vm1585, %v1745, %v1747
      %v1749 = vrot.slane %v1441, 1
      %v1750 = vsel %vm1585, %v1747, %v1749
      %v1751 = vrot.slane %v1442, 1
      %v1752 = vsel %vm1585, %v1749, %v1751
      %v1753 = vrot.slane %v1443, 1
      %v1754 = vsel %vm1585, %v1751, %v1753
      %v1755 = vrot.slane %v1444, 1
      %v1756 = vsel %vm1585, %v1753, %v1755
      %v1757 = vrot.slane %v1445, 1
      %v1758 = vsel %vm1585, %v1755, %v1757
      %v1759 = vrot.slane %v1446, 1
      %v1760 = vsel %vm1585, %v1757, %v1759
      %v1761 = vrot.slane %v1447, 1
      %v1762 = vsel %vm1585, %v1759, %v1761
      %v1763 = vrot.slane %v1448, 1
      %v1764 = vsel %vm1585, %v1761, %v1763
      %v1765 = vrot.slane %v1449, 1
      %v1766 = vsel %vm1585, %v1763, %v1765
      %v1767 = vrot.slane %v1450, 1
      %v1768 = vsel %vm1585, %v1765, %v1767
      %v1769 = vrot.slane %v1451, 1
      %v1770 = vsel %vm1585, %v1767, %v1769
      %v1771 = vrot.slane %v1452, 1
      %v1772 = vsel %vm1585, %v1769, %v1771
      %v1773 = vrot.slane %v1453, 1
      %v1774 = vsel %vm1585, %v1771, %v1773
      %v1775 = vrot.slane %v1454, 1
      %v1776 = vsel %vm1585, %v1773, %v1775
      %v1777 = vrot.slane %v1455, 1
      %v1778 = vsel %vm1585, %v1775, %v1777
      %v1779 = vrot.slane %v1456, 1
      %v1780 = vsel %vm1585, %v1777, %v1779
      %v1781 = vrot.slane %v1457, 1
      %v1782 = vsel %vm1585, %v1779, %v1781
      %v1783 = vrot.slane %v1458, 1
      %v1784 = vsel %vm1585, %v1781, %v1783
      %v1785 = vrot.slane %v1459, 1
      %v1786 = vsel %vm1585, %v1783, %v1785
      %v1787 = vrot.slane %v1460, 1
      %v1788 = vsel %vm1585, %v1785, %v1787
      %v1789 = vrot.slane %v1461, 1
      %v1790 = vsel %vm1585, %v1787, %v1789
      %v1791 = vrot.slane %v1462, 1
      %v1792 = vsel %vm1585, %v1789, %v1791
      %v1793 = vrot.slane %v1463, 1
      %v1794 = vsel %vm1585, %v1791, %v1793
      %v1795 = vrot.slane %v1464, 1
      %v1796 = vsel %vm1585, %v1793, %v1795
      %v1797 = vrot.slane %v1465, 1
      %v1798 = vsel %vm1585, %v1795, %v1797
      %v1799 = vrot.slane %v1466, 1
      %v1800 = vsel %vm1585, %v1797, %v1799
      %v1801 = vrot.slane %v1467, 1
      %v1802 = vsel %vm1585, %v1799, %v1801
      %v1803 = vrot.slane %v1468, 1
      %v1804 = vsel %vm1585, %v1801, %v1803
      %v1805 = vrot.slane %v1469, 1
      %v1806 = vsel %vm1585, %v1803, %v1805
      %v1807 = vrot.slane %v1470, 1
      %v1808 = vsel %vm1585, %v1805, %v1807
      %v1809 = vrot.slane %v1471, 1
      %v1810 = vsel %vm1585, %v1807, %v1809
      %v1924 = vmax.f32 %v1359, %v1588
      %v1925 = vmax.f32 %v1360, %v1590
      %v1926 = vmax.f32 %v1361, %v1592
      %v1927 = vmax.f32 %v1362, %v1594
      %v1928 = vmax.f32 %v1363, %v1596
      %v1929 = vmax.f32 %v1364, %v1598
      %v1930 = vmax.f32 %v1365, %v1600
      %v1931 = vmax.f32 %v1366, %v1602
      %v1932 = vmax.f32 %v1367, %v1604
      %v1933 = vmax.f32 %v1368, %v1606
      %v1934 = vmax.f32 %v1369, %v1608
      %v1935 = vmax.f32 %v1370, %v1610
      %v1936 = vmax.f32 %v1371, %v1612
      %v1937 = vmax.f32 %v1372, %v1614
      %v1938 = vmax.f32 %v1373, %v1616
      %v1939 = vmax.f32 %v1374, %v1618
      %v1940 = vmax.f32 %v1375, %v1620
      %v1941 = vmax.f32 %v1376, %v1622
      %v1942 = vmax.f32 %v1377, %v1624
      %v1943 = vmax.f32 %v1378, %v1626
      %v1944 = vmax.f32 %v1379, %v1628
      %v1945 = vmax.f32 %v1380, %v1630
      %v1946 = vmax.f32 %v1381, %v1632
      %v1947 = vmax.f32 %v1382, %v1634
      %v1948 = vmax.f32 %v1383, %v1636
      %v1949 = vmax.f32 %v1384, %v1638
      %v1950 = vmax.f32 %v1385, %v1640
      %v1951 = vmax.f32 %v1386, %v1642
      %v1952 = vmax.f32 %v1387, %v1644
      %v1953 = vmax.f32 %v1388, %v1646
      %v1954 = vmax.f32 %v1389, %v1648
      %v1955 = vmax.f32 %v1390, %v1650
      %v1956 = vmax.f32 %v1391, %v1652
      %v1957 = vmax.f32 %v1392, %v1654
      %v1958 = vmax.f32 %v1393, %v1656
      %v1959 = vmax.f32 %v1394, %v1658
      %v1960 = vmax.f32 %v1395, %v1660
      %v1961 = vmax.f32 %v1396, %v1662
      %v1962 = vmax.f32 %v1397, %v1664
      %v1963 = vmax.f32 %v1398, %v1666
      %v1964 = vmax.f32 %v1399, %v1668
      %v1965 = vmax.f32 %v1400, %v1670
      %v1966 = vmax.f32 %v1401, %v1672
      %v1967 = vmax.f32 %v1402, %v1674
      %v1968 = vmax.f32 %v1403, %v1676
      %v1969 = vmax.f32 %v1404, %v1678
      %v1970 = vmax.f32 %v1405, %v1680
      %v1971 = vmax.f32 %v1406, %v1682
      %v1972 = vmax.f32 %v1407, %v1684
      %v1973 = vmax.f32 %v1408, %v1686
      %v1974 = vmax.f32 %v1409, %v1688
      %v1975 = vmax.f32 %v1410, %v1690
      %v1976 = vmax.f32 %v1411, %v1692
      %v1977 = vmax.f32 %v1412, %v1694
      %v1978 = vmax.f32 %v1413, %v1696
      %v1979 = vmax.f32 %v1414, %v1698
      %v1980 = vmax.f32 %v1415, %v1700
      %v1981 = vmax.f32 %v1416, %v1702
      %v1982 = vmax.f32 %v1417, %v1704
      %v1983 = vmax.f32 %v1418, %v1706
      %v1984 = vmax.f32 %v1419, %v1708
      %v1985 = vmax.f32 %v1420, %v1710
      %v1986 = vmax.f32 %v1421, %v1712
      %v1987 = vmax.f32 %v1422, %v1714
      %v1988 = vmax.f32 %v1423, %v1716
      %v1989 = vmax.f32 %v1424, %v1718
      %v1990 = vmax.f32 %v1425, %v1720
      %v1991 = vmax.f32 %v1426, %v1722
      %v1992 = vmax.f32 %v1427, %v1724
      %v1993 = vmax.f32 %v1428, %v1726
      %v1994 = vmax.f32 %v1429, %v1728
      %v1995 = vmax.f32 %v1430, %v1730
      %v1996 = vmax.f32 %v1431, %v1732
      %v1997 = vmax.f32 %v1432, %v1734
      %v1998 = vmax.f32 %v1433, %v1736
      %v1999 = vmax.f32 %v1434, %v1738
      %v2000 = vmax.f32 %v1435, %v1740
      %v2001 = vmax.f32 %v1436, %v1742
      %v2002 = vmax.f32 %v1437, %v1744
      %v2003 = vmax.f32 %v1438, %v1746
      %v2004 = vmax.f32 %v1439, %v1748
      %v2005 = vmax.f32 %v1440, %v1750
      %v2006 = vmax.f32 %v1441, %v1752
      %v2007 = vmax.f32 %v1442, %v1754
      %v2008 = vmax.f32 %v1443, %v1756
      %v2009 = vmax.f32 %v1444, %v1758
      %v2010 = vmax.f32 %v1445, %v1760
      %v2011 = vmax.f32 %v1446, %v1762
      %v2012 = vmax.f32 %v1447, %v1764
      %v2013 = vmax.f32 %v1448, %v1766
      %v2014 = vmax.f32 %v1449, %v1768
      %v2015 = vmax.f32 %v1450, %v1770
      %v2016 = vmax.f32 %v1451, %v1772
      %v2017 = vmax.f32 %v1452, %v1774
      %v2018 = vmax.f32 %v1453, %v1776
      %v2019 = vmax.f32 %v1454, %v1778
      %v2020 = vmax.f32 %v1455, %v1780
      %v2021 = vmax.f32 %v1456, %v1782
      %v2022 = vmax.f32 %v1457, %v1784
      %v2023 = vmax.f32 %v1458, %v1786
      %v2024 = vmax.f32 %v1459, %v1788
      %v2025 = vmax.f32 %v1460, %v1790
      %v2026 = vmax.f32 %v1461, %v1792
      %v2027 = vmax.f32 %v1462, %v1794
      %v2028 = vmax.f32 %v1463, %v1796
      %v2029 = vmax.f32 %v1464, %v1798
      %v2030 = vmax.f32 %v1465, %v1800
      %v2031 = vmax.f32 %v1466, %v1802
      %v2032 = vmax.f32 %v1467, %v1804
      %v2033 = vmax.f32 %v1468, %v1806
      %v2034 = vmax.f32 %v1469, %v1808
      %v2035 = vmax.f32 %v1470, %v1810
      %v2036 = vmax.f32 %v1471, %v1809
      %vm2147 = vcmask 1041408
      %v2148 = vrot.slane %v1927, 6
      %v2149 = vrot.slane %v1928, 6
      %v2150 = vsel %vm2147, %v2148, %v2149
      %v2151 = vrot.slane %v1929, 6
      %v2152 = vsel %vm2147, %v2149, %v2151
      %v2153 = vrot.slane %v1930, 6
      %v2154 = vsel %vm2147, %v2151, %v2153
      %v2155 = vrot.slane %v1931, 6
      %v2156 = vsel %vm2147, %v2153, %v2155
      %v2157 = vrot.slane %v1932, 6
      %v2158 = vsel %vm2147, %v2155, %v2157
      %v2159 = vrot.slane %v1933, 6
      %v2160 = vsel %vm2147, %v2157, %v2159
      %v2161 = vrot.slane %v1934, 6
      %v2162 = vsel %vm2147, %v2159, %v2161
      %v2163 = vrot.slane %v1935, 6
      %v2164 = vsel %vm2147, %v2161, %v2163
      %v2165 = vrot.slane %v1936, 6
      %v2166 = vsel %vm2147, %v2163, %v2165
      %v2167 = vrot.slane %v1937, 6
      %v2168 = vsel %vm2147, %v2165, %v2167
      %v2169 = vrot.slane %v1938, 6
      %v2170 = vsel %vm2147, %v2167, %v2169
      %v2171 = vrot.slane %v1939, 6
      %v2172 = vsel %vm2147, %v2169, %v2171
      %v2173 = vrot.slane %v1940, 6
      %v2174 = vsel %vm2147, %v2171, %v2173
      %v2175 = vrot.slane %v1941, 6
      %v2176 = vsel %vm2147, %v2173, %v2175
      %v2177 = vrot.slane %v1942, 6
      %v2178 = vsel %vm2147, %v2175, %v2177
      %v2179 = vrot.slane %v1943, 6
      %v2180 = vsel %vm2147, %v2177, %v2179
      %v2181 = vrot.slane %v1944, 6
      %v2182 = vsel %vm2147, %v2179, %v2181
      %v2183 = vrot.slane %v1945, 6
      %v2184 = vsel %vm2147, %v2181, %v2183
      %v2185 = vrot.slane %v1946, 6
      %v2186 = vsel %vm2147, %v2183, %v2185
      %v2187 = vrot.slane %v1947, 6
      %v2188 = vsel %vm2147, %v2185, %v2187
      %v2189 = vrot.slane %v1948, 6
      %v2190 = vsel %vm2147, %v2187, %v2189
      %v2191 = vrot.slane %v1949, 6
      %v2192 = vsel %vm2147, %v2189, %v2191
      %v2193 = vrot.slane %v1950, 6
      %v2194 = vsel %vm2147, %v2191, %v2193
      %v2195 = vrot.slane %v1951, 6
      %v2196 = vsel %vm2147, %v2193, %v2195
      %v2197 = vrot.slane %v1952, 6
      %v2198 = vsel %vm2147, %v2195, %v2197
      %v2199 = vrot.slane %v1953, 6
      %v2200 = vsel %vm2147, %v2197, %v2199
      %v2201 = vrot.slane %v1954, 6
      %v2202 = vsel %vm2147, %v2199, %v2201
      %v2203 = vrot.slane %v1955, 6
      %v2204 = vsel %vm2147, %v2201, %v2203
      %v2205 = vrot.slane %v1956, 6
      %v2206 = vsel %vm2147, %v2203, %v2205
      %v2207 = vrot.slane %v1957, 6
      %v2208 = vsel %vm2147, %v2205, %v2207
      %v2209 = vrot.slane %v1958, 6
      %v2210 = vsel %vm2147, %v2207, %v2209
      %v2211 = vrot.slane %v1959, 6
      %v2212 = vsel %vm2147, %v2209, %v2211
      %v2213 = vrot.slane %v1960, 6
      %v2214 = vsel %vm2147, %v2211, %v2213
      %v2215 = vrot.slane %v1961, 6
      %v2216 = vsel %vm2147, %v2213, %v2215
      %v2217 = vrot.slane %v1962, 6
      %v2218 = vsel %vm2147, %v2215, %v2217
      %v2219 = vrot.slane %v1963, 6
      %v2220 = vsel %vm2147, %v2217, %v2219
      %v2221 = vrot.slane %v1964, 6
      %v2222 = vsel %vm2147, %v2219, %v2221
      %v2223 = vrot.slane %v1965, 6
      %v2224 = vsel %vm2147, %v2221, %v2223
      %v2225 = vrot.slane %v1966, 6
      %v2226 = vsel %vm2147, %v2223, %v2225
      %v2227 = vrot.slane %v1967, 6
      %v2228 = vsel %vm2147, %v2225, %v2227
      %v2229 = vrot.slane %v1968, 6
      %v2230 = vsel %vm2147, %v2227, %v2229
      %v2231 = vrot.slane %v1969, 6
      %v2232 = vsel %vm2147, %v2229, %v2231
      %v2233 = vrot.slane %v1970, 6
      %v2234 = vsel %vm2147, %v2231, %v2233
      %v2235 = vrot.slane %v1971, 6
      %v2236 = vsel %vm2147, %v2233, %v2235
      %v2237 = vrot.slane %v1972, 6
      %v2238 = vsel %vm2147, %v2235, %v2237
      %v2239 = vrot.slane %v1973, 6
      %v2240 = vsel %vm2147, %v2237, %v2239
      %v2241 = vrot.slane %v1974, 6
      %v2242 = vsel %vm2147, %v2239, %v2241
      %v2243 = vrot.slane %v1975, 6
      %v2244 = vsel %vm2147, %v2241, %v2243
      %v2245 = vrot.slane %v1976, 6
      %v2246 = vsel %vm2147, %v2243, %v2245
      %v2247 = vrot.slane %v1977, 6
      %v2248 = vsel %vm2147, %v2245, %v2247
      %v2249 = vrot.slane %v1978, 6
      %v2250 = vsel %vm2147, %v2247, %v2249
      %v2251 = vrot.slane %v1979, 6
      %v2252 = vsel %vm2147, %v2249, %v2251
      %v2253 = vrot.slane %v1980, 6
      %v2254 = vsel %vm2147, %v2251, %v2253
      %v2255 = vrot.slane %v1981, 6
      %v2256 = vsel %vm2147, %v2253, %v2255
      %v2257 = vrot.slane %v1982, 6
      %v2258 = vsel %vm2147, %v2255, %v2257
      %v2259 = vrot.slane %v1983, 6
      %v2260 = vsel %vm2147, %v2257, %v2259
      %v2261 = vrot.slane %v1984, 6
      %v2262 = vsel %vm2147, %v2259, %v2261
      %v2263 = vrot.slane %v1985, 6
      %v2264 = vsel %vm2147, %v2261, %v2263
      %v2265 = vrot.slane %v1986, 6
      %v2266 = vsel %vm2147, %v2263, %v2265
      %v2267 = vrot.slane %v1987, 6
      %v2268 = vsel %vm2147, %v2265, %v2267
      %v2269 = vrot.slane %v1988, 6
      %v2270 = vsel %vm2147, %v2267, %v2269
      %v2271 = vrot.slane %v1989, 6
      %v2272 = vsel %vm2147, %v2269, %v2271
      %v2273 = vrot.slane %v1990, 6
      %v2274 = vsel %vm2147, %v2271, %v2273
      %v2275 = vrot.slane %v1991, 6
      %v2276 = vsel %vm2147, %v2273, %v2275
      %v2277 = vrot.slane %v1992, 6
      %v2278 = vsel %vm2147, %v2275, %v2277
      %v2279 = vrot.slane %v1993, 6
      %v2280 = vsel %vm2147, %v2277, %v2279
      %v2281 = vrot.slane %v1994, 6
      %v2282 = vsel %vm2147, %v2279, %v2281
      %v2283 = vrot.slane %v1995, 6
      %v2284 = vsel %vm2147, %v2281, %v2283
      %v2285 = vrot.slane %v1996, 6
      %v2286 = vsel %vm2147, %v2283, %v2285
      %v2287 = vrot.slane %v1997, 6
      %v2288 = vsel %vm2147, %v2285, %v2287
      %v2289 = vrot.slane %v1998, 6
      %v2290 = vsel %vm2147, %v2287, %v2289
      %v2291 = vrot.slane %v1999, 6
      %v2292 = vsel %vm2147, %v2289, %v2291
      %v2293 = vrot.slane %v2000, 6
      %v2294 = vsel %vm2147, %v2291, %v2293
      %v2295 = vrot.slane %v2001, 6
      %v2296 = vsel %vm2147, %v2293, %v2295
      %v2297 = vrot.slane %v2002, 6
      %v2298 = vsel %vm2147, %v2295, %v2297
      %v2299 = vrot.slane %v2003, 6
      %v2300 = vsel %vm2147, %v2297, %v2299
      %v2301 = vrot.slane %v2004, 6
      %v2302 = vsel %vm2147, %v2299, %v2301
      %v2303 = vrot.slane %v2005, 6
      %v2304 = vsel %vm2147, %v2301, %v2303
      %v2305 = vrot.slane %v2006, 6
      %v2306 = vsel %vm2147, %v2303, %v2305
      %v2307 = vrot.slane %v2007, 6
      %v2308 = vsel %vm2147, %v2305, %v2307
      %v2309 = vrot.slane %v2008, 6
      %v2310 = vsel %vm2147, %v2307, %v2309
      %v2311 = vrot.slane %v2009, 6
      %v2312 = vsel %vm2147, %v2309, %v2311
      %v2313 = vrot.slane %v2010, 6
      %v2314 = vsel %vm2147, %v2311, %v2313
      %v2315 = vrot.slane %v2011, 6
      %v2316 = vsel %vm2147, %v2313, %v2315
      %v2317 = vrot.slane %v2012, 6
      %v2318 = vsel %vm2147, %v2315, %v2317
      %v2319 = vrot.slane %v2013, 6
      %v2320 = vsel %vm2147, %v2317, %v2319
      %v2321 = vrot.slane %v2014, 6
      %v2322 = vsel %vm2147, %v2319, %v2321
      %v2323 = vrot.slane %v2015, 6
      %v2324 = vsel %vm2147, %v2321, %v2323
      %v2325 = vrot.slane %v2016, 6
      %v2326 = vsel %vm2147, %v2323, %v2325
      %v2327 = vrot.slane %v2017, 6
      %v2328 = vsel %vm2147, %v2325, %v2327
      %v2329 = vrot.slane %v2018, 6
      %v2330 = vsel %vm2147, %v2327, %v2329
      %v2331 = vrot.slane %v2019, 6
      %v2332 = vsel %vm2147, %v2329, %v2331
      %v2333 = vrot.slane %v2020, 6
      %v2334 = vsel %vm2147, %v2331, %v2333
      %v2335 = vrot.slane %v2021, 6
      %v2336 = vsel %vm2147, %v2333, %v2335
      %v2337 = vrot.slane %v2022, 6
      %v2338 = vsel %vm2147, %v2335, %v2337
      %v2339 = vrot.slane %v2023, 6
      %v2340 = vsel %vm2147, %v2337, %v2339
      %v2341 = vrot.slane %v2024, 6
      %v2342 = vsel %vm2147, %v2339, %v2341
      %v2343 = vrot.slane %v2025, 6
      %v2344 = vsel %vm2147, %v2341, %v2343
      %v2345 = vrot.slane %v2026, 6
      %v2346 = vsel %vm2147, %v2343, %v2345
      %v2347 = vrot.slane %v2027, 6
      %v2348 = vsel %vm2147, %v2345, %v2347
      %v2349 = vrot.slane %v2028, 6
      %v2350 = vsel %vm2147, %v2347, %v2349
      %v2351 = vrot.slane %v2029, 6
      %v2352 = vsel %vm2147, %v2349, %v2351
      %v2353 = vrot.slane %v2030, 6
      %v2354 = vsel %vm2147, %v2351, %v2353
      %v2355 = vrot.slane %v2031, 6
      %v2356 = vsel %vm2147, %v2353, %v2355
      %v2357 = vrot.slane %v2032, 6
      %v2358 = vsel %vm2147, %v2355, %v2357
      %v2359 = vrot.slane %v2033, 6
      %v2360 = vsel %vm2147, %v2357, %v2359
      %v2361 = vrot.slane %v2034, 6
      %v2362 = vsel %vm2147, %v2359, %v2361
      %v2363 = vrot.slane %v2035, 6
      %v2364 = vsel %vm2147, %v2361, %v2363
      %v2365 = vrot.slane %v2036, 6
      %v2366 = vsel %vm2147, %v2363, %v2365
      %v2476 = vmax.f32 %v1924, %v2150
      %v2477 = vmax.f32 %v1925, %v2152
      %v2478 = vmax.f32 %v1926, %v2154
      %v2479 = vmax.f32 %v1927, %v2156
      %v2480 = vmax.f32 %v1928, %v2158
      %v2481 = vmax.f32 %v1929, %v2160
      %v2482 = vmax.f32 %v1930, %v2162
      %v2483 = vmax.f32 %v1931, %v2164
      %v2484 = vmax.f32 %v1932, %v2166
      %v2485 = vmax.f32 %v1933, %v2168
      %v2486 = vmax.f32 %v1934, %v2170
      %v2487 = vmax.f32 %v1935, %v2172
      %v2488 = vmax.f32 %v1936, %v2174
      %v2489 = vmax.f32 %v1937, %v2176
      %v2490 = vmax.f32 %v1938, %v2178
      %v2491 = vmax.f32 %v1939, %v2180
      %v2492 = vmax.f32 %v1940, %v2182
      %v2493 = vmax.f32 %v1941, %v2184
      %v2494 = vmax.f32 %v1942, %v2186
      %v2495 = vmax.f32 %v1943, %v2188
      %v2496 = vmax.f32 %v1944, %v2190
      %v2497 = vmax.f32 %v1945, %v2192
      %v2498 = vmax.f32 %v1946, %v2194
      %v2499 = vmax.f32 %v1947, %v2196
      %v2500 = vmax.f32 %v1948, %v2198
      %v2501 = vmax.f32 %v1949, %v2200
      %v2502 = vmax.f32 %v1950, %v2202
      %v2503 = vmax.f32 %v1951, %v2204
      %v2504 = vmax.f32 %v1952, %v2206
      %v2505 = vmax.f32 %v1953, %v2208
      %v2506 = vmax.f32 %v1954, %v2210
      %v2507 = vmax.f32 %v1955, %v2212
      %v2508 = vmax.f32 %v1956, %v2214
      %v2509 = vmax.f32 %v1957, %v2216
      %v2510 = vmax.f32 %v1958, %v2218
      %v2511 = vmax.f32 %v1959, %v2220
      %v2512 = vmax.f32 %v1960, %v2222
      %v2513 = vmax.f32 %v1961, %v2224
      %v2514 = vmax.f32 %v1962, %v2226
      %v2515 = vmax.f32 %v1963, %v2228
      %v2516 = vmax.f32 %v1964, %v2230
      %v2517 = vmax.f32 %v1965, %v2232
      %v2518 = vmax.f32 %v1966, %v2234
      %v2519 = vmax.f32 %v1967, %v2236
      %v2520 = vmax.f32 %v1968, %v2238
      %v2521 = vmax.f32 %v1969, %v2240
      %v2522 = vmax.f32 %v1970, %v2242
      %v2523 = vmax.f32 %v1971, %v2244
      %v2524 = vmax.f32 %v1972, %v2246
      %v2525 = vmax.f32 %v1973, %v2248
      %v2526 = vmax.f32 %v1974, %v2250
      %v2527 = vmax.f32 %v1975, %v2252
      %v2528 = vmax.f32 %v1976, %v2254
      %v2529 = vmax.f32 %v1977, %v2256
      %v2530 = vmax.f32 %v1978, %v2258
      %v2531 = vmax.f32 %v1979, %v2260
      %v2532 = vmax.f32 %v1980, %v2262
      %v2533 = vmax.f32 %v1981, %v2264
      %v2534 = vmax.f32 %v1982, %v2266
      %v2535 = vmax.f32 %v1983, %v2268
      %v2536 = vmax.f32 %v1984, %v2270
      %v2537 = vmax.f32 %v1985, %v2272
      %v2538 = vmax.f32 %v1986, %v2274
      %v2539 = vmax.f32 %v1987, %v2276
      %v2540 = vmax.f32 %v1988, %v2278
      %v2541 = vmax.f32 %v1989, %v2280
      %v2542 = vmax.f32 %v1990, %v2282
      %v2543 = vmax.f32 %v1991, %v2284
      %v2544 = vmax.f32 %v1992, %v2286
      %v2545 = vmax.f32 %v1993, %v2288
      %v2546 = vmax.f32 %v1994, %v2290
      %v2547 = vmax.f32 %v1995, %v2292
      %v2548 = vmax.f32 %v1996, %v2294
      %v2549 = vmax.f32 %v1997, %v2296
      %v2550 = vmax.f32 %v1998, %v2298
      %v2551 = vmax.f32 %v1999, %v2300
      %v2552 = vmax.f32 %v2000, %v2302
      %v2553 = vmax.f32 %v2001, %v2304
      %v2554 = vmax.f32 %v2002, %v2306
      %v2555 = vmax.f32 %v2003, %v2308
      %v2556 = vmax.f32 %v2004, %v2310
      %v2557 = vmax.f32 %v2005, %v2312
      %v2558 = vmax.f32 %v2006, %v2314
      %v2559 = vmax.f32 %v2007, %v2316
      %v2560 = vmax.f32 %v2008, %v2318
      %v2561 = vmax.f32 %v2009, %v2320
      %v2562 = vmax.f32 %v2010, %v2322
      %v2563 = vmax.f32 %v2011, %v2324
      %v2564 = vmax.f32 %v2012, %v2326
      %v2565 = vmax.f32 %v2013, %v2328
      %v2566 = vmax.f32 %v2014, %v2330
      %v2567 = vmax.f32 %v2015, %v2332
      %v2568 = vmax.f32 %v2016, %v2334
      %v2569 = vmax.f32 %v2017, %v2336
      %v2570 = vmax.f32 %v2018, %v2338
      %v2571 = vmax.f32 %v2019, %v2340
      %v2572 = vmax.f32 %v2020, %v2342
      %v2573 = vmax.f32 %v2021, %v2344
      %v2574 = vmax.f32 %v2022, %v2346
      %v2575 = vmax.f32 %v2023, %v2348
      %v2576 = vmax.f32 %v2024, %v2350
      %v2577 = vmax.f32 %v2025, %v2352
      %v2578 = vmax.f32 %v2026, %v2354
      %v2579 = vmax.f32 %v2027, %v2356
      %v2580 = vmax.f32 %v2028, %v2358
      %v2581 = vmax.f32 %v2029, %v2360
      %v2582 = vmax.f32 %v2030, %v2362
      %v2583 = vmax.f32 %v2031, %v2364
      %v2584 = vmax.f32 %v2032, %v2366
      %2585 = vst [vmem:[#allocation2] sm:$0xff] %v2476
      %2586 = vst [vmem:[#allocation2 + $0x8] sm:$0xff] %v2477
      %2587 = vst [vmem:[#allocation2 + $0x10] sm:$0xff] %v2478
      %2588 = vst [vmem:[#allocation2 + $0x18] sm:$0xff] %v2479
      %2589 = vst [vmem:[#allocation2 + $0x20] sm:$0xff] %v2480
      %2590 = vst [vmem:[#allocation2 + $0x28] sm:$0xff] %v2481
      %2591 = vst [vmem:[#allocation2 + $0x30] sm:$0xff] %v2482
      %2592 = vst [vmem:[#allocation2 + $0x38] sm:$0xff] %v2483
      %2593 = vst [vmem:[#allocation2 + $0x40] sm:$0xff] %v2484
      %2594 = vst [vmem:[#allocation2 + $0x48] sm:$0xff] %v2485
      %2595 = vst [vmem:[#allocation2 + $0x50] sm:$0xff] %v2486
      %2596 = vst [vmem:[#allocation2 + $0x58] sm:$0xff] %v2487
      %2597 = vst [vmem:[#allocation2 + $0x60] sm:$0xff] %v2488
      %2598 = vst [vmem:[#allocation2 + $0x68] sm:$0xff] %v2489
      %2599 = vst [vmem:[#allocation2 + $0x70] sm:$0xff] %v2490
      %2600 = vst [vmem:[#allocation2 + $0x78] sm:$0xff] %v2491
      %2601 = vst [vmem:[#allocation2 + $0x80] sm:$0xff] %v2492
      %2602 = vst [vmem:[#allocation2 + $0x88] sm:$0xff] %v2493
      %2603 = vst [vmem:[#allocation2 + $0x90] sm:$0xff] %v2494
      %2604 = vst [vmem:[#allocation2 + $0x98] sm:$0xff] %v2495
      %2605 = vst [vmem:[#allocation2 + $0xa0] sm:$0xff] %v2496
      %2606 = vst [vmem:[#allocation2 + $0xa8] sm:$0xff] %v2497
      %2607 = vst [vmem:[#allocation2 + $0xb0] sm:$0xff] %v2498
      %2608 = vst [vmem:[#allocation2 + $0xb8] sm:$0xff] %v2499
      %2609 = vst [vmem:[#allocation2 + $0xc0] sm:$0xff] %v2500
      %2610 = vst [vmem:[#allocation2 + $0xc8] sm:$0xff] %v2501
      %2611 = vst [vmem:[#allocation2 + $0xd0] sm:$0xff] %v2502
      %2612 = vst [vmem:[#allocation2 + $0xd8] sm:$0xff] %v2503
      %2613 = vst [vmem:[#allocation2 + $0xe0] sm:$0xff] %v2504
      %2614 = vst [vmem:[#allocation2 + $0xe8] sm:$0xff] %v2505
      %2615 = vst [vmem:[#allocation2 + $0xf0] sm:$0xff] %v2506
      %2616 = vst [vmem:[#allocation2 + $0xf8] sm:$0xff] %v2507
      %2617 = vst [vmem:[#allocation2 + $0x100] sm:$0xff] %v2508
      %2618 = vst [vmem:[#allocation2 + $0x108] sm:$0xff] %v2509
      %2619 = vst [vmem:[#allocation2 + $0x110] sm:$0xff] %v2510
      %2620 = vst [vmem:[#allocation2 + $0x118] sm:$0xff] %v2511
      %2621 = vst [vmem:[#allocation2 + $0x120] sm:$0xff] %v2512
      %2622 = vst [vmem:[#allocation2 + $0x128] sm:$0xff] %v2513
      %2623 = vst [vmem:[#allocation2 + $0x130] sm:$0xff] %v2514
      %2624 = vst [vmem:[#allocation2 + $0x138] sm:$0xff] %v2515
      %2625 = vst [vmem:[#allocation2 + $0x140] sm:$0xff] %v2516
      %2626 = vst [vmem:[#allocation2 + $0x148] sm:$0xff] %v2517
      %2627 = vst [vmem:[#allocation2 + $0x150] sm:$0xff] %v2518
      %2628 = vst [vmem:[#allocation2 + $0x158] sm:$0xff] %v2519
      %2629 = vst [vmem:[#allocation2 + $0x160] sm:$0xff] %v2520
      %2630 = vst [vmem:[#allocation2 + $0x168] sm:$0xff] %v2521
      %2631 = vst [vmem:[#allocation2 + $0x170] sm:$0xff] %v2522
      %2632 = vst [vmem:[#allocation2 + $0x178] sm:$0xff] %v2523
      %2633 = vst [vmem:[#allocation2 + $0x180] sm:$0xff] %v2524
      %2634 = vst [vmem:[#allocation2 + $0x188] sm:$0xff] %v2525
      %2635 = vst [vmem:[#allocation2 + $0x190] sm:$0xff] %v2526
      %2636 = vst [vmem:[#allocation2 + $0x198] sm:$0xff] %v2527
      %2637 = vst [vmem:[#allocation2 + $0x1a0] sm:$0xff] %v2528
      %2638 = vst [vmem:[#allocation2 + $0x1a8] sm:$0xff] %v2529
      %2639 = vst [vmem:[#allocation2 + $0x1b0] sm:$0xff] %v2530
      %2640 = vst [vmem:[#allocation2 + $0x1b8] sm:$0xff] %v2531
      %2641 = vst [vmem:[#allocation2 + $0x1c0] sm:$0xff] %v2532
      %2642 = vst [vmem:[#allocation2 + $0x1c8] sm:$0xff] %v2533
      %2643 = vst [vmem:[#allocation2 + $0x1d0] sm:$0xff] %v2534
      %2644 = vst [vmem:[#allocation2 + $0x1d8] sm:$0xff] %v2535
      %2645 = vst [vmem:[#allocation2 + $0x1e0] sm:$0xff] %v2536
      %2646 = vst [vmem:[#allocation2 + $0x1e8] sm:$0xff] %v2537
      %2647 = vst [vmem:[#allocation2 + $0x1f0] sm:$0xff] %v2538
      %2648 = vst [vmem:[#allocation2 + $0x1f8] sm:$0xff] %v2539
      %2649 = vst [vmem:[#allocation2 + $0x200] sm:$0xff] %v2540
      %2650 = vst [vmem:[#allocation2 + $0x208] sm:$0xff] %v2541
      %2651 = vst [vmem:[#allocation2 + $0x210] sm:$0xff] %v2542
      %2652 = vst [vmem:[#allocation2 + $0x218] sm:$0xff] %v2543
      %2653 = vst [vmem:[#allocation2 + $0x220] sm:$0xff] %v2544
      %2654 = vst [vmem:[#allocation2 + $0x228] sm:$0xff] %v2545
      %2655 = vst [vmem:[#allocation2 + $0x230] sm:$0xff] %v2546
      %2656 = vst [vmem:[#allocation2 + $0x238] sm:$0xff] %v2547
      %2657 = vst [vmem:[#allocation2 + $0x240] sm:$0xff] %v2548
      %2658 = vst [vmem:[#allocation2 + $0x248] sm:$0xff] %v2549
      %2659 = vst [vmem:[#allocation2 + $0x250] sm:$0xff] %v2550
      %2660 = vst [vmem:[#allocation2 + $0x258] sm:$0xff] %v2551
      %2661 = vst [vmem:[#allocation2 + $0x260] sm:$0xff] %v2552
      %2662 = vst [vmem:[#allocation2 + $0x268] sm:$0xff] %v2553
      %2663 = vst [vmem:[#allocation2 + $0x270] sm:$0xff] %v2554
      %2664 = vst [vmem:[#allocation2 + $0x278] sm:$0xff] %v2555
      %2665 = vst [vmem:[#allocation2 + $0x280] sm:$0xff] %v2556
      %2666 = vst [vmem:[#allocation2 + $0x288] sm:$0xff] %v2557
      %2667 = vst [vmem:[#allocation2 + $0x290] sm:$0xff] %v2558
      %2668 = vst [vmem:[#allocation2 + $0x298] sm:$0xff] %v2559
      %2669 = vst [vmem:[#allocation2 + $0x2a0] sm:$0xff] %v2560
      %2670 = vst [vmem:[#allocation2 + $0x2a8] sm:$0xff] %v2561
      %2671 = vst [vmem:[#allocation2 + $0x2b0] sm:$0xff] %v2562
      %2672 = vst [vmem:[#allocation2 + $0x2b8] sm:$0xff] %v2563
      %2673 = vst [vmem:[#allocation2 + $0x2c0] sm:$0xff] %v2564
      %2674 = vst [vmem:[#allocation2 + $0x2c8] sm:$0xff] %v2565
      %2675 = vst [vmem:[#allocation2 + $0x2d0] sm:$0xff] %v2566
      %2676 = vst [vmem:[#allocation2 + $0x2d8] sm:$0xff] %v2567
      %2677 = vst [vmem:[#allocation2 + $0x2e0] sm:$0xff] %v2568
      %2678 = vst [vmem:[#allocation2 + $0x2e8] sm:$0xff] %v2569
      %2679 = vst [vmem:[#allocation2 + $0x2f0] sm:$0xff] %v2570
      %2680 = vst [vmem:[#allocation2 + $0x2f8] sm:$0xff] %v2571
      %2681 = vst [vmem:[#allocation2 + $0x300] sm:$0xff] %v2572
      %2682 = vst [vmem:[#allocation2 + $0x308] sm:$0xff] %v2573
      %2683 = vst [vmem:[#allocation2 + $0x310] sm:$0xff] %v2574
      %2684 = vst [vmem:[#allocation2 + $0x318] sm:$0xff] %v2575
      %2685 = vst [vmem:[#allocation2 + $0x320] sm:$0xff] %v2576
      %2686 = vst [vmem:[#allocation2 + $0x328] sm:$0xff] %v2577
      %2687 = vst [vmem:[#allocation2 + $0x330] sm:$0xff] %v2578
      %2688 = vst [vmem:[#allocation2 + $0x338] sm:$0xff] %v2579
      %2689 = vst [vmem:[#allocation2 + $0x340] sm:$0xff] %v2580
      %2690 = vst [vmem:[#allocation2 + $0x348] sm:$0xff] %v2581
      %2691 = vst [vmem:[#allocation2 + $0x350] sm:$0xff] %v2582
      %2692 = vst [vmem:[#allocation2 + $0x358] sm:$0xff] %v2583
      %2693 = vst [vmem:[#allocation2 + $0x360] sm:$0x1f] %v2584
      %v2694 = vld [vmem:[#allocation2] ss:$2 sm:$0xff]
      %s2695 = scalar_lea.vmem [#allocation2], 16
      %v2696 = vld [vmem:[%s2695] ss:$2 sm:$0x7f]
      %2697 = vst [vmem:[#allocation3] sm:$0xff] %v2694
      %2698 = vst [vmem:[#allocation3 + $0x8] sm:$0x7f] %v2696
      %s2699 = scalar_lea.vmem [#allocation2], 60
      %v2700 = vld [vmem:[%s2699] ss:$2 sm:$0xff]
      %s2701 = scalar_lea.vmem [#allocation2], 76
      %v2702 = vld [vmem:[%s2701] ss:$2 sm:$0x7f]
      %2703 = vst [vmem:[#allocation3 + $0xf] sm:$0xff] %v2700
      %2704 = vst [vmem:[#allocation3 + $0x17] sm:$0x7f] %v2702
      %s2705 = scalar_lea.vmem [#allocation2], 120
      %v2706 = vld [vmem:[%s2705] ss:$2 sm:$0xff]
      %s2707 = scalar_lea.vmem [#allocation2], 136
      %v2708 = vld [vmem:[%s2707] ss:$2 sm:$0x7f]
      %2709 = vst [vmem:[#allocation3 + $0x1e] sm:$0xff] %v2706
      %2710 = vst [vmem:[#allocation3 + $0x26] sm:$0x7f] %v2708
      %s2711 = scalar_lea.vmem [#allocation2], 180
      %v2712 = vld [vmem:[%s2711] ss:$2 sm:$0xff]
      %s2713 = scalar_lea.vmem [#allocation2], 196
      %v2714 = vld [vmem:[%s2713] ss:$2 sm:$0x7f]
      %2715 = vst [vmem:[#allocation3 + $0x2d] sm:$0xff] %v2712
      %2716 = vst [vmem:[#allocation3 + $0x35] sm:$0x7f] %v2714
      %s2717 = scalar_lea.vmem [#allocation2], 240
      %v2718 = vld [vmem:[%s2717] ss:$2 sm:$0xff]
      %s2719 = scalar_lea.vmem [#allocation2], 256
      %v2720 = vld [vmem:[%s2719] ss:$2 sm:$0x7f]
      %2721 = vst [vmem:[#allocation3 + $0x3c] sm:$0xff] %v2718
      %2722 = vst [vmem:[#allocation3 + $0x44] sm:$0x7f] %v2720
      %s2723 = scalar_lea.vmem [#allocation2], 300
      %v2724 = vld [vmem:[%s2723] ss:$2 sm:$0xff]
      %s2725 = scalar_lea.vmem [#allocation2], 316
      %v2726 = vld [vmem:[%s2725] ss:$2 sm:$0x7f]
      %2727 = vst [vmem:[#allocation3 + $0x4b] sm:$0xff] %v2724
      %2728 = vst [vmem:[#allocation3 + $0x53] sm:$0x7f] %v2726
      %s2729 = scalar_lea.vmem [#allocation2], 360
      %v2730 = vld [vmem:[%s2729] ss:$2 sm:$0xff]
      %s2731 = scalar_lea.vmem [#allocation2], 376
      %v2732 = vld [vmem:[%s2731] ss:$2 sm:$0x7f]
      %2733 = vst [vmem:[#allocation3 + $0x5a] sm:$0xff] %v2730
      %2734 = vst [vmem:[#allocation3 + $0x62] sm:$0x7f] %v2732
      %s2735 = scalar_lea.vmem [#allocation2], 420
      %v2736 = vld [vmem:[%s2735] ss:$2 sm:$0xff]
      %s2737 = scalar_lea.vmem [#allocation2], 436
      %v2738 = vld [vmem:[%s2737] ss:$2 sm:$0x7f]
      %2739 = vst [vmem:[#allocation3 + $0x69] sm:$0xff] %v2736
      %2740 = vst [vmem:[#allocation3 + $0x71] sm:$0x7f] %v2738
      %s2741 = scalar_lea.vmem [#allocation2], 480
      %v2742 = vld [vmem:[%s2741] ss:$2 sm:$0xff]
      %s2743 = scalar_lea.vmem [#allocation2], 496
      %v2744 = vld [vmem:[%s2743] ss:$2 sm:$0x7f]
      %2745 = vst [vmem:[#allocation3 + $0x78] sm:$0xff] %v2742
      %2746 = vst [vmem:[#allocation3 + $0x80] sm:$0x7f] %v2744
      %s2747 = scalar_lea.vmem [#allocation2], 540
      %v2748 = vld [vmem:[%s2747] ss:$2 sm:$0xff]
      %s2749 = scalar_lea.vmem [#allocation2], 556
      %v2750 = vld [vmem:[%s2749] ss:$2 sm:$0x7f]
      %2751 = vst [vmem:[#allocation3 + $0x87] sm:$0xff] %v2748
      %2752 = vst [vmem:[#allocation3 + $0x8f] sm:$0x7f] %v2750
      %s2753 = scalar_lea.vmem [#allocation2], 600
      %v2754 = vld [vmem:[%s2753] ss:$2 sm:$0xff]
      %s2755 = scalar_lea.vmem [#allocation2], 616
      %v2756 = vld [vmem:[%s2755] ss:$2 sm:$0x7f]
      %2757 = vst [vmem:[#allocation3 + $0x96] sm:$0xff] %v2754
      %2758 = vst [vmem:[#allocation3 + $0x9e] sm:$0x7f] %v2756
      %s2759 = scalar_lea.vmem [#allocation2], 660
      %v2760 = vld [vmem:[%s2759] ss:$2 sm:$0xff]
      %s2761 = scalar_lea.vmem [#allocation2], 676
      %v2762 = vld [vmem:[%s2761] ss:$2 sm:$0x7f]
      %2763 = vst [vmem:[#allocation3 + $0xa5] sm:$0xff] %v2760
      %2764 = vst [vmem:[#allocation3 + $0xad] sm:$0x7f] %v2762
      %s2765 = scalar_lea.vmem [#allocation2], 720
      %v2766 = vld [vmem:[%s2765] ss:$2 sm:$0xff]
      %s2767 = scalar_lea.vmem [#allocation2], 736
      %v2768 = vld [vmem:[%s2767] ss:$2 sm:$0x7f]
      %2769 = vst [vmem:[#allocation3 + $0xb4] sm:$0xff] %v2766
      %2770 = vst [vmem:[#allocation3 + $0xbc] sm:$0x7f] %v2768
      %s2771 = scalar_lea.vmem [#allocation2], 780
      %v2772 = vld [vmem:[%s2771] ss:$2 sm:$0xff]
      %s2773 = scalar_lea.vmem [#allocation2], 796
      %v2774 = vld [vmem:[%s2773] ss:$2 sm:$0x7f]
      %2775 = vst [vmem:[#allocation3 + $0xc3] sm:$0xff] %v2772
      %2776 = vst [vmem:[#allocation3 + $0xcb] sm:$0x7f] %v2774
      %s2777 = scalar_lea.vmem [#allocation2], 840
      %v2778 = vld [vmem:[%s2777] ss:$2 sm:$0xff]
      %s2779 = scalar_lea.vmem [#allocation2], 856
      %v2780 = vld [vmem:[%s2779] ss:$2 sm:$0x7f]
      %2781 = vst [vmem:[#allocation3 + $0xd2] sm:$0xff] %v2778
      %2782 = vst [vmem:[#allocation3 + $0xda] sm:$0x7f] %v2780
      %v2783 = vld [vmem:[#allocation3] sm:$0xff]
      %v2784 = vld [vmem:[#allocation3 + $0x8] sm:$0xff]
      %v2785 = vld [vmem:[#allocation3 + $0x10] sm:$0xff]
      %v2786 = vld [vmem:[#allocation3 + $0x18] sm:$0xff]
      %v2787 = vld [vmem:[#allocation3 + $0x20] sm:$0xff]
      %v2788 = vld [vmem:[#allocation3 + $0x28] sm:$0xff]
      %v2789 = vld [vmem:[#allocation3 + $0x30] sm:$0xff]
      %v2790 = vld [vmem:[#allocation3 + $0x38] sm:$0xff]
      %v2791 = vld [vmem:[#allocation3 + $0x40] sm:$0xff]
      %v2792 = vld [vmem:[#allocation3 + $0x48] sm:$0xff]
      %v2793 = vld [vmem:[#allocation3 + $0x50] sm:$0xff]
      %v2794 = vld [vmem:[#allocation3 + $0x58] sm:$0xff]
      %v2795 = vld [vmem:[#allocation3 + $0x60] sm:$0xff]
      %v2796 = vld [vmem:[#allocation3 + $0x68] sm:$0xff]
      %v2797 = vld [vmem:[#allocation3 + $0x70] sm:$0xff]
      %v2798 = vld [vmem:[#allocation3 + $0x78] sm:$0xff]
      %v2799 = vld [vmem:[#allocation3 + $0x80] sm:$0xff]
      %v2800 = vld [vmem:[#allocation3 + $0x88] sm:$0xff]
      %v2801 = vld [vmem:[#allocation3 + $0x90] sm:$0xff]
      %v2802 = vld [vmem:[#allocation3 + $0x98] sm:$0xff]
      %v2803 = vld [vmem:[#allocation3 + $0xa0] sm:$0xff]
      %v2804 = vld [vmem:[#allocation3 + $0xa8] sm:$0xff]
      %v2805 = vld [vmem:[#allocation3 + $0xb0] sm:$0xff]
      %v2806 = vld [vmem:[#allocation3 + $0xb8] sm:$0xff]
      %v2807 = vld [vmem:[#allocation3 + $0xc0] sm:$0x1]
      %v2808 = vpack.c.bf16 %v2784, %v2783
      %v2809 = vpack.c.bf16 %v2786, %v2785
      %v2810 = vpack.c.bf16 %v2788, %v2787
      %v2811 = vpack.c.bf16 %v2790, %v2789
      %v2812 = vpack.c.bf16 %v2792, %v2791
      %v2813 = vpack.c.bf16 %v2794, %v2793
      %v2814 = vpack.c.bf16 %v2796, %v2795
      %v2815 = vpack.c.bf16 %v2798, %v2797
      %v2816 = vpack.c.bf16 %v2800, %v2799
      %v2817 = vpack.c.bf16 %v2802, %v2801
      %v2818 = vpack.c.bf16 %v2804, %v2803
      %v2819 = vpack.c.bf16 %v2806, %v2805
      %v2820 = vpack.c.bf16 %v2807, %v2807
      %v2834 = vunpack.c.l.b16 %v2808
      %v2835 = vunpack.c.h.b16 %v2808
      %v2836 = vunpack.c.l.b16 %v2809
      %v2837 = vunpack.c.h.b16 %v2809
      %v2838 = vunpack.c.l.b16 %v2810
      %v2839 = vunpack.c.h.b16 %v2810
      %v2840 = vunpack.c.l.b16 %v2811
      %v2841 = vunpack.c.h.b16 %v2811
      %v2842 = vunpack.c.l.b16 %v2812
      %v2843 = vunpack.c.h.b16 %v2812
      %v2844 = vunpack.c.l.b16 %v2813
      %v2845 = vunpack.c.h.b16 %v2813
      %v2846 = vunpack.c.l.b16 %v2814
      %v2847 = vunpack.c.h.b16 %v2814
      %v2848 = vunpack.c.l.b16 %v2815
      %v2849 = vunpack.c.h.b16 %v2815
      %v2850 = vunpack.c.l.b16 %v2816
      %v2851 = vunpack.c.h.b16 %v2816
      %v2852 = vunpack.c.l.b16 %v2817
      %v2853 = vunpack.c.h.b16 %v2817
      %v2854 = vunpack.c.l.b16 %v2818
      %v2855 = vunpack.c.h.b16 %v2818
      %v2856 = vunpack.c.l.b16 %v2819
      %v2857 = vunpack.c.h.b16 %v2819
      %v2858 = vunpack.c.l.b16 %v2820
      %v2859 = vpack.c.b16 %v2834, %v2834
      %v2860 = vpack.c.b16 %v2835, %v2835
      %v2861 = vpack.c.b16 %v2836, %v2836
      %v2862 = vpack.c.b16 %v2837, %v2837
      %v2863 = vpack.c.b16 %v2838, %v2838
      %v2864 = vpack.c.b16 %v2839, %v2839
      %v2865 = vpack.c.b16 %v2840, %v2840
      %v2866 = vpack.c.b16 %v2841, %v2841
      %v2867 = vpack.c.b16 %v2842, %v2842
      %v2868 = vpack.c.b16 %v2843, %v2843
      %v2869 = vpack.c.b16 %v2844, %v2844
      %v2870 = vpack.c.b16 %v2845, %v2845
      %v2871 = vpack.c.b16 %v2846, %v2846
      %v2872 = vpack.c.b16 %v2847, %v2847
      %v2873 = vpack.c.b16 %v2848, %v2848
      %v2874 = vpack.c.b16 %v2849, %v2849
      %v2875 = vpack.c.b16 %v2850, %v2850
      %v2876 = vpack.c.b16 %v2851, %v2851
      %v2877 = vpack.c.b16 %v2852, %v2852
      %v2878 = vpack.c.b16 %v2853, %v2853
      %v2879 = vpack.c.b16 %v2854, %v2854
      %v2880 = vpack.c.b16 %v2855, %v2855
      %v2881 = vpack.c.b16 %v2856, %v2856
      %v2882 = vpack.c.b16 %v2857, %v2857
      %v2883 = vpack.c.b16 %v2858, %v2858
      %2909 = vst [vmem:[#allocation4] sm:$0xf] %v2859
      %2910 = vst [vmem:[#allocation4 + $0x24] sm:$0xf] %v2860
      %2911 = vst [vmem:[#allocation4 + $0x48] sm:$0xf] %v2861
      %2912 = vst [vmem:[#allocation4 + $0x6c] sm:$0xf] %v2862
      %2913 = vst [vmem:[#allocation4 + $0x90] sm:$0xf] %v2863
      %2914 = vst [vmem:[#allocation4 + $0xb4] sm:$0xf] %v2864
      %2915 = vst [vmem:[#allocation4 + $0xd8] sm:$0xf] %v2865
      %2916 = vst [vmem:[#allocation4 + $0xfc] sm:$0xf] %v2866
      %2917 = vst [vmem:[#allocation4 + $0x120] sm:$0xf] %v2867
      %2918 = vst [vmem:[#allocation4 + $0x144] sm:$0xf] %v2868
      %2919 = vst [vmem:[#allocation4 + $0x168] sm:$0xf] %v2869
      %2920 = vst [vmem:[#allocation4 + $0x18c] sm:$0xf] %v2870
      %2921 = vst [vmem:[#allocation4 + $0x1b0] sm:$0xf] %v2871
      %2922 = vst [vmem:[#allocation4 + $0x1d4] sm:$0xf] %v2872
      %2923 = vst [vmem:[#allocation4 + $0x1f8] sm:$0xf] %v2873
      %2924 = vst [vmem:[#allocation4 + $0x21c] sm:$0xf] %v2874
      %2925 = vst [vmem:[#allocation4 + $0x240] sm:$0xf] %v2875
      %2926 = vst [vmem:[#allocation4 + $0x264] sm:$0xf] %v2876
      %2927 = vst [vmem:[#allocation4 + $0x288] sm:$0xf] %v2877
      %2928 = vst [vmem:[#allocation4 + $0x2ac] sm:$0xf] %v2878
      %2929 = vst [vmem:[#allocation4 + $0x2d0] sm:$0xf] %v2879
      %2930 = vst [vmem:[#allocation4 + $0x2f4] sm:$0xf] %v2880
      %2931 = vst [vmem:[#allocation4 + $0x318] sm:$0xf] %v2881
      %2932 = vst [vmem:[#allocation4 + $0x33c] sm:$0xf] %v2882
      %vm2933 = vcmask 1040384
      %vm2934 = vsmask.f32 256
      %vm2935 = vmand %vm2933, %vm2934
      %v2936 = vld [vmem:[#allocation4 + $0x360] sm:$0x1]
      %v2937 = vsel %vm2935, %v2883, %v2936
      %2938 = vst [vmem:[#allocation4 + $0x360] sm:$0x1] %v2937
      %v2939 = vld [vmem:[#allocation3 + $0x1] sm:$0xff]
      %v2940 = vld [vmem:[#allocation3 + $0x9] sm:$0xff]
      %v2941 = vld [vmem:[#allocation3 + $0x11] sm:$0xff]
      %v2942 = vld [vmem:[#allocation3 + $0x19] sm:$0xff]
      %v2943 = vld [vmem:[#allocation3 + $0x21] sm:$0xff]
      %v2944 = vld [vmem:[#allocation3 + $0x29] sm:$0xff]
      %v2945 = vld [vmem:[#allocation3 + $0x31] sm:$0xff]
      %v2946 = vld [vmem:[#allocation3 + $0x39] sm:$0xff]
      %v2947 = vld [vmem:[#allocation3 + $0x41] sm:$0xff]
      %v2948 = vld [vmem:[#allocation3 + $0x49] sm:$0xff]
      %v2949 = vld [vmem:[#allocation3 + $0x51] sm:$0xff]
      %v2950 = vld [vmem:[#allocation3 + $0x59] sm:$0xff]
      %v2951 = vld [vmem:[#allocation3 + $0x61] sm:$0xff]
      %v2952 = vld [vmem:[#allocation3 + $0x69] sm:$0xff]
      %v2953 = vld [vmem:[#allocation3 + $0x71] sm:$0xff]
      %v2954 = vld [vmem:[#allocation3 + $0x79] sm:$0xff]
      %v2955 = vld [vmem:[#allocation3 + $0x81] sm:$0xff]
      %v2956 = vld [vmem:[#allocation3 + $0x89] sm:$0xff]
      %v2957 = vld [vmem:[#allocation3 + $0x91] sm:$0xff]
      %v2958 = vld [vmem:[#allocation3 + $0x99] sm:$0xff]
      %v2959 = vld [vmem:[#allocation3 + $0xa1] sm:$0xff]
      %v2960 = vld [vmem:[#allocation3 + $0xa9] sm:$0xff]
      %v2961 = vld [vmem:[#allocation3 + $0xb1] sm:$0xff]
      %v2962 = vld [vmem:[#allocation3 + $0xb9] sm:$0xff]
      %v2963 = vld [vmem:[#allocation3 + $0xc1] sm:$0x1]
      %v2964 = vpack.c.bf16 %v2940, %v2939
      %v2965 = vpack.c.bf16 %v2942, %v2941
      %v2966 = vpack.c.bf16 %v2944, %v2943
      %v2967 = vpack.c.bf16 %v2946, %v2945
      %v2968 = vpack.c.bf16 %v2948, %v2947
      %v2969 = vpack.c.bf16 %v2950, %v2949
      %v2970 = vpack.c.bf16 %v2952, %v2951
      %v2971 = vpack.c.bf16 %v2954, %v2953
      %v2972 = vpack.c.bf16 %v2956, %v2955
      %v2973 = vpack.c.bf16 %v2958, %v2957
      %v2974 = vpack.c.bf16 %v2960, %v2959
      %v2975 = vpack.c.bf16 %v2962, %v2961
      %v2976 = vpack.c.bf16 %v2963, %v2963
      %v2990 = vunpack.c.l.b16 %v2964
      %v2991 = vunpack.c.h.b16 %v2964
      %v2992 = vunpack.c.l.b16 %v2965
      %v2993 = vunpack.c.h.b16 %v2965
      %v2994 = vunpack.c.l.b16 %v2966
      %v2995 = vunpack.c.h.b16 %v2966
      %v2996 = vunpack.c.l.b16 %v2967
      %v2997 = vunpack.c.h.b16 %v2967
      %v2998 = vunpack.c.l.b16 %v2968
      %v2999 = vunpack.c.h.b16 %v2968
      %v3000 = vunpack.c.l.b16 %v2969
      %v3001 = vunpack.c.h.b16 %v2969
      %v3002 = vunpack.c.l.b16 %v2970
      %v3003 = vunpack.c.h.b16 %v2970
      %v3004 = vunpack.c.l.b16 %v2971
      %v3005 = vunpack.c.h.b16 %v2971
      %v3006 = vunpack.c.l.b16 %v2972
      %v3007 = vunpack.c.h.b16 %v2972
      %v3008 = vunpack.c.l.b16 %v2973
      %v3009 = vunpack.c.h.b16 %v2973
      %v3010 = vunpack.c.l.b16 %v2974
      %v3011 = vunpack.c.h.b16 %v2974
      %v3012 = vunpack.c.l.b16 %v2975
      %v3013 = vunpack.c.h.b16 %v2975
      %v3014 = vunpack.c.l.b16 %v2976
      %v3015 = vpack.c.b16 %v2990, %v2990
      %v3016 = vpack.c.b16 %v2991, %v2991
      %v3017 = vpack.c.b16 %v2992, %v2992
      %v3018 = vpack.c.b16 %v2993, %v2993
      %v3019 = vpack.c.b16 %v2994, %v2994
      %v3020 = vpack.c.b16 %v2995, %v2995
      %v3021 = vpack.c.b16 %v2996, %v2996
      %v3022 = vpack.c.b16 %v2997, %v2997
      %v3023 = vpack.c.b16 %v2998, %v2998
      %v3024 = vpack.c.b16 %v2999, %v2999
      %v3025 = vpack.c.b16 %v3000, %v3000
      %v3026 = vpack.c.b16 %v3001, %v3001
      %v3027 = vpack.c.b16 %v3002, %v3002
      %v3028 = vpack.c.b16 %v3003, %v3003
      %v3029 = vpack.c.b16 %v3004, %v3004
      %v3030 = vpack.c.b16 %v3005, %v3005
      %v3031 = vpack.c.b16 %v3006, %v3006
      %v3032 = vpack.c.b16 %v3007, %v3007
      %v3033 = vpack.c.b16 %v3008, %v3008
      %v3034 = vpack.c.b16 %v3009, %v3009
      %v3035 = vpack.c.b16 %v3010, %v3010
      %v3036 = vpack.c.b16 %v3011, %v3011
      %v3037 = vpack.c.b16 %v3012, %v3012
      %v3038 = vpack.c.b16 %v3013, %v3013
      %v3039 = vpack.c.b16 %v3014, %v3014
      %3065 = vst [vmem:[#allocation4 + $0x4] sm:$0xf] %v3015
      %3066 = vst [vmem:[#allocation4 + $0x28] sm:$0xf] %v3016
      %3067 = vst [vmem:[#allocation4 + $0x4c] sm:$0xf] %v3017
      %3068 = vst [vmem:[#allocation4 + $0x70] sm:$0xf] %v3018
      %3069 = vst [vmem:[#allocation4 + $0x94] sm:$0xf] %v3019
      %3070 = vst [vmem:[#allocation4 + $0xb8] sm:$0xf] %v3020
      %3071 = vst [vmem:[#allocation4 + $0xdc] sm:$0xf] %v3021
      %3072 = vst [vmem:[#allocation4 + $0x100] sm:$0xf] %v3022
      %3073 = vst [vmem:[#allocation4 + $0x124] sm:$0xf] %v3023
      %3074 = vst [vmem:[#allocation4 + $0x148] sm:$0xf] %v3024
      %3075 = vst [vmem:[#allocation4 + $0x16c] sm:$0xf] %v3025
      %3076 = vst [vmem:[#allocation4 + $0x190] sm:$0xf] %v3026
      %3077 = vst [vmem:[#allocation4 + $0x1b4] sm:$0xf] %v3027
      %3078 = vst [vmem:[#allocation4 + $0x1d8] sm:$0xf] %v3028
      %3079 = vst [vmem:[#allocation4 + $0x1fc] sm:$0xf] %v3029
      %3080 = vst [vmem:[#allocation4 + $0x220] sm:$0xf] %v3030
      %3081 = vst [vmem:[#allocation4 + $0x244] sm:$0xf] %v3031
      %3082 = vst [vmem:[#allocation4 + $0x268] sm:$0xf] %v3032
      %3083 = vst [vmem:[#allocation4 + $0x28c] sm:$0xf] %v3033
      %3084 = vst [vmem:[#allocation4 + $0x2b0] sm:$0xf] %v3034
      %3085 = vst [vmem:[#allocation4 + $0x2d4] sm:$0xf] %v3035
      %3086 = vst [vmem:[#allocation4 + $0x2f8] sm:$0xf] %v3036
      %3087 = vst [vmem:[#allocation4 + $0x31c] sm:$0xf] %v3037
      %3088 = vst [vmem:[#allocation4 + $0x340] sm:$0xf] %v3038
      %v3089 = vld [vmem:[#allocation4 + $0x364] sm:$0x1]
      %v3090 = vsel %vm2935, %v3039, %v3089
      %3091 = vst [vmem:[#allocation4 + $0x364] sm:$0x1] %v3090
      %v3092 = vld [vmem:[#allocation3 + $0x2] sm:$0xff]
      %v3093 = vld [vmem:[#allocation3 + $0xa] sm:$0xff]
      %v3094 = vld [vmem:[#allocation3 + $0x12] sm:$0xff]
      %v3095 = vld [vmem:[#allocation3 + $0x1a] sm:$0xff]
      %v3096 = vld [vmem:[#allocation3 + $0x22] sm:$0xff]
      %v3097 = vld [vmem:[#allocation3 + $0x2a] sm:$0xff]
      %v3098 = vld [vmem:[#allocation3 + $0x32] sm:$0xff]
      %v3099 = vld [vmem:[#allocation3 + $0x3a] sm:$0xff]
      %v3100 = vld [vmem:[#allocation3 + $0x42] sm:$0xff]
      %v3101 = vld [vmem:[#allocation3 + $0x4a] sm:$0xff]
      %v3102 = vld [vmem:[#allocation3 + $0x52] sm:$0xff]
      %v3103 = vld [vmem:[#allocation3 + $0x5a] sm:$0xff]
      %v3104 = vld [vmem:[#allocation3 + $0x62] sm:$0xff]
      %v3105 = vld [vmem:[#allocation3 + $0x6a] sm:$0xff]
      %v3106 = vld [vmem:[#allocation3 + $0x72] sm:$0xff]
      %v3107 = vld [vmem:[#allocation3 + $0x7a] sm:$0xff]
      %v3108 = vld [vmem:[#allocation3 + $0x82] sm:$0xff]
      %v3109 = vld [vmem:[#allocation3 + $0x8a] sm:$0xff]
      %v3110 = vld [vmem:[#allocation3 + $0x92] sm:$0xff]
      %v3111 = vld [vmem:[#allocation3 + $0x9a] sm:$0xff]
      %v3112 = vld [vmem:[#allocation3 + $0xa2] sm:$0xff]
      %v3113 = vld [vmem:[#allocation3 + $0xaa] sm:$0xff]
      %v3114 = vld [vmem:[#allocation3 + $0xb2] sm:$0xff]
      %v3115 = vld [vmem:[#allocation3 + $0xba] sm:$0xff]
      %v3116 = vld [vmem:[#allocation3 + $0xc2] sm:$0x1]
      %v3117 = vpack.c.bf16 %v3093, %v3092
      %v3118 = vpack.c.bf16 %v3095, %v3094
      %v3119 = vpack.c.bf16 %v3097, %v3096
      %v3120 = vpack.c.bf16 %v3099, %v3098
      %v3121 = vpack.c.bf16 %v3101, %v3100
      %v3122 = vpack.c.bf16 %v3103, %v3102
      %v3123 = vpack.c.bf16 %v3105, %v3104
      %v3124 = vpack.c.bf16 %v3107, %v3106
      %v3125 = vpack.c.bf16 %v3109, %v3108
      %v3126 = vpack.c.bf16 %v3111, %v3110
      %v3127 = vpack.c.bf16 %v3113, %v3112
      %v3128 = vpack.c.bf16 %v3115, %v3114
      %v3129 = vpack.c.bf16 %v3116, %v3116
      %v3143 = vunpack.c.l.b16 %v3117
      %v3144 = vunpack.c.h.b16 %v3117
      %v3145 = vunpack.c.l.b16 %v3118
      %v3146 = vunpack.c.h.b16 %v3118
      %v3147 = vunpack.c.l.b16 %v3119
      %v3148 = vunpack.c.h.b16 %v3119
      %v3149 = vunpack.c.l.b16 %v3120
      %v3150 = vunpack.c.h.b16 %v3120
      %v3151 = vunpack.c.l.b16 %v3121
      %v3152 = vunpack.c.h.b16 %v3121
      %v3153 = vunpack.c.l.b16 %v3122
      %v3154 = vunpack.c.h.b16 %v3122
      %v3155 = vunpack.c.l.b16 %v3123
      %v3156 = vunpack.c.h.b16 %v3123
      %v3157 = vunpack.c.l.b16 %v3124
      %v3158 = vunpack.c.h.b16 %v3124
      %v3159 = vunpack.c.l.b16 %v3125
      %v3160 = vunpack.c.h.b16 %v3125
      %v3161 = vunpack.c.l.b16 %v3126
      %v3162 = vunpack.c.h.b16 %v3126
      %v3163 = vunpack.c.l.b16 %v3127
      %v3164 = vunpack.c.h.b16 %v3127
      %v3165 = vunpack.c.l.b16 %v3128
      %v3166 = vunpack.c.h.b16 %v3128
      %v3167 = vunpack.c.l.b16 %v3129
      %v3168 = vpack.c.b16 %v3143, %v3143
      %v3169 = vpack.c.b16 %v3144, %v3144
      %v3170 = vpack.c.b16 %v3145, %v3145
      %v3171 = vpack.c.b16 %v3146, %v3146
      %v3172 = vpack.c.b16 %v3147, %v3147
      %v3173 = vpack.c.b16 %v3148, %v3148
      %v3174 = vpack.c.b16 %v3149, %v3149
      %v3175 = vpack.c.b16 %v3150, %v3150
      %v3176 = vpack.c.b16 %v3151, %v3151
      %v3177 = vpack.c.b16 %v3152, %v3152
      %v3178 = vpack.c.b16 %v3153, %v3153
      %v3179 = vpack.c.b16 %v3154, %v3154
      %v3180 = vpack.c.b16 %v3155, %v3155
      %v3181 = vpack.c.b16 %v3156, %v3156
      %v3182 = vpack.c.b16 %v3157, %v3157
      %v3183 = vpack.c.b16 %v3158, %v3158
      %v3184 = vpack.c.b16 %v3159, %v3159
      %v3185 = vpack.c.b16 %v3160, %v3160
      %v3186 = vpack.c.b16 %v3161, %v3161
      %v3187 = vpack.c.b16 %v3162, %v3162
      %v3188 = vpack.c.b16 %v3163, %v3163
      %v3189 = vpack.c.b16 %v3164, %v3164
      %v3190 = vpack.c.b16 %v3165, %v3165
      %v3191 = vpack.c.b16 %v3166, %v3166
      %v3192 = vpack.c.b16 %v3167, %v3167
      %3218 = vst [vmem:[#allocation4 + $0x8] sm:$0xf] %v3168
      %3219 = vst [vmem:[#allocation4 + $0x2c] sm:$0xf] %v3169
      %3220 = vst [vmem:[#allocation4 + $0x50] sm:$0xf] %v3170
      %3221 = vst [vmem:[#allocation4 + $0x74] sm:$0xf] %v3171
      %3222 = vst [vmem:[#allocation4 + $0x98] sm:$0xf] %v3172
      %3223 = vst [vmem:[#allocation4 + $0xbc] sm:$0xf] %v3173
      %3224 = vst [vmem:[#allocation4 + $0xe0] sm:$0xf] %v3174
      %3225 = vst [vmem:[#allocation4 + $0x104] sm:$0xf] %v3175
      %3226 = vst [vmem:[#allocation4 + $0x128] sm:$0xf] %v3176
      %3227 = vst [vmem:[#allocation4 + $0x14c] sm:$0xf] %v3177
      %3228 = vst [vmem:[#allocation4 + $0x170] sm:$0xf] %v3178
      %3229 = vst [vmem:[#allocation4 + $0x194] sm:$0xf] %v3179
      %3230 = vst [vmem:[#allocation4 + $0x1b8] sm:$0xf] %v3180
      %3231 = vst [vmem:[#allocation4 + $0x1dc] sm:$0xf] %v3181
      %3232 = vst [vmem:[#allocation4 + $0x200] sm:$0xf] %v3182
      %3233 = vst [vmem:[#allocation4 + $0x224] sm:$0xf] %v3183
      %3234 = vst [vmem:[#allocation4 + $0x248] sm:$0xf] %v3184
      %3235 = vst [vmem:[#allocation4 + $0x26c] sm:$0xf] %v3185
      %3236 = vst [vmem:[#allocation4 + $0x290] sm:$0xf] %v3186
      %3237 = vst [vmem:[#allocation4 + $0x2b4] sm:$0xf] %v3187
      %3238 = vst [vmem:[#allocation4 + $0x2d8] sm:$0xf] %v3188
      %3239 = vst [vmem:[#allocation4 + $0x2fc] sm:$0xf] %v3189
      %3240 = vst [vmem:[#allocation4 + $0x320] sm:$0xf] %v3190
      %3241 = vst [vmem:[#allocation4 + $0x344] sm:$0xf] %v3191
      %v3242 = vld [vmem:[#allocation4 + $0x368] sm:$0x1]
      %v3243 = vsel %vm2935, %v3192, %v3242
      %3244 = vst [vmem:[#allocation4 + $0x368] sm:$0x1] %v3243
      %v3245 = vld [vmem:[#allocation3 + $0xf] sm:$0xff]
      %v3246 = vld [vmem:[#allocation3 + $0x17] sm:$0xff]
      %v3247 = vld [vmem:[#allocation3 + $0x1f] sm:$0xff]
      %v3248 = vld [vmem:[#allocation3 + $0x27] sm:$0xff]
      %v3249 = vld [vmem:[#allocation3 + $0x2f] sm:$0xff]
      %v3250 = vld [vmem:[#allocation3 + $0x37] sm:$0xff]
      %v3251 = vld [vmem:[#allocation3 + $0x3f] sm:$0xff]
      %v3252 = vld [vmem:[#allocation3 + $0x47] sm:$0xff]
      %v3253 = vld [vmem:[#allocation3 + $0x4f] sm:$0xff]
      %v3254 = vld [vmem:[#allocation3 + $0x57] sm:$0xff]
      %v3255 = vld [vmem:[#allocation3 + $0x5f] sm:$0xff]
      %v3256 = vld [vmem:[#allocation3 + $0x67] sm:$0xff]
      %v3257 = vld [vmem:[#allocation3 + $0x6f] sm:$0xff]
      %v3258 = vld [vmem:[#allocation3 + $0x77] sm:$0xff]
      %v3259 = vld [vmem:[#allocation3 + $0x7f] sm:$0xff]
      %v3260 = vld [vmem:[#allocation3 + $0x87] sm:$0xff]
      %v3261 = vld [vmem:[#allocation3 + $0x8f] sm:$0xff]
      %v3262 = vld [vmem:[#allocation3 + $0x97] sm:$0xff]
      %v3263 = vld [vmem:[#allocation3 + $0x9f] sm:$0xff]
      %v3264 = vld [vmem:[#allocation3 + $0xa7] sm:$0xff]
      %v3265 = vld [vmem:[#allocation3 + $0xaf] sm:$0xff]
      %v3266 = vld [vmem:[#allocation3 + $0xb7] sm:$0xff]
      %v3267 = vld [vmem:[#allocation3 + $0xbf] sm:$0xff]
      %v3268 = vld [vmem:[#allocation3 + $0xc7] sm:$0xff]
      %v3269 = vld [vmem:[#allocation3 + $0xcf] sm:$0x1]
      %v3270 = vpack.c.bf16 %v3246, %v3245
      %v3271 = vpack.c.bf16 %v3248, %v3247
      %v3272 = vpack.c.bf16 %v3250, %v3249
      %v3273 = vpack.c.bf16 %v3252, %v3251
      %v3274 = vpack.c.bf16 %v3254, %v3253
      %v3275 = vpack.c.bf16 %v3256, %v3255
      %v3276 = vpack.c.bf16 %v3258, %v3257
      %v3277 = vpack.c.bf16 %v3260, %v3259
      %v3278 = vpack.c.bf16 %v3262, %v3261
      %v3279 = vpack.c.bf16 %v3264, %v3263
      %v3280 = vpack.c.bf16 %v3266, %v3265
      %v3281 = vpack.c.bf16 %v3268, %v3267
      %v3282 = vpack.c.bf16 %v3269, %v3269
      %v3296 = vunpack.c.l.b16 %v3270
      %v3297 = vunpack.c.h.b16 %v3270
      %v3298 = vunpack.c.l.b16 %v3271
      %v3299 = vunpack.c.h.b16 %v3271
      %v3300 = vunpack.c.l.b16 %v3272
      %v3301 = vunpack.c.h.b16 %v3272
      %v3302 = vunpack.c.l.b16 %v3273
      %v3303 = vunpack.c.h.b16 %v3273
      %v3304 = vunpack.c.l.b16 %v3274
      %v3305 = vunpack.c.h.b16 %v3274
      %v3306 = vunpack.c.l.b16 %v3275
      %v3307 = vunpack.c.h.b16 %v3275
      %v3308 = vunpack.c.l.b16 %v3276
      %v3309 = vunpack.c.h.b16 %v3276
      %v3310 = vunpack.c.l.b16 %v3277
      %v3311 = vunpack.c.h.b16 %v3277
      %v3312 = vunpack.c.l.b16 %v3278
      %v3313 = vunpack.c.h.b16 %v3278
      %v3314 = vunpack.c.l.b16 %v3279
      %v3315 = vunpack.c.h.b16 %v3279
      %v3316 = vunpack.c.l.b16 %v3280
      %v3317 = vunpack.c.h.b16 %v3280
      %v3318 = vunpack.c.l.b16 %v3281
      %v3319 = vunpack.c.h.b16 %v3281
      %v3320 = vunpack.c.l.b16 %v3282
      %v3321 = vpack.c.b16 %v3296, %v3296
      %v3322 = vpack.c.b16 %v3297, %v3297
      %v3323 = vpack.c.b16 %v3298, %v3298
      %v3324 = vpack.c.b16 %v3299, %v3299
      %v3325 = vpack.c.b16 %v3300, %v3300
      %v3326 = vpack.c.b16 %v3301, %v3301
      %v3327 = vpack.c.b16 %v3302, %v3302
      %v3328 = vpack.c.b16 %v3303, %v3303
      %v3329 = vpack.c.b16 %v3304, %v3304
      %v3330 = vpack.c.b16 %v3305, %v3305
      %v3331 = vpack.c.b16 %v3306, %v3306
      %v3332 = vpack.c.b16 %v3307, %v3307
      %v3333 = vpack.c.b16 %v3308, %v3308
      %v3334 = vpack.c.b16 %v3309, %v3309
      %v3335 = vpack.c.b16 %v3310, %v3310
      %v3336 = vpack.c.b16 %v3311, %v3311
      %v3337 = vpack.c.b16 %v3312, %v3312
      %v3338 = vpack.c.b16 %v3313, %v3313
      %v3339 = vpack.c.b16 %v3314, %v3314
      %v3340 = vpack.c.b16 %v3315, %v3315
      %v3341 = vpack.c.b16 %v3316, %v3316
      %v3342 = vpack.c.b16 %v3317, %v3317
      %v3343 = vpack.c.b16 %v3318, %v3318
      %v3344 = vpack.c.b16 %v3319, %v3319
      %v3345 = vpack.c.b16 %v3320, %v3320
      %3371 = vst [vmem:[#allocation4 + $0xc] sm:$0xf] %v3321
      %3372 = vst [vmem:[#allocation4 + $0x30] sm:$0xf] %v3322
      %3373 = vst [vmem:[#allocation4 + $0x54] sm:$0xf] %v3323
      %3374 = vst [vmem:[#allocation4 + $0x78] sm:$0xf] %v3324
      %3375 = vst [vmem:[#allocation4 + $0x9c] sm:$0xf] %v3325
      %3376 = vst [vmem:[#allocation4 + $0xc0] sm:$0xf] %v3326
      %3377 = vst [vmem:[#allocation4 + $0xe4] sm:$0xf] %v3327
      %3378 = vst [vmem:[#allocation4 + $0x108] sm:$0xf] %v3328
      %3379 = vst [vmem:[#allocation4 + $0x12c] sm:$0xf] %v3329
      %3380 = vst [vmem:[#allocation4 + $0x150] sm:$0xf] %v3330
      %3381 = vst [vmem:[#allocation4 + $0x174] sm:$0xf] %v3331
      %3382 = vst [vmem:[#allocation4 + $0x198] sm:$0xf] %v3332
      %3383 = vst [vmem:[#allocation4 + $0x1bc] sm:$0xf] %v3333
      %3384 = vst [vmem:[#allocation4 + $0x1e0] sm:$0xf] %v3334
      %3385 = vst [vmem:[#allocation4 + $0x204] sm:$0xf] %v3335
      %3386 = vst [vmem:[#allocation4 + $0x228] sm:$0xf] %v3336
      %3387 = vst [vmem:[#allocation4 + $0x24c] sm:$0xf] %v3337
      %3388 = vst [vmem:[#allocation4 + $0x270] sm:$0xf] %v3338
      %3389 = vst [vmem:[#allocation4 + $0x294] sm:$0xf] %v3339
      %3390 = vst [vmem:[#allocation4 + $0x2b8] sm:$0xf] %v3340
      %3391 = vst [vmem:[#allocation4 + $0x2dc] sm:$0xf] %v3341
      %3392 = vst [vmem:[#allocation4 + $0x300] sm:$0xf] %v3342
      %3393 = vst [vmem:[#allocation4 + $0x324] sm:$0xf] %v3343
      %3394 = vst [vmem:[#allocation4 + $0x348] sm:$0xf] %v3344
      %v3395 = vld [vmem:[#allocation4 + $0x36c] sm:$0x1]
      %v3396 = vsel %vm2935, %v3345, %v3395
      %3397 = vst [vmem:[#allocation4 + $0x36c] sm:$0x1] %v3396
      %v3398 = vld [vmem:[#allocation3 + $0x10] sm:$0xff]
      %v3399 = vld [vmem:[#allocation3 + $0x18] sm:$0xff]
      %v3400 = vld [vmem:[#allocation3 + $0x20] sm:$0xff]
      %v3401 = vld [vmem:[#allocation3 + $0x28] sm:$0xff]
      %v3402 = vld [vmem:[#allocation3 + $0x30] sm:$0xff]
      %v3403 = vld [vmem:[#allocation3 + $0x38] sm:$0xff]
      %v3404 = vld [vmem:[#allocation3 + $0x40] sm:$0xff]
      %v3405 = vld [vmem:[#allocation3 + $0x48] sm:$0xff]
      %v3406 = vld [vmem:[#allocation3 + $0x50] sm:$0xff]
      %v3407 = vld [vmem:[#allocation3 + $0x58] sm:$0xff]
      %v3408 = vld [vmem:[#allocation3 + $0x60] sm:$0xff]
      %v3409 = vld [vmem:[#allocation3 + $0x68] sm:$0xff]
      %v3410 = vld [vmem:[#allocation3 + $0x70] sm:$0xff]
      %v3411 = vld [vmem:[#allocation3 + $0x78] sm:$0xff]
      %v3412 = vld [vmem:[#allocation3 + $0x80] sm:$0xff]
      %v3413 = vld [vmem:[#allocation3 + $0x88] sm:$0xff]
      %v3414 = vld [vmem:[#allocation3 + $0x90] sm:$0xff]
      %v3415 = vld [vmem:[#allocation3 + $0x98] sm:$0xff]
      %v3416 = vld [vmem:[#allocation3 + $0xa0] sm:$0xff]
      %v3417 = vld [vmem:[#allocation3 + $0xa8] sm:$0xff]
      %v3418 = vld [vmem:[#allocation3 + $0xb0] sm:$0xff]
      %v3419 = vld [vmem:[#allocation3 + $0xb8] sm:$0xff]
      %v3420 = vld [vmem:[#allocation3 + $0xc0] sm:$0xff]
      %v3421 = vld [vmem:[#allocation3 + $0xc8] sm:$0xff]
      %v3422 = vld [vmem:[#allocation3 + $0xd0] sm:$0x1]
      %v3423 = vpack.c.bf16 %v3399, %v3398
      %v3424 = vpack.c.bf16 %v3401, %v3400
      %v3425 = vpack.c.bf16 %v3403, %v3402
      %v3426 = vpack.c.bf16 %v3405, %v3404
      %v3427 = vpack.c.bf16 %v3407, %v3406
      %v3428 = vpack.c.bf16 %v3409, %v3408
      %v3429 = vpack.c.bf16 %v3411, %v3410
      %v3430 = vpack.c.bf16 %v3413, %v3412
      %v3431 = vpack.c.bf16 %v3415, %v3414
      %v3432 = vpack.c.bf16 %v3417, %v3416
      %v3433 = vpack.c.bf16 %v3419, %v3418
      %v3434 = vpack.c.bf16 %v3421, %v3420
      %v3435 = vpack.c.bf16 %v3422, %v3422
      %v3449 = vunpack.c.l.b16 %v3423
      %v3450 = vunpack.c.h.b16 %v3423
      %v3451 = vunpack.c.l.b16 %v3424
      %v3452 = vunpack.c.h.b16 %v3424
      %v3453 = vunpack.c.l.b16 %v3425
      %v3454 = vunpack.c.h.b16 %v3425
      %v3455 = vunpack.c.l.b16 %v3426
      %v3456 = vunpack.c.h.b16 %v3426
      %v3457 = vunpack.c.l.b16 %v3427
      %v3458 = vunpack.c.h.b16 %v3427
      %v3459 = vunpack.c.l.b16 %v3428
      %v3460 = vunpack.c.h.b16 %v3428
      %v3461 = vunpack.c.l.b16 %v3429
      %v3462 = vunpack.c.h.b16 %v3429
      %v3463 = vunpack.c.l.b16 %v3430
      %v3464 = vunpack.c.h.b16 %v3430
      %v3465 = vunpack.c.l.b16 %v3431
      %v3466 = vunpack.c.h.b16 %v3431
      %v3467 = vunpack.c.l.b16 %v3432
      %v3468 = vunpack.c.h.b16 %v3432
      %v3469 = vunpack.c.l.b16 %v3433
      %v3470 = vunpack.c.h.b16 %v3433
      %v3471 = vunpack.c.l.b16 %v3434
      %v3472 = vunpack.c.h.b16 %v3434
      %v3473 = vunpack.c.l.b16 %v3435
      %v3474 = vpack.c.b16 %v3449, %v3449
      %v3475 = vpack.c.b16 %v3450, %v3450
      %v3476 = vpack.c.b16 %v3451, %v3451
      %v3477 = vpack.c.b16 %v3452, %v3452
      %v3478 = vpack.c.b16 %v3453, %v3453
      %v3479 = vpack.c.b16 %v3454, %v3454
      %v3480 = vpack.c.b16 %v3455, %v3455
      %v3481 = vpack.c.b16 %v3456, %v3456
      %v3482 = vpack.c.b16 %v3457, %v3457
      %v3483 = vpack.c.b16 %v3458, %v3458
      %v3484 = vpack.c.b16 %v3459, %v3459
      %v3485 = vpack.c.b16 %v3460, %v3460
      %v3486 = vpack.c.b16 %v3461, %v3461
      %v3487 = vpack.c.b16 %v3462, %v3462
      %v3488 = vpack.c.b16 %v3463, %v3463
      %v3489 = vpack.c.b16 %v3464, %v3464
      %v3490 = vpack.c.b16 %v3465, %v3465
      %v3491 = vpack.c.b16 %v3466, %v3466
      %v3492 = vpack.c.b16 %v3467, %v3467
      %v3493 = vpack.c.b16 %v3468, %v3468
      %v3494 = vpack.c.b16 %v3469, %v3469
      %v3495 = vpack.c.b16 %v3470, %v3470
      %v3496 = vpack.c.b16 %v3471, %v3471
      %v3497 = vpack.c.b16 %v3472, %v3472
      %v3498 = vpack.c.b16 %v3473, %v3473
      %3524 = vst [vmem:[#allocation4 + $0x10] sm:$0xf] %v3474
      %3525 = vst [vmem:[#allocation4 + $0x34] sm:$0xf] %v3475
      %3526 = vst [vmem:[#allocation4 + $0x58] sm:$0xf] %v3476
      %3527 = vst [vmem:[#allocation4 + $0x7c] sm:$0xf] %v3477
      %3528 = vst [vmem:[#allocation4 + $0xa0] sm:$0xf] %v3478
      %3529 = vst [vmem:[#allocation4 + $0xc4] sm:$0xf] %v3479
      %3530 = vst [vmem:[#allocation4 + $0xe8] sm:$0xf] %v3480
      %3531 = vst [vmem:[#allocation4 + $0x10c] sm:$0xf] %v3481
      %3532 = vst [vmem:[#allocation4 + $0x130] sm:$0xf] %v3482
      %3533 = vst [vmem:[#allocation4 + $0x154] sm:$0xf] %v3483
      %3534 = vst [vmem:[#allocation4 + $0x178] sm:$0xf] %v3484
      %3535 = vst [vmem:[#allocation4 + $0x19c] sm:$0xf] %v3485
      %3536 = vst [vmem:[#allocation4 + $0x1c0] sm:$0xf] %v3486
      %3537 = vst [vmem:[#allocation4 + $0x1e4] sm:$0xf] %v3487
      %3538 = vst [vmem:[#allocation4 + $0x208] sm:$0xf] %v3488
      %3539 = vst [vmem:[#allocation4 + $0x22c] sm:$0xf] %v3489
      %3540 = vst [vmem:[#allocation4 + $0x250] sm:$0xf] %v3490
      %3541 = vst [vmem:[#allocation4 + $0x274] sm:$0xf] %v3491
      %3542 = vst [vmem:[#allocation4 + $0x298] sm:$0xf] %v3492
      %3543 = vst [vmem:[#allocation4 + $0x2bc] sm:$0xf] %v3493
      %3544 = vst [vmem:[#allocation4 + $0x2e0] sm:$0xf] %v3494
      %3545 = vst [vmem:[#allocation4 + $0x304] sm:$0xf] %v3495
      %3546 = vst [vmem:[#allocation4 + $0x328] sm:$0xf] %v3496
      %3547 = vst [vmem:[#allocation4 + $0x34c] sm:$0xf] %v3497
      %v3548 = vld [vmem:[#allocation4 + $0x370] sm:$0x1]
      %v3549 = vsel %vm2935, %v3498, %v3548
      %3550 = vst [vmem:[#allocation4 + $0x370] sm:$0x1] %v3549
      %v3551 = vld [vmem:[#allocation3 + $0x11] sm:$0xff]
      %v3552 = vld [vmem:[#allocation3 + $0x19] sm:$0xff]
      %v3553 = vld [vmem:[#allocation3 + $0x21] sm:$0xff]
      %v3554 = vld [vmem:[#allocation3 + $0x29] sm:$0xff]
      %v3555 = vld [vmem:[#allocation3 + $0x31] sm:$0xff]
      %v3556 = vld [vmem:[#allocation3 + $0x39] sm:$0xff]
      %v3557 = vld [vmem:[#allocation3 + $0x41] sm:$0xff]
      %v3558 = vld [vmem:[#allocation3 + $0x49] sm:$0xff]
      %v3559 = vld [vmem:[#allocation3 + $0x51] sm:$0xff]
      %v3560 = vld [vmem:[#allocation3 + $0x59] sm:$0xff]
      %v3561 = vld [vmem:[#allocation3 + $0x61] sm:$0xff]
      %v3562 = vld [vmem:[#allocation3 + $0x69] sm:$0xff]
      %v3563 = vld [vmem:[#allocation3 + $0x71] sm:$0xff]
      %v3564 = vld [vmem:[#allocation3 + $0x79] sm:$0xff]
      %v3565 = vld [vmem:[#allocation3 + $0x81] sm:$0xff]
      %v3566 = vld [vmem:[#allocation3 + $0x89] sm:$0xff]
      %v3567 = vld [vmem:[#allocation3 + $0x91] sm:$0xff]
      %v3568 = vld [vmem:[#allocation3 + $0x99] sm:$0xff]
      %v3569 = vld [vmem:[#allocation3 + $0xa1] sm:$0xff]
      %v3570 = vld [vmem:[#allocation3 + $0xa9] sm:$0xff]
      %v3571 = vld [vmem:[#allocation3 + $0xb1] sm:$0xff]
      %v3572 = vld [vmem:[#allocation3 + $0xb9] sm:$0xff]
      %v3573 = vld [vmem:[#allocation3 + $0xc1] sm:$0xff]
      %v3574 = vld [vmem:[#allocation3 + $0xc9] sm:$0xff]
      %v3575 = vld [vmem:[#allocation3 + $0xd1] sm:$0x1]
      %v3576 = vpack.c.bf16 %v3552, %v3551
      %v3577 = vpack.c.bf16 %v3554, %v3553
      %v3578 = vpack.c.bf16 %v3556, %v3555
      %v3579 = vpack.c.bf16 %v3558, %v3557
      %v3580 = vpack.c.bf16 %v3560, %v3559
      %v3581 = vpack.c.bf16 %v3562, %v3561
      %v3582 = vpack.c.bf16 %v3564, %v3563
      %v3583 = vpack.c.bf16 %v3566, %v3565
      %v3584 = vpack.c.bf16 %v3568, %v3567
      %v3585 = vpack.c.bf16 %v3570, %v3569
      %v3586 = vpack.c.bf16 %v3572, %v3571
      %v3587 = vpack.c.bf16 %v3574, %v3573
      %v3588 = vpack.c.bf16 %v3575, %v3575
      %v3602 = vunpack.c.l.b16 %v3576
      %v3603 = vunpack.c.h.b16 %v3576
      %v3604 = vunpack.c.l.b16 %v3577
      %v3605 = vunpack.c.h.b16 %v3577
      %v3606 = vunpack.c.l.b16 %v3578
      %v3607 = vunpack.c.h.b16 %v3578
      %v3608 = vunpack.c.l.b16 %v3579
      %v3609 = vunpack.c.h.b16 %v3579
      %v3610 = vunpack.c.l.b16 %v3580
      %v3611 = vunpack.c.h.b16 %v3580
      %v3612 = vunpack.c.l.b16 %v3581
      %v3613 = vunpack.c.h.b16 %v3581
      %v3614 = vunpack.c.l.b16 %v3582
      %v3615 = vunpack.c.h.b16 %v3582
      %v3616 = vunpack.c.l.b16 %v3583
      %v3617 = vunpack.c.h.b16 %v3583
      %v3618 = vunpack.c.l.b16 %v3584
      %v3619 = vunpack.c.h.b16 %v3584
      %v3620 = vunpack.c.l.b16 %v3585
      %v3621 = vunpack.c.h.b16 %v3585
      %v3622 = vunpack.c.l.b16 %v3586
      %v3623 = vunpack.c.h.b16 %v3586
      %v3624 = vunpack.c.l.b16 %v3587
      %v3625 = vunpack.c.h.b16 %v3587
      %v3626 = vunpack.c.l.b16 %v3588
      %v3627 = vpack.c.b16 %v3602, %v3602
      %v3628 = vpack.c.b16 %v3603, %v3603
      %v3629 = vpack.c.b16 %v3604, %v3604
      %v3630 = vpack.c.b16 %v3605, %v3605
      %v3631 = vpack.c.b16 %v3606, %v3606
      %v3632 = vpack.c.b16 %v3607, %v3607
      %v3633 = vpack.c.b16 %v3608, %v3608
      %v3634 = vpack.c.b16 %v3609, %v3609
      %v3635 = vpack.c.b16 %v3610, %v3610
      %v3636 = vpack.c.b16 %v3611, %v3611
      %v3637 = vpack.c.b16 %v3612, %v3612
      %v3638 = vpack.c.b16 %v3613, %v3613
      %v3639 = vpack.c.b16 %v3614, %v3614
      %v3640 = vpack.c.b16 %v3615, %v3615
      %v3641 = vpack.c.b16 %v3616, %v3616
      %v3642 = vpack.c.b16 %v3617, %v3617
      %v3643 = vpack.c.b16 %v3618, %v3618
      %v3644 = vpack.c.b16 %v3619, %v3619
      %v3645 = vpack.c.b16 %v3620, %v3620
      %v3646 = vpack.c.b16 %v3621, %v3621
      %v3647 = vpack.c.b16 %v3622, %v3622
      %v3648 = vpack.c.b16 %v3623, %v3623
      %v3649 = vpack.c.b16 %v3624, %v3624
      %v3650 = vpack.c.b16 %v3625, %v3625
      %v3651 = vpack.c.b16 %v3626, %v3626
      %3677 = vst [vmem:[#allocation4 + $0x14] sm:$0xf] %v3627
      %3678 = vst [vmem:[#allocation4 + $0x38] sm:$0xf] %v3628
      %3679 = vst [vmem:[#allocation4 + $0x5c] sm:$0xf] %v3629
      %3680 = vst [vmem:[#allocation4 + $0x80] sm:$0xf] %v3630
      %3681 = vst [vmem:[#allocation4 + $0xa4] sm:$0xf] %v3631
      %3682 = vst [vmem:[#allocation4 + $0xc8] sm:$0xf] %v3632
      %3683 = vst [vmem:[#allocation4 + $0xec] sm:$0xf] %v3633
      %3684 = vst [vmem:[#allocation4 + $0x110] sm:$0xf] %v3634
      %3685 = vst [vmem:[#allocation4 + $0x134] sm:$0xf] %v3635
      %3686 = vst [vmem:[#allocation4 + $0x158] sm:$0xf] %v3636
      %3687 = vst [vmem:[#allocation4 + $0x17c] sm:$0xf] %v3637
      %3688 = vst [vmem:[#allocation4 + $0x1a0] sm:$0xf] %v3638
      %3689 = vst [vmem:[#allocation4 + $0x1c4] sm:$0xf] %v3639
      %3690 = vst [vmem:[#allocation4 + $0x1e8] sm:$0xf] %v3640
      %3691 = vst [vmem:[#allocation4 + $0x20c] sm:$0xf] %v3641
      %3692 = vst [vmem:[#allocation4 + $0x230] sm:$0xf] %v3642
      %3693 = vst [vmem:[#allocation4 + $0x254] sm:$0xf] %v3643
      %3694 = vst [vmem:[#allocation4 + $0x278] sm:$0xf] %v3644
      %3695 = vst [vmem:[#allocation4 + $0x29c] sm:$0xf] %v3645
      %3696 = vst [vmem:[#allocation4 + $0x2c0] sm:$0xf] %v3646
      %3697 = vst [vmem:[#allocation4 + $0x2e4] sm:$0xf] %v3647
      %3698 = vst [vmem:[#allocation4 + $0x308] sm:$0xf] %v3648
      %3699 = vst [vmem:[#allocation4 + $0x32c] sm:$0xf] %v3649
      %3700 = vst [vmem:[#allocation4 + $0x350] sm:$0xf] %v3650
      %v3701 = vld [vmem:[#allocation4 + $0x374] sm:$0x1]
      %v3702 = vsel %vm2935, %v3651, %v3701
      %3703 = vst [vmem:[#allocation4 + $0x374] sm:$0x1] %v3702
      %v3704 = vld [vmem:[#allocation3 + $0x1e] sm:$0xff]
      %v3705 = vld [vmem:[#allocation3 + $0x26] sm:$0xff]
      %v3706 = vld [vmem:[#allocation3 + $0x2e] sm:$0xff]
      %v3707 = vld [vmem:[#allocation3 + $0x36] sm:$0xff]
      %v3708 = vld [vmem:[#allocation3 + $0x3e] sm:$0xff]
      %v3709 = vld [vmem:[#allocation3 + $0x46] sm:$0xff]
      %v3710 = vld [vmem:[#allocation3 + $0x4e] sm:$0xff]
      %v3711 = vld [vmem:[#allocation3 + $0x56] sm:$0xff]
      %v3712 = vld [vmem:[#allocation3 + $0x5e] sm:$0xff]
      %v3713 = vld [vmem:[#allocation3 + $0x66] sm:$0xff]
      %v3714 = vld [vmem:[#allocation3 + $0x6e] sm:$0xff]
      %v3715 = vld [vmem:[#allocation3 + $0x76] sm:$0xff]
      %v3716 = vld [vmem:[#allocation3 + $0x7e] sm:$0xff]
      %v3717 = vld [vmem:[#allocation3 + $0x86] sm:$0xff]
      %v3718 = vld [vmem:[#allocation3 + $0x8e] sm:$0xff]
      %v3719 = vld [vmem:[#allocation3 + $0x96] sm:$0xff]
      %v3720 = vld [vmem:[#allocation3 + $0x9e] sm:$0xff]
      %v3721 = vld [vmem:[#allocation3 + $0xa6] sm:$0xff]
      %v3722 = vld [vmem:[#allocation3 + $0xae] sm:$0xff]
      %v3723 = vld [vmem:[#allocation3 + $0xb6] sm:$0xff]
      %v3724 = vld [vmem:[#allocation3 + $0xbe] sm:$0xff]
      %v3725 = vld [vmem:[#allocation3 + $0xc6] sm:$0xff]
      %v3726 = vld [vmem:[#allocation3 + $0xce] sm:$0xff]
      %v3727 = vld [vmem:[#allocation3 + $0xd6] sm:$0xff]
      %v3728 = vld [vmem:[#allocation3 + $0xde] sm:$0x1]
      %v3729 = vpack.c.bf16 %v3705, %v3704
      %v3730 = vpack.c.bf16 %v3707, %v3706
      %v3731 = vpack.c.bf16 %v3709, %v3708
      %v3732 = vpack.c.bf16 %v3711, %v3710
      %v3733 = vpack.c.bf16 %v3713, %v3712
      %v3734 = vpack.c.bf16 %v3715, %v3714
      %v3735 = vpack.c.bf16 %v3717, %v3716
      %v3736 = vpack.c.bf16 %v3719, %v3718
      %v3737 = vpack.c.bf16 %v3721, %v3720
      %v3738 = vpack.c.bf16 %v3723, %v3722
      %v3739 = vpack.c.bf16 %v3725, %v3724
      %v3740 = vpack.c.bf16 %v3727, %v3726
      %v3741 = vpack.c.bf16 %v3728, %v3728
      %v3755 = vunpack.c.l.b16 %v3729
      %v3756 = vunpack.c.h.b16 %v3729
      %v3757 = vunpack.c.l.b16 %v3730
      %v3758 = vunpack.c.h.b16 %v3730
      %v3759 = vunpack.c.l.b16 %v3731
      %v3760 = vunpack.c.h.b16 %v3731
      %v3761 = vunpack.c.l.b16 %v3732
      %v3762 = vunpack.c.h.b16 %v3732
      %v3763 = vunpack.c.l.b16 %v3733
      %v3764 = vunpack.c.h.b16 %v3733
      %v3765 = vunpack.c.l.b16 %v3734
      %v3766 = vunpack.c.h.b16 %v3734
      %v3767 = vunpack.c.l.b16 %v3735
      %v3768 = vunpack.c.h.b16 %v3735
      %v3769 = vunpack.c.l.b16 %v3736
      %v3770 = vunpack.c.h.b16 %v3736
      %v3771 = vunpack.c.l.b16 %v3737
      %v3772 = vunpack.c.h.b16 %v3737
      %v3773 = vunpack.c.l.b16 %v3738
      %v3774 = vunpack.c.h.b16 %v3738
      %v3775 = vunpack.c.l.b16 %v3739
      %v3776 = vunpack.c.h.b16 %v3739
      %v3777 = vunpack.c.l.b16 %v3740
      %v3778 = vunpack.c.h.b16 %v3740
      %v3779 = vunpack.c.l.b16 %v3741
      %v3780 = vpack.c.b16 %v3755, %v3755
      %v3781 = vpack.c.b16 %v3756, %v3756
      %v3782 = vpack.c.b16 %v3757, %v3757
      %v3783 = vpack.c.b16 %v3758, %v3758
      %v3784 = vpack.c.b16 %v3759, %v3759
      %v3785 = vpack.c.b16 %v3760, %v3760
      %v3786 = vpack.c.b16 %v3761, %v3761
      %v3787 = vpack.c.b16 %v3762, %v3762
      %v3788 = vpack.c.b16 %v3763, %v3763
      %v3789 = vpack.c.b16 %v3764, %v3764
      %v3790 = vpack.c.b16 %v3765, %v3765
      %v3791 = vpack.c.b16 %v3766, %v3766
      %v3792 = vpack.c.b16 %v3767, %v3767
      %v3793 = vpack.c.b16 %v3768, %v3768
      %v3794 = vpack.c.b16 %v3769, %v3769
      %v3795 = vpack.c.b16 %v3770, %v3770
      %v3796 = vpack.c.b16 %v3771, %v3771
      %v3797 = vpack.c.b16 %v3772, %v3772
      %v3798 = vpack.c.b16 %v3773, %v3773
      %v3799 = vpack.c.b16 %v3774, %v3774
      %v3800 = vpack.c.b16 %v3775, %v3775
      %v3801 = vpack.c.b16 %v3776, %v3776
      %v3802 = vpack.c.b16 %v3777, %v3777
      %v3803 = vpack.c.b16 %v3778, %v3778
      %v3804 = vpack.c.b16 %v3779, %v3779
      %3830 = vst [vmem:[#allocation4 + $0x18] sm:$0xf] %v3780
      %3831 = vst [vmem:[#allocation4 + $0x3c] sm:$0xf] %v3781
      %3832 = vst [vmem:[#allocation4 + $0x60] sm:$0xf] %v3782
      %3833 = vst [vmem:[#allocation4 + $0x84] sm:$0xf] %v3783
      %3834 = vst [vmem:[#allocation4 + $0xa8] sm:$0xf] %v3784
      %3835 = vst [vmem:[#allocation4 + $0xcc] sm:$0xf] %v3785
      %3836 = vst [vmem:[#allocation4 + $0xf0] sm:$0xf] %v3786
      %3837 = vst [vmem:[#allocation4 + $0x114] sm:$0xf] %v3787
      %3838 = vst [vmem:[#allocation4 + $0x138] sm:$0xf] %v3788
      %3839 = vst [vmem:[#allocation4 + $0x15c] sm:$0xf] %v3789
      %3840 = vst [vmem:[#allocation4 + $0x180] sm:$0xf] %v3790
      %3841 = vst [vmem:[#allocation4 + $0x1a4] sm:$0xf] %v3791
      %3842 = vst [vmem:[#allocation4 + $0x1c8] sm:$0xf] %v3792
      %3843 = vst [vmem:[#allocation4 + $0x1ec] sm:$0xf] %v3793
      %3844 = vst [vmem:[#allocation4 + $0x210] sm:$0xf] %v3794
      %3845 = vst [vmem:[#allocation4 + $0x234] sm:$0xf] %v3795
      %3846 = vst [vmem:[#allocation4 + $0x258] sm:$0xf] %v3796
      %3847 = vst [vmem:[#allocation4 + $0x27c] sm:$0xf] %v3797
      %3848 = vst [vmem:[#allocation4 + $0x2a0] sm:$0xf] %v3798
      %3849 = vst [vmem:[#allocation4 + $0x2c4] sm:$0xf] %v3799
      %3850 = vst [vmem:[#allocation4 + $0x2e8] sm:$0xf] %v3800
      %3851 = vst [vmem:[#allocation4 + $0x30c] sm:$0xf] %v3801
      %3852 = vst [vmem:[#allocation4 + $0x330] sm:$0xf] %v3802
      %3853 = vst [vmem:[#allocation4 + $0x354] sm:$0xf] %v3803
      %v3854 = vld [vmem:[#allocation4 + $0x378] sm:$0x1]
      %v3855 = vsel %vm2935, %v3804, %v3854
      %3856 = vst [vmem:[#allocation4 + $0x378] sm:$0x1] %v3855
      %v3857 = vld [vmem:[#allocation3 + $0x1f] sm:$0xff]
      %v3858 = vld [vmem:[#allocation3 + $0x27] sm:$0xff]
      %v3859 = vld [vmem:[#allocation3 + $0x2f] sm:$0xff]
      %v3860 = vld [vmem:[#allocation3 + $0x37] sm:$0xff]
      %v3861 = vld [vmem:[#allocation3 + $0x3f] sm:$0xff]
      %v3862 = vld [vmem:[#allocation3 + $0x47] sm:$0xff]
      %v3863 = vld [vmem:[#allocation3 + $0x4f] sm:$0xff]
      %v3864 = vld [vmem:[#allocation3 + $0x57] sm:$0xff]
      %v3865 = vld [vmem:[#allocation3 + $0x5f] sm:$0xff]
      %v3866 = vld [vmem:[#allocation3 + $0x67] sm:$0xff]
      %v3867 = vld [vmem:[#allocation3 + $0x6f] sm:$0xff]
      %v3868 = vld [vmem:[#allocation3 + $0x77] sm:$0xff]
      %v3869 = vld [vmem:[#allocation3 + $0x7f] sm:$0xff]
      %v3870 = vld [vmem:[#allocation3 + $0x87] sm:$0xff]
      %v3871 = vld [vmem:[#allocation3 + $0x8f] sm:$0xff]
      %v3872 = vld [vmem:[#allocation3 + $0x97] sm:$0xff]
      %v3873 = vld [vmem:[#allocation3 + $0x9f] sm:$0xff]
      %v3874 = vld [vmem:[#allocation3 + $0xa7] sm:$0xff]
      %v3875 = vld [vmem:[#allocation3 + $0xaf] sm:$0xff]
      %v3876 = vld [vmem:[#allocation3 + $0xb7] sm:$0xff]
      %v3877 = vld [vmem:[#allocation3 + $0xbf] sm:$0xff]
      %v3878 = vld [vmem:[#allocation3 + $0xc7] sm:$0xff]
      %v3879 = vld [vmem:[#allocation3 + $0xcf] sm:$0xff]
      %v3880 = vld [vmem:[#allocation3 + $0xd7] sm:$0xff]
      %v3881 = vld [vmem:[#allocation3 + $0xdf] sm:$0x1]
      %v3882 = vpack.c.bf16 %v3858, %v3857
      %v3883 = vpack.c.bf16 %v3860, %v3859
      %v3884 = vpack.c.bf16 %v3862, %v3861
      %v3885 = vpack.c.bf16 %v3864, %v3863
      %v3886 = vpack.c.bf16 %v3866, %v3865
      %v3887 = vpack.c.bf16 %v3868, %v3867
      %v3888 = vpack.c.bf16 %v3870, %v3869
      %v3889 = vpack.c.bf16 %v3872, %v3871
      %v3890 = vpack.c.bf16 %v3874, %v3873
      %v3891 = vpack.c.bf16 %v3876, %v3875
      %v3892 = vpack.c.bf16 %v3878, %v3877
      %v3893 = vpack.c.bf16 %v3880, %v3879
      %v3894 = vpack.c.bf16 %v3881, %v3881
      %v3908 = vunpack.c.l.b16 %v3882
      %v3909 = vunpack.c.h.b16 %v3882
      %v3910 = vunpack.c.l.b16 %v3883
      %v3911 = vunpack.c.h.b16 %v3883
      %v3912 = vunpack.c.l.b16 %v3884
      %v3913 = vunpack.c.h.b16 %v3884
      %v3914 = vunpack.c.l.b16 %v3885
      %v3915 = vunpack.c.h.b16 %v3885
      %v3916 = vunpack.c.l.b16 %v3886
      %v3917 = vunpack.c.h.b16 %v3886
      %v3918 = vunpack.c.l.b16 %v3887
      %v3919 = vunpack.c.h.b16 %v3887
      %v3920 = vunpack.c.l.b16 %v3888
      %v3921 = vunpack.c.h.b16 %v3888
      %v3922 = vunpack.c.l.b16 %v3889
      %v3923 = vunpack.c.h.b16 %v3889
      %v3924 = vunpack.c.l.b16 %v3890
      %v3925 = vunpack.c.h.b16 %v3890
      %v3926 = vunpack.c.l.b16 %v3891
      %v3927 = vunpack.c.h.b16 %v3891
      %v3928 = vunpack.c.l.b16 %v3892
      %v3929 = vunpack.c.h.b16 %v3892
      %v3930 = vunpack.c.l.b16 %v3893
      %v3931 = vunpack.c.h.b16 %v3893
      %v3932 = vunpack.c.l.b16 %v3894
      %v3933 = vpack.c.b16 %v3908, %v3908
      %v3934 = vpack.c.b16 %v3909, %v3909
      %v3935 = vpack.c.b16 %v3910, %v3910
      %v3936 = vpack.c.b16 %v3911, %v3911
      %v3937 = vpack.c.b16 %v3912, %v3912
      %v3938 = vpack.c.b16 %v3913, %v3913
      %v3939 = vpack.c.b16 %v3914, %v3914
      %v3940 = vpack.c.b16 %v3915, %v3915
      %v3941 = vpack.c.b16 %v3916, %v3916
      %v3942 = vpack.c.b16 %v3917, %v3917
      %v3943 = vpack.c.b16 %v3918, %v3918
      %v3944 = vpack.c.b16 %v3919, %v3919
      %v3945 = vpack.c.b16 %v3920, %v3920
      %v3946 = vpack.c.b16 %v3921, %v3921
      %v3947 = vpack.c.b16 %v3922, %v3922
      %v3948 = vpack.c.b16 %v3923, %v3923
      %v3949 = vpack.c.b16 %v3924, %v3924
      %v3950 = vpack.c.b16 %v3925, %v3925
      %v3951 = vpack.c.b16 %v3926, %v3926
      %v3952 = vpack.c.b16 %v3927, %v3927
      %v3953 = vpack.c.b16 %v3928, %v3928
      %v3954 = vpack.c.b16 %v3929, %v3929
      %v3955 = vpack.c.b16 %v3930, %v3930
      %v3956 = vpack.c.b16 %v3931, %v3931
      %v3957 = vpack.c.b16 %v3932, %v3932
      %3983 = vst [vmem:[#allocation4 + $0x1c] sm:$0xf] %v3933
      %3984 = vst [vmem:[#allocation4 + $0x40] sm:$0xf] %v3934
      %3985 = vst [vmem:[#allocation4 + $0x64] sm:$0xf] %v3935
      %3986 = vst [vmem:[#allocation4 + $0x88] sm:$0xf] %v3936
      %3987 = vst [vmem:[#allocation4 + $0xac] sm:$0xf] %v3937
      %3988 = vst [vmem:[#allocation4 + $0xd0] sm:$0xf] %v3938
      %3989 = vst [vmem:[#allocation4 + $0xf4] sm:$0xf] %v3939
      %3990 = vst [vmem:[#allocation4 + $0x118] sm:$0xf] %v3940
      %3991 = vst [vmem:[#allocation4 + $0x13c] sm:$0xf] %v3941
      %3992 = vst [vmem:[#allocation4 + $0x160] sm:$0xf] %v3942
      %3993 = vst [vmem:[#allocation4 + $0x184] sm:$0xf] %v3943
      %3994 = vst [vmem:[#allocation4 + $0x1a8] sm:$0xf] %v3944
      %3995 = vst [vmem:[#allocation4 + $0x1cc] sm:$0xf] %v3945
      %3996 = vst [vmem:[#allocation4 + $0x1f0] sm:$0xf] %v3946
      %3997 = vst [vmem:[#allocation4 + $0x214] sm:$0xf] %v3947
      %3998 = vst [vmem:[#allocation4 + $0x238] sm:$0xf] %v3948
      %3999 = vst [vmem:[#allocation4 + $0x25c] sm:$0xf] %v3949
      %4000 = vst [vmem:[#allocation4 + $0x280] sm:$0xf] %v3950
      %4001 = vst [vmem:[#allocation4 + $0x2a4] sm:$0xf] %v3951
      %4002 = vst [vmem:[#allocation4 + $0x2c8] sm:$0xf] %v3952
      %4003 = vst [vmem:[#allocation4 + $0x2ec] sm:$0xf] %v3953
      %4004 = vst [vmem:[#allocation4 + $0x310] sm:$0xf] %v3954
      %4005 = vst [vmem:[#allocation4 + $0x334] sm:$0xf] %v3955
      %4006 = vst [vmem:[#allocation4 + $0x358] sm:$0xf] %v3956
      %v4007 = vld [vmem:[#allocation4 + $0x37c] sm:$0x1]
      %v4008 = vsel %vm2935, %v3957, %v4007
      %4009 = vst [vmem:[#allocation4 + $0x37c] sm:$0x1] %v4008
      %v4010 = vld [vmem:[#allocation3 + $0x20] sm:$0xff]
      %v4011 = vld [vmem:[#allocation3 + $0x28] sm:$0xff]
      %v4012 = vld [vmem:[#allocation3 + $0x30] sm:$0xff]
      %v4013 = vld [vmem:[#allocation3 + $0x38] sm:$0xff]
      %v4014 = vld [vmem:[#allocation3 + $0x40] sm:$0xff]
      %v4015 = vld [vmem:[#allocation3 + $0x48] sm:$0xff]
      %v4016 = vld [vmem:[#allocation3 + $0x50] sm:$0xff]
      %v4017 = vld [vmem:[#allocation3 + $0x58] sm:$0xff]
      %v4018 = vld [vmem:[#allocation3 + $0x60] sm:$0xff]
      %v4019 = vld [vmem:[#allocation3 + $0x68] sm:$0xff]
      %v4020 = vld [vmem:[#allocation3 + $0x70] sm:$0xff]
      %v4021 = vld [vmem:[#allocation3 + $0x78] sm:$0xff]
      %v4022 = vld [vmem:[#allocation3 + $0x80] sm:$0xff]
      %v4023 = vld [vmem:[#allocation3 + $0x88] sm:$0xff]
      %v4024 = vld [vmem:[#allocation3 + $0x90] sm:$0xff]
      %v4025 = vld [vmem:[#allocation3 + $0x98] sm:$0xff]
      %v4026 = vld [vmem:[#allocation3 + $0xa0] sm:$0xff]
      %v4027 = vld [vmem:[#allocation3 + $0xa8] sm:$0xff]
      %v4028 = vld [vmem:[#allocation3 + $0xb0] sm:$0xff]
      %v4029 = vld [vmem:[#allocation3 + $0xb8] sm:$0xff]
      %v4030 = vld [vmem:[#allocation3 + $0xc0] sm:$0xff]
      %v4031 = vld [vmem:[#allocation3 + $0xc8] sm:$0xff]
      %v4032 = vld [vmem:[#allocation3 + $0xd0] sm:$0xff]
      %v4033 = vld [vmem:[#allocation3 + $0xd8] sm:$0xff]
      %v4034 = vld [vmem:[#allocation3 + $0xe0] sm:$0x1]
      %v4035 = vpack.c.bf16 %v4011, %v4010
      %v4036 = vpack.c.bf16 %v4013, %v4012
      %v4037 = vpack.c.bf16 %v4015, %v4014
      %v4038 = vpack.c.bf16 %v4017, %v4016
      %v4039 = vpack.c.bf16 %v4019, %v4018
      %v4040 = vpack.c.bf16 %v4021, %v4020
      %v4041 = vpack.c.bf16 %v4023, %v4022
      %v4042 = vpack.c.bf16 %v4025, %v4024
      %v4043 = vpack.c.bf16 %v4027, %v4026
      %v4044 = vpack.c.bf16 %v4029, %v4028
      %v4045 = vpack.c.bf16 %v4031, %v4030
      %v4046 = vpack.c.bf16 %v4033, %v4032
      %v4047 = vpack.c.bf16 %v4034, %v4034
      %v4061 = vunpack.c.l.b16 %v4035
      %v4062 = vunpack.c.h.b16 %v4035
      %v4063 = vunpack.c.l.b16 %v4036
      %v4064 = vunpack.c.h.b16 %v4036
      %v4065 = vunpack.c.l.b16 %v4037
      %v4066 = vunpack.c.h.b16 %v4037
      %v4067 = vunpack.c.l.b16 %v4038
      %v4068 = vunpack.c.h.b16 %v4038
      %v4069 = vunpack.c.l.b16 %v4039
      %v4070 = vunpack.c.h.b16 %v4039
      %v4071 = vunpack.c.l.b16 %v4040
      %v4072 = vunpack.c.h.b16 %v4040
      %v4073 = vunpack.c.l.b16 %v4041
      %v4074 = vunpack.c.h.b16 %v4041
      %v4075 = vunpack.c.l.b16 %v4042
      %v4076 = vunpack.c.h.b16 %v4042
      %v4077 = vunpack.c.l.b16 %v4043
      %v4078 = vunpack.c.h.b16 %v4043
      %v4079 = vunpack.c.l.b16 %v4044
      %v4080 = vunpack.c.h.b16 %v4044
      %v4081 = vunpack.c.l.b16 %v4045
      %v4082 = vunpack.c.h.b16 %v4045
      %v4083 = vunpack.c.l.b16 %v4046
      %v4084 = vunpack.c.h.b16 %v4046
      %v4085 = vunpack.c.l.b16 %v4047
      %v4086 = vpack.c.b16 %v4061, %v4061
      %v4087 = vpack.c.b16 %v4062, %v4062
      %v4088 = vpack.c.b16 %v4063, %v4063
      %v4089 = vpack.c.b16 %v4064, %v4064
      %v4090 = vpack.c.b16 %v4065, %v4065
      %v4091 = vpack.c.b16 %v4066, %v4066
      %v4092 = vpack.c.b16 %v4067, %v4067
      %v4093 = vpack.c.b16 %v4068, %v4068
      %v4094 = vpack.c.b16 %v4069, %v4069
      %v4095 = vpack.c.b16 %v4070, %v4070
      %v4096 = vpack.c.b16 %v4071, %v4071
      %v4097 = vpack.c.b16 %v4072, %v4072
      %v4098 = vpack.c.b16 %v4073, %v4073
      %v4099 = vpack.c.b16 %v4074, %v4074
      %v4100 = vpack.c.b16 %v4075, %v4075
      %v4101 = vpack.c.b16 %v4076, %v4076
      %v4102 = vpack.c.b16 %v4077, %v4077
      %v4103 = vpack.c.b16 %v4078, %v4078
      %v4104 = vpack.c.b16 %v4079, %v4079
      %v4105 = vpack.c.b16 %v4080, %v4080
      %v4106 = vpack.c.b16 %v4081, %v4081
      %v4107 = vpack.c.b16 %v4082, %v4082
      %v4108 = vpack.c.b16 %v4083, %v4083
      %v4109 = vpack.c.b16 %v4084, %v4084
      %v4110 = vpack.c.b16 %v4085, %v4085
      %4136 = vst [vmem:[#allocation4 + $0x20] sm:$0xf] %v4086
      %4137 = vst [vmem:[#allocation4 + $0x44] sm:$0xf] %v4087
      %4138 = vst [vmem:[#allocation4 + $0x68] sm:$0xf] %v4088
      %4139 = vst [vmem:[#allocation4 + $0x8c] sm:$0xf] %v4089
      %4140 = vst [vmem:[#allocation4 + $0xb0] sm:$0xf] %v4090
      %4141 = vst [vmem:[#allocation4 + $0xd4] sm:$0xf] %v4091
      %4142 = vst [vmem:[#allocation4 + $0xf8] sm:$0xf] %v4092
      %4143 = vst [vmem:[#allocation4 + $0x11c] sm:$0xf] %v4093
      %4144 = vst [vmem:[#allocation4 + $0x140] sm:$0xf] %v4094
      %4145 = vst [vmem:[#allocation4 + $0x164] sm:$0xf] %v4095
      %4146 = vst [vmem:[#allocation4 + $0x188] sm:$0xf] %v4096
      %4147 = vst [vmem:[#allocation4 + $0x1ac] sm:$0xf] %v4097
      %4148 = vst [vmem:[#allocation4 + $0x1d0] sm:$0xf] %v4098
      %4149 = vst [vmem:[#allocation4 + $0x1f4] sm:$0xf] %v4099
      %4150 = vst [vmem:[#allocation4 + $0x218] sm:$0xf] %v4100
      %4151 = vst [vmem:[#allocation4 + $0x23c] sm:$0xf] %v4101
      %4152 = vst [vmem:[#allocation4 + $0x260] sm:$0xf] %v4102
      %4153 = vst [vmem:[#allocation4 + $0x284] sm:$0xf] %v4103
      %4154 = vst [vmem:[#allocation4 + $0x2a8] sm:$0xf] %v4104
      %4155 = vst [vmem:[#allocation4 + $0x2cc] sm:$0xf] %v4105
      %4156 = vst [vmem:[#allocation4 + $0x2f0] sm:$0xf] %v4106
      %4157 = vst [vmem:[#allocation4 + $0x314] sm:$0xf] %v4107
      %4158 = vst [vmem:[#allocation4 + $0x338] sm:$0xf] %v4108
      %4159 = vst [vmem:[#allocation4 + $0x35c] sm:$0xf] %v4109
      %v4160 = vld [vmem:[#allocation4 + $0x380] sm:$0x1]
      %v4161 = vsel %vm2935, %v4110, %v4160
      %4162 = vst [vmem:[#allocation4 + $0x380] sm:$0x1] %v4161
      %v4163 = vld [vmem:[#allocation4] sm:$0xff]
      %v4164 = vld [vmem:[#allocation4 + $0x8] sm:$0xff]
      %v4165 = vld [vmem:[#allocation4 + $0x10] sm:$0xff]
      %v4166 = vld [vmem:[#allocation4 + $0x18] sm:$0xff]
      %v4167 = vld [vmem:[#allocation4 + $0x20] sm:$0xf]
      %v4168 = vld [vmem:[#allocation4 + $0x24] sm:$0xff]
      %v4169 = vld [vmem:[#allocation4 + $0x2c] sm:$0xff]
      %v4170 = vld [vmem:[#allocation4 + $0x34] sm:$0xff]
      %v4171 = vld [vmem:[#allocation4 + $0x3c] sm:$0xff]
      %v4172 = vld [vmem:[#allocation4 + $0x44] sm:$0xf]
      %v4173 = vld [vmem:[#allocation4 + $0x48] sm:$0xff]
      %v4174 = vld [vmem:[#allocation4 + $0x50] sm:$0xff]
      %v4175 = vld [vmem:[#allocation4 + $0x58] sm:$0xff]
      %v4176 = vld [vmem:[#allocation4 + $0x60] sm:$0xff]
      %v4177 = vld [vmem:[#allocation4 + $0x68] sm:$0xf]
      %v4178 = vld [vmem:[#allocation4 + $0x6c] sm:$0xff]
      %v4179 = vld [vmem:[#allocation4 + $0x74] sm:$0xff]
      %v4180 = vld [vmem:[#allocation4 + $0x7c] sm:$0xff]
      %v4181 = vld [vmem:[#allocation4 + $0x84] sm:$0xff]
      %v4182 = vld [vmem:[#allocation4 + $0x8c] sm:$0xf]
      %v4183 = vld [vmem:[#allocation4 + $0x90] sm:$0xff]
      %v4184 = vld [vmem:[#allocation4 + $0x98] sm:$0xff]
      %v4185 = vld [vmem:[#allocation4 + $0xa0] sm:$0xff]
      %v4186 = vld [vmem:[#allocation4 + $0xa8] sm:$0xff]
      %v4187 = vld [vmem:[#allocation4 + $0xb0] sm:$0xf]
      %v4188 = vld [vmem:[#allocation4 + $0xb4] sm:$0xff]
      %v4189 = vld [vmem:[#allocation4 + $0xbc] sm:$0xff]
      %v4190 = vld [vmem:[#allocation4 + $0xc4] sm:$0xff]
      %v4191 = vld [vmem:[#allocation4 + $0xcc] sm:$0xff]
      %v4192 = vld [vmem:[#allocation4 + $0xd4] sm:$0xf]
      %v4193 = vld [vmem:[#allocation4 + $0xd8] sm:$0xff]
      %v4194 = vld [vmem:[#allocation4 + $0xe0] sm:$0xff]
      %v4195 = vld [vmem:[#allocation4 + $0xe8] sm:$0xff]
      %v4196 = vld [vmem:[#allocation4 + $0xf0] sm:$0xff]
      %v4197 = vld [vmem:[#allocation4 + $0xf8] sm:$0xf]
      %v4198 = vld [vmem:[#allocation4 + $0xfc] sm:$0xff]
      %v4199 = vld [vmem:[#allocation4 + $0x104] sm:$0xff]
      %v4200 = vld [vmem:[#allocation4 + $0x10c] sm:$0xff]
      %v4201 = vld [vmem:[#allocation4 + $0x114] sm:$0xff]
      %v4202 = vld [vmem:[#allocation4 + $0x11c] sm:$0xf]
      %v4203 = vld [vmem:[#allocation4 + $0x120] sm:$0xff]
      %v4204 = vld [vmem:[#allocation4 + $0x128] sm:$0xff]
      %v4205 = vld [vmem:[#allocation4 + $0x130] sm:$0xff]
      %v4206 = vld [vmem:[#allocation4 + $0x138] sm:$0xff]
      %v4207 = vld [vmem:[#allocation4 + $0x140] sm:$0xf]
      %v4208 = vld [vmem:[#allocation4 + $0x144] sm:$0xff]
      %v4209 = vld [vmem:[#allocation4 + $0x14c] sm:$0xff]
      %v4210 = vld [vmem:[#allocation4 + $0x154] sm:$0xff]
      %v4211 = vld [vmem:[#allocation4 + $0x15c] sm:$0xff]
      %v4212 = vld [vmem:[#allocation4 + $0x164] sm:$0xf]
      %v4213 = vld [vmem:[#allocation4 + $0x168] sm:$0xff]
      %v4214 = vld [vmem:[#allocation4 + $0x170] sm:$0xff]
      %v4215 = vld [vmem:[#allocation4 + $0x178] sm:$0xff]
      %v4216 = vld [vmem:[#allocation4 + $0x180] sm:$0xff]
      %v4217 = vld [vmem:[#allocation4 + $0x188] sm:$0xf]
      %v4218 = vld [vmem:[#allocation4 + $0x18c] sm:$0xff]
      %v4219 = vld [vmem:[#allocation4 + $0x194] sm:$0xff]
      %v4220 = vld [vmem:[#allocation4 + $0x19c] sm:$0xff]
      %v4221 = vld [vmem:[#allocation4 + $0x1a4] sm:$0xff]
      %v4222 = vld [vmem:[#allocation4 + $0x1ac] sm:$0xf]
      %v4223 = vld [vmem:[#allocation4 + $0x1b0] sm:$0xff]
      %v4224 = vld [vmem:[#allocation4 + $0x1b8] sm:$0xff]
      %v4225 = vld [vmem:[#allocation4 + $0x1c0] sm:$0xff]
      %v4226 = vld [vmem:[#allocation4 + $0x1c8] sm:$0xff]
      %v4227 = vld [vmem:[#allocation4 + $0x1d0] sm:$0xf]
      %v4228 = vld [vmem:[#allocation4 + $0x1d4] sm:$0xff]
      %v4229 = vld [vmem:[#allocation4 + $0x1dc] sm:$0xff]
      %v4230 = vld [vmem:[#allocation4 + $0x1e4] sm:$0xff]
      %v4231 = vld [vmem:[#allocation4 + $0x1ec] sm:$0xff]
      %v4232 = vld [vmem:[#allocation4 + $0x1f4] sm:$0xf]
      %v4233 = vld [vmem:[#allocation4 + $0x1f8] sm:$0xff]
      %v4234 = vld [vmem:[#allocation4 + $0x200] sm:$0xff]
      %v4235 = vld [vmem:[#allocation4 + $0x208] sm:$0xff]
      %v4236 = vld [vmem:[#allocation4 + $0x210] sm:$0xff]
      %v4237 = vld [vmem:[#allocation4 + $0x218] sm:$0xf]
      %v4238 = vld [vmem:[#allocation4 + $0x21c] sm:$0xff]
      %v4239 = vld [vmem:[#allocation4 + $0x224] sm:$0xff]
      %v4240 = vld [vmem:[#allocation4 + $0x22c] sm:$0xff]
      %v4241 = vld [vmem:[#allocation4 + $0x234] sm:$0xff]
      %v4242 = vld [vmem:[#allocation4 + $0x23c] sm:$0xf]
      %v4243 = vld [vmem:[#allocation4 + $0x240] sm:$0xff]
      %v4244 = vld [vmem:[#allocation4 + $0x248] sm:$0xff]
      %v4245 = vld [vmem:[#allocation4 + $0x250] sm:$0xff]
      %v4246 = vld [vmem:[#allocation4 + $0x258] sm:$0xff]
      %v4247 = vld [vmem:[#allocation4 + $0x260] sm:$0xf]
      %v4248 = vld [vmem:[#allocation4 + $0x264] sm:$0xff]
      %v4249 = vld [vmem:[#allocation4 + $0x26c] sm:$0xff]
      %v4250 = vld [vmem:[#allocation4 + $0x274] sm:$0xff]
      %v4251 = vld [vmem:[#allocation4 + $0x27c] sm:$0xff]
      %v4252 = vld [vmem:[#allocation4 + $0x284] sm:$0xf]
      %v4253 = vld [vmem:[#allocation4 + $0x288] sm:$0xff]
      %v4254 = vld [vmem:[#allocation4 + $0x290] sm:$0xff]
      %v4255 = vld [vmem:[#allocation4 + $0x298] sm:$0xff]
      %v4256 = vld [vmem:[#allocation4 + $0x2a0] sm:$0xff]
      %v4257 = vld [vmem:[#allocation4 + $0x2a8] sm:$0xf]
      %v4258 = vld [vmem:[#allocation4 + $0x2ac] sm:$0xff]
      %v4259 = vld [vmem:[#allocation4 + $0x2b4] sm:$0xff]
      %v4260 = vld [vmem:[#allocation4 + $0x2bc] sm:$0xff]
      %v4261 = vld [vmem:[#allocation4 + $0x2c4] sm:$0xff]
      %v4262 = vld [vmem:[#allocation4 + $0x2cc] sm:$0xf]
      %v4263 = vld [vmem:[#allocation4 + $0x2d0] sm:$0xff]
      %v4264 = vld [vmem:[#allocation4 + $0x2d8] sm:$0xff]
      %v4265 = vld [vmem:[#allocation4 + $0x2e0] sm:$0xff]
      %v4266 = vld [vmem:[#allocation4 + $0x2e8] sm:$0xff]
      %v4267 = vld [vmem:[#allocation4 + $0x2f0] sm:$0xf]
      %v4268 = vld [vmem:[#allocation4 + $0x2f4] sm:$0xff]
      %v4269 = vld [vmem:[#allocation4 + $0x2fc] sm:$0xff]
      %v4270 = vld [vmem:[#allocation4 + $0x304] sm:$0xff]
      %v4271 = vld [vmem:[#allocation4 + $0x30c] sm:$0xff]
      %v4272 = vld [vmem:[#allocation4 + $0x314] sm:$0xf]
      %v4273 = vld [vmem:[#allocation4 + $0x318] sm:$0xff]
      %v4274 = vld [vmem:[#allocation4 + $0x320] sm:$0xff]
      %v4275 = vld [vmem:[#allocation4 + $0x328] sm:$0xff]
      %v4276 = vld [vmem:[#allocation4 + $0x330] sm:$0xff]
      %v4277 = vld [vmem:[#allocation4 + $0x338] sm:$0xf]
      %v4278 = vld [vmem:[#allocation4 + $0x33c] sm:$0xff]
      %v4279 = vld [vmem:[#allocation4 + $0x344] sm:$0xff]
      %v4280 = vld [vmem:[#allocation4 + $0x34c] sm:$0xff]
      %v4281 = vld [vmem:[#allocation4 + $0x354] sm:$0xff]
      %v4282 = vld [vmem:[#allocation4 + $0x35c] sm:$0xf]
      %v4283 = vld [vmem:[#allocation4 + $0x360] sm:$0x11]
      %v4284 = vld [vmem:[#allocation4 + $0x368] sm:$0x11]
      %v4285 = vld [vmem:[#allocation4 + $0x370] sm:$0x11]
      %v4286 = vld [vmem:[#allocation4 + $0x378] sm:$0x11]
      %v4287 = vld [vmem:[#allocation4 + $0x380] sm:$0x1]
      %v4288 = vld [vmem:[%s3] sm:$0xf]
      %v4289 = vld [vmem:[%s3 + $0x4] sm:$0xf]
      %v4290 = vld [vmem:[%s3 + $0x8] sm:$0xf]
      %v4291 = vld [vmem:[%s3 + $0xc] sm:$0xf]
      %v4292 = vld [vmem:[%s3 + $0x10] sm:$0xf]
      %v4293 = vld [vmem:[%s3 + $0x14] sm:$0xf]
      %v4294 = vld [vmem:[%s3 + $0x18] sm:$0xf]
      %v4295 = vld [vmem:[%s3 + $0x1c] sm:$0xf]
      %v4296 = vld [vmem:[%s3 + $0x20] sm:$0xf]
      %v4297 = vld [vmem:[%s3 + $0x24] sm:$0xf]
      %v4298 = vld [vmem:[%s3 + $0x28] sm:$0xf]
      %v4299 = vld [vmem:[%s3 + $0x2c] sm:$0xf]
      %v4300 = vld [vmem:[%s3 + $0x30] sm:$0xf]
      %v4301 = vld [vmem:[%s3 + $0x34] sm:$0xf]
      %v4302 = vld [vmem:[%s3 + $0x38] sm:$0xf]
      %v4303 = vld [vmem:[%s3 + $0x3c] sm:$0xf]
      %v4304 = vld [vmem:[%s3 + $0x40] sm:$0xf]
      %v4305 = vld [vmem:[%s3 + $0x44] sm:$0xf]
      %v4306 = vld [vmem:[%s3 + $0x48] sm:$0xf]
      %v4307 = vld [vmem:[%s3 + $0x4c] sm:$0xf]
      %v4308 = vld [vmem:[%s3 + $0x50] sm:$0xf]
      %v4309 = vld [vmem:[%s3 + $0x54] sm:$0xf]
      %v4310 = vld [vmem:[%s3 + $0x58] sm:$0xf]
      %v4311 = vld [vmem:[%s3 + $0x5c] sm:$0xf]
      %v4312 = vld [vmem:[%s3 + $0x60] sm:$0xf]
      %v4313 = vld [vmem:[%s3 + $0x64] sm:$0xf]
      %v4314 = vld [vmem:[%s3 + $0x68] sm:$0xf]
      %v4315 = vld [vmem:[%s3 + $0x6c] sm:$0xf]
      %v4316 = vld [vmem:[%s3 + $0x70] sm:$0xf]
      %v4317 = vld [vmem:[%s3 + $0x74] sm:$0xf]
      %v4318 = vld [vmem:[%s3 + $0x78] sm:$0xf]
      %v4319 = vld [vmem:[%s3 + $0x7c] sm:$0xf]
      %v4320 = vld [vmem:[%s3 + $0x80] sm:$0xf]
      %v4321 = vld [vmem:[%s3 + $0x84] sm:$0xf]
      %v4322 = vld [vmem:[%s3 + $0x88] sm:$0xf]
      %v4323 = vld [vmem:[%s3 + $0x8c] sm:$0xf]
      %v4324 = vld [vmem:[%s3 + $0x90] sm:$0xf]
      %v4325 = vld [vmem:[%s3 + $0x94] sm:$0xf]
      %v4326 = vld [vmem:[%s3 + $0x98] sm:$0xf]
      %v4327 = vld [vmem:[%s3 + $0x9c] sm:$0xf]
      %v4328 = vld [vmem:[%s3 + $0xa0] sm:$0xf]
      %v4329 = vld [vmem:[%s3 + $0xa4] sm:$0xf]
      %v4330 = vld [vmem:[%s3 + $0xa8] sm:$0xf]
      %v4331 = vld [vmem:[%s3 + $0xac] sm:$0xf]
      %v4332 = vld [vmem:[%s3 + $0xb0] sm:$0xf]
      %v4333 = vld [vmem:[%s3 + $0xb4] sm:$0xf]
      %v4334 = vld [vmem:[%s3 + $0xb8] sm:$0xf]
      %v4335 = vld [vmem:[%s3 + $0xbc] sm:$0xf]
      %v4336 = vld [vmem:[%s3 + $0xc0] sm:$0xf]
      %v4337 = vld [vmem:[%s3 + $0xc4] sm:$0xf]
      %v4338 = vld [vmem:[%s3 + $0xc8] sm:$0xf]
      %v4339 = vld [vmem:[%s3 + $0xcc] sm:$0xf]
      %v4340 = vld [vmem:[%s3 + $0xd0] sm:$0xf]
      %v4341 = vld [vmem:[%s3 + $0xd4] sm:$0xf]
      %v4342 = vld [vmem:[%s3 + $0xd8] sm:$0xf]
      %v4343 = vld [vmem:[%s3 + $0xdc] sm:$0xf]
      %v4344 = vld [vmem:[%s3 + $0xe0] sm:$0xf]
      %v4345 = vld [vmem:[%s3 + $0xe4] sm:$0xf]
      %v4346 = vld [vmem:[%s3 + $0xe8] sm:$0xf]
      %v4347 = vld [vmem:[%s3 + $0xec] sm:$0xf]
      %v4348 = vld [vmem:[%s3 + $0xf0] sm:$0xf]
      %v4349 = vld [vmem:[%s3 + $0xf4] sm:$0xf]
      %v4350 = vld [vmem:[%s3 + $0xf8] sm:$0xf]
      %v4351 = vld [vmem:[%s3 + $0xfc] sm:$0xf]
      %v4352 = vld [vmem:[%s3 + $0x100] sm:$0xf]
      %v4353 = vld [vmem:[%s3 + $0x104] sm:$0xf]
      %v4354 = vld [vmem:[%s3 + $0x108] sm:$0xf]
      %v4355 = vld [vmem:[%s3 + $0x10c] sm:$0xf]
      %v4356 = vld [vmem:[%s3 + $0x110] sm:$0xf]
      %v4357 = vld [vmem:[%s3 + $0x114] sm:$0xf]
      %v4358 = vld [vmem:[%s3 + $0x118] sm:$0xf]
      %v4359 = vld [vmem:[%s3 + $0x11c] sm:$0xf]
      %v4360 = vld [vmem:[%s3 + $0x120] sm:$0xf]
      %v4361 = vld [vmem:[%s3 + $0x124] sm:$0xf]
      %v4362 = vld [vmem:[%s3 + $0x128] sm:$0xf]
      %v4363 = vld [vmem:[%s3 + $0x12c] sm:$0xf]
      %v4364 = vld [vmem:[%s3 + $0x130] sm:$0xf]
      %v4365 = vld [vmem:[%s3 + $0x134] sm:$0xf]
      %v4366 = vld [vmem:[%s3 + $0x138] sm:$0xf]
      %v4367 = vld [vmem:[%s3 + $0x13c] sm:$0xf]
      %v4368 = vld [vmem:[%s3 + $0x140] sm:$0xf]
      %v4369 = vld [vmem:[%s3 + $0x144] sm:$0xf]
      %v4370 = vld [vmem:[%s3 + $0x148] sm:$0xf]
      %v4371 = vld [vmem:[%s3 + $0x14c] sm:$0xf]
      %v4372 = vld [vmem:[%s3 + $0x150] sm:$0xf]
      %v4373 = vld [vmem:[%s3 + $0x154] sm:$0xf]
      %v4374 = vld [vmem:[%s3 + $0x158] sm:$0xf]
      %v4375 = vld [vmem:[%s3 + $0x15c] sm:$0xf]
      %v4376 = vld [vmem:[%s3 + $0x160] sm:$0xf]
      %v4377 = vld [vmem:[%s3 + $0x164] sm:$0xf]
      %v4378 = vld [vmem:[%s3 + $0x168] sm:$0xf]
      %v4379 = vld [vmem:[%s3 + $0x16c] sm:$0xf]
      %v4380 = vld [vmem:[%s3 + $0x170] sm:$0xf]
      %v4381 = vld [vmem:[%s3 + $0x174] sm:$0xf]
      %v4382 = vld [vmem:[%s3 + $0x178] sm:$0xf]
      %v4383 = vld [vmem:[%s3 + $0x17c] sm:$0xf]
      %v4384 = vld [vmem:[%s3 + $0x180] sm:$0xf]
      %v4385 = vld [vmem:[%s3 + $0x184] sm:$0xf]
      %v4386 = vld [vmem:[%s3 + $0x188] sm:$0xf]
      %v4387 = vld [vmem:[%s3 + $0x18c] sm:$0xf]
      %v4388 = vld [vmem:[%s3 + $0x190] sm:$0xf]
      %v4389 = vld [vmem:[%s3 + $0x194] sm:$0xf]
      %v4390 = vld [vmem:[%s3 + $0x198] sm:$0xf]
      %v4391 = vld [vmem:[%s3 + $0x19c] sm:$0xf]
      %v4392 = vld [vmem:[%s3 + $0x1a0] sm:$0xf]
      %v4393 = vld [vmem:[%s3 + $0x1a4] sm:$0xf]
      %v4394 = vld [vmem:[%s3 + $0x1a8] sm:$0xf]
      %v4395 = vld [vmem:[%s3 + $0x1ac] sm:$0xf]
      %v4396 = vld [vmem:[%s3 + $0x1b0] sm:$0xf]
      %v4397 = vld [vmem:[%s3 + $0x1b4] sm:$0xf]
      %v4398 = vld [vmem:[%s3 + $0x1b8] sm:$0xf]
      %v4399 = vld [vmem:[%s3 + $0x1bc] sm:$0xf]
      %v4400 = vld [vmem:[%s3 + $0x1c0] sm:$0xf]
      %v4401 = vld [vmem:[%s3 + $0x1c4] sm:$0xf]
      %v4402 = vld [vmem:[%s3 + $0x1c8] sm:$0xf]
      %v4403 = vld [vmem:[%s3 + $0x1cc] sm:$0xf]
      %v4404 = vld [vmem:[%s3 + $0x1d0] sm:$0xf]
      %v4405 = vld [vmem:[%s3 + $0x1d4] sm:$0xf]
      %v4406 = vld [vmem:[%s3 + $0x1d8] sm:$0xf]
      %v4407 = vld [vmem:[%s3 + $0x1dc] sm:$0xf]
      %v4408 = vld [vmem:[%s3 + $0x1e0] sm:$0xf]
      %v4409 = vld [vmem:[%s3 + $0x1e4] sm:$0xf]
      %v4410 = vld [vmem:[%s3 + $0x1e8] sm:$0xf]
      %v4411 = vld [vmem:[%s3 + $0x1ec] sm:$0xf]
      %v4412 = vld [vmem:[%s3 + $0x1f0] sm:$0xf]
      %v4413 = vld [vmem:[%s3 + $0x1f4] sm:$0xf]
      %v4414 = vld [vmem:[%s3 + $0x1f8] sm:$0xf]
      %v4415 = vld [vmem:[%s3 + $0x1fc] sm:$0xf]
      %v4416 = vld [vmem:[%s3 + $0x200] sm:$0xf]
      %v4417 = vld [vmem:[%s3 + $0x204] sm:$0xf]
      %v4418 = vld [vmem:[%s3 + $0x208] sm:$0xf]
      %v4419 = vld [vmem:[%s3 + $0x20c] sm:$0xf]
      %v4420 = vld [vmem:[%s3 + $0x210] sm:$0xf]
      %v4421 = vld [vmem:[%s3 + $0x214] sm:$0xf]
      %v4422 = vld [vmem:[%s3 + $0x218] sm:$0xf]
      %v4423 = vld [vmem:[%s3 + $0x21c] sm:$0xf]
      %v4424 = vld [vmem:[%s3 + $0x220] sm:$0xf]
      %v4425 = vld [vmem:[%s3 + $0x224] sm:$0xf]
      %v4426 = vld [vmem:[%s3 + $0x228] sm:$0xf]
      %v4427 = vld [vmem:[%s3 + $0x22c] sm:$0xf]
      %v4428 = vld [vmem:[%s3 + $0x230] sm:$0xf]
      %v4429 = vld [vmem:[%s3 + $0x234] sm:$0xf]
      %v4430 = vld [vmem:[%s3 + $0x238] sm:$0xf]
      %v4431 = vld [vmem:[%s3 + $0x23c] sm:$0xf]
      %v4432 = vld [vmem:[%s4] sm:$0x1]
      %v4434 = vlaneseq
      %v4435 = vshrl.u32 %v4434, 7
      %v4436 = vsub.s32 0, %v4435
      %v4437 = vrot.slane %v4432, %v4436
      %v4564 = vunpack.c.l.b16 %v4163
      %v4565 = vunpack.c.h.b16 %v4163
      %v4566 = vunpack.c.l.b16 %v4164
      %v4567 = vunpack.c.h.b16 %v4164
      %v4568 = vunpack.c.l.b16 %v4165
      %v4569 = vunpack.c.h.b16 %v4165
      %v4570 = vunpack.c.l.b16 %v4166
      %v4571 = vunpack.c.h.b16 %v4166
      %v4572 = vunpack.c.l.b16 %v4167
      %v4573 = vunpack.c.l.b16 %v4168
      %v4574 = vunpack.c.h.b16 %v4168
      %v4575 = vunpack.c.l.b16 %v4169
      %v4576 = vunpack.c.h.b16 %v4169
      %v4577 = vunpack.c.l.b16 %v4170
      %v4578 = vunpack.c.h.b16 %v4170
      %v4579 = vunpack.c.l.b16 %v4171
      %v4580 = vunpack.c.h.b16 %v4171
      %v4581 = vunpack.c.l.b16 %v4172
      %v4582 = vunpack.c.l.b16 %v4173
      %v4583 = vunpack.c.h.b16 %v4173
      %v4584 = vunpack.c.l.b16 %v4174
      %v4585 = vunpack.c.h.b16 %v4174
      %v4586 = vunpack.c.l.b16 %v4175
      %v4587 = vunpack.c.h.b16 %v4175
      %v4588 = vunpack.c.l.b16 %v4176
      %v4589 = vunpack.c.h.b16 %v4176
      %v4590 = vunpack.c.l.b16 %v4177
      %v4591 = vunpack.c.l.b16 %v4178
      %v4592 = vunpack.c.h.b16 %v4178
      %v4593 = vunpack.c.l.b16 %v4179
      %v4594 = vunpack.c.h.b16 %v4179
      %v4595 = vunpack.c.l.b16 %v4180
      %v4596 = vunpack.c.h.b16 %v4180
      %v4597 = vunpack.c.l.b16 %v4181
      %v4598 = vunpack.c.h.b16 %v4181
      %v4599 = vunpack.c.l.b16 %v4182
      %v4600 = vunpack.c.l.b16 %v4183
      %v4601 = vunpack.c.h.b16 %v4183
      %v4602 = vunpack.c.l.b16 %v4184
      %v4603 = vunpack.c.h.b16 %v4184
      %v4604 = vunpack.c.l.b16 %v4185
      %v4605 = vunpack.c.h.b16 %v4185
      %v4606 = vunpack.c.l.b16 %v4186
      %v4607 = vunpack.c.h.b16 %v4186
      %v4608 = vunpack.c.l.b16 %v4187
      %v4609 = vunpack.c.l.b16 %v4188
      %v4610 = vunpack.c.h.b16 %v4188
      %v4611 = vunpack.c.l.b16 %v4189
      %v4612 = vunpack.c.h.b16 %v4189
      %v4613 = vunpack.c.l.b16 %v4190
      %v4614 = vunpack.c.h.b16 %v4190
      %v4615 = vunpack.c.l.b16 %v4191
      %v4616 = vunpack.c.h.b16 %v4191
      %v4617 = vunpack.c.l.b16 %v4192
      %v4618 = vunpack.c.l.b16 %v4193
      %v4619 = vunpack.c.h.b16 %v4193
      %v4620 = vunpack.c.l.b16 %v4194
      %v4621 = vunpack.c.h.b16 %v4194
      %v4622 = vunpack.c.l.b16 %v4195
      %v4623 = vunpack.c.h.b16 %v4195
      %v4624 = vunpack.c.l.b16 %v4196
      %v4625 = vunpack.c.h.b16 %v4196
      %v4626 = vunpack.c.l.b16 %v4197
      %v4627 = vunpack.c.l.b16 %v4198
      %v4628 = vunpack.c.h.b16 %v4198
      %v4629 = vunpack.c.l.b16 %v4199
      %v4630 = vunpack.c.h.b16 %v4199
      %v4631 = vunpack.c.l.b16 %v4200
      %v4632 = vunpack.c.h.b16 %v4200
      %v4633 = vunpack.c.l.b16 %v4201
      %v4634 = vunpack.c.h.b16 %v4201
      %v4635 = vunpack.c.l.b16 %v4202
      %v4636 = vunpack.c.l.b16 %v4203
      %v4637 = vunpack.c.h.b16 %v4203
      %v4638 = vunpack.c.l.b16 %v4204
      %v4639 = vunpack.c.h.b16 %v4204
      %v4640 = vunpack.c.l.b16 %v4205
      %v4641 = vunpack.c.h.b16 %v4205
      %v4642 = vunpack.c.l.b16 %v4206
      %v4643 = vunpack.c.h.b16 %v4206
      %v4644 = vunpack.c.l.b16 %v4207
      %v4645 = vunpack.c.l.b16 %v4208
      %v4646 = vunpack.c.h.b16 %v4208
      %v4647 = vunpack.c.l.b16 %v4209
      %v4648 = vunpack.c.h.b16 %v4209
      %v4649 = vunpack.c.l.b16 %v4210
      %v4650 = vunpack.c.h.b16 %v4210
      %v4651 = vunpack.c.l.b16 %v4211
      %v4652 = vunpack.c.h.b16 %v4211
      %v4653 = vunpack.c.l.b16 %v4212
      %v4654 = vunpack.c.l.b16 %v4213
      %v4655 = vunpack.c.h.b16 %v4213
      %v4656 = vunpack.c.l.b16 %v4214
      %v4657 = vunpack.c.h.b16 %v4214
      %v4658 = vunpack.c.l.b16 %v4215
      %v4659 = vunpack.c.h.b16 %v4215
      %v4660 = vunpack.c.l.b16 %v4216
      %v4661 = vunpack.c.h.b16 %v4216
      %v4662 = vunpack.c.l.b16 %v4217
      %v4663 = vunpack.c.l.b16 %v4218
      %v4664 = vunpack.c.h.b16 %v4218
      %v4665 = vunpack.c.l.b16 %v4219
      %v4666 = vunpack.c.h.b16 %v4219
      %v4667 = vunpack.c.l.b16 %v4220
      %v4668 = vunpack.c.h.b16 %v4220
      %v4669 = vunpack.c.l.b16 %v4221
      %v4670 = vunpack.c.h.b16 %v4221
      %v4671 = vunpack.c.l.b16 %v4222
      %v4672 = vunpack.c.l.b16 %v4223
      %v4673 = vunpack.c.h.b16 %v4223
      %v4674 = vunpack.c.l.b16 %v4224
      %v4675 = vunpack.c.h.b16 %v4224
      %v4676 = vunpack.c.l.b16 %v4225
      %v4677 = vunpack.c.h.b16 %v4225
      %v4678 = vunpack.c.l.b16 %v4226
      %v4679 = vunpack.c.h.b16 %v4226
      %v4680 = vunpack.c.l.b16 %v4227
      %v4681 = vunpack.c.l.b16 %v4228
      %v4682 = vunpack.c.h.b16 %v4228
      %v4683 = vunpack.c.l.b16 %v4229
      %v4684 = vunpack.c.h.b16 %v4229
      %v4685 = vunpack.c.l.b16 %v4230
      %v4686 = vunpack.c.h.b16 %v4230
      %v4687 = vunpack.c.l.b16 %v4231
      %v4688 = vunpack.c.h.b16 %v4231
      %v4689 = vunpack.c.l.b16 %v4232
      %v4690 = vunpack.c.l.b16 %v4233
      %v4691 = vunpack.c.h.b16 %v4233
      %v4692 = vunpack.c.l.b16 %v4234
      %v4693 = vunpack.c.h.b16 %v4234
      %v4694 = vunpack.c.l.b16 %v4235
      %v4695 = vunpack.c.h.b16 %v4235
      %v4696 = vunpack.c.l.b16 %v4236
      %v4697 = vunpack.c.h.b16 %v4236
      %v4698 = vunpack.c.l.b16 %v4237
      %v4699 = vunpack.c.l.b16 %v4238
      %v4700 = vunpack.c.h.b16 %v4238
      %v4701 = vunpack.c.l.b16 %v4239
      %v4702 = vunpack.c.h.b16 %v4239
      %v4703 = vunpack.c.l.b16 %v4240
      %v4704 = vunpack.c.h.b16 %v4240
      %v4705 = vunpack.c.l.b16 %v4241
      %v4706 = vunpack.c.h.b16 %v4241
      %v4707 = vunpack.c.l.b16 %v4242
      %v4708 = vunpack.c.l.b16 %v4243
      %v4709 = vunpack.c.h.b16 %v4243
      %v4710 = vunpack.c.l.b16 %v4244
      %v4711 = vunpack.c.h.b16 %v4244
      %v4712 = vunpack.c.l.b16 %v4245
      %v4713 = vunpack.c.h.b16 %v4245
      %v4714 = vunpack.c.l.b16 %v4246
      %v4715 = vunpack.c.h.b16 %v4246
      %v4716 = vunpack.c.l.b16 %v4247
      %v4717 = vunpack.c.l.b16 %v4248
      %v4718 = vunpack.c.h.b16 %v4248
      %v4719 = vunpack.c.l.b16 %v4249
      %v4720 = vunpack.c.h.b16 %v4249
      %v4721 = vunpack.c.l.b16 %v4250
      %v4722 = vunpack.c.h.b16 %v4250
      %v4723 = vunpack.c.l.b16 %v4251
      %v4724 = vunpack.c.h.b16 %v4251
      %v4725 = vunpack.c.l.b16 %v4252
      %v4726 = vunpack.c.l.b16 %v4253
      %v4727 = vunpack.c.h.b16 %v4253
      %v4728 = vunpack.c.l.b16 %v4254
      %v4729 = vunpack.c.h.b16 %v4254
      %v4730 = vunpack.c.l.b16 %v4255
      %v4731 = vunpack.c.h.b16 %v4255
      %v4732 = vunpack.c.l.b16 %v4256
      %v4733 = vunpack.c.h.b16 %v4256
      %v4734 = vunpack.c.l.b16 %v4257
      %v4735 = vunpack.c.l.b16 %v4258
      %v4736 = vunpack.c.h.b16 %v4258
      %v4737 = vunpack.c.l.b16 %v4259
      %v4738 = vunpack.c.h.b16 %v4259
      %v4739 = vunpack.c.l.b16 %v4260
      %v4740 = vunpack.c.h.b16 %v4260
      %v4741 = vunpack.c.l.b16 %v4261
      %v4742 = vunpack.c.h.b16 %v4261
      %v4743 = vunpack.c.l.b16 %v4262
      %v4744 = vunpack.c.l.b16 %v4263
      %v4745 = vunpack.c.h.b16 %v4263
      %v4746 = vunpack.c.l.b16 %v4264
      %v4747 = vunpack.c.h.b16 %v4264
      %v4748 = vunpack.c.l.b16 %v4265
      %v4749 = vunpack.c.h.b16 %v4265
      %v4750 = vunpack.c.l.b16 %v4266
      %v4751 = vunpack.c.h.b16 %v4266
      %v4752 = vunpack.c.l.b16 %v4267
      %v4753 = vunpack.c.l.b16 %v4268
      %v4754 = vunpack.c.h.b16 %v4268
      %v4755 = vunpack.c.l.b16 %v4269
      %v4756 = vunpack.c.h.b16 %v4269
      %v4757 = vunpack.c.l.b16 %v4270
      %v4758 = vunpack.c.h.b16 %v4270
      %v4759 = vunpack.c.l.b16 %v4271
      %v4760 = vunpack.c.h.b16 %v4271
      %v4761 = vunpack.c.l.b16 %v4272
      %v4762 = vunpack.c.l.b16 %v4273
      %v4763 = vunpack.c.h.b16 %v4273
      %v4764 = vunpack.c.l.b16 %v4274
      %v4765 = vunpack.c.h.b16 %v4274
      %v4766 = vunpack.c.l.b16 %v4275
      %v4767 = vunpack.c.h.b16 %v4275
      %v4768 = vunpack.c.l.b16 %v4276
      %v4769 = vunpack.c.h.b16 %v4276
      %v4770 = vunpack.c.l.b16 %v4277
      %v4771 = vunpack.c.l.b16 %v4278
      %v4772 = vunpack.c.h.b16 %v4278
      %v4773 = vunpack.c.l.b16 %v4279
      %v4774 = vunpack.c.h.b16 %v4279
      %v4775 = vunpack.c.l.b16 %v4280
      %v4776 = vunpack.c.h.b16 %v4280
      %v4777 = vunpack.c.l.b16 %v4281
      %v4778 = vunpack.c.h.b16 %v4281
      %v4779 = vunpack.c.l.b16 %v4282
      %v4780 = vunpack.c.l.b16 %v4283
      %v4781 = vunpack.c.h.b16 %v4283
      %v4782 = vunpack.c.l.b16 %v4284
      %v4783 = vunpack.c.h.b16 %v4284
      %v4784 = vunpack.c.l.b16 %v4285
      %v4785 = vunpack.c.h.b16 %v4285
      %v4786 = vunpack.c.l.b16 %v4286
      %v4787 = vunpack.c.h.b16 %v4286
      %v4788 = vunpack.c.l.b16 %v4287
      %v4789 = vpack.c.b16 %v4573, %v4564
      %v4790 = vpack.c.b16 %v4574, %v4565
      %v4791 = vpack.c.b16 %v4575, %v4566
      %v4792 = vpack.c.b16 %v4576, %v4567
      %v4793 = vpack.c.b16 %v4577, %v4568
      %v4794 = vpack.c.b16 %v4578, %v4569
      %v4795 = vpack.c.b16 %v4579, %v4570
      %v4796 = vpack.c.b16 %v4580, %v4571
      %v4797 = vpack.c.b16 %v4581, %v4572
      %v4798 = vpack.c.b16 %v4591, %v4582
      %v4799 = vpack.c.b16 %v4592, %v4583
      %v4800 = vpack.c.b16 %v4593, %v4584
      %v4801 = vpack.c.b16 %v4594, %v4585
      %v4802 = vpack.c.b16 %v4595, %v4586
      %v4803 = vpack.c.b16 %v4596, %v4587
      %v4804 = vpack.c.b16 %v4597, %v4588
      %v4805 = vpack.c.b16 %v4598, %v4589
      %v4806 = vpack.c.b16 %v4599, %v4590
      %v4807 = vpack.c.b16 %v4609, %v4600
      %v4808 = vpack.c.b16 %v4610, %v4601
      %v4809 = vpack.c.b16 %v4611, %v4602
      %v4810 = vpack.c.b16 %v4612, %v4603
      %v4811 = vpack.c.b16 %v4613, %v4604
      %v4812 = vpack.c.b16 %v4614, %v4605
      %v4813 = vpack.c.b16 %v4615, %v4606
      %v4814 = vpack.c.b16 %v4616, %v4607
      %v4815 = vpack.c.b16 %v4617, %v4608
      %v4816 = vpack.c.b16 %v4627, %v4618
      %v4817 = vpack.c.b16 %v4628, %v4619
      %v4818 = vpack.c.b16 %v4629, %v4620
      %v4819 = vpack.c.b16 %v4630, %v4621
      %v4820 = vpack.c.b16 %v4631, %v4622
      %v4821 = vpack.c.b16 %v4632, %v4623
      %v4822 = vpack.c.b16 %v4633, %v4624
      %v4823 = vpack.c.b16 %v4634, %v4625
      %v4824 = vpack.c.b16 %v4635, %v4626
      %v4825 = vpack.c.b16 %v4645, %v4636
      %v4826 = vpack.c.b16 %v4646, %v4637
      %v4827 = vpack.c.b16 %v4647, %v4638
      %v4828 = vpack.c.b16 %v4648, %v4639
      %v4829 = vpack.c.b16 %v4649, %v4640
      %v4830 = vpack.c.b16 %v4650, %v4641
      %v4831 = vpack.c.b16 %v4651, %v4642
      %v4832 = vpack.c.b16 %v4652, %v4643
      %v4833 = vpack.c.b16 %v4653, %v4644
      %v4834 = vpack.c.b16 %v4663, %v4654
      %v4835 = vpack.c.b16 %v4664, %v4655
      %v4836 = vpack.c.b16 %v4665, %v4656
      %v4837 = vpack.c.b16 %v4666, %v4657
      %v4838 = vpack.c.b16 %v4667, %v4658
      %v4839 = vpack.c.b16 %v4668, %v4659
      %v4840 = vpack.c.b16 %v4669, %v4660
      %v4841 = vpack.c.b16 %v4670, %v4661
      %v4842 = vpack.c.b16 %v4671, %v4662
      %v4843 = vpack.c.b16 %v4681, %v4672
      %v4844 = vpack.c.b16 %v4682, %v4673
      %v4845 = vpack.c.b16 %v4683, %v4674
      %v4846 = vpack.c.b16 %v4684, %v4675
      %v4847 = vpack.c.b16 %v4685, %v4676
      %v4848 = vpack.c.b16 %v4686, %v4677
      %v4849 = vpack.c.b16 %v4687, %v4678
      %v4850 = vpack.c.b16 %v4688, %v4679
      %v4851 = vpack.c.b16 %v4689, %v4680
      %v4852 = vpack.c.b16 %v4699, %v4690
      %v4853 = vpack.c.b16 %v4700, %v4691
      %v4854 = vpack.c.b16 %v4701, %v4692
      %v4855 = vpack.c.b16 %v4702, %v4693
      %v4856 = vpack.c.b16 %v4703, %v4694
      %v4857 = vpack.c.b16 %v4704, %v4695
      %v4858 = vpack.c.b16 %v4705, %v4696
      %v4859 = vpack.c.b16 %v4706, %v4697
      %v4860 = vpack.c.b16 %v4707, %v4698
      %v4861 = vpack.c.b16 %v4717, %v4708
      %v4862 = vpack.c.b16 %v4718, %v4709
      %v4863 = vpack.c.b16 %v4719, %v4710
      %v4864 = vpack.c.b16 %v4720, %v4711
      %v4865 = vpack.c.b16 %v4721, %v4712
      %v4866 = vpack.c.b16 %v4722, %v4713
      %v4867 = vpack.c.b16 %v4723, %v4714
      %v4868 = vpack.c.b16 %v4724, %v4715
      %v4869 = vpack.c.b16 %v4725, %v4716
      %v4870 = vpack.c.b16 %v4735, %v4726
      %v4871 = vpack.c.b16 %v4736, %v4727
      %v4872 = vpack.c.b16 %v4737, %v4728
      %v4873 = vpack.c.b16 %v4738, %v4729
      %v4874 = vpack.c.b16 %v4739, %v4730
      %v4875 = vpack.c.b16 %v4740, %v4731
      %v4876 = vpack.c.b16 %v4741, %v4732
      %v4877 = vpack.c.b16 %v4742, %v4733
      %v4878 = vpack.c.b16 %v4743, %v4734
      %v4879 = vpack.c.b16 %v4753, %v4744
      %v4880 = vpack.c.b16 %v4754, %v4745
      %v4881 = vpack.c.b16 %v4755, %v4746
      %v4882 = vpack.c.b16 %v4756, %v4747
      %v4883 = vpack.c.b16 %v4757, %v4748
      %v4884 = vpack.c.b16 %v4758, %v4749
      %v4885 = vpack.c.b16 %v4759, %v4750
      %v4886 = vpack.c.b16 %v4760, %v4751
      %v4887 = vpack.c.b16 %v4761, %v4752
      %v4888 = vpack.c.b16 %v4771, %v4762
      %v4889 = vpack.c.b16 %v4772, %v4763
      %v4890 = vpack.c.b16 %v4773, %v4764
      %v4891 = vpack.c.b16 %v4774, %v4765
      %v4892 = vpack.c.b16 %v4775, %v4766
      %v4893 = vpack.c.b16 %v4776, %v4767
      %v4894 = vpack.c.b16 %v4777, %v4768
      %v4895 = vpack.c.b16 %v4778, %v4769
      %v4896 = vpack.c.b16 %v4779, %v4770
      %v4897 = vpack.c.b16 %v4780, %v4780
      %v4898 = vpack.c.b16 %v4781, %v4781
      %v4899 = vpack.c.b16 %v4782, %v4782
      %v4900 = vpack.c.b16 %v4783, %v4783
      %v4901 = vpack.c.b16 %v4784, %v4784
      %v4902 = vpack.c.b16 %v4785, %v4785
      %v4903 = vpack.c.b16 %v4786, %v4786
      %v4904 = vpack.c.b16 %v4787, %v4787
      %v4905 = vpack.c.b16 %v4788, %v4788
      %v5167 = vunpack.c.l.b16 %v4288
      %v5168 = vunpack.c.l.b16 %v4289
      %v5169 = vunpack.c.l.b16 %v4290
      %v5170 = vunpack.c.l.b16 %v4291
      %v5171 = vunpack.c.l.b16 %v4292
      %v5172 = vunpack.c.l.b16 %v4293
      %v5173 = vunpack.c.l.b16 %v4294
      %v5174 = vunpack.c.l.b16 %v4295
      %v5175 = vunpack.c.l.b16 %v4296
      %v5176 = vunpack.c.l.b16 %v4297
      %v5177 = vunpack.c.l.b16 %v4298
      %v5178 = vunpack.c.l.b16 %v4299
      %v5179 = vunpack.c.l.b16 %v4300
      %v5180 = vunpack.c.l.b16 %v4301
      %v5181 = vunpack.c.l.b16 %v4302
      %v5182 = vunpack.c.l.b16 %v4303
      %v5183 = vunpack.c.l.b16 %v4304
      %v5184 = vunpack.c.l.b16 %v4305
      %v5185 = vunpack.c.l.b16 %v4306
      %v5186 = vunpack.c.l.b16 %v4307
      %v5187 = vunpack.c.l.b16 %v4308
      %v5188 = vunpack.c.l.b16 %v4309
      %v5189 = vunpack.c.l.b16 %v4310
      %v5190 = vunpack.c.l.b16 %v4311
      %v5191 = vunpack.c.l.b16 %v4312
      %v5192 = vunpack.c.l.b16 %v4313
      %v5193 = vunpack.c.l.b16 %v4314
      %v5194 = vunpack.c.l.b16 %v4315
      %v5195 = vunpack.c.l.b16 %v4316
      %v5196 = vunpack.c.l.b16 %v4317
      %v5197 = vunpack.c.l.b16 %v4318
      %v5198 = vunpack.c.l.b16 %v4319
      %v5199 = vunpack.c.l.b16 %v4320
      %v5200 = vunpack.c.l.b16 %v4321
      %v5201 = vunpack.c.l.b16 %v4322
      %v5202 = vunpack.c.l.b16 %v4323
      %v5203 = vunpack.c.l.b16 %v4324
      %v5204 = vunpack.c.l.b16 %v4325
      %v5205 = vunpack.c.l.b16 %v4326
      %v5206 = vunpack.c.l.b16 %v4327
      %v5207 = vunpack.c.l.b16 %v4328
      %v5208 = vunpack.c.l.b16 %v4329
      %v5209 = vunpack.c.l.b16 %v4330
      %v5210 = vunpack.c.l.b16 %v4331
      %v5211 = vunpack.c.l.b16 %v4332
      %v5212 = vunpack.c.l.b16 %v4333
      %v5213 = vunpack.c.l.b16 %v4334
      %v5214 = vunpack.c.l.b16 %v4335
      %v5215 = vunpack.c.l.b16 %v4336
      %v5216 = vunpack.c.l.b16 %v4337
      %v5217 = vunpack.c.l.b16 %v4338
      %v5218 = vunpack.c.l.b16 %v4339
      %v5219 = vunpack.c.l.b16 %v4340
      %v5220 = vunpack.c.l.b16 %v4341
      %v5221 = vunpack.c.l.b16 %v4342
      %v5222 = vunpack.c.l.b16 %v4343
      %v5223 = vunpack.c.l.b16 %v4344
      %v5224 = vunpack.c.l.b16 %v4345
      %v5225 = vunpack.c.l.b16 %v4346
      %v5226 = vunpack.c.l.b16 %v4347
      %v5227 = vunpack.c.l.b16 %v4348
      %v5228 = vunpack.c.l.b16 %v4349
      %v5229 = vunpack.c.l.b16 %v4350
      %v5230 = vunpack.c.l.b16 %v4351
      %v5231 = vunpack.c.l.b16 %v4352
      %v5232 = vunpack.c.l.b16 %v4353
      %v5233 = vunpack.c.l.b16 %v4354
      %v5234 = vunpack.c.l.b16 %v4355
      %v5235 = vunpack.c.l.b16 %v4356
      %v5236 = vunpack.c.l.b16 %v4357
      %v5237 = vunpack.c.l.b16 %v4358
      %v5238 = vunpack.c.l.b16 %v4359
      %v5239 = vunpack.c.l.b16 %v4360
      %v5240 = vunpack.c.l.b16 %v4361
      %v5241 = vunpack.c.l.b16 %v4362
      %v5242 = vunpack.c.l.b16 %v4363
      %v5243 = vunpack.c.l.b16 %v4364
      %v5244 = vunpack.c.l.b16 %v4365
      %v5245 = vunpack.c.l.b16 %v4366
      %v5246 = vunpack.c.l.b16 %v4367
      %v5247 = vunpack.c.l.b16 %v4368
      %v5248 = vunpack.c.l.b16 %v4369
      %v5249 = vunpack.c.l.b16 %v4370
      %v5250 = vunpack.c.l.b16 %v4371
      %v5251 = vunpack.c.l.b16 %v4372
      %v5252 = vunpack.c.l.b16 %v4373
      %v5253 = vunpack.c.l.b16 %v4374
      %v5254 = vunpack.c.l.b16 %v4375
      %v5255 = vunpack.c.l.b16 %v4376
      %v5256 = vunpack.c.l.b16 %v4377
      %v5257 = vunpack.c.l.b16 %v4378
      %v5258 = vunpack.c.l.b16 %v4379
      %v5259 = vunpack.c.l.b16 %v4380
      %v5260 = vunpack.c.l.b16 %v4381
      %v5261 = vunpack.c.l.b16 %v4382
      %v5262 = vunpack.c.l.b16 %v4383
      %v5263 = vunpack.c.l.b16 %v4384
      %v5264 = vunpack.c.l.b16 %v4385
      %v5265 = vunpack.c.l.b16 %v4386
      %v5266 = vunpack.c.l.b16 %v4387
      %v5267 = vunpack.c.l.b16 %v4388
      %v5268 = vunpack.c.l.b16 %v4389
      %v5269 = vunpack.c.l.b16 %v4390
      %v5270 = vunpack.c.l.b16 %v4391
      %v5271 = vunpack.c.l.b16 %v4392
      %v5272 = vunpack.c.l.b16 %v4393
      %v5273 = vunpack.c.l.b16 %v4394
      %v5274 = vunpack.c.l.b16 %v4395
      %v5275 = vunpack.c.l.b16 %v4396
      %v5276 = vunpack.c.l.b16 %v4397
      %v5277 = vunpack.c.l.b16 %v4398
      %v5278 = vunpack.c.l.b16 %v4399
      %v5279 = vunpack.c.l.b16 %v4400
      %v5280 = vunpack.c.l.b16 %v4401
      %v5281 = vunpack.c.l.b16 %v4402
      %v5282 = vunpack.c.l.b16 %v4403
      %v5283 = vunpack.c.l.b16 %v4404
      %v5284 = vunpack.c.l.b16 %v4405
      %v5285 = vunpack.c.l.b16 %v4406
      %v5286 = vunpack.c.l.b16 %v4407
      %v5287 = vunpack.c.l.b16 %v4408
      %v5288 = vunpack.c.l.b16 %v4409
      %v5289 = vunpack.c.l.b16 %v4410
      %v5290 = vunpack.c.l.b16 %v4411
      %v5291 = vunpack.c.l.b16 %v4412
      %v5292 = vunpack.c.l.b16 %v4413
      %v5293 = vunpack.c.l.b16 %v4414
      %v5294 = vunpack.c.l.b16 %v4415
      %v5295 = vunpack.c.l.b16 %v4416
      %v5296 = vunpack.c.l.b16 %v4417
      %v5297 = vunpack.c.l.b16 %v4418
      %v5298 = vunpack.c.l.b16 %v4419
      %v5299 = vunpack.c.l.b16 %v4420
      %v5300 = vunpack.c.l.b16 %v4421
      %v5301 = vunpack.c.l.b16 %v4422
      %v5302 = vunpack.c.l.b16 %v4423
      %v5303 = vunpack.c.l.b16 %v4424
      %v5304 = vunpack.c.l.b16 %v4425
      %v5305 = vunpack.c.l.b16 %v4426
      %v5306 = vunpack.c.l.b16 %v4427
      %v5307 = vunpack.c.l.b16 %v4428
      %v5308 = vunpack.c.l.b16 %v4429
      %v5309 = vunpack.c.l.b16 %v4430
      %v5310 = vunpack.c.l.b16 %v4431
      %v5311 = vpack.c.b16 %v5168, %v5167
      %v5312 = vpack.c.b16 %v5170, %v5169
      %v5313 = vpack.c.b16 %v5172, %v5171
      %v5314 = vpack.c.b16 %v5174, %v5173
      %v5315 = vpack.c.b16 %v5176, %v5175
      %v5316 = vpack.c.b16 %v5178, %v5177
      %v5317 = vpack.c.b16 %v5180, %v5179
      %v5318 = vpack.c.b16 %v5182, %v5181
      %v5319 = vpack.c.b16 %v5184, %v5183
      %v5320 = vpack.c.b16 %v5186, %v5185
      %v5321 = vpack.c.b16 %v5188, %v5187
      %v5322 = vpack.c.b16 %v5190, %v5189
      %v5323 = vpack.c.b16 %v5192, %v5191
      %v5324 = vpack.c.b16 %v5194, %v5193
      %v5325 = vpack.c.b16 %v5196, %v5195
      %v5326 = vpack.c.b16 %v5198, %v5197
      %v5327 = vpack.c.b16 %v5200, %v5199
      %v5328 = vpack.c.b16 %v5202, %v5201
      %v5329 = vpack.c.b16 %v5204, %v5203
      %v5330 = vpack.c.b16 %v5206, %v5205
      %v5331 = vpack.c.b16 %v5208, %v5207
      %v5332 = vpack.c.b16 %v5210, %v5209
      %v5333 = vpack.c.b16 %v5212, %v5211
      %v5334 = vpack.c.b16 %v5214, %v5213
      %v5335 = vpack.c.b16 %v5216, %v5215
      %v5336 = vpack.c.b16 %v5218, %v5217
      %v5337 = vpack.c.b16 %v5220, %v5219
      %v5338 = vpack.c.b16 %v5222, %v5221
      %v5339 = vpack.c.b16 %v5224, %v5223
      %v5340 = vpack.c.b16 %v5226, %v5225
      %v5341 = vpack.c.b16 %v5228, %v5227
      %v5342 = vpack.c.b16 %v5230, %v5229
      %v5343 = vpack.c.b16 %v5232, %v5231
      %v5344 = vpack.c.b16 %v5234, %v5233
      %v5345 = vpack.c.b16 %v5236, %v5235
      %v5346 = vpack.c.b16 %v5238, %v5237
      %v5347 = vpack.c.b16 %v5240, %v5239
      %v5348 = vpack.c.b16 %v5242, %v5241
      %v5349 = vpack.c.b16 %v5244, %v5243
      %v5350 = vpack.c.b16 %v5246, %v5245
      %v5351 = vpack.c.b16 %v5248, %v5247
      %v5352 = vpack.c.b16 %v5250, %v5249
      %v5353 = vpack.c.b16 %v5252, %v5251
      %v5354 = vpack.c.b16 %v5254, %v5253
      %v5355 = vpack.c.b16 %v5256, %v5255
      %v5356 = vpack.c.b16 %v5258, %v5257
      %v5357 = vpack.c.b16 %v5260, %v5259
      %v5358 = vpack.c.b16 %v5262, %v5261
      %v5359 = vpack.c.b16 %v5264, %v5263
      %v5360 = vpack.c.b16 %v5266, %v5265
      %v5361 = vpack.c.b16 %v5268, %v5267
      %v5362 = vpack.c.b16 %v5270, %v5269
      %v5363 = vpack.c.b16 %v5272, %v5271
      %v5364 = vpack.c.b16 %v5274, %v5273
      %v5365 = vpack.c.b16 %v5276, %v5275
      %v5366 = vpack.c.b16 %v5278, %v5277
      %v5367 = vpack.c.b16 %v5280, %v5279
      %v5368 = vpack.c.b16 %v5282, %v5281
      %v5369 = vpack.c.b16 %v5284, %v5283
      %v5370 = vpack.c.b16 %v5286, %v5285
      %v5371 = vpack.c.b16 %v5288, %v5287
      %v5372 = vpack.c.b16 %v5290, %v5289
      %v5373 = vpack.c.b16 %v5292, %v5291
      %v5374 = vpack.c.b16 %v5294, %v5293
      %v5375 = vpack.c.b16 %v5296, %v5295
      %v5376 = vpack.c.b16 %v5298, %v5297
      %v5377 = vpack.c.b16 %v5300, %v5299
      %v5378 = vpack.c.b16 %v5302, %v5301
      %v5379 = vpack.c.b16 %v5304, %v5303
      %v5380 = vpack.c.b16 %v5306, %v5305
      %v5381 = vpack.c.b16 %v5308, %v5307
      %v5382 = vpack.c.b16 %v5310, %v5309
      %5455 = vmatprep.subr.bf16.mxu0 0
      %5456 = vmatpush1.bf16.msra.mxu0 %v5311
      %5457 = vmatprep.subr.bf16.mxu0 0
      %5458 = vmatpush1.bf16.msra.mxu0 %v5312
      %5459 = vmatprep.subr.bf16.mxu0 0
      %5460 = vmatpush1.bf16.msra.mxu0 %v5313
      %5461 = vmatprep.subr.bf16.mxu0 0
      %5462 = vmatpush1.bf16.msra.mxu0 %v5314
      %5463 = vmatprep.subr.bf16.mxu0 0
      %5464 = vmatpush1.bf16.msra.mxu0 %v5315
      %5465 = vmatprep.subr.bf16.mxu0 0
      %5466 = vmatpush1.bf16.msra.mxu0 %v5316
      %5467 = vmatprep.subr.bf16.mxu0 0
      %5468 = vmatpush1.bf16.msra.mxu0 %v5317
      %5469 = vmatprep.subr.bf16.mxu0 0
      %5470 = vmatpush1.bf16.msra.mxu0 %v5318
      %5471 = vmatprep.subr.bf16.mxu0 0
      %5472 = vmatpush1.bf16.msra.mxu0 %v5319
      %5473 = vmatprep.subr.bf16.mxu0 0
      %5474 = vmatpush1.bf16.msra.mxu0 %v5320
      %5475 = vmatprep.subr.bf16.mxu0 0
      %5476 = vmatpush1.bf16.msra.mxu0 %v5321
      %5477 = vmatprep.subr.bf16.mxu0 0
      %5478 = vmatpush1.bf16.msra.mxu0 %v5322
      %5479 = vmatprep.subr.bf16.mxu0 0
      %5480 = vmatpush1.bf16.msra.mxu0 %v5323
      %5481 = vmatprep.subr.bf16.mxu0 0
      %5482 = vmatpush1.bf16.msra.mxu0 %v5324
      %5483 = vmatprep.subr.bf16.mxu0 0
      %5484 = vmatpush1.bf16.msra.mxu0 %v5325
      %5485 = vmatprep.subr.bf16.mxu0 0
      %5486 = vmatpush1.bf16.msra.mxu0 %v5326
      %5487 = vmatprep.mubr.bf16.mxu0 %v4790
      %5488 = vmatmul.mubr.bf16.gmra.mrb[0].mxu0 %v4789
      %v5489 = vpop.f32.mrb[0].mxu0
      %v5490 = vadd.f32 %v4437, %v5489
      %v5491 = vpop.f32.mrb[0].mxu0
      %v5492 = vpop.f32.mrb[0].mxu0
      %v5493 = vadd.f32 %v4437, %v5492
      %v5494 = vpop.f32.mrb[0].mxu0
      %5495 = vmatprep.mubr.bf16.mxu0 %v4799
      %5496 = vmatmul.mubr.bf16.gmra.mrb[0].mxu0 %v4798
      %v5497 = vpop.f32.mrb[0].mxu0
      %v5498 = vadd.f32 %v4437, %v5497
      %v5499 = vpop.f32.mrb[0].mxu0
      %v5500 = vpop.f32.mrb[0].mxu0
      %v5501 = vadd.f32 %v4437, %v5500
      %v5502 = vpop.f32.mrb[0].mxu0
      %5503 = vmatprep.mubr.bf16.mxu0 %v4808
      %5504 = vmatmul.mubr.bf16.gmra.mrb[0].mxu0 %v4807
      %v5505 = vpop.f32.mrb[0].mxu0
      %v5506 = vadd.f32 %v4437, %v5505
      %v5507 = vpop.f32.mrb[0].mxu0
      %v5508 = vpop.f32.mrb[0].mxu0
      %v5509 = vadd.f32 %v4437, %v5508
      %v5510 = vpop.f32.mrb[0].mxu0
      %5511 = vmatprep.mubr.bf16.mxu0 %v4817
      %5512 = vmatmul.mubr.bf16.gmra.mrb[0].mxu0 %v4816
      %v5513 = vpop.f32.mrb[0].mxu0
      %v5514 = vadd.f32 %v4437, %v5513
      %v5515 = vpop.f32.mrb[0].mxu0
      %v5516 = vpop.f32.mrb[0].mxu0
      %v5517 = vadd.f32 %v4437, %v5516
      %v5518 = vpop.f32.mrb[0].mxu0
      %5519 = vmatprep.mubr.bf16.mxu0 %v4826
      %5520 = vmatmul.mubr.bf16.gmra.mrb[0].mxu0 %v4825
      %v5521 = vpop.f32.mrb[0].mxu0
      %v5522 = vadd.f32 %v4437, %v5521
      %v5523 = vpop.f32.mrb[0].mxu0
      %v5524 = vpop.f32.mrb[0].mxu0
      %v5525 = vadd.f32 %v4437, %v5524
      %v5526 = vpop.f32.mrb[0].mxu0
      %5527 = vmatprep.mubr.bf16.mxu0 %v4835
      %5528 = vmatmul.mubr.bf16.gmra.mrb[0].mxu0 %v4834
      %v5529 = vpop.f32.mrb[0].mxu0
      %v5530 = vadd.f32 %v4437, %v5529
      %v5531 = vpop.f32.mrb[0].mxu0
      %v5532 = vpop.f32.mrb[0].mxu0
      %v5533 = vadd.f32 %v4437, %v5532
      %v5534 = vpop.f32.mrb[0].mxu0
      %5535 = vmatprep.mubr.bf16.mxu0 %v4844
      %5536 = vmatmul.mubr.bf16.gmra.mrb[0].mxu0 %v4843
      %v5537 = vpop.f32.mrb[0].mxu0
      %v5538 = vadd.f32 %v4437, %v5537
      %v5539 = vpop.f32.mrb[0].mxu0
      %v5540 = vpop.f32.mrb[0].mxu0
      %v5541 = vadd.f32 %v4437, %v5540
      %v5542 = vpop.f32.mrb[0].mxu0
      %5543 = vmatprep.mubr.bf16.mxu0 %v4853
      %5544 = vmatmul.mubr.bf16.gmra.mrb[0].mxu0 %v4852
      %v5545 = vpop.f32.mrb[0].mxu0
      %v5546 = vadd.f32 %v4437, %v5545
      %v5547 = vpop.f32.mrb[0].mxu0
      %v5548 = vpop.f32.mrb[0].mxu0
      %v5549 = vadd.f32 %v4437, %v5548
      %v5550 = vpop.f32.mrb[0].mxu0
      %5551 = vmatprep.mubr.bf16.mxu0 %v4862
      %5552 = vmatmul.mubr.bf16.gmra.mrb[0].mxu0 %v4861
      %v5553 = vpop.f32.mrb[0].mxu0
      %v5554 = vadd.f32 %v4437, %v5553
      %v5555 = vpop.f32.mrb[0].mxu0
      %v5556 = vpop.f32.mrb[0].mxu0
      %v5557 = vadd.f32 %v4437, %v5556
      %v5558 = vpop.f32.mrb[0].mxu0
      %5559 = vmatprep.mubr.bf16.mxu0 %v4871
      %5560 = vmatmul.mubr.bf16.gmra.mrb[0].mxu0 %v4870
      %v5561 = vpop.f32.mrb[0].mxu0
      %v5562 = vadd.f32 %v4437, %v5561
      %v5563 = vpop.f32.mrb[0].mxu0
      %v5564 = vpop.f32.mrb[0].mxu0
      %v5565 = vadd.f32 %v4437, %v5564
      %v5566 = vpop.f32.mrb[0].mxu0
      %5567 = vmatprep.mubr.bf16.mxu0 %v4880
      %5568 = vmatmul.mubr.bf16.gmra.mrb[0].mxu0 %v4879
      %v5569 = vpop.f32.mrb[0].mxu0
      %v5570 = vadd.f32 %v4437, %v5569
      %v5571 = vpop.f32.mrb[0].mxu0
      %v5572 = vpop.f32.mrb[0].mxu0
      %v5573 = vadd.f32 %v4437, %v5572
      %v5574 = vpop.f32.mrb[0].mxu0
      %5575 = vmatprep.mubr.bf16.mxu0 %v4889
      %5576 = vmatmul.mubr.bf16.gmra.mrb[0].mxu0 %v4888
      %v5577 = vpop.f32.mrb[0].mxu0
      %v5578 = vadd.f32 %v4437, %v5577
      %v5579 = vpop.f32.mrb[0].mxu0
      %v5580 = vpop.f32.mrb[0].mxu0
      %v5581 = vadd.f32 %v4437, %v5580
      %v5582 = vpop.f32.mrb[0].mxu0
      %5583 = vmatprep.mubr.bf16.mxu0 %v4898
      %5584 = vmatmul.mubr.bf16.gmra.mrb[0].mxu0 %v4897
      %v5585 = vpop.f32.mrb[0].mxu0
      %v5586 = vadd.f32 %v4437, %v5585
      %v5587 = vpop.f32.mrb[0].mxu0
      %v5588 = vpop.f32.mrb[0].mxu0
      %v5589 = vpop.f32.mrb[0].mxu0
      %5590 = vdwg.mxu0
      %5591 = vmatprep.subr.bf16.mxu0 0
      %5592 = vmatpush1.bf16.msra.mxu0 %v5327
      %5593 = vmatprep.subr.bf16.mxu0 0
      %5594 = vmatpush1.bf16.msra.mxu0 %v5328
      %5595 = vmatprep.subr.bf16.mxu0 0
      %5596 = vmatpush1.bf16.msra.mxu0 %v5329
      %5597 = vmatprep.subr.bf16.mxu0 0
      %5598 = vmatpush1.bf16.msra.mxu0 %v5330
      %5599 = vmatprep.subr.bf16.mxu0 0
      %5600 = vmatpush1.bf16.msra.mxu0 %v5331
      %5601 = vmatprep.subr.bf16.mxu0 0
      %5602 = vmatpush1.bf16.msra.mxu0 %v5332
      %5603 = vmatprep.subr.bf16.mxu0 0
      %5604 = vmatpush1.bf16.msra.mxu0 %v5333
      %5605 = vmatprep.subr.bf16.mxu0 0
      %5606 = vmatpush1.bf16.msra.mxu0 %v5334
      %5607 = vmatprep.subr.bf16.mxu0 0
      %5608 = vmatpush1.bf16.msra.mxu0 %v5335
      %5609 = vmatprep.subr.bf16.mxu0 0
      %5610 = vmatpush1.bf16.msra.mxu0 %v5336
      %5611 = vmatprep.subr.bf16.mxu0 0
      %5612 = vmatpush1.bf16.msra.mxu0 %v5337
      %5613 = vmatprep.subr.bf16.mxu0 0
      %5614 = vmatpush1.bf16.msra.mxu0 %v5338
      %5615 = vmatprep.subr.bf16.mxu0 0
      %5616 = vmatpush1.bf16.msra.mxu0 %v5339
      %5617 = vmatprep.subr.bf16.mxu0 0
      %5618 = vmatpush1.bf16.msra.mxu0 %v5340
      %5619 = vmatprep.subr.bf16.mxu0 0
      %5620 = vmatpush1.bf16.msra.mxu0 %v5341
      %5621 = vmatprep.subr.bf16.mxu0 0
      %5622 = vmatpush1.bf16.msra.mxu0 %v5342
      %5623 = vmatprep.mubr.bf16.mxu0 %v4792
      %5624 = vmatmul.mubr.bf16.gmra.mrb[0].mxu0 %v4791
      %v5625 = vpop.f32.mrb[0].mxu0
      %v5626 = vadd.f32 %v5490, %v5625
      %v5627 = vpop.f32.mrb[0].mxu0
      %v5628 = vpop.f32.mrb[0].mxu0
      %v5629 = vadd.f32 %v5493, %v5628
      %v5630 = vpop.f32.mrb[0].mxu0
      %5631 = vmatprep.mubr.bf16.mxu0 %v4801
      %5632 = vmatmul.mubr.bf16.gmra.mrb[0].mxu0 %v4800
      %v5633 = vpop.f32.mrb[0].mxu0
      %v5634 = vadd.f32 %v5498, %v5633
      %v5635 = vpop.f32.mrb[0].mxu0
      %v5636 = vpop.f32.mrb[0].mxu0
      %v5637 = vadd.f32 %v5501, %v5636
      %v5638 = vpop.f32.mrb[0].mxu0
      %5639 = vmatprep.mubr.bf16.mxu0 %v4810
      %5640 = vmatmul.mubr.bf16.gmra.mrb[0].mxu0 %v4809
      %v5641 = vpop.f32.mrb[0].mxu0
      %v5642 = vadd.f32 %v5506, %v5641
      %v5643 = vpop.f32.mrb[0].mxu0
      %v5644 = vpop.f32.mrb[0].mxu0
      %v5645 = vadd.f32 %v5509, %v5644
      %v5646 = vpop.f32.mrb[0].mxu0
      %5647 = vmatprep.mubr.bf16.mxu0 %v4819
      %5648 = vmatmul.mubr.bf16.gmra.mrb[0].mxu0 %v4818
      %v5649 = vpop.f32.mrb[0].mxu0
      %v5650 = vadd.f32 %v5514, %v5649
      %v5651 = vpop.f32.mrb[0].mxu0
      %v5652 = vpop.f32.mrb[0].mxu0
      %v5653 = vadd.f32 %v5517, %v5652
      %v5654 = vpop.f32.mrb[0].mxu0
      %5655 = vmatprep.mubr.bf16.mxu0 %v4828
      %5656 = vmatmul.mubr.bf16.gmra.mrb[0].mxu0 %v4827
      %v5657 = vpop.f32.mrb[0].mxu0
      %v5658 = vadd.f32 %v5522, %v5657
      %v5659 = vpop.f32.mrb[0].mxu0
      %v5660 = vpop.f32.mrb[0].mxu0
      %v5661 = vadd.f32 %v5525, %v5660
      %v5662 = vpop.f32.mrb[0].mxu0
      %5663 = vmatprep.mubr.bf16.mxu0 %v4837
      %5664 = vmatmul.mubr.bf16.gmra.mrb[0].mxu0 %v4836
      %v5665 = vpop.f32.mrb[0].mxu0
      %v5666 = vadd.f32 %v5530, %v5665
      %v5667 = vpop.f32.mrb[0].mxu0
      %v5668 = vpop.f32.mrb[0].mxu0
      %v5669 = vadd.f32 %v5533, %v5668
      %v5670 = vpop.f32.mrb[0].mxu0
      %5671 = vmatprep.mubr.bf16.mxu0 %v4846
      %5672 = vmatmul.mubr.bf16.gmra.mrb[0].mxu0 %v4845
      %v5673 = vpop.f32.mrb[0].mxu0
      %v5674 = vadd.f32 %v5538, %v5673
      %v5675 = vpop.f32.mrb[0].mxu0
      %v5676 = vpop.f32.mrb[0].mxu0
      %v5677 = vadd.f32 %v5541, %v5676
      %v5678 = vpop.f32.mrb[0].mxu0
      %5679 = vmatprep.mubr.bf16.mxu0 %v4855
      %5680 = vmatmul.mubr.bf16.gmra.mrb[0].mxu0 %v4854
      %v5681 = vpop.f32.mrb[0].mxu0
      %v5682 = vadd.f32 %v5546, %v5681
      %v5683 = vpop.f32.mrb[0].mxu0
      %v5684 = vpop.f32.mrb[0].mxu0
      %v5685 = vadd.f32 %v5549, %v5684
      %v5686 = vpop.f32.mrb[0].mxu0
      %5687 = vmatprep.mubr.bf16.mxu0 %v4864
      %5688 = vmatmul.mubr.bf16.gmra.mrb[0].mxu0 %v4863
      %v5689 = vpop.f32.mrb[0].mxu0
      %v5690 = vadd.f32 %v5554, %v5689
      %v5691 = vpop.f32.mrb[0].mxu0
      %v5692 = vpop.f32.mrb[0].mxu0
      %v5693 = vadd.f32 %v5557, %v5692
      %v5694 = vpop.f32.mrb[0].mxu0
      %5695 = vmatprep.mubr.bf16.mxu0 %v4873
      %5696 = vmatmul.mubr.bf16.gmra.mrb[0].mxu0 %v4872
      %v5697 = vpop.f32.mrb[0].mxu0
      %v5698 = vadd.f32 %v5562, %v5697
      %v5699 = vpop.f32.mrb[0].mxu0
      %v5700 = vpop.f32.mrb[0].mxu0
      %v5701 = vadd.f32 %v5565, %v5700
      %v5702 = vpop.f32.mrb[0].mxu0
      %5703 = vmatprep.mubr.bf16.mxu0 %v4882
      %5704 = vmatmul.mubr.bf16.gmra.mrb[0].mxu0 %v4881
      %v5705 = vpop.f32.mrb[0].mxu0
      %v5706 = vadd.f32 %v5570, %v5705
      %v5707 = vpop.f32.mrb[0].mxu0
      %v5708 = vpop.f32.mrb[0].mxu0
      %v5709 = vadd.f32 %v5573, %v5708
      %v5710 = vpop.f32.mrb[0].mxu0
      %5711 = vmatprep.mubr.bf16.mxu0 %v4891
      %5712 = vmatmul.mubr.bf16.gmra.mrb[0].mxu0 %v4890
      %v5713 = vpop.f32.mrb[0].mxu0
      %v5714 = vadd.f32 %v5578, %v5713
      %v5715 = vpop.f32.mrb[0].mxu0
      %v5716 = vpop.f32.mrb[0].mxu0
      %v5717 = vadd.f32 %v5581, %v5716
      %v5718 = vpop.f32.mrb[0].mxu0
      %5719 = vmatprep.mubr.bf16.mxu0 %v4900
      %5720 = vmatmul.mubr.bf16.gmra.mrb[0].mxu0 %v4899
      %v5721 = vpop.f32.mrb[0].mxu0
      %v5722 = vadd.f32 %v5586, %v5721
      %v5723 = vpop.f32.mrb[0].mxu0
      %v5724 = vpop.f32.mrb[0].mxu0
      %v5725 = vpop.f32.mrb[0].mxu0
      %5726 = vdwg.mxu0
      %5727 = vmatprep.subr.bf16.mxu0 0
      %5728 = vmatpush1.bf16.msra.mxu0 %v5343
      %5729 = vmatprep.subr.bf16.mxu0 0
      %5730 = vmatpush1.bf16.msra.mxu0 %v5344
      %5731 = vmatprep.subr.bf16.mxu0 0
      %5732 = vmatpush1.bf16.msra.mxu0 %v5345
      %5733 = vmatprep.subr.bf16.mxu0 0
      %5734 = vmatpush1.bf16.msra.mxu0 %v5346
      %5735 = vmatprep.subr.bf16.mxu0 0
      %5736 = vmatpush1.bf16.msra.mxu0 %v5347
      %5737 = vmatprep.subr.bf16.mxu0 0
      %5738 = vmatpush1.bf16.msra.mxu0 %v5348
      %5739 = vmatprep.subr.bf16.mxu0 0
      %5740 = vmatpush1.bf16.msra.mxu0 %v5349
      %5741 = vmatprep.subr.bf16.mxu0 0
      %5742 = vmatpush1.bf16.msra.mxu0 %v5350
      %5743 = vmatprep.subr.bf16.mxu0 0
      %5744 = vmatpush1.bf16.msra.mxu0 %v5351
      %5745 = vmatprep.subr.bf16.mxu0 0
      %5746 = vmatpush1.bf16.msra.mxu0 %v5352
      %5747 = vmatprep.subr.bf16.mxu0 0
      %5748 = vmatpush1.bf16.msra.mxu0 %v5353
      %5749 = vmatprep.subr.bf16.mxu0 0
      %5750 = vmatpush1.bf16.msra.mxu0 %v5354
      %5751 = vmatprep.subr.bf16.mxu0 0
      %5752 = vmatpush1.bf16.msra.mxu0 %v5355
      %5753 = vmatprep.subr.bf16.mxu0 0
      %5754 = vmatpush1.bf16.msra.mxu0 %v5356
      %5755 = vmatprep.subr.bf16.mxu0 0
      %5756 = vmatpush1.bf16.msra.mxu0 %v5357
      %5757 = vmatprep.subr.bf16.mxu0 0
      %5758 = vmatpush1.bf16.msra.mxu0 %v5358
      %5759 = vmatprep.mubr.bf16.mxu0 %v4794
      %5760 = vmatmul.mubr.bf16.gmra.mrb[0].mxu0 %v4793
      %v5761 = vpop.f32.mrb[0].mxu0
      %v5762 = vadd.f32 %v5626, %v5761
      %v5763 = vpop.f32.mrb[0].mxu0
      %v5764 = vpop.f32.mrb[0].mxu0
      %v5765 = vadd.f32 %v5629, %v5764
      %v5766 = vpop.f32.mrb[0].mxu0
      %5767 = vmatprep.mubr.bf16.mxu0 %v4803
      %5768 = vmatmul.mubr.bf16.gmra.mrb[0].mxu0 %v4802
      %v5769 = vpop.f32.mrb[0].mxu0
      %v5770 = vadd.f32 %v5634, %v5769
      %v5771 = vpop.f32.mrb[0].mxu0
      %v5772 = vpop.f32.mrb[0].mxu0
      %v5773 = vadd.f32 %v5637, %v5772
      %v5774 = vpop.f32.mrb[0].mxu0
      %5775 = vmatprep.mubr.bf16.mxu0 %v4812
      %5776 = vmatmul.mubr.bf16.gmra.mrb[0].mxu0 %v4811
      %v5777 = vpop.f32.mrb[0].mxu0
      %v5778 = vadd.f32 %v5642, %v5777
      %v5779 = vpop.f32.mrb[0].mxu0
      %v5780 = vpop.f32.mrb[0].mxu0
      %v5781 = vadd.f32 %v5645, %v5780
      %v5782 = vpop.f32.mrb[0].mxu0
      %5783 = vmatprep.mubr.bf16.mxu0 %v4821
      %5784 = vmatmul.mubr.bf16.gmra.mrb[0].mxu0 %v4820
      %v5785 = vpop.f32.mrb[0].mxu0
      %v5786 = vadd.f32 %v5650, %v5785
      %v5787 = vpop.f32.mrb[0].mxu0
      %v5788 = vpop.f32.mrb[0].mxu0
      %v5789 = vadd.f32 %v5653, %v5788
      %v5790 = vpop.f32.mrb[0].mxu0
      %5791 = vmatprep.mubr.bf16.mxu0 %v4830
      %5792 = vmatmul.mubr.bf16.gmra.mrb[0].mxu0 %v4829
      %v5793 = vpop.f32.mrb[0].mxu0
      %v5794 = vadd.f32 %v5658, %v5793
      %v5795 = vpop.f32.mrb[0].mxu0
      %v5796 = vpop.f32.mrb[0].mxu0
      %v5797 = vadd.f32 %v5661, %v5796
      %v5798 = vpop.f32.mrb[0].mxu0
      %5799 = vmatprep.mubr.bf16.mxu0 %v4839
      %5800 = vmatmul.mubr.bf16.gmra.mrb[0].mxu0 %v4838
      %v5801 = vpop.f32.mrb[0].mxu0
      %v5802 = vadd.f32 %v5666, %v5801
      %v5803 = vpop.f32.mrb[0].mxu0
      %v5804 = vpop.f32.mrb[0].mxu0
      %v5805 = vadd.f32 %v5669, %v5804
      %v5806 = vpop.f32.mrb[0].mxu0
      %5807 = vmatprep.mubr.bf16.mxu0 %v4848
      %5808 = vmatmul.mubr.bf16.gmra.mrb[0].mxu0 %v4847
      %v5809 = vpop.f32.mrb[0].mxu0
      %v5810 = vadd.f32 %v5674, %v5809
      %v5811 = vpop.f32.mrb[0].mxu0
      %v5812 = vpop.f32.mrb[0].mxu0
      %v5813 = vadd.f32 %v5677, %v5812
      %v5814 = vpop.f32.mrb[0].mxu0
      %5815 = vmatprep.mubr.bf16.mxu0 %v4857
      %5816 = vmatmul.mubr.bf16.gmra.mrb[0].mxu0 %v4856
      %v5817 = vpop.f32.mrb[0].mxu0
      %v5818 = vadd.f32 %v5682, %v5817
      %v5819 = vpop.f32.mrb[0].mxu0
      %v5820 = vpop.f32.mrb[0].mxu0
      %v5821 = vadd.f32 %v5685, %v5820
      %v5822 = vpop.f32.mrb[0].mxu0
      %5823 = vmatprep.mubr.bf16.mxu0 %v4866
      %5824 = vmatmul.mubr.bf16.gmra.mrb[0].mxu0 %v4865
      %v5825 = vpop.f32.mrb[0].mxu0
      %v5826 = vadd.f32 %v5690, %v5825
      %v5827 = vpop.f32.mrb[0].mxu0
      %v5828 = vpop.f32.mrb[0].mxu0
      %v5829 = vadd.f32 %v5693, %v5828
      %v5830 = vpop.f32.mrb[0].mxu0
      %5831 = vmatprep.mubr.bf16.mxu0 %v4875
      %5832 = vmatmul.mubr.bf16.gmra.mrb[0].mxu0 %v4874
      %v5833 = vpop.f32.mrb[0].mxu0
      %v5834 = vadd.f32 %v5698, %v5833
      %v5835 = vpop.f32.mrb[0].mxu0
      %v5836 = vpop.f32.mrb[0].mxu0
      %v5837 = vadd.f32 %v5701, %v5836
      %v5838 = vpop.f32.mrb[0].mxu0
      %5839 = vmatprep.mubr.bf16.mxu0 %v4884
      %5840 = vmatmul.mubr.bf16.gmra.mrb[0].mxu0 %v4883
      %v5841 = vpop.f32.mrb[0].mxu0
      %v5842 = vadd.f32 %v5706, %v5841
      %v5843 = vpop.f32.mrb[0].mxu0
      %v5844 = vpop.f32.mrb[0].mxu0
      %v5845 = vadd.f32 %v5709, %v5844
      %v5846 = vpop.f32.mrb[0].mxu0
      %5847 = vmatprep.mubr.bf16.mxu0 %v4893
      %5848 = vmatmul.mubr.bf16.gmra.mrb[0].mxu0 %v4892
      %v5849 = vpop.f32.mrb[0].mxu0
      %v5850 = vadd.f32 %v5714, %v5849
      %v5851 = vpop.f32.mrb[0].mxu0
      %v5852 = vpop.f32.mrb[0].mxu0
      %v5853 = vadd.f32 %v5717, %v5852
      %v5854 = vpop.f32.mrb[0].mxu0
      %5855 = vmatprep.mubr.bf16.mxu0 %v4902
      %5856 = vmatmul.mubr.bf16.gmra.mrb[0].mxu0 %v4901
      %v5857 = vpop.f32.mrb[0].mxu0
      %v5858 = vadd.f32 %v5722, %v5857
      %v5859 = vpop.f32.mrb[0].mxu0
      %v5860 = vpop.f32.mrb[0].mxu0
      %v5861 = vpop.f32.mrb[0].mxu0
      %5862 = vdwg.mxu0
      %5863 = vmatprep.subr.bf16.mxu0 0
      %5864 = vmatpush1.bf16.msra.mxu0 %v5359
      %5865 = vmatprep.subr.bf16.mxu0 0
      %5866 = vmatpush1.bf16.msra.mxu0 %v5360
      %5867 = vmatprep.subr.bf16.mxu0 0
      %5868 = vmatpush1.bf16.msra.mxu0 %v5361
      %5869 = vmatprep.subr.bf16.mxu0 0
      %5870 = vmatpush1.bf16.msra.mxu0 %v5362
      %5871 = vmatprep.subr.bf16.mxu0 0
      %5872 = vmatpush1.bf16.msra.mxu0 %v5363
      %5873 = vmatprep.subr.bf16.mxu0 0
      %5874 = vmatpush1.bf16.msra.mxu0 %v5364
      %5875 = vmatprep.subr.bf16.mxu0 0
      %5876 = vmatpush1.bf16.msra.mxu0 %v5365
      %5877 = vmatprep.subr.bf16.mxu0 0
      %5878 = vmatpush1.bf16.msra.mxu0 %v5366
      %5879 = vmatprep.subr.bf16.mxu0 0
      %5880 = vmatpush1.bf16.msra.mxu0 %v5367
      %5881 = vmatprep.subr.bf16.mxu0 0
      %5882 = vmatpush1.bf16.msra.mxu0 %v5368
      %5883 = vmatprep.subr.bf16.mxu0 0
      %5884 = vmatpush1.bf16.msra.mxu0 %v5369
      %5885 = vmatprep.subr.bf16.mxu0 0
      %5886 = vmatpush1.bf16.msra.mxu0 %v5370
      %5887 = vmatprep.subr.bf16.mxu0 0
      %5888 = vmatpush1.bf16.msra.mxu0 %v5371
      %5889 = vmatprep.subr.bf16.mxu0 0
      %5890 = vmatpush1.bf16.msra.mxu0 %v5372
      %5891 = vmatprep.subr.bf16.mxu0 0
      %5892 = vmatpush1.bf16.msra.mxu0 %v5373
      %5893 = vmatprep.subr.bf16.mxu0 0
      %5894 = vmatpush1.bf16.msra.mxu0 %v5374
      %5895 = vmatprep.mubr.bf16.mxu0 %v4796
      %5896 = vmatmul.mubr.bf16.gmra.mrb[0].mxu0 %v4795
      %v5897 = vpop.f32.mrb[0].mxu0
      %v5898 = vadd.f32 %v5762, %v5897
      %v5899 = vpop.f32.mrb[0].mxu0
      %v5900 = vpop.f32.mrb[0].mxu0
      %v5901 = vadd.f32 %v5765, %v5900
      %v5902 = vpop.f32.mrb[0].mxu0
      %5903 = vmatprep.mubr.bf16.mxu0 %v4805
      %5904 = vmatmul.mubr.bf16.gmra.mrb[0].mxu0 %v4804
      %v5905 = vpop.f32.mrb[0].mxu0
      %v5906 = vadd.f32 %v5770, %v5905
      %v5907 = vpop.f32.mrb[0].mxu0
      %v5908 = vpop.f32.mrb[0].mxu0
      %v5909 = vadd.f32 %v5773, %v5908
      %v5910 = vpop.f32.mrb[0].mxu0
      %5911 = vmatprep.mubr.bf16.mxu0 %v4814
      %5912 = vmatmul.mubr.bf16.gmra.mrb[0].mxu0 %v4813
      %v5913 = vpop.f32.mrb[0].mxu0
      %v5914 = vadd.f32 %v5778, %v5913
      %v5915 = vpop.f32.mrb[0].mxu0
      %v5916 = vpop.f32.mrb[0].mxu0
      %v5917 = vadd.f32 %v5781, %v5916
      %v5918 = vpop.f32.mrb[0].mxu0
      %5919 = vmatprep.mubr.bf16.mxu0 %v4823
      %5920 = vmatmul.mubr.bf16.gmra.mrb[0].mxu0 %v4822
      %v5921 = vpop.f32.mrb[0].mxu0
      %v5922 = vadd.f32 %v5786, %v5921
      %v5923 = vpop.f32.mrb[0].mxu0
      %v5924 = vpop.f32.mrb[0].mxu0
      %v5925 = vadd.f32 %v5789, %v5924
      %v5926 = vpop.f32.mrb[0].mxu0
      %5927 = vmatprep.mubr.bf16.mxu0 %v4832
      %5928 = vmatmul.mubr.bf16.gmra.mrb[0].mxu0 %v4831
      %v5929 = vpop.f32.mrb[0].mxu0
      %v5930 = vadd.f32 %v5794, %v5929
      %v5931 = vpop.f32.mrb[0].mxu0
      %v5932 = vpop.f32.mrb[0].mxu0
      %v5933 = vadd.f32 %v5797, %v5932
      %v5934 = vpop.f32.mrb[0].mxu0
      %5935 = vmatprep.mubr.bf16.mxu0 %v4841
      %5936 = vmatmul.mubr.bf16.gmra.mrb[0].mxu0 %v4840
      %v5937 = vpop.f32.mrb[0].mxu0
      %v5938 = vadd.f32 %v5802, %v5937
      %v5939 = vpop.f32.mrb[0].mxu0
      %v5940 = vpop.f32.mrb[0].mxu0
      %v5941 = vadd.f32 %v5805, %v5940
      %v5942 = vpop.f32.mrb[0].mxu0
      %5943 = vmatprep.mubr.bf16.mxu0 %v4850
      %5944 = vmatmul.mubr.bf16.gmra.mrb[0].mxu0 %v4849
      %v5945 = vpop.f32.mrb[0].mxu0
      %v5946 = vadd.f32 %v5810, %v5945
      %v5947 = vpop.f32.mrb[0].mxu0
      %v5948 = vpop.f32.mrb[0].mxu0
      %v5949 = vadd.f32 %v5813, %v5948
      %v5950 = vpop.f32.mrb[0].mxu0
      %5951 = vmatprep.mubr.bf16.mxu0 %v4859
      %5952 = vmatmul.mubr.bf16.gmra.mrb[0].mxu0 %v4858
      %v5953 = vpop.f32.mrb[0].mxu0
      %v5954 = vadd.f32 %v5818, %v5953
      %v5955 = vpop.f32.mrb[0].mxu0
      %v5956 = vpop.f32.mrb[0].mxu0
      %v5957 = vadd.f32 %v5821, %v5956
      %v5958 = vpop.f32.mrb[0].mxu0
      %5959 = vmatprep.mubr.bf16.mxu0 %v4868
      %5960 = vmatmul.mubr.bf16.gmra.mrb[0].mxu0 %v4867
      %v5961 = vpop.f32.mrb[0].mxu0
      %v5962 = vadd.f32 %v5826, %v5961
      %v5963 = vpop.f32.mrb[0].mxu0
      %v5964 = vpop.f32.mrb[0].mxu0
      %v5965 = vadd.f32 %v5829, %v5964
      %v5966 = vpop.f32.mrb[0].mxu0
      %5967 = vmatprep.mubr.bf16.mxu0 %v4877
      %5968 = vmatmul.mubr.bf16.gmra.mrb[0].mxu0 %v4876
      %v5969 = vpop.f32.mrb[0].mxu0
      %v5970 = vadd.f32 %v5834, %v5969
      %v5971 = vpop.f32.mrb[0].mxu0
      %v5972 = vpop.f32.mrb[0].mxu0
      %v5973 = vadd.f32 %v5837, %v5972
      %v5974 = vpop.f32.mrb[0].mxu0
      %5975 = vmatprep.mubr.bf16.mxu0 %v4886
      %5976 = vmatmul.mubr.bf16.gmra.mrb[0].mxu0 %v4885
      %v5977 = vpop.f32.mrb[0].mxu0
      %v5978 = vadd.f32 %v5842, %v5977
      %v5979 = vpop.f32.mrb[0].mxu0
      %v5980 = vpop.f32.mrb[0].mxu0
      %v5981 = vadd.f32 %v5845, %v5980
      %v5982 = vpop.f32.mrb[0].mxu0
      %5983 = vmatprep.mubr.bf16.mxu0 %v4895
      %5984 = vmatmul.mubr.bf16.gmra.mrb[0].mxu0 %v4894
      %v5985 = vpop.f32.mrb[0].mxu0
      %v5986 = vadd.f32 %v5850, %v5985
      %v5987 = vpop.f32.mrb[0].mxu0
      %v5988 = vpop.f32.mrb[0].mxu0
      %v5989 = vadd.f32 %v5853, %v5988
      %v5990 = vpop.f32.mrb[0].mxu0
      %5991 = vmatprep.mubr.bf16.mxu0 %v4904
      %5992 = vmatmul.mubr.bf16.gmra.mrb[0].mxu0 %v4903
      %v5993 = vpop.f32.mrb[0].mxu0
      %v5994 = vadd.f32 %v5858, %v5993
      %v5995 = vpop.f32.mrb[0].mxu0
      %v5996 = vpop.f32.mrb[0].mxu0
      %v5997 = vpop.f32.mrb[0].mxu0
      %5998 = vdwg.mxu0
      %5999 = vmatprep.subr.bf16.mxu0 0
      %6000 = vmatpush1.bf16.msra.mxu0 %v5375
      %6001 = vmatprep.subr.bf16.mxu0 0
      %6002 = vmatpush1.bf16.msra.mxu0 %v5376
      %6003 = vmatprep.subr.bf16.mxu0 0
      %6004 = vmatpush1.bf16.msra.mxu0 %v5377
      %6005 = vmatprep.subr.bf16.mxu0 0
      %6006 = vmatpush1.bf16.msra.mxu0 %v5378
      %6007 = vmatprep.subr.bf16.mxu0 0
      %6008 = vmatpush1.bf16.msra.mxu0 %v5379
      %6009 = vmatprep.subr.bf16.mxu0 0
      %6010 = vmatpush1.bf16.msra.mxu0 %v5380
      %6011 = vmatprep.subr.bf16.mxu0 0
      %6012 = vmatpush1.bf16.msra.mxu0 %v5381
      %6013 = vmatprep.subr.bf16.mxu0 0
      %6014 = vmatpush1.bf16.msra.mxu0 %v5382
      %6015 = vmatprep.subr.bf16.mxu0 0
      %6016 = vmatpush1.bf16.msra.mxu0 0
      %6017 = vmatprep.subr.bf16.mxu0 0
      %6018 = vmatpush1.bf16.msra.mxu0 0
      %6019 = vmatprep.subr.bf16.mxu0 0
      %6020 = vmatpush1.bf16.msra.mxu0 0
      %6021 = vmatprep.subr.bf16.mxu0 0
      %6022 = vmatpush1.bf16.msra.mxu0 0
      %6023 = vmatprep.subr.bf16.mxu0 0
      %6024 = vmatpush1.bf16.msra.mxu0 0
      %6025 = vmatprep.subr.bf16.mxu0 0
      %6026 = vmatpush1.bf16.msra.mxu0 0
      %6027 = vmatprep.subr.bf16.mxu0 0
      %6028 = vmatpush1.bf16.msra.mxu0 0
      %6029 = vmatprep.subr.bf16.mxu0 0
      %6030 = vmatpush1.bf16.msra.mxu0 0
      %6031 = vmatprep.mubr.bf16.mxu0 0
      %6032 = vmatmul.mubr.bf16.gmra.mrb[0].mxu0 %v4797
      %v6033 = vpop.f32.mrb[0].mxu0
      %v6034 = vadd.f32 %v5898, %v6033
      %v6035 = vpop.f32.mrb[0].mxu0
      %v6036 = vpop.f32.mrb[0].mxu0
      %v6037 = vadd.f32 %v5901, %v6036
      %v6038 = vpop.f32.mrb[0].mxu0
      %6039 = vmatprep.mubr.bf16.mxu0 0
      %6040 = vmatmul.mubr.bf16.gmra.mrb[0].mxu0 %v4806
      %v6041 = vpop.f32.mrb[0].mxu0
      %v6042 = vadd.f32 %v5906, %v6041
      %v6043 = vpop.f32.mrb[0].mxu0
      %v6044 = vpop.f32.mrb[0].mxu0
      %v6045 = vadd.f32 %v5909, %v6044
      %v6046 = vpop.f32.mrb[0].mxu0
      %6047 = vmatprep.mubr.bf16.mxu0 0
      %6048 = vmatmul.mubr.bf16.gmra.mrb[0].mxu0 %v4815
      %v6049 = vpop.f32.mrb[0].mxu0
      %v6050 = vadd.f32 %v5914, %v6049
      %v6051 = vpop.f32.mrb[0].mxu0
      %v6052 = vpop.f32.mrb[0].mxu0
      %v6053 = vadd.f32 %v5917, %v6052
      %v6054 = vpop.f32.mrb[0].mxu0
      %6055 = vmatprep.mubr.bf16.mxu0 0
      %6056 = vmatmul.mubr.bf16.gmra.mrb[0].mxu0 %v4824
      %v6057 = vpop.f32.mrb[0].mxu0
      %v6058 = vadd.f32 %v5922, %v6057
      %v6059 = vpop.f32.mrb[0].mxu0
      %v6060 = vpop.f32.mrb[0].mxu0
      %v6061 = vadd.f32 %v5925, %v6060
      %v6062 = vpop.f32.mrb[0].mxu0
      %6063 = vmatprep.mubr.bf16.mxu0 0
      %6064 = vmatmul.mubr.bf16.gmra.mrb[0].mxu0 %v4833
      %v6065 = vpop.f32.mrb[0].mxu0
      %v6066 = vadd.f32 %v5930, %v6065
      %v6067 = vpop.f32.mrb[0].mxu0
      %v6068 = vpop.f32.mrb[0].mxu0
      %v6069 = vadd.f32 %v5933, %v6068
      %v6070 = vpop.f32.mrb[0].mxu0
      %6071 = vmatprep.mubr.bf16.mxu0 0
      %6072 = vmatmul.mubr.bf16.gmra.mrb[0].mxu0 %v4842
      %v6073 = vpop.f32.mrb[0].mxu0
      %v6074 = vadd.f32 %v5938, %v6073
      %v6075 = vpop.f32.mrb[0].mxu0
      %v6076 = vpop.f32.mrb[0].mxu0
      %v6077 = vadd.f32 %v5941, %v6076
      %v6078 = vpop.f32.mrb[0].mxu0
      %6079 = vmatprep.mubr.bf16.mxu0 0
      %6080 = vmatmul.mubr.bf16.gmra.mrb[0].mxu0 %v4851
      %v6081 = vpop.f32.mrb[0].mxu0
      %v6082 = vadd.f32 %v5946, %v6081
      %v6083 = vpop.f32.mrb[0].mxu0
      %v6084 = vpop.f32.mrb[0].mxu0
      %v6085 = vadd.f32 %v5949, %v6084
      %v6086 = vpop.f32.mrb[0].mxu0
      %6087 = vmatprep.mubr.bf16.mxu0 0
      %6088 = vmatmul.mubr.bf16.gmra.mrb[0].mxu0 %v4860
      %v6089 = vpop.f32.mrb[0].mxu0
      %v6090 = vadd.f32 %v5954, %v6089
      %v6091 = vpop.f32.mrb[0].mxu0
      %v6092 = vpop.f32.mrb[0].mxu0
      %v6093 = vadd.f32 %v5957, %v6092
      %v6094 = vpop.f32.mrb[0].mxu0
      %6095 = vmatprep.mubr.bf16.mxu0 0
      %6096 = vmatmul.mubr.bf16.gmra.mrb[0].mxu0 %v4869
      %v6097 = vpop.f32.mrb[0].mxu0
      %v6098 = vadd.f32 %v5962, %v6097
      %v6099 = vpop.f32.mrb[0].mxu0
      %v6100 = vpop.f32.mrb[0].mxu0
      %v6101 = vadd.f32 %v5965, %v6100
      %v6102 = vpop.f32.mrb[0].mxu0
      %6103 = vmatprep.mubr.bf16.mxu0 0
      %6104 = vmatmul.mubr.bf16.gmra.mrb[0].mxu0 %v4878
      %v6105 = vpop.f32.mrb[0].mxu0
      %v6106 = vadd.f32 %v5970, %v6105
      %v6107 = vpop.f32.mrb[0].mxu0
      %v6108 = vpop.f32.mrb[0].mxu0
      %v6109 = vadd.f32 %v5973, %v6108
      %v6110 = vpop.f32.mrb[0].mxu0
      %6111 = vmatprep.mubr.bf16.mxu0 0
      %6112 = vmatmul.mubr.bf16.gmra.mrb[0].mxu0 %v4887
      %v6113 = vpop.f32.mrb[0].mxu0
      %v6114 = vadd.f32 %v5978, %v6113
      %v6115 = vpop.f32.mrb[0].mxu0
      %v6116 = vpop.f32.mrb[0].mxu0
      %v6117 = vadd.f32 %v5981, %v6116
      %v6118 = vpop.f32.mrb[0].mxu0
      %6119 = vmatprep.mubr.bf16.mxu0 0
      %6120 = vmatmul.mubr.bf16.gmra.mrb[0].mxu0 %v4896
      %v6121 = vpop.f32.mrb[0].mxu0
      %v6122 = vadd.f32 %v5986, %v6121
      %v6123 = vpop.f32.mrb[0].mxu0
      %v6124 = vpop.f32.mrb[0].mxu0
      %v6125 = vadd.f32 %v5989, %v6124
      %v6126 = vpop.f32.mrb[0].mxu0
      %6127 = vmatprep.mubr.bf16.mxu0 0
      %6128 = vmatmul.mubr.bf16.gmra.mrb[0].mxu0 %v4905
      %v6129 = vpop.f32.mrb[0].mxu0
      %v6130 = vadd.f32 %v5994, %v6129
      %v6131 = vpop.f32.mrb[0].mxu0
      %v6132 = vpop.f32.mrb[0].mxu0
      %v6133 = vpop.f32.mrb[0].mxu0
      %6134 = vdwg.mxu0
      %v6135 = vmax.f32 %v6034, 0.0
      %v6136 = vmax.f32 %v6037, 0.0
      %v6137 = vmax.f32 %v6042, 0.0
      %v6138 = vmax.f32 %v6045, 0.0
      %v6139 = vmax.f32 %v6050, 0.0
      %v6140 = vmax.f32 %v6053, 0.0
      %v6141 = vmax.f32 %v6058, 0.0
      %v6142 = vmax.f32 %v6061, 0.0
      %v6143 = vmax.f32 %v6066, 0.0
      %v6144 = vmax.f32 %v6069, 0.0
      %v6145 = vmax.f32 %v6074, 0.0
      %v6146 = vmax.f32 %v6077, 0.0
      %v6147 = vmax.f32 %v6082, 0.0
      %v6148 = vmax.f32 %v6085, 0.0
      %v6149 = vmax.f32 %v6090, 0.0
      %v6150 = vmax.f32 %v6093, 0.0
      %v6151 = vmax.f32 %v6098, 0.0
      %v6152 = vmax.f32 %v6101, 0.0
      %v6153 = vmax.f32 %v6106, 0.0
      %v6154 = vmax.f32 %v6109, 0.0
      %v6155 = vmax.f32 %v6114, 0.0
      %v6156 = vmax.f32 %v6117, 0.0
      %v6157 = vmax.f32 %v6122, 0.0
      %v6158 = vmax.f32 %v6125, 0.0
      %v6159 = vmax.f32 %v6130, 0.0
      %v6185 = vrot.slane %v6135, 1
      %v6186 = vrot.slane %v6136, 1
      %v6187 = vsel %vm1585, %v6185, %v6186
      %v6188 = vrot.slane %v6137, 1
      %v6189 = vsel %vm1585, %v6186, %v6188
      %v6190 = vrot.slane %v6138, 1
      %v6191 = vsel %vm1585, %v6188, %v6190
      %v6192 = vrot.slane %v6139, 1
      %v6193 = vsel %vm1585, %v6190, %v6192
      %v6194 = vrot.slane %v6140, 1
      %v6195 = vsel %vm1585, %v6192, %v6194
      %v6196 = vrot.slane %v6141, 1
      %v6197 = vsel %vm1585, %v6194, %v6196
      %v6198 = vrot.slane %v6142, 1
      %v6199 = vsel %vm1585, %v6196, %v6198
      %v6200 = vrot.slane %v6143, 1
      %v6201 = vsel %vm1585, %v6198, %v6200
      %v6202 = vrot.slane %v6144, 1
      %v6203 = vsel %vm1585, %v6200, %v6202
      %v6204 = vrot.slane %v6145, 1
      %v6205 = vsel %vm1585, %v6202, %v6204
      %v6206 = vrot.slane %v6146, 1
      %v6207 = vsel %vm1585, %v6204, %v6206
      %v6208 = vrot.slane %v6147, 1
      %v6209 = vsel %vm1585, %v6206, %v6208
      %v6210 = vrot.slane %v6148, 1
      %v6211 = vsel %vm1585, %v6208, %v6210
      %v6212 = vrot.slane %v6149, 1
      %v6213 = vsel %vm1585, %v6210, %v6212
      %v6214 = vrot.slane %v6150, 1
      %v6215 = vsel %vm1585, %v6212, %v6214
      %v6216 = vrot.slane %v6151, 1
      %v6217 = vsel %vm1585, %v6214, %v6216
      %v6218 = vrot.slane %v6152, 1
      %v6219 = vsel %vm1585, %v6216, %v6218
      %v6220 = vrot.slane %v6153, 1
      %v6221 = vsel %vm1585, %v6218, %v6220
      %v6222 = vrot.slane %v6154, 1
      %v6223 = vsel %vm1585, %v6220, %v6222
      %v6224 = vrot.slane %v6155, 1
      %v6225 = vsel %vm1585, %v6222, %v6224
      %v6226 = vrot.slane %v6156, 1
      %v6227 = vsel %vm1585, %v6224, %v6226
      %v6228 = vrot.slane %v6157, 1
      %v6229 = vsel %vm1585, %v6226, %v6228
      %v6230 = vrot.slane %v6158, 1
      %v6231 = vsel %vm1585, %v6228, %v6230
      %v6232 = vrot.slane %v6159, 1
      %v6233 = vsel %vm1585, %v6230, %v6232
      %v6258 = vmax.f32 %v6135, %v6187
      %v6259 = vmax.f32 %v6136, %v6189
      %v6260 = vmax.f32 %v6137, %v6191
      %v6261 = vmax.f32 %v6138, %v6193
      %v6262 = vmax.f32 %v6139, %v6195
      %v6263 = vmax.f32 %v6140, %v6197
      %v6264 = vmax.f32 %v6141, %v6199
      %v6265 = vmax.f32 %v6142, %v6201
      %v6266 = vmax.f32 %v6143, %v6203
      %v6267 = vmax.f32 %v6144, %v6205
      %v6268 = vmax.f32 %v6145, %v6207
      %v6269 = vmax.f32 %v6146, %v6209
      %v6270 = vmax.f32 %v6147, %v6211
      %v6271 = vmax.f32 %v6148, %v6213
      %v6272 = vmax.f32 %v6149, %v6215
      %v6273 = vmax.f32 %v6150, %v6217
      %v6274 = vmax.f32 %v6151, %v6219
      %v6275 = vmax.f32 %v6152, %v6221
      %v6276 = vmax.f32 %v6153, %v6223
      %v6277 = vmax.f32 %v6154, %v6225
      %v6278 = vmax.f32 %v6155, %v6227
      %v6279 = vmax.f32 %v6156, %v6229
      %v6280 = vmax.f32 %v6157, %v6231
      %v6281 = vmax.f32 %v6158, %v6233
      %vm6305 = vcmask 1040384
      %v6306 = vrot.slane %v6259, 7
      %v6307 = vrot.slane %v6260, 7
      %v6308 = vsel %vm6305, %v6306, %v6307
      %v6309 = vrot.slane %v6261, 7
      %v6310 = vsel %vm6305, %v6307, %v6309
      %v6311 = vrot.slane %v6262, 7
      %v6312 = vsel %vm6305, %v6309, %v6311
      %v6313 = vrot.slane %v6263, 7
      %v6314 = vsel %vm6305, %v6311, %v6313
      %v6315 = vrot.slane %v6264, 7
      %v6316 = vsel %vm6305, %v6313, %v6315
      %v6317 = vrot.slane %v6265, 7
      %v6318 = vsel %vm6305, %v6315, %v6317
      %v6319 = vrot.slane %v6266, 7
      %v6320 = vsel %vm6305, %v6317, %v6319
      %v6321 = vrot.slane %v6267, 7
      %v6322 = vsel %vm6305, %v6319, %v6321
      %v6323 = vrot.slane %v6268, 7
      %v6324 = vsel %vm6305, %v6321, %v6323
      %v6325 = vrot.slane %v6269, 7
      %v6326 = vsel %vm6305, %v6323, %v6325
      %v6327 = vrot.slane %v6270, 7
      %v6328 = vsel %vm6305, %v6325, %v6327
      %v6329 = vrot.slane %v6271, 7
      %v6330 = vsel %vm6305, %v6327, %v6329
      %v6331 = vrot.slane %v6272, 7
      %v6332 = vsel %vm6305, %v6329, %v6331
      %v6333 = vrot.slane %v6273, 7
      %v6334 = vsel %vm6305, %v6331, %v6333
      %v6335 = vrot.slane %v6274, 7
      %v6336 = vsel %vm6305, %v6333, %v6335
      %v6337 = vrot.slane %v6275, 7
      %v6338 = vsel %vm6305, %v6335, %v6337
      %v6339 = vrot.slane %v6276, 7
      %v6340 = vsel %vm6305, %v6337, %v6339
      %v6341 = vrot.slane %v6277, 7
      %v6342 = vsel %vm6305, %v6339, %v6341
      %v6343 = vrot.slane %v6278, 7
      %v6344 = vsel %vm6305, %v6341, %v6343
      %v6345 = vrot.slane %v6279, 7
      %v6346 = vsel %vm6305, %v6343, %v6345
      %v6347 = vrot.slane %v6280, 7
      %v6348 = vsel %vm6305, %v6345, %v6347
      %v6349 = vrot.slane %v6281, 7
      %v6350 = vsel %vm6305, %v6347, %v6349
      %v6374 = vmax.f32 %v6258, %v6308
      %v6375 = vmax.f32 %v6259, %v6310
      %v6376 = vmax.f32 %v6260, %v6312
      %v6377 = vmax.f32 %v6261, %v6314
      %v6378 = vmax.f32 %v6262, %v6316
      %v6379 = vmax.f32 %v6263, %v6318
      %v6380 = vmax.f32 %v6264, %v6320
      %v6381 = vmax.f32 %v6265, %v6322
      %v6382 = vmax.f32 %v6266, %v6324
      %v6383 = vmax.f32 %v6267, %v6326
      %v6384 = vmax.f32 %v6268, %v6328
      %v6385 = vmax.f32 %v6269, %v6330
      %v6386 = vmax.f32 %v6270, %v6332
      %v6387 = vmax.f32 %v6271, %v6334
      %v6388 = vmax.f32 %v6272, %v6336
      %v6389 = vmax.f32 %v6273, %v6338
      %v6390 = vmax.f32 %v6274, %v6340
      %v6391 = vmax.f32 %v6275, %v6342
      %v6392 = vmax.f32 %v6276, %v6344
      %v6393 = vmax.f32 %v6277, %v6346
      %v6394 = vmax.f32 %v6278, %v6348
      %v6395 = vmax.f32 %v6279, %v6350
      %v6396 = vmax.f32 %v6280, %v6349
      %6397 = vst [vmem:[#allocation5] sm:$0xff] %v6374
      %6398 = vst [vmem:[#allocation5 + $0x8] sm:$0xff] %v6375
      %6399 = vst [vmem:[#allocation5 + $0x10] sm:$0xff] %v6376
      %6400 = vst [vmem:[#allocation5 + $0x18] sm:$0xff] %v6377
      %6401 = vst [vmem:[#allocation5 + $0x20] sm:$0xff] %v6378
      %6402 = vst [vmem:[#allocation5 + $0x28] sm:$0xff] %v6379
      %6403 = vst [vmem:[#allocation5 + $0x30] sm:$0xff] %v6380
      %6404 = vst [vmem:[#allocation5 + $0x38] sm:$0xff] %v6381
      %6405 = vst [vmem:[#allocation5 + $0x40] sm:$0xff] %v6382
      %6406 = vst [vmem:[#allocation5 + $0x48] sm:$0xff] %v6383
      %6407 = vst [vmem:[#allocation5 + $0x50] sm:$0xff] %v6384
      %6408 = vst [vmem:[#allocation5 + $0x58] sm:$0xff] %v6385
      %6409 = vst [vmem:[#allocation5 + $0x60] sm:$0xff] %v6386
      %6410 = vst [vmem:[#allocation5 + $0x68] sm:$0xff] %v6387
      %6411 = vst [vmem:[#allocation5 + $0x70] sm:$0xff] %v6388
      %6412 = vst [vmem:[#allocation5 + $0x78] sm:$0xff] %v6389
      %6413 = vst [vmem:[#allocation5 + $0x80] sm:$0xff] %v6390
      %6414 = vst [vmem:[#allocation5 + $0x88] sm:$0xff] %v6391
      %6415 = vst [vmem:[#allocation5 + $0x90] sm:$0xff] %v6392
      %6416 = vst [vmem:[#allocation5 + $0x98] sm:$0xff] %v6393
      %6417 = vst [vmem:[#allocation5 + $0xa0] sm:$0xff] %v6394
      %6418 = vst [vmem:[#allocation5 + $0xa8] sm:$0xff] %v6395
      %6419 = vst [vmem:[#allocation5 + $0xb0] sm:$0x1] %v6396
      %v6420 = vld [vmem:[#allocation5] ss:$2 sm:$0x3f]
      %6421 = vst [vmem:[#allocation6] sm:$0x3f] %v6420
      %s6422 = scalar_lea.vmem [#allocation5], 30
      %v6423 = vld [vmem:[%s6422] ss:$2 sm:$0x3f]
      %6424 = vst [vmem:[#allocation6 + $0x6] sm:$0x3f] %v6423
      %s6425 = scalar_lea.vmem [#allocation5], 60
      %v6426 = vld [vmem:[%s6425] ss:$2 sm:$0x3f]
      %6427 = vst [vmem:[#allocation6 + $0xc] sm:$0x3f] %v6426
      %s6428 = scalar_lea.vmem [#allocation5], 90
      %v6429 = vld [vmem:[%s6428] ss:$2 sm:$0x3f]
      %6430 = vst [vmem:[#allocation6 + $0x12] sm:$0x3f] %v6429
      %s6431 = scalar_lea.vmem [#allocation5], 120
      %v6432 = vld [vmem:[%s6431] ss:$2 sm:$0x3f]
      %6433 = vst [vmem:[#allocation6 + $0x18] sm:$0x3f] %v6432
      %s6434 = scalar_lea.vmem [#allocation5], 150
      %v6435 = vld [vmem:[%s6434] ss:$2 sm:$0x3f]
      %6436 = vst [vmem:[#allocation6 + $0x1e] sm:$0x3f] %v6435
      %v6437 = vld [vmem:[#allocation6] sm:$0xff]
      %v6438 = vld [vmem:[#allocation6 + $0x8] sm:$0xff]
      %v6439 = vld [vmem:[#allocation6 + $0x10] sm:$0x3f]
      %v6440 = vpack.c.bf16 %v6438, %v6437
      %v6441 = vpack.c.bf16 %v6439, %v6439
      %v6444 = vunpack.c.l.b16 %v6440
      %v6445 = vunpack.c.h.b16 %v6440
      %v6446 = vunpack.c.l.b16 %v6441
      %v6447 = vpack.c.b16 %v6444, %v6444
      %v6448 = vpack.c.b16 %v6445, %v6445
      %v6449 = vpack.c.b16 %v6446, %v6446
      %6453 = vst [vmem:[#allocation7] sm:$0xf] %v6447
      %6454 = vst [vmem:[#allocation7 + $0x24] sm:$0xf] %v6448
      %6455 = vst [vmem:[#allocation7 + $0x48] sm:$0x7] %v6449
      %v6456 = vld [vmem:[#allocation6 + $0x1] sm:$0xff]
      %v6457 = vld [vmem:[#allocation6 + $0x9] sm:$0xff]
      %v6458 = vld [vmem:[#allocation6 + $0x11] sm:$0x3f]
      %v6459 = vpack.c.bf16 %v6457, %v6456
      %v6460 = vpack.c.bf16 %v6458, %v6458
      %v6463 = vunpack.c.l.b16 %v6459
      %v6464 = vunpack.c.h.b16 %v6459
      %v6465 = vunpack.c.l.b16 %v6460
      %v6466 = vpack.c.b16 %v6463, %v6463
      %v6467 = vpack.c.b16 %v6464, %v6464
      %v6468 = vpack.c.b16 %v6465, %v6465
      %6472 = vst [vmem:[#allocation7 + $0x4] sm:$0xf] %v6466
      %6473 = vst [vmem:[#allocation7 + $0x28] sm:$0xf] %v6467
      %6474 = vst [vmem:[#allocation7 + $0x4c] sm:$0x7] %v6468
      %v6475 = vld [vmem:[#allocation6 + $0x2] sm:$0xff]
      %v6476 = vld [vmem:[#allocation6 + $0xa] sm:$0xff]
      %v6477 = vld [vmem:[#allocation6 + $0x12] sm:$0x3f]
      %v6478 = vpack.c.bf16 %v6476, %v6475
      %v6479 = vpack.c.bf16 %v6477, %v6477
      %v6482 = vunpack.c.l.b16 %v6478
      %v6483 = vunpack.c.h.b16 %v6478
      %v6484 = vunpack.c.l.b16 %v6479
      %v6485 = vpack.c.b16 %v6482, %v6482
      %v6486 = vpack.c.b16 %v6483, %v6483
      %v6487 = vpack.c.b16 %v6484, %v6484
      %6491 = vst [vmem:[#allocation7 + $0x8] sm:$0xf] %v6485
      %6492 = vst [vmem:[#allocation7 + $0x2c] sm:$0xf] %v6486
      %6493 = vst [vmem:[#allocation7 + $0x50] sm:$0x7] %v6487
      %v6494 = vld [vmem:[#allocation6 + $0x6] sm:$0xff]
      %v6495 = vld [vmem:[#allocation6 + $0xe] sm:$0xff]
      %v6496 = vld [vmem:[#allocation6 + $0x16] sm:$0x3f]
      %v6497 = vpack.c.bf16 %v6495, %v6494
      %v6498 = vpack.c.bf16 %v6496, %v6496
      %v6501 = vunpack.c.l.b16 %v6497
      %v6502 = vunpack.c.h.b16 %v6497
      %v6503 = vunpack.c.l.b16 %v6498
      %v6504 = vpack.c.b16 %v6501, %v6501
      %v6505 = vpack.c.b16 %v6502, %v6502
      %v6506 = vpack.c.b16 %v6503, %v6503
      %6510 = vst [vmem:[#allocation7 + $0xc] sm:$0xf] %v6504
      %6511 = vst [vmem:[#allocation7 + $0x30] sm:$0xf] %v6505
      %6512 = vst [vmem:[#allocation7 + $0x54] sm:$0x7] %v6506
      %v6513 = vld [vmem:[#allocation6 + $0x7] sm:$0xff]
      %v6514 = vld [vmem:[#allocation6 + $0xf] sm:$0xff]
      %v6515 = vld [vmem:[#allocation6 + $0x17] sm:$0x3f]
      %v6516 = vpack.c.bf16 %v6514, %v6513
      %v6517 = vpack.c.bf16 %v6515, %v6515
      %v6520 = vunpack.c.l.b16 %v6516
      %v6521 = vunpack.c.h.b16 %v6516
      %v6522 = vunpack.c.l.b16 %v6517
      %v6523 = vpack.c.b16 %v6520, %v6520
      %v6524 = vpack.c.b16 %v6521, %v6521
      %v6525 = vpack.c.b16 %v6522, %v6522
      %6529 = vst [vmem:[#allocation7 + $0x10] sm:$0xf] %v6523
      %6530 = vst [vmem:[#allocation7 + $0x34] sm:$0xf] %v6524
      %6531 = vst [vmem:[#allocation7 + $0x58] sm:$0x7] %v6525
      %v6532 = vld [vmem:[#allocation6 + $0x8] sm:$0xff]
      %v6533 = vld [vmem:[#allocation6 + $0x10] sm:$0xff]
      %v6534 = vld [vmem:[#allocation6 + $0x18] sm:$0x3f]
      %v6535 = vpack.c.bf16 %v6533, %v6532
      %v6536 = vpack.c.bf16 %v6534, %v6534
      %v6539 = vunpack.c.l.b16 %v6535
      %v6540 = vunpack.c.h.b16 %v6535
      %v6541 = vunpack.c.l.b16 %v6536
      %v6542 = vpack.c.b16 %v6539, %v6539
      %v6543 = vpack.c.b16 %v6540, %v6540
      %v6544 = vpack.c.b16 %v6541, %v6541
      %6548 = vst [vmem:[#allocation7 + $0x14] sm:$0xf] %v6542
      %6549 = vst [vmem:[#allocation7 + $0x38] sm:$0xf] %v6543
      %6550 = vst [vmem:[#allocation7 + $0x5c] sm:$0x7] %v6544
      %v6551 = vld [vmem:[#allocation6 + $0xc] sm:$0xff]
      %v6552 = vld [vmem:[#allocation6 + $0x14] sm:$0xff]
      %v6553 = vld [vmem:[#allocation6 + $0x1c] sm:$0x3f]
      %v6554 = vpack.c.bf16 %v6552, %v6551
      %v6555 = vpack.c.bf16 %v6553, %v6553
      %v6558 = vunpack.c.l.b16 %v6554
      %v6559 = vunpack.c.h.b16 %v6554
      %v6560 = vunpack.c.l.b16 %v6555
      %v6561 = vpack.c.b16 %v6558, %v6558
      %v6562 = vpack.c.b16 %v6559, %v6559
      %v6563 = vpack.c.b16 %v6560, %v6560
      %6567 = vst [vmem:[#allocation7 + $0x18] sm:$0xf] %v6561
      %6568 = vst [vmem:[#allocation7 + $0x3c] sm:$0xf] %v6562
      %6569 = vst [vmem:[#allocation7 + $0x60] sm:$0x7] %v6563
      %v6570 = vld [vmem:[#allocation6 + $0xd] sm:$0xff]
      %v6571 = vld [vmem:[#allocation6 + $0x15] sm:$0xff]
      %v6572 = vld [vmem:[#allocation6 + $0x1d] sm:$0x3f]
      %v6573 = vpack.c.bf16 %v6571, %v6570
      %v6574 = vpack.c.bf16 %v6572, %v6572
      %v6577 = vunpack.c.l.b16 %v6573
      %v6578 = vunpack.c.h.b16 %v6573
      %v6579 = vunpack.c.l.b16 %v6574
      %v6580 = vpack.c.b16 %v6577, %v6577
      %v6581 = vpack.c.b16 %v6578, %v6578
      %v6582 = vpack.c.b16 %v6579, %v6579
      %6586 = vst [vmem:[#allocation7 + $0x1c] sm:$0xf] %v6580
      %6587 = vst [vmem:[#allocation7 + $0x40] sm:$0xf] %v6581
      %6588 = vst [vmem:[#allocation7 + $0x64] sm:$0x7] %v6582
      %v6589 = vld [vmem:[#allocation6 + $0xe] sm:$0xff]
      %v6590 = vld [vmem:[#allocation6 + $0x16] sm:$0xff]
      %v6591 = vld [vmem:[#allocation6 + $0x1e] sm:$0x3f]
      %v6592 = vpack.c.bf16 %v6590, %v6589
      %v6593 = vpack.c.bf16 %v6591, %v6591
      %v6596 = vunpack.c.l.b16 %v6592
      %v6597 = vunpack.c.h.b16 %v6592
      %v6598 = vunpack.c.l.b16 %v6593
      %v6599 = vpack.c.b16 %v6596, %v6596
      %v6600 = vpack.c.b16 %v6597, %v6597
      %v6601 = vpack.c.b16 %v6598, %v6598
      %6605 = vst [vmem:[#allocation7 + $0x20] sm:$0xf] %v6599
      %6606 = vst [vmem:[#allocation7 + $0x44] sm:$0xf] %v6600
      %6607 = vst [vmem:[#allocation7 + $0x68] sm:$0x7] %v6601
      %v6608 = vld [vmem:[#allocation7] sm:$0xff]
      %v6609 = vld [vmem:[#allocation7 + $0x8] sm:$0xff]
      %v6610 = vld [vmem:[#allocation7 + $0x10] sm:$0xff]
      %v6611 = vld [vmem:[#allocation7 + $0x18] sm:$0xff]
      %v6612 = vld [vmem:[#allocation7 + $0x20] sm:$0xf]
      %v6613 = vld [vmem:[#allocation7 + $0x24] sm:$0xff]
      %v6614 = vld [vmem:[#allocation7 + $0x2c] sm:$0xff]
      %v6615 = vld [vmem:[#allocation7 + $0x34] sm:$0xff]
      %v6616 = vld [vmem:[#allocation7 + $0x3c] sm:$0xff]
      %v6617 = vld [vmem:[#allocation7 + $0x44] sm:$0xf]
      %v6618 = vld [vmem:[#allocation7 + $0x48] sm:$0x77]
      %v6619 = vld [vmem:[#allocation7 + $0x50] sm:$0x77]
      %v6620 = vld [vmem:[#allocation7 + $0x58] sm:$0x77]
      %v6621 = vld [vmem:[#allocation7 + $0x60] sm:$0x77]
      %v6622 = vld [vmem:[#allocation7 + $0x68] sm:$0x7]
      %v6623 = vld [vmem:[%s5] sm:$0xf]
      %v6624 = vld [vmem:[%s5 + $0x4] sm:$0xf]
      %v6625 = vld [vmem:[%s5 + $0x8] sm:$0xf]
      %v6626 = vld [vmem:[%s5 + $0xc] sm:$0xf]
      %v6627 = vld [vmem:[%s5 + $0x10] sm:$0xf]
      %v6628 = vld [vmem:[%s5 + $0x14] sm:$0xf]
      %v6629 = vld [vmem:[%s5 + $0x18] sm:$0xf]
      %v6630 = vld [vmem:[%s5 + $0x1c] sm:$0xf]
      %v6631 = vld [vmem:[%s5 + $0x20] sm:$0xf]
      %v6632 = vld [vmem:[%s5 + $0x24] sm:$0xf]
      %v6633 = vld [vmem:[%s5 + $0x28] sm:$0xf]
      %v6634 = vld [vmem:[%s5 + $0x2c] sm:$0xf]
      %v6635 = vld [vmem:[%s5 + $0x30] sm:$0xf]
      %v6636 = vld [vmem:[%s5 + $0x34] sm:$0xf]
      %v6637 = vld [vmem:[%s5 + $0x38] sm:$0xf]
      %v6638 = vld [vmem:[%s5 + $0x3c] sm:$0xf]
      %v6639 = vld [vmem:[%s5 + $0x40] sm:$0xf]
      %v6640 = vld [vmem:[%s5 + $0x44] sm:$0xf]
      %v6641 = vld [vmem:[%s5 + $0x48] sm:$0xf]
      %v6642 = vld [vmem:[%s5 + $0x4c] sm:$0xf]
      %v6643 = vld [vmem:[%s5 + $0x50] sm:$0xf]
      %v6644 = vld [vmem:[%s5 + $0x54] sm:$0xf]
      %v6645 = vld [vmem:[%s5 + $0x58] sm:$0xf]
      %v6646 = vld [vmem:[%s5 + $0x5c] sm:$0xf]
      %v6647 = vld [vmem:[%s5 + $0x60] sm:$0xf]
      %v6648 = vld [vmem:[%s5 + $0x64] sm:$0xf]
      %v6649 = vld [vmem:[%s5 + $0x68] sm:$0xf]
      %v6650 = vld [vmem:[%s5 + $0x6c] sm:$0xf]
      %v6651 = vld [vmem:[%s5 + $0x70] sm:$0xf]
      %v6652 = vld [vmem:[%s5 + $0x74] sm:$0xf]
      %v6653 = vld [vmem:[%s5 + $0x78] sm:$0xf]
      %v6654 = vld [vmem:[%s5 + $0x7c] sm:$0xf]
      %v6655 = vld [vmem:[%s5 + $0x80] sm:$0xf]
      %v6656 = vld [vmem:[%s5 + $0x84] sm:$0xf]
      %v6657 = vld [vmem:[%s5 + $0x88] sm:$0xf]
      %v6658 = vld [vmem:[%s5 + $0x8c] sm:$0xf]
      %v6659 = vld [vmem:[%s5 + $0x90] sm:$0xf]
      %v6660 = vld [vmem:[%s5 + $0x94] sm:$0xf]
      %v6661 = vld [vmem:[%s5 + $0x98] sm:$0xf]
      %v6662 = vld [vmem:[%s5 + $0x9c] sm:$0xf]
      %v6663 = vld [vmem:[%s5 + $0xa0] sm:$0xf]
      %v6664 = vld [vmem:[%s5 + $0xa4] sm:$0xf]
      %v6665 = vld [vmem:[%s5 + $0xa8] sm:$0xf]
      %v6666 = vld [vmem:[%s5 + $0xac] sm:$0xf]
      %v6667 = vld [vmem:[%s5 + $0xb0] sm:$0xf]
      %v6668 = vld [vmem:[%s5 + $0xb4] sm:$0xf]
      %v6669 = vld [vmem:[%s5 + $0xb8] sm:$0xf]
      %v6670 = vld [vmem:[%s5 + $0xbc] sm:$0xf]
      %v6671 = vld [vmem:[%s5 + $0xc0] sm:$0xf]
      %v6672 = vld [vmem:[%s5 + $0xc4] sm:$0xf]
      %v6673 = vld [vmem:[%s5 + $0xc8] sm:$0xf]
      %v6674 = vld [vmem:[%s5 + $0xcc] sm:$0xf]
      %v6675 = vld [vmem:[%s5 + $0xd0] sm:$0xf]
      %v6676 = vld [vmem:[%s5 + $0xd4] sm:$0xf]
      %v6677 = vld [vmem:[%s5 + $0xd8] sm:$0xf]
      %v6678 = vld [vmem:[%s5 + $0xdc] sm:$0xf]
      %v6679 = vld [vmem:[%s5 + $0xe0] sm:$0xf]
      %v6680 = vld [vmem:[%s5 + $0xe4] sm:$0xf]
      %v6681 = vld [vmem:[%s5 + $0xe8] sm:$0xf]
      %v6682 = vld [vmem:[%s5 + $0xec] sm:$0xf]
      %v6683 = vld [vmem:[%s5 + $0xf0] sm:$0xf]
      %v6684 = vld [vmem:[%s5 + $0xf4] sm:$0xf]
      %v6685 = vld [vmem:[%s5 + $0xf8] sm:$0xf]
      %v6686 = vld [vmem:[%s5 + $0xfc] sm:$0xf]
      %v6687 = vld [vmem:[%s5 + $0x100] sm:$0xf]
      %v6688 = vld [vmem:[%s5 + $0x104] sm:$0xf]
      %v6689 = vld [vmem:[%s5 + $0x108] sm:$0xf]
      %v6690 = vld [vmem:[%s5 + $0x10c] sm:$0xf]
      %v6691 = vld [vmem:[%s5 + $0x110] sm:$0xf]
      %v6692 = vld [vmem:[%s5 + $0x114] sm:$0xf]
      %v6693 = vld [vmem:[%s5 + $0x118] sm:$0xf]
      %v6694 = vld [vmem:[%s5 + $0x11c] sm:$0xf]
      %v6695 = vld [vmem:[%s5 + $0x120] sm:$0xf]
      %v6696 = vld [vmem:[%s5 + $0x124] sm:$0xf]
      %v6697 = vld [vmem:[%s5 + $0x128] sm:$0xf]
      %v6698 = vld [vmem:[%s5 + $0x12c] sm:$0xf]
      %v6699 = vld [vmem:[%s5 + $0x130] sm:$0xf]
      %v6700 = vld [vmem:[%s5 + $0x134] sm:$0xf]
      %v6701 = vld [vmem:[%s5 + $0x138] sm:$0xf]
      %v6702 = vld [vmem:[%s5 + $0x13c] sm:$0xf]
      %v6703 = vld [vmem:[%s5 + $0x140] sm:$0xf]
      %v6704 = vld [vmem:[%s5 + $0x144] sm:$0xf]
      %v6705 = vld [vmem:[%s5 + $0x148] sm:$0xf]
      %v6706 = vld [vmem:[%s5 + $0x14c] sm:$0xf]
      %v6707 = vld [vmem:[%s5 + $0x150] sm:$0xf]
      %v6708 = vld [vmem:[%s5 + $0x154] sm:$0xf]
      %v6709 = vld [vmem:[%s5 + $0x158] sm:$0xf]
      %v6710 = vld [vmem:[%s5 + $0x15c] sm:$0xf]
      %v6711 = vld [vmem:[%s5 + $0x160] sm:$0xf]
      %v6712 = vld [vmem:[%s5 + $0x164] sm:$0xf]
      %v6713 = vld [vmem:[%s5 + $0x168] sm:$0xf]
      %v6714 = vld [vmem:[%s5 + $0x16c] sm:$0xf]
      %v6715 = vld [vmem:[%s5 + $0x170] sm:$0xf]
      %v6716 = vld [vmem:[%s5 + $0x174] sm:$0xf]
      %v6717 = vld [vmem:[%s5 + $0x178] sm:$0xf]
      %v6718 = vld [vmem:[%s5 + $0x17c] sm:$0xf]
      %v6719 = vld [vmem:[%s5 + $0x180] sm:$0xf]
      %v6720 = vld [vmem:[%s5 + $0x184] sm:$0xf]
      %v6721 = vld [vmem:[%s5 + $0x188] sm:$0xf]
      %v6722 = vld [vmem:[%s5 + $0x18c] sm:$0xf]
      %v6723 = vld [vmem:[%s5 + $0x190] sm:$0xf]
      %v6724 = vld [vmem:[%s5 + $0x194] sm:$0xf]
      %v6725 = vld [vmem:[%s5 + $0x198] sm:$0xf]
      %v6726 = vld [vmem:[%s5 + $0x19c] sm:$0xf]
      %v6727 = vld [vmem:[%s5 + $0x1a0] sm:$0xf]
      %v6728 = vld [vmem:[%s5 + $0x1a4] sm:$0xf]
      %v6729 = vld [vmem:[%s5 + $0x1a8] sm:$0xf]
      %v6730 = vld [vmem:[%s5 + $0x1ac] sm:$0xf]
      %v6731 = vld [vmem:[%s5 + $0x1b0] sm:$0xf]
      %v6732 = vld [vmem:[%s5 + $0x1b4] sm:$0xf]
      %v6733 = vld [vmem:[%s5 + $0x1b8] sm:$0xf]
      %v6734 = vld [vmem:[%s5 + $0x1bc] sm:$0xf]
      %v6735 = vld [vmem:[%s5 + $0x1c0] sm:$0xf]
      %v6736 = vld [vmem:[%s5 + $0x1c4] sm:$0xf]
      %v6737 = vld [vmem:[%s5 + $0x1c8] sm:$0xf]
      %v6738 = vld [vmem:[%s5 + $0x1cc] sm:$0xf]
      %v6739 = vld [vmem:[%s5 + $0x1d0] sm:$0xf]
      %v6740 = vld [vmem:[%s5 + $0x1d4] sm:$0xf]
      %v6741 = vld [vmem:[%s5 + $0x1d8] sm:$0xf]
      %v6742 = vld [vmem:[%s5 + $0x1dc] sm:$0xf]
      %v6743 = vld [vmem:[%s5 + $0x1e0] sm:$0xf]
      %v6744 = vld [vmem:[%s5 + $0x1e4] sm:$0xf]
      %v6745 = vld [vmem:[%s5 + $0x1e8] sm:$0xf]
      %v6746 = vld [vmem:[%s5 + $0x1ec] sm:$0xf]
      %v6747 = vld [vmem:[%s5 + $0x1f0] sm:$0xf]
      %v6748 = vld [vmem:[%s5 + $0x1f4] sm:$0xf]
      %v6749 = vld [vmem:[%s5 + $0x1f8] sm:$0xf]
      %v6750 = vld [vmem:[%s5 + $0x1fc] sm:$0xf]
      %v6751 = vld [vmem:[%s5 + $0x200] sm:$0xf]
      %v6752 = vld [vmem:[%s5 + $0x204] sm:$0xf]
      %v6753 = vld [vmem:[%s5 + $0x208] sm:$0xf]
      %v6754 = vld [vmem:[%s5 + $0x20c] sm:$0xf]
      %v6755 = vld [vmem:[%s5 + $0x210] sm:$0xf]
      %v6756 = vld [vmem:[%s5 + $0x214] sm:$0xf]
      %v6757 = vld [vmem:[%s5 + $0x218] sm:$0xf]
      %v6758 = vld [vmem:[%s5 + $0x21c] sm:$0xf]
      %v6759 = vld [vmem:[%s5 + $0x220] sm:$0xf]
      %v6760 = vld [vmem:[%s5 + $0x224] sm:$0xf]
      %v6761 = vld [vmem:[%s5 + $0x228] sm:$0xf]
      %v6762 = vld [vmem:[%s5 + $0x22c] sm:$0xf]
      %v6763 = vld [vmem:[%s5 + $0x230] sm:$0xf]
      %v6764 = vld [vmem:[%s5 + $0x234] sm:$0xf]
      %v6765 = vld [vmem:[%s5 + $0x238] sm:$0xf]
      %v6766 = vld [vmem:[%s5 + $0x23c] sm:$0xf]
      %v6767 = vld [vmem:[%s6] sm:$0x1]
      %v6769 = vlaneseq
      %v6770 = vshrl.u32 %v6769, 7
      %v6771 = vsub.s32 0, %v6770
      %v6772 = vrot.slane %v6767, %v6771
      %v6789 = vunpack.c.l.b16 %v6608
      %v6790 = vunpack.c.h.b16 %v6608
      %v6791 = vunpack.c.l.b16 %v6609
      %v6792 = vunpack.c.h.b16 %v6609
      %v6793 = vunpack.c.l.b16 %v6610
      %v6794 = vunpack.c.h.b16 %v6610
      %v6795 = vunpack.c.l.b16 %v6611
      %v6796 = vunpack.c.h.b16 %v6611
      %v6797 = vunpack.c.l.b16 %v6612
      %v6798 = vunpack.c.l.b16 %v6613
      %v6799 = vunpack.c.h.b16 %v6613
      %v6800 = vunpack.c.l.b16 %v6614
      %v6801 = vunpack.c.h.b16 %v6614
      %v6802 = vunpack.c.l.b16 %v6615
      %v6803 = vunpack.c.h.b16 %v6615
      %v6804 = vunpack.c.l.b16 %v6616
      %v6805 = vunpack.c.h.b16 %v6616
      %v6806 = vunpack.c.l.b16 %v6617
      %v6807 = vunpack.c.l.b16 %v6618
      %v6808 = vunpack.c.h.b16 %v6618
      %v6809 = vunpack.c.l.b16 %v6619
      %v6810 = vunpack.c.h.b16 %v6619
      %v6811 = vunpack.c.l.b16 %v6620
      %v6812 = vunpack.c.h.b16 %v6620
      %v6813 = vunpack.c.l.b16 %v6621
      %v6814 = vunpack.c.h.b16 %v6621
      %v6815 = vunpack.c.l.b16 %v6622
      %v6816 = vpack.c.b16 %v6798, %v6789
      %v6817 = vpack.c.b16 %v6799, %v6790
      %v6818 = vpack.c.b16 %v6800, %v6791
      %v6819 = vpack.c.b16 %v6801, %v6792
      %v6820 = vpack.c.b16 %v6802, %v6793
      %v6821 = vpack.c.b16 %v6803, %v6794
      %v6822 = vpack.c.b16 %v6804, %v6795
      %v6823 = vpack.c.b16 %v6805, %v6796
      %v6824 = vpack.c.b16 %v6806, %v6797
      %v6825 = vpack.c.b16 %v6807, %v6807
      %v6826 = vpack.c.b16 %v6808, %v6808
      %v6827 = vpack.c.b16 %v6809, %v6809
      %v6828 = vpack.c.b16 %v6810, %v6810
      %v6829 = vpack.c.b16 %v6811, %v6811
      %v6830 = vpack.c.b16 %v6812, %v6812
      %v6831 = vpack.c.b16 %v6813, %v6813
      %v6832 = vpack.c.b16 %v6814, %v6814
      %v6833 = vpack.c.b16 %v6815, %v6815
      %v6996 = vunpack.c.l.b16 %v6623
      %v6997 = vunpack.c.l.b16 %v6624
      %v6998 = vunpack.c.l.b16 %v6625
      %v6999 = vunpack.c.l.b16 %v6626
      %v7000 = vunpack.c.l.b16 %v6627
      %v7001 = vunpack.c.l.b16 %v6628
      %v7002 = vunpack.c.l.b16 %v6629
      %v7003 = vunpack.c.l.b16 %v6630
      %v7004 = vunpack.c.l.b16 %v6631
      %v7005 = vunpack.c.l.b16 %v6632
      %v7006 = vunpack.c.l.b16 %v6633
      %v7007 = vunpack.c.l.b16 %v6634
      %v7008 = vunpack.c.l.b16 %v6635
      %v7009 = vunpack.c.l.b16 %v6636
      %v7010 = vunpack.c.l.b16 %v6637
      %v7011 = vunpack.c.l.b16 %v6638
      %v7012 = vunpack.c.l.b16 %v6639
      %v7013 = vunpack.c.l.b16 %v6640
      %v7014 = vunpack.c.l.b16 %v6641
      %v7015 = vunpack.c.l.b16 %v6642
      %v7016 = vunpack.c.l.b16 %v6643
      %v7017 = vunpack.c.l.b16 %v6644
      %v7018 = vunpack.c.l.b16 %v6645
      %v7019 = vunpack.c.l.b16 %v6646
      %v7020 = vunpack.c.l.b16 %v6647
      %v7021 = vunpack.c.l.b16 %v6648
      %v7022 = vunpack.c.l.b16 %v6649
      %v7023 = vunpack.c.l.b16 %v6650
      %v7024 = vunpack.c.l.b16 %v6651
      %v7025 = vunpack.c.l.b16 %v6652
      %v7026 = vunpack.c.l.b16 %v6653
      %v7027 = vunpack.c.l.b16 %v6654
      %v7028 = vunpack.c.l.b16 %v6655
      %v7029 = vunpack.c.l.b16 %v6656
      %v7030 = vunpack.c.l.b16 %v6657
      %v7031 = vunpack.c.l.b16 %v6658
      %v7032 = vunpack.c.l.b16 %v6659
      %v7033 = vunpack.c.l.b16 %v6660
      %v7034 = vunpack.c.l.b16 %v6661
      %v7035 = vunpack.c.l.b16 %v6662
      %v7036 = vunpack.c.l.b16 %v6663
      %v7037 = vunpack.c.l.b16 %v6664
      %v7038 = vunpack.c.l.b16 %v6665
      %v7039 = vunpack.c.l.b16 %v6666
      %v7040 = vunpack.c.l.b16 %v6667
      %v7041 = vunpack.c.l.b16 %v6668
      %v7042 = vunpack.c.l.b16 %v6669
      %v7043 = vunpack.c.l.b16 %v6670
      %v7044 = vunpack.c.l.b16 %v6671
      %v7045 = vunpack.c.l.b16 %v6672
      %v7046 = vunpack.c.l.b16 %v6673
      %v7047 = vunpack.c.l.b16 %v6674
      %v7048 = vunpack.c.l.b16 %v6675
      %v7049 = vunpack.c.l.b16 %v6676
      %v7050 = vunpack.c.l.b16 %v6677
      %v7051 = vunpack.c.l.b16 %v6678
      %v7052 = vunpack.c.l.b16 %v6679
      %v7053 = vunpack.c.l.b16 %v6680
      %v7054 = vunpack.c.l.b16 %v6681
      %v7055 = vunpack.c.l.b16 %v6682
      %v7056 = vunpack.c.l.b16 %v6683
      %v7057 = vunpack.c.l.b16 %v6684
      %v7058 = vunpack.c.l.b16 %v6685
      %v7059 = vunpack.c.l.b16 %v6686
      %v7060 = vunpack.c.l.b16 %v6687
      %v7061 = vunpack.c.l.b16 %v6688
      %v7062 = vunpack.c.l.b16 %v6689
      %v7063 = vunpack.c.l.b16 %v6690
      %v7064 = vunpack.c.l.b16 %v6691
      %v7065 = vunpack.c.l.b16 %v6692
      %v7066 = vunpack.c.l.b16 %v6693
      %v7067 = vunpack.c.l.b16 %v6694
      %v7068 = vunpack.c.l.b16 %v6695
      %v7069 = vunpack.c.l.b16 %v6696
      %v7070 = vunpack.c.l.b16 %v6697
      %v7071 = vunpack.c.l.b16 %v6698
      %v7072 = vunpack.c.l.b16 %v6699
      %v7073 = vunpack.c.l.b16 %v6700
      %v7074 = vunpack.c.l.b16 %v6701
      %v7075 = vunpack.c.l.b16 %v6702
      %v7076 = vunpack.c.l.b16 %v6703
      %v7077 = vunpack.c.l.b16 %v6704
      %v7078 = vunpack.c.l.b16 %v6705
      %v7079 = vunpack.c.l.b16 %v6706
      %v7080 = vunpack.c.l.b16 %v6707
      %v7081 = vunpack.c.l.b16 %v6708
      %v7082 = vunpack.c.l.b16 %v6709
      %v7083 = vunpack.c.l.b16 %v6710
      %v7084 = vunpack.c.l.b16 %v6711
      %v7085 = vunpack.c.l.b16 %v6712
      %v7086 = vunpack.c.l.b16 %v6713
      %v7087 = vunpack.c.l.b16 %v6714
      %v7088 = vunpack.c.l.b16 %v6715
      %v7089 = vunpack.c.l.b16 %v6716
      %v7090 = vunpack.c.l.b16 %v6717
      %v7091 = vunpack.c.l.b16 %v6718
      %v7092 = vunpack.c.l.b16 %v6719
      %v7093 = vunpack.c.l.b16 %v6720
      %v7094 = vunpack.c.l.b16 %v6721
      %v7095 = vunpack.c.l.b16 %v6722
      %v7096 = vunpack.c.l.b16 %v6723
      %v7097 = vunpack.c.l.b16 %v6724
      %v7098 = vunpack.c.l.b16 %v6725
      %v7099 = vunpack.c.l.b16 %v6726
      %v7100 = vunpack.c.l.b16 %v6727
      %v7101 = vunpack.c.l.b16 %v6728
      %v7102 = vunpack.c.l.b16 %v6729
      %v7103 = vunpack.c.l.b16 %v6730
      %v7104 = vunpack.c.l.b16 %v6731
      %v7105 = vunpack.c.l.b16 %v6732
      %v7106 = vunpack.c.l.b16 %v6733
      %v7107 = vunpack.c.l.b16 %v6734
      %v7108 = vunpack.c.l.b16 %v6735
      %v7109 = vunpack.c.l.b16 %v6736
      %v7110 = vunpack.c.l.b16 %v6737
      %v7111 = vunpack.c.l.b16 %v6738
      %v7112 = vunpack.c.l.b16 %v6739
      %v7113 = vunpack.c.l.b16 %v6740
      %v7114 = vunpack.c.l.b16 %v6741
      %v7115 = vunpack.c.l.b16 %v6742
      %v7116 = vunpack.c.l.b16 %v6743
      %v7117 = vunpack.c.l.b16 %v6744
      %v7118 = vunpack.c.l.b16 %v6745
      %v7119 = vunpack.c.l.b16 %v6746
      %v7120 = vunpack.c.l.b16 %v6747
      %v7121 = vunpack.c.l.b16 %v6748
      %v7122 = vunpack.c.l.b16 %v6749
      %v7123 = vunpack.c.l.b16 %v6750
      %v7124 = vunpack.c.l.b16 %v6751
      %v7125 = vunpack.c.l.b16 %v6752
      %v7126 = vunpack.c.l.b16 %v6753
      %v7127 = vunpack.c.l.b16 %v6754
      %v7128 = vunpack.c.l.b16 %v6755
      %v7129 = vunpack.c.l.b16 %v6756
      %v7130 = vunpack.c.l.b16 %v6757
      %v7131 = vunpack.c.l.b16 %v6758
      %v7132 = vunpack.c.l.b16 %v6759
      %v7133 = vunpack.c.l.b16 %v6760
      %v7134 = vunpack.c.l.b16 %v6761
      %v7135 = vunpack.c.l.b16 %v6762
      %v7136 = vunpack.c.l.b16 %v6763
      %v7137 = vunpack.c.l.b16 %v6764
      %v7138 = vunpack.c.l.b16 %v6765
      %v7139 = vunpack.c.l.b16 %v6766
      %v7140 = vpack.c.b16 %v6997, %v6996
      %v7141 = vpack.c.b16 %v6999, %v6998
      %v7142 = vpack.c.b16 %v7001, %v7000
      %v7143 = vpack.c.b16 %v7003, %v7002
      %v7144 = vpack.c.b16 %v7005, %v7004
      %v7145 = vpack.c.b16 %v7007, %v7006
      %v7146 = vpack.c.b16 %v7009, %v7008
      %v7147 = vpack.c.b16 %v7011, %v7010
      %v7148 = vpack.c.b16 %v7013, %v7012
      %v7149 = vpack.c.b16 %v7015, %v7014
      %v7150 = vpack.c.b16 %v7017, %v7016
      %v7151 = vpack.c.b16 %v7019, %v7018
      %v7152 = vpack.c.b16 %v7021, %v7020
      %v7153 = vpack.c.b16 %v7023, %v7022
      %v7154 = vpack.c.b16 %v7025, %v7024
      %v7155 = vpack.c.b16 %v7027, %v7026
      %v7156 = vpack.c.b16 %v7029, %v7028
      %v7157 = vpack.c.b16 %v7031, %v7030
      %v7158 = vpack.c.b16 %v7033, %v7032
      %v7159 = vpack.c.b16 %v7035, %v7034
      %v7160 = vpack.c.b16 %v7037, %v7036
      %v7161 = vpack.c.b16 %v7039, %v7038
      %v7162 = vpack.c.b16 %v7041, %v7040
      %v7163 = vpack.c.b16 %v7043, %v7042
      %v7164 = vpack.c.b16 %v7045, %v7044
      %v7165 = vpack.c.b16 %v7047, %v7046
      %v7166 = vpack.c.b16 %v7049, %v7048
      %v7167 = vpack.c.b16 %v7051, %v7050
      %v7168 = vpack.c.b16 %v7053, %v7052
      %v7169 = vpack.c.b16 %v7055, %v7054
      %v7170 = vpack.c.b16 %v7057, %v7056
      %v7171 = vpack.c.b16 %v7059, %v7058
      %v7172 = vpack.c.b16 %v7061, %v7060
      %v7173 = vpack.c.b16 %v7063, %v7062
      %v7174 = vpack.c.b16 %v7065, %v7064
      %v7175 = vpack.c.b16 %v7067, %v7066
      %v7176 = vpack.c.b16 %v7069, %v7068
      %v7177 = vpack.c.b16 %v7071, %v7070
      %v7178 = vpack.c.b16 %v7073, %v7072
      %v7179 = vpack.c.b16 %v7075, %v7074
      %v7180 = vpack.c.b16 %v7077, %v7076
      %v7181 = vpack.c.b16 %v7079, %v7078
      %v7182 = vpack.c.b16 %v7081, %v7080
      %v7183 = vpack.c.b16 %v7083, %v7082
      %v7184 = vpack.c.b16 %v7085, %v7084
      %v7185 = vpack.c.b16 %v7087, %v7086
      %v7186 = vpack.c.b16 %v7089, %v7088
      %v7187 = vpack.c.b16 %v7091, %v7090
      %v7188 = vpack.c.b16 %v7093, %v7092
      %v7189 = vpack.c.b16 %v7095, %v7094
      %v7190 = vpack.c.b16 %v7097, %v7096
      %v7191 = vpack.c.b16 %v7099, %v7098
      %v7192 = vpack.c.b16 %v7101, %v7100
      %v7193 = vpack.c.b16 %v7103, %v7102
      %v7194 = vpack.c.b16 %v7105, %v7104
      %v7195 = vpack.c.b16 %v7107, %v7106
      %v7196 = vpack.c.b16 %v7109, %v7108
      %v7197 = vpack.c.b16 %v7111, %v7110
      %v7198 = vpack.c.b16 %v7113, %v7112
      %v7199 = vpack.c.b16 %v7115, %v7114
      %v7200 = vpack.c.b16 %v7117, %v7116
      %v7201 = vpack.c.b16 %v7119, %v7118
      %v7202 = vpack.c.b16 %v7121, %v7120
      %v7203 = vpack.c.b16 %v7123, %v7122
      %v7204 = vpack.c.b16 %v7125, %v7124
      %v7205 = vpack.c.b16 %v7127, %v7126
      %v7206 = vpack.c.b16 %v7129, %v7128
      %v7207 = vpack.c.b16 %v7131, %v7130
      %v7208 = vpack.c.b16 %v7133, %v7132
      %v7209 = vpack.c.b16 %v7135, %v7134
      %v7210 = vpack.c.b16 %v7137, %v7136
      %v7211 = vpack.c.b16 %v7139, %v7138
      %7284 = vmatprep.subr.bf16.mxu0 0
      %7285 = vmatpush1.bf16.msra.mxu0 %v7140
      %7286 = vmatprep.subr.bf16.mxu0 0
      %7287 = vmatpush1.bf16.msra.mxu0 %v7141
      %7288 = vmatprep.subr.bf16.mxu0 0
      %7289 = vmatpush1.bf16.msra.mxu0 %v7142
      %7290 = vmatprep.subr.bf16.mxu0 0
      %7291 = vmatpush1.bf16.msra.mxu0 %v7143
      %7292 = vmatprep.subr.bf16.mxu0 0
      %7293 = vmatpush1.bf16.msra.mxu0 %v7144
      %7294 = vmatprep.subr.bf16.mxu0 0
      %7295 = vmatpush1.bf16.msra.mxu0 %v7145
      %7296 = vmatprep.subr.bf16.mxu0 0
      %7297 = vmatpush1.bf16.msra.mxu0 %v7146
      %7298 = vmatprep.subr.bf16.mxu0 0
      %7299 = vmatpush1.bf16.msra.mxu0 %v7147
      %7300 = vmatprep.subr.bf16.mxu0 0
      %7301 = vmatpush1.bf16.msra.mxu0 %v7148
      %7302 = vmatprep.subr.bf16.mxu0 0
      %7303 = vmatpush1.bf16.msra.mxu0 %v7149
      %7304 = vmatprep.subr.bf16.mxu0 0
      %7305 = vmatpush1.bf16.msra.mxu0 %v7150
      %7306 = vmatprep.subr.bf16.mxu0 0
      %7307 = vmatpush1.bf16.msra.mxu0 %v7151
      %7308 = vmatprep.subr.bf16.mxu0 0
      %7309 = vmatpush1.bf16.msra.mxu0 %v7152
      %7310 = vmatprep.subr.bf16.mxu0 0
      %7311 = vmatpush1.bf16.msra.mxu0 %v7153
      %7312 = vmatprep.subr.bf16.mxu0 0
      %7313 = vmatpush1.bf16.msra.mxu0 %v7154
      %7314 = vmatprep.subr.bf16.mxu0 0
      %7315 = vmatpush1.bf16.msra.mxu0 %v7155
      %7316 = vmatprep.mubr.bf16.mxu0 %v6817
      %7317 = vmatmul.mubr.bf16.gmra.mrb[0].mxu0 %v6816
      %v7318 = vpop.f32.mrb[0].mxu0
      %v7319 = vadd.f32 %v6772, %v7318
      %v7320 = vpop.f32.mrb[0].mxu0
      %v7321 = vpop.f32.mrb[0].mxu0
      %v7322 = vadd.f32 %v6772, %v7321
      %v7323 = vpop.f32.mrb[0].mxu0
      %7324 = vmatprep.mubr.bf16.mxu0 %v6826
      %7325 = vmatmul.mubr.bf16.gmra.mrb[0].mxu0 %v6825
      %v7326 = vpop.f32.mrb[0].mxu0
      %v7327 = vadd.f32 %v6772, %v7326
      %v7328 = vpop.f32.mrb[0].mxu0
      %v7329 = vpop.f32.mrb[0].mxu0
      %v7330 = vpop.f32.mrb[0].mxu0
      %7331 = vdwg.mxu0
      %7332 = vmatprep.subr.bf16.mxu0 0
      %7333 = vmatpush1.bf16.msra.mxu0 %v7156
      %7334 = vmatprep.subr.bf16.mxu0 0
      %7335 = vmatpush1.bf16.msra.mxu0 %v7157
      %7336 = vmatprep.subr.bf16.mxu0 0
      %7337 = vmatpush1.bf16.msra.mxu0 %v7158
      %7338 = vmatprep.subr.bf16.mxu0 0
      %7339 = vmatpush1.bf16.msra.mxu0 %v7159
      %7340 = vmatprep.subr.bf16.mxu0 0
      %7341 = vmatpush1.bf16.msra.mxu0 %v7160
      %7342 = vmatprep.subr.bf16.mxu0 0
      %7343 = vmatpush1.bf16.msra.mxu0 %v7161
      %7344 = vmatprep.subr.bf16.mxu0 0
      %7345 = vmatpush1.bf16.msra.mxu0 %v7162
      %7346 = vmatprep.subr.bf16.mxu0 0
      %7347 = vmatpush1.bf16.msra.mxu0 %v7163
      %7348 = vmatprep.subr.bf16.mxu0 0
      %7349 = vmatpush1.bf16.msra.mxu0 %v7164
      %7350 = vmatprep.subr.bf16.mxu0 0
      %7351 = vmatpush1.bf16.msra.mxu0 %v7165
      %7352 = vmatprep.subr.bf16.mxu0 0
      %7353 = vmatpush1.bf16.msra.mxu0 %v7166
      %7354 = vmatprep.subr.bf16.mxu0 0
      %7355 = vmatpush1.bf16.msra.mxu0 %v7167
      %7356 = vmatprep.subr.bf16.mxu0 0
      %7357 = vmatpush1.bf16.msra.mxu0 %v7168
      %7358 = vmatprep.subr.bf16.mxu0 0
      %7359 = vmatpush1.bf16.msra.mxu0 %v7169
      %7360 = vmatprep.subr.bf16.mxu0 0
      %7361 = vmatpush1.bf16.msra.mxu0 %v7170
      %7362 = vmatprep.subr.bf16.mxu0 0
      %7363 = vmatpush1.bf16.msra.mxu0 %v7171
      %7364 = vmatprep.mubr.bf16.mxu0 %v6819
      %7365 = vmatmul.mubr.bf16.gmra.mrb[0].mxu0 %v6818
      %v7366 = vpop.f32.mrb[0].mxu0
      %v7367 = vadd.f32 %v7319, %v7366
      %v7368 = vpop.f32.mrb[0].mxu0
      %v7369 = vpop.f32.mrb[0].mxu0
      %v7370 = vadd.f32 %v7322, %v7369
      %v7371 = vpop.f32.mrb[0].mxu0
      %7372 = vmatprep.mubr.bf16.mxu0 %v6828
      %7373 = vmatmul.mubr.bf16.gmra.mrb[0].mxu0 %v6827
      %v7374 = vpop.f32.mrb[0].mxu0
      %v7375 = vadd.f32 %v7327, %v7374
      %v7376 = vpop.f32.mrb[0].mxu0
      %v7377 = vpop.f32.mrb[0].mxu0
      %v7378 = vpop.f32.mrb[0].mxu0
      %7379 = vdwg.mxu0
      %7380 = vmatprep.subr.bf16.mxu0 0
      %7381 = vmatpush1.bf16.msra.mxu0 %v7172
      %7382 = vmatprep.subr.bf16.mxu0 0
      %7383 = vmatpush1.bf16.msra.mxu0 %v7173
      %7384 = vmatprep.subr.bf16.mxu0 0
      %7385 = vmatpush1.bf16.msra.mxu0 %v7174
      %7386 = vmatprep.subr.bf16.mxu0 0
      %7387 = vmatpush1.bf16.msra.mxu0 %v7175
      %7388 = vmatprep.subr.bf16.mxu0 0
      %7389 = vmatpush1.bf16.msra.mxu0 %v7176
      %7390 = vmatprep.subr.bf16.mxu0 0
      %7391 = vmatpush1.bf16.msra.mxu0 %v7177
      %7392 = vmatprep.subr.bf16.mxu0 0
      %7393 = vmatpush1.bf16.msra.mxu0 %v7178
      %7394 = vmatprep.subr.bf16.mxu0 0
      %7395 = vmatpush1.bf16.msra.mxu0 %v7179
      %7396 = vmatprep.subr.bf16.mxu0 0
      %7397 = vmatpush1.bf16.msra.mxu0 %v7180
      %7398 = vmatprep.subr.bf16.mxu0 0
      %7399 = vmatpush1.bf16.msra.mxu0 %v7181
      %7400 = vmatprep.subr.bf16.mxu0 0
      %7401 = vmatpush1.bf16.msra.mxu0 %v7182
      %7402 = vmatprep.subr.bf16.mxu0 0
      %7403 = vmatpush1.bf16.msra.mxu0 %v7183
      %7404 = vmatprep.subr.bf16.mxu0 0
      %7405 = vmatpush1.bf16.msra.mxu0 %v7184
      %7406 = vmatprep.subr.bf16.mxu0 0
      %7407 = vmatpush1.bf16.msra.mxu0 %v7185
      %7408 = vmatprep.subr.bf16.mxu0 0
      %7409 = vmatpush1.bf16.msra.mxu0 %v7186
      %7410 = vmatprep.subr.bf16.mxu0 0
      %7411 = vmatpush1.bf16.msra.mxu0 %v7187
      %7412 = vmatprep.mubr.bf16.mxu0 %v6821
      %7413 = vmatmul.mubr.bf16.gmra.mrb[0].mxu0 %v6820
      %v7414 = vpop.f32.mrb[0].mxu0
      %v7415 = vadd.f32 %v7367, %v7414
      %v7416 = vpop.f32.mrb[0].mxu0
      %v7417 = vpop.f32.mrb[0].mxu0
      %v7418 = vadd.f32 %v7370, %v7417
      %v7419 = vpop.f32.mrb[0].mxu0
      %7420 = vmatprep.mubr.bf16.mxu0 %v6830
      %7421 = vmatmul.mubr.bf16.gmra.mrb[0].mxu0 %v6829
      %v7422 = vpop.f32.mrb[0].mxu0
      %v7423 = vadd.f32 %v7375, %v7422
      %v7424 = vpop.f32.mrb[0].mxu0
      %v7425 = vpop.f32.mrb[0].mxu0
      %v7426 = vpop.f32.mrb[0].mxu0
      %7427 = vdwg.mxu0
      %7428 = vmatprep.subr.bf16.mxu0 0
      %7429 = vmatpush1.bf16.msra.mxu0 %v7188
      %7430 = vmatprep.subr.bf16.mxu0 0
      %7431 = vmatpush1.bf16.msra.mxu0 %v7189
      %7432 = vmatprep.subr.bf16.mxu0 0
      %7433 = vmatpush1.bf16.msra.mxu0 %v7190
      %7434 = vmatprep.subr.bf16.mxu0 0
      %7435 = vmatpush1.bf16.msra.mxu0 %v7191
      %7436 = vmatprep.subr.bf16.mxu0 0
      %7437 = vmatpush1.bf16.msra.mxu0 %v7192
      %7438 = vmatprep.subr.bf16.mxu0 0
      %7439 = vmatpush1.bf16.msra.mxu0 %v7193
      %7440 = vmatprep.subr.bf16.mxu0 0
      %7441 = vmatpush1.bf16.msra.mxu0 %v7194
      %7442 = vmatprep.subr.bf16.mxu0 0
      %7443 = vmatpush1.bf16.msra.mxu0 %v7195
      %7444 = vmatprep.subr.bf16.mxu0 0
      %7445 = vmatpush1.bf16.msra.mxu0 %v7196
      %7446 = vmatprep.subr.bf16.mxu0 0
      %7447 = vmatpush1.bf16.msra.mxu0 %v7197
      %7448 = vmatprep.subr.bf16.mxu0 0
      %7449 = vmatpush1.bf16.msra.mxu0 %v7198
      %7450 = vmatprep.subr.bf16.mxu0 0
      %7451 = vmatpush1.bf16.msra.mxu0 %v7199
      %7452 = vmatprep.subr.bf16.mxu0 0
      %7453 = vmatpush1.bf16.msra.mxu0 %v7200
      %7454 = vmatprep.subr.bf16.mxu0 0
      %7455 = vmatpush1.bf16.msra.mxu0 %v7201
      %7456 = vmatprep.subr.bf16.mxu0 0
      %7457 = vmatpush1.bf16.msra.mxu0 %v7202
      %7458 = vmatprep.subr.bf16.mxu0 0
      %7459 = vmatpush1.bf16.msra.mxu0 %v7203
      %7460 = vmatprep.mubr.bf16.mxu0 %v6823
      %7461 = vmatmul.mubr.bf16.gmra.mrb[0].mxu0 %v6822
      %v7462 = vpop.f32.mrb[0].mxu0
      %v7463 = vadd.f32 %v7415, %v7462
      %v7464 = vpop.f32.mrb[0].mxu0
      %v7465 = vpop.f32.mrb[0].mxu0
      %v7466 = vadd.f32 %v7418, %v7465
      %v7467 = vpop.f32.mrb[0].mxu0
      %7468 = vmatprep.mubr.bf16.mxu0 %v6832
      %7469 = vmatmul.mubr.bf16.gmra.mrb[0].mxu0 %v6831
      %v7470 = vpop.f32.mrb[0].mxu0
      %v7471 = vadd.f32 %v7423, %v7470
      %v7472 = vpop.f32.mrb[0].mxu0
      %v7473 = vpop.f32.mrb[0].mxu0
      %v7474 = vpop.f32.mrb[0].mxu0
      %7475 = vdwg.mxu0
      %7476 = vmatprep.subr.bf16.mxu0 0
      %7477 = vmatpush1.bf16.msra.mxu0 %v7204
      %7478 = vmatprep.subr.bf16.mxu0 0
      %7479 = vmatpush1.bf16.msra.mxu0 %v7205
      %7480 = vmatprep.subr.bf16.mxu0 0
      %7481 = vmatpush1.bf16.msra.mxu0 %v7206
      %7482 = vmatprep.subr.bf16.mxu0 0
      %7483 = vmatpush1.bf16.msra.mxu0 %v7207
      %7484 = vmatprep.subr.bf16.mxu0 0
      %7485 = vmatpush1.bf16.msra.mxu0 %v7208
      %7486 = vmatprep.subr.bf16.mxu0 0
      %7487 = vmatpush1.bf16.msra.mxu0 %v7209
      %7488 = vmatprep.subr.bf16.mxu0 0
      %7489 = vmatpush1.bf16.msra.mxu0 %v7210
      %7490 = vmatprep.subr.bf16.mxu0 0
      %7491 = vmatpush1.bf16.msra.mxu0 %v7211
      %7492 = vmatprep.subr.bf16.mxu0 0
      %7493 = vmatpush1.bf16.msra.mxu0 0
      %7494 = vmatprep.subr.bf16.mxu0 0
      %7495 = vmatpush1.bf16.msra.mxu0 0
      %7496 = vmatprep.subr.bf16.mxu0 0
      %7497 = vmatpush1.bf16.msra.mxu0 0
      %7498 = vmatprep.subr.bf16.mxu0 0
      %7499 = vmatpush1.bf16.msra.mxu0 0
      %7500 = vmatprep.subr.bf16.mxu0 0
      %7501 = vmatpush1.bf16.msra.mxu0 0
      %7502 = vmatprep.subr.bf16.mxu0 0
      %7503 = vmatpush1.bf16.msra.mxu0 0
      %7504 = vmatprep.subr.bf16.mxu0 0
      %7505 = vmatpush1.bf16.msra.mxu0 0
      %7506 = vmatprep.subr.bf16.mxu0 0
      %7507 = vmatpush1.bf16.msra.mxu0 0
      %7508 = vmatprep.mubr.bf16.mxu0 0
      %7509 = vmatmul.mubr.bf16.gmra.mrb[0].mxu0 %v6824
      %v7510 = vpop.f32.mrb[0].mxu0
      %v7511 = vadd.f32 %v7463, %v7510
      %v7512 = vpop.f32.mrb[0].mxu0
      %v7513 = vpop.f32.mrb[0].mxu0
      %v7514 = vadd.f32 %v7466, %v7513
      %v7515 = vpop.f32.mrb[0].mxu0
      %7516 = vmatprep.mubr.bf16.mxu0 0
      %7517 = vmatmul.mubr.bf16.gmra.mrb[0].mxu0 %v6833
      %v7518 = vpop.f32.mrb[0].mxu0
      %v7519 = vadd.f32 %v7471, %v7518
      %v7520 = vpop.f32.mrb[0].mxu0
      %v7521 = vpop.f32.mrb[0].mxu0
      %v7522 = vpop.f32.mrb[0].mxu0
      %7523 = vdwg.mxu0
      %v7524 = vmax.f32 %v7511, 0.0
      %v7525 = vmax.f32 %v7514, 0.0
      %v7526 = vmax.f32 %v7519, 0.0
      %7527 = vst [vmem:[%s278] sm:$0xf] %v7524
      %7528 = vst [vmem:[%s278 - $0x2] sm:$0xc0] %v7524
      %7529 = vst [vmem:[%s278 + $0x6] sm:$0x3] %v7525
      %7530 = vst [vmem:[%s278 + $0x4] sm:$0xf0] %v7525
      %7531 = vst [vmem:[%s278 + $0xa] sm:$0x3c] %v7526
      %p7532 = scmp.lt.s32.totalorder %s18, 1
      %s7533 = scalar_select %p7532, %s18, 1
      %s7534 = smul.addr %s7533, 2
      %s7535 = smul.addr %s7534, 8
      %s7536 = scalar_lea.vmem %s7, %s7535
      // Predicated region
      $region49: #{cnn_cifar_forward.2} parent=47 // pred_check
        %p7537 = pneg %p188
      $region50: #{cnn_cifar_forward.2} parent=47 // pred_check_branch
        %7539 = sbr.rel (%p7537) target = $region52
      $region51: #{cnn_cifar_forward.2} parent=47 // pred_region
        _
      $region52: #{cnn_cifar_forward.2} parent=47 // pred_fallthru
        _
    $region48: #{cnn_cifar_forward.2} parent=5 // pred_fallthru
      _
    %p7540 = scmp.le.s32.totalorder 2, %s13
    // Predicated region
    $region53: #{cnn_cifar_forward.2} parent=5 // pred_check
      %p7541 = pneg %p7540
    $region54: #{cnn_cifar_forward.2} parent=5 // pred_check_branch
      %7543 = sbr.rel (%p7541) target = $region56
    $region55: #{cnn_cifar_forward.2} parent=5 // pred_region
      %s7544 = ssub.s32 %s13, 2
      // Predicated region
      $region57: #{cnn_cifar_forward.2} parent=55 // pred_check
        %p7545 = pneg %p194
      $region58: #{cnn_cifar_forward.2} parent=55 // pred_check_branch
        %7547 = sbr.rel (%p7545) target = $region60
      $region59: #{cnn_cifar_forward.2} parent=55 // pred_region
        %p7548 = scmp.lt.s32.totalorder %s19, 1
        %s7549 = scalar_select %p7548, %s19, 1
        %s7550 = smul.addr %s7549, 2
        %s7551 = smul.addr %s7550, 8
        %s7552 = scalar_lea.vmem %s7, %s7551
      $region60: #{cnn_cifar_forward.2} parent=55 // pred_fallthru
        _
    $region56: #{cnn_cifar_forward.2} parent=5 // pred_fallthru
      _
  $region6: #{cnn_cifar_forward.2} parent=0 // loop_footer
    %s17 = sadd.s32 1, %s13
  $region7: #{cnn_cifar_forward.2} parent=0 // loop_footer_branch
    %12 = sbr.rel target = $region3
  $region8: #{cnn_cifar_forward.2} parent=0 // loop_exit
    _

</llo_original>
